<compile_context>
chip_gen: v7x
topology: tpu7x:2x2x1
jax: 0.10.0
libtpu: 0.0.40
codegen_flags: <defaults>
</compile_context>

<pallas_src>
import functools

import jax
import jax.numpy as jnp
from jax.experimental import pallas as pl
from jax.experimental.pallas import tpu as pltpu

# ----------------------------- Pallas kernels ---------------------------------


def _relu(x):
    return jnp.maximum(x, 0.0)


def _bf16(x):
    return x.astype(jnp.bfloat16)


def _xyz_fma(xyz_ref, w):
    """K=3 contraction as three VPU broadcast multiply-adds (keeps the nearly-empty
    K=3 weight tile off the MXU).  xyz f32, w bf16 -> f32 [rows, Cout]."""
    return (xyz_ref[:, 0:1] * w[0:1, :].astype(jnp.float32)
            + xyz_ref[:, 1:2] * w[1:2, :].astype(jnp.float32)
            + xyz_ref[:, 2:3] * w[2:3, :].astype(jnp.float32))


def _sa1_kernel(x_ref, w1, b1, w2, b2, w3, b3, o_ref, *, nsample):
    """3-layer pointwise MLP (folded-BN bias, ReLU) + max over nsample; bf16 output."""
    rows = x_ref.shape[0]                      # tile_g * nsample
    h = _relu(_xyz_fma(x_ref, w1) + b1[...])   # Cin = 3 -> VPU FMAs
    h = _relu(jnp.dot(_bf16(h), w2[...], preferred_element_type=jnp.float32) + b2[...])
    h = _relu(jnp.dot(_bf16(h), w3[...], preferred_element_type=jnp.float32) + b3[...])
    o_ref[...] = jnp.max(h.reshape(rows // nsample, nsample, h.shape[-1]), axis=1).astype(o_ref.dtype)


def _sa2_kernel(xyz_ref, feat_ref, w1a, w1b, b1, w2, b2, w3, b3, o_ref, *, nsample):
    """Split-K first layer: xyz part on the VPU, feature part on the MXU; then MLP + max."""
    rows = xyz_ref.shape[0]
    h = _relu(_xyz_fma(xyz_ref, w1a)
              + jnp.dot(feat_ref[...], w1b[...], preferred_element_type=jnp.float32)
              + b1[...])
    h = _relu(jnp.dot(_bf16(h), w2[...], preferred_element_type=jnp.float32) + b2[...])
    h = _relu(jnp.dot(_bf16(h), w3[...], preferred_element_type=jnp.float32) + b3[...])
    o_ref[...] = jnp.max(h.reshape(rows // nsample, nsample, h.shape[-1]), axis=1).astype(o_ref.dtype)


def _sa3_head_kernel(xyz_ref, feat_ref, w1a, w1b, b1, w2, b2, w3c, b3c, hwc, hb,
                     o_ref, h2_ref, *, npoint):
    """SA3 group-all MLP + max + fused Linear head.  w3 / b3 / head_w arrive as streamed
    output-channel chunks over grid axis 1; the head is a split-K accumulation into the
    resident (lane-dense) output block.  Layers 1-2 are computed once per batch block."""
    c = pl.program_id(1)
    rows = xyz_ref.shape[0]                    # tile_b * npoint
    nb = rows // npoint

    @pl.when(c == 0)
    def _():
        h = _relu(_xyz_fma(xyz_ref, w1a)
                  + jnp.dot(feat_ref[...], w1b[...], preferred_element_type=jnp.float32)
                  + b1[...])
        h2_ref[...] = _relu(jnp.dot(_bf16(h), w2[...], preferred_element_type=jnp.float32)
                            + b2[...])
        o_ref[...] = jnp.broadcast_to(hb[...][None], o_ref.shape)   # init accumulator with head bias

    # layer-3 chunk + per-batch max over npoint + split-K head accumulation.
    h3 = _relu(jnp.dot(_bf16(h2_ref[...]), w3c[...], preferred_element_type=jnp.float32) + b3c[...])
    g = jnp.max(h3.reshape(nb, npoint, h3.shape[-1]), axis=1)        # [nb, chunk] global-feat slice
    o_ref[...] += jnp.dot(_bf16(g), hwc[...], preferred_element_type=jnp.float32)[:, None, :]


# ------------------------------ pallas_call wrappers ----------------------------


def _const1(a):
    # full-array block, constant index over a 1-D grid (no re-DMA across grid steps)
    return pl.BlockSpec(a.shape, lambda i: (0, 0))


def _const2(a):
    # full-array block, constant index over a 2-D grid
    return pl.BlockSpec(a.shape, lambda i, j: (0, 0))


def _bytes(*arrays):
    return int(sum(a.size * a.dtype.itemsize for a in arrays))


def _num_tensorcores():
    """2 on dual-TensorCore chips (v7x), else 1.  Queried defensively; only affects tiling."""
    try:
        info = pltpu.get_tpu_info()
        for attr in ("num_cores", "num_tensorcores", "tensorcore_count", "cores_per_chip"):
            v = getattr(info, attr, None)
            if isinstance(v, int) and v > 0:
                return int(v)
    except Exception:
        pass
    try:
        kind = str(getattr(jax.devices()[0], "device_kind", "")).lower()
    except Exception:
        kind = ""
    return 2 if "7" in kind else 1


def _pick_tile_g(G, num_cores):
    """Split the 'parallel' group axis in two only on dual-TC chips; on 1-TC chips one
    full-size grid step avoids the extra per-step overhead (these kernels are sub-10us)."""
    half = G // 2
    if num_cores >= 2 and G % 2 == 0 and half % 16 == 0:   # 16: bf16 sublane packing
        return half
    return G


def sa1_forward(x, layer_params, *, nsample, num_cores):
    """x: [G*nsample, 3] f32 -> [G, Cout] bf16 (shared MLP then max over nsample)."""
    (w1, b1), (w2, b2), (w3, b3) = layer_params
    rows, cin = x.shape
    G = rows // nsample
    cout = w3.shape[1]
    tile_g = _pick_tile_g(G, num_cores)
    block_rows = tile_g * nsample
    weights = (w1, b1, w2, b2, w3, b3)
    flops = 2 * rows * (cin * w1.shape[1] + w1.shape[1] * w2.shape[1] + w2.shape[1] * cout)
    return pl.pallas_call(
        functools.partial(_sa1_kernel, nsample=nsample),
        out_shape=jax.ShapeDtypeStruct((G, cout), jnp.bfloat16),
        grid=(G // tile_g,),
        in_specs=[pl.BlockSpec((block_rows, cin), lambda i: (i, 0))]
        + [_const1(a) for a in weights],
        out_specs=pl.BlockSpec((tile_g, cout), lambda i: (i, 0)),
        compiler_params=pltpu.CompilerParams(dimension_semantics=("parallel",)),
        cost_estimate=pl.CostEstimate(
            flops=flops, transcendentals=0,
            bytes_accessed=_bytes(x, *weights) + G * cout * 2),
    )(x, *weights)


def sa2_forward(xyz, feat, layer_params, *, nsample, num_cores):
    """xyz: [G*ns, 3] f32, feat: [G*ns, C] bf16 -> [G, Cout] bf16 (split-K first layer)."""
    (w1a, w1b, b1), (w2, b2), (w3, b3) = layer_params
    rows = xyz.shape[0]
    G = rows // nsample
    c1, cout = w1b.shape[1], w3.shape[1]
    tile_g = _pick_tile_g(G, num_cores)
    block_rows = tile_g * nsample
    weights = (w1a, w1b, b1, w2, b2, w3, b3)
    flops = 2 * rows * ((w1a.shape[0] + w1b.shape[0]) * c1 + c1 * w2.shape[1] + w2.shape[1] * cout)
    return pl.pallas_call(
        functools.partial(_sa2_kernel, nsample=nsample),
        out_shape=jax.ShapeDtypeStruct((G, cout), jnp.bfloat16),
        grid=(G // tile_g,),
        in_specs=[
            pl.BlockSpec((block_rows, xyz.shape[1]), lambda i: (i, 0)),
            pl.BlockSpec((block_rows, feat.shape[1]), lambda i: (i, 0)),
        ] + [_const1(a) for a in weights],
        out_specs=pl.BlockSpec((tile_g, cout), lambda i: (i, 0)),
        compiler_params=pltpu.CompilerParams(dimension_semantics=("parallel",)),
        cost_estimate=pl.CostEstimate(
            flops=flops, transcendentals=0,
            bytes_accessed=_bytes(xyz, feat, *weights) + G * cout * 2),
    )(xyz, feat, *weights)


def sa3_head_forward(xyz, feat, layer_params, head_w, head_b, *, npoint, num_cores, chunk=256):
    """Group-all SA3 + fused Linear head.
    xyz: [B*np, 3] f32, feat: [B*np, C] bf16 -> [B, cls_dim] f32.
    Grid = (batch, w3-channel-chunks): the batch axis is 'parallel' (both v7x TCs busy),
    the chunk axis streams w3/b3/head_w so their DMA overlaps compute (split-K head)."""
    (w1a, w1b, b1), (w2, b2), (w3, b3) = layer_params
    rows = xyz.shape[0]
    B = rows // npoint
    c1, c2, c3 = w1b.shape[1], w2.shape[1], w3.shape[1]
    cls_dim = head_w.shape[1]
    cls_pad = pl.cdiv(cls_dim, 128) * 128                    # lane-dense head output
    head_w_p = jnp.pad(head_w, ((0, 0), (0, cls_pad - cls_dim)))
    head_b_p = jnp.pad(head_b, ((0, 0), (0, cls_pad - cls_dim)))
    nchunk = c3 // chunk
    tile_b = 1 if (num_cores >= 2 and B >= 2) else B         # batch-parallel only on dual-TC chips
    block_rows = tile_b * npoint
    weights = (w1a, w1b, b1, w2, b2, w3, b3, head_w_p, head_b_p)
    flops = (2 * rows * ((w1a.shape[0] + w1b.shape[0]) * c1 + c1 * c2 + c2 * c3)
             + 2 * B * c3 * cls_pad)
    out = pl.pallas_call(
        functools.partial(_sa3_head_kernel, npoint=npoint),
        out_shape=jax.ShapeDtypeStruct((B, 1, cls_pad), jnp.float32),
        grid=(B // tile_b, nchunk),
        in_specs=[
            pl.BlockSpec((block_rows, 3), lambda b, c: (b, 0)),
            pl.BlockSpec((block_rows, feat.shape[1]), lambda b, c: (b, 0)),
            _const2(w1a), _const2(w1b), _const2(b1), _const2(w2), _const2(b2),
            pl.BlockSpec((c2, chunk), lambda b, c: (0, c)),        # w3: streamed column chunk
            pl.BlockSpec((1, chunk), lambda b, c: (0, c)),         # b3 chunk
            pl.BlockSpec((chunk, cls_pad), lambda b, c: (c, 0)),   # head_w: split-K row chunk
            _const2(head_b_p),
        ],
        out_specs=pl.BlockSpec((tile_b, 1, cls_pad), lambda b, c: (b, 0, 0)),
        scratch_shapes=[pltpu.VMEM((block_rows, c2), jnp.float32)],   # layer-2 activations
        compiler_params=pltpu.CompilerParams(dimension_semantics=("parallel", "arbitrary")),
        cost_estimate=pl.CostEstimate(
            flops=flops, transcendentals=0,
            bytes_accessed=_bytes(xyz, feat, *weights) + B * cls_pad * 4),
    )(xyz, feat, *weights)
    return out.reshape(B, cls_pad)[:, :cls_dim]


# ------------------------- plain-JAX glue (sampling / grouping) ------------------
# TODO(synk): FPS + ball-query + gather could be fused into a PrefetchScalarGridSpec
# kernel (indices in SMEM, pl.Element row-gather); kept as plain-JAX glue here since
# the gathers are data-dependent and tiny at these shapes.


def index_points(points, idx):
    """points [B,N,C], idx [B,...] int -> [B,...,C]  (same as pointnet2 index_points)."""
    return jax.vmap(lambda p, i: p[i])(points, idx)


def farthest_point_sample(xyz, npoint):
    """xyz [B,N,3] -> [B,npoint] int32 indices.
    # TODO(synk): PyTorch impl uses a random initial farthest index; we use index 0 deterministically.
    """
    B, N, _ = xyz.shape

    def body(i, state):
        centroids, distance, farthest = state
        centroids = centroids.at[:, i].set(farthest)
        centroid = index_points(xyz, farthest[:, None])          # [B,1,3]
        dist = jnp.sum((xyz - centroid) ** 2, axis=-1)
        distance = jnp.minimum(distance, dist)
        farthest = jnp.argmax(distance, axis=-1).astype(jnp.int32)
        return centroids, distance, farthest

    centroids = jnp.zeros((B, npoint), jnp.int32)
    distance = jnp.full((B, N), 1e10, jnp.float32)
    farthest = jnp.zeros((B,), jnp.int32)
    centroids, _, _ = jax.lax.fori_loop(0, npoint, body, (centroids, distance, farthest))
    return centroids


def square_distance(src, dst):
    return jnp.sum((src[:, :, None, :] - dst[:, None, :, :]) ** 2, axis=-1)


def ball_query(radius, nsample, xyz, new_xyz):
    """query_ball_point: nsample smallest in-radius indices (top_k instead of full sort)."""
    B, N, _ = xyz.shape
    sqrdists = square_distance(new_xyz, xyz)                     # [B,S,N]
    group_idx = jnp.broadcast_to(jnp.arange(N, dtype=jnp.int32), sqrdists.shape)
    group_idx = jnp.where(sqrdists > radius ** 2, N, group_idx)
    neg_vals, _ = jax.lax.top_k(-group_idx, nsample)             # nsample smallest indices, ascending
    group_idx = -neg_vals
    group_first = jnp.broadcast_to(group_idx[:, :, :1], group_idx.shape)
    group_idx = jnp.where(group_idx == N, group_first, group_idx)
    return group_idx


# ------------------------------ parameters ------------------------------------


def make_mlp_params(key, c_in, channels, split_first=0):
    """Conv2d(1x1) weights with eval-mode BatchNorm folded in (affine only); bf16 weights, f32 bias.
    If split_first>0 the first layer's weight is split row-wise (xyz rows vs feature rows)
    so the kernel can contract the [xyz || feat] concat as two partial sums without concat.
    # TODO(synk): training-mode BatchNorm2d batch statistics are a cross-batch reduction;
    # folded here as eval-mode affine with running_mean=0, running_var=1.
    """
    params = []
    c = c_in
    for li, cout in enumerate(channels):
        key, kw, kg = jax.random.split(key, 3)
        w = jax.random.normal(kw, (c, cout), jnp.float32) * 0.02
        conv_b = jnp.zeros((cout,), jnp.float32)
        gamma = 1.0 + 0.1 * jax.random.normal(kg, (cout,), jnp.float32)
        beta = jnp.zeros((cout,), jnp.float32)
        scale = gamma / jnp.sqrt(1.0 + 1e-5)
        wf = (w * scale[None, :]).astype(jnp.bfloat16)
        bf = (conv_b * scale + beta)[None, :].astype(jnp.float32)   # keep 2-D for TPU blocks
        if li == 0 and split_first > 0:
            params.append((wf[:split_first], wf[split_first:], bf))
        else:
            params.append((wf, bf))
        c = cout
    return key, params


def build_params(key, cls_dim):
    key, sa1 = make_mlp_params(key, 3, [64, 64, 128])
    key, sa2 = make_mlp_params(key, 128 + 3, [128, 128, 256], split_first=3)
    key, sa3 = make_mlp_params(key, 256 + 3, [256, 512, 1024], split_first=3)
    key, kw = jax.random.split(key)
    head_w = (jax.random.normal(kw, (1024, cls_dim), jnp.float32) * 0.02).astype(jnp.bfloat16)
    head_b = jnp.zeros((1, cls_dim), jnp.float32)
    return {"sa1": sa1, "sa2": sa2, "sa3": sa3, "head_w": head_w, "head_b": head_b}


# ------------------------------- forward ---------------------------------------

# Down-scaled point counts (channel widths kept exact: ... -> 1024 -> cls_dim).
NPOINT1, NSAMPLE1, R1 = 32, 16, 0.2
NPOINT2, NSAMPLE2, R2 = 16, 16, 0.4


def pointnetv2_linear_forward(pts, params):
    xyz = pts[:, :, :3]                                            # pts[:, :, :3].contiguous()
    B = xyz.shape[0]
    ncores = _num_tensorcores()                                    # trace-time hardware query

    # ---- SA1: sample_and_group(npoint1, r1, ns1) + shared MLP [64,64,128] + max ----
    fps1 = farthest_point_sample(xyz, NPOINT1)
    new_xyz1 = index_points(xyz, fps1)                             # [B, NP1, 3]
    idx1 = ball_query(R1, NSAMPLE1, xyz, new_xyz1)                 # [B, NP1, NS1]
    grouped_xyz1 = index_points(xyz, idx1) - new_xyz1[:, :, None, :]
    x1 = grouped_xyz1.reshape(B * NPOINT1 * NSAMPLE1, 3)           # lane collapse in wrapper
    feat1 = sa1_forward(x1, params["sa1"], nsample=NSAMPLE1, num_cores=ncores)   # [B*NP1,128] bf16
    feat1 = feat1.reshape(B, NPOINT1, 128)

    # ---- SA2: sample_and_group(npoint2, r2, ns2) + shared MLP [128,128,256] + max ----
    fps2 = farthest_point_sample(new_xyz1, NPOINT2)
    new_xyz2 = index_points(new_xyz1, fps2)                        # [B, NP2, 3]
    idx2 = ball_query(R2, NSAMPLE2, new_xyz1, new_xyz2)            # [B, NP2, NS2]
    grouped_xyz2 = index_points(new_xyz1, idx2) - new_xyz2[:, :, None, :]
    grouped_feat2 = index_points(feat1, idx2)                      # [B, NP2, NS2, 128] bf16 gather
    xyz2 = grouped_xyz2.reshape(B * NPOINT2 * NSAMPLE2, 3)
    f2 = grouped_feat2.reshape(B * NPOINT2 * NSAMPLE2, 128)        # already bf16 (kernel output dtype)
    feat2 = sa2_forward(xyz2, f2, params["sa2"], nsample=NSAMPLE2, num_cores=ncores)  # [B*NP2,256] bf16
    feat2 = feat2.reshape(B, NPOINT2, 256)

    # ---- SA3: group_all + shared MLP [256,512,1024] + max + fused Linear(1024, cls_dim) ----
    xyz3 = new_xyz2.reshape(B * NPOINT2, 3)
    f3 = feat2.reshape(B * NPOINT2, 256)                           # already bf16
    ret = sa3_head_forward(xyz3, f3, params["sa3"], params["head_w"], params["head_b"],
                           npoint=NPOINT2, num_cores=ncores)       # [B, cls_dim] f32
    return ret


# --------------------------------- main ----------------------------------------

if __name__ == "__main__":
    key = jax.random.PRNGKey(0)
    k_pts, k_par = jax.random.split(key)

    B, N, CLS_DIM = 2, 128, 40
    # pts has >3 trailing channels to exercise the pts[:, :, :3] slice in forward().
    pts = jax.random.uniform(k_pts, (B, N, 6), jnp.float32, minval=-1.0, maxval=1.0)

    params = build_params(k_par, CLS_DIM)

    fwd = jax.jit(functools.partial(pointnetv2_linear_forward, params=params))
    ret = fwd(pts)
    jax.block_until_ready(ret)

    assert ret.shape == (B, CLS_DIM), ret.shape
    assert jnp.all(jnp.isfinite(ret))
    print("KERNEL_OK")
</pallas_src>

<mosaic_0001>
module attributes {stable_mosaic.version = 11 : i64} {
  func.func @_sa1_kernel(%arg0: i32, %arg1: memref<1024x3xf32, #tpu.memory_space<vmem>>, %arg2: memref<3x64xbf16, #tpu.memory_space<vmem>>, %arg3: memref<1x64xf32, #tpu.memory_space<vmem>>, %arg4: memref<64x64xbf16, #tpu.memory_space<vmem>>, %arg5: memref<1x64xf32, #tpu.memory_space<vmem>>, %arg6: memref<64x128xbf16, #tpu.memory_space<vmem>>, %arg7: memref<1x128xf32, #tpu.memory_space<vmem>>, %arg8: memref<64x128xbf16, #tpu.memory_space<vmem>>) attributes {dimension_semantics = [#tpu.dimension_semantics<parallel>], iteration_bounds = array<i64: 1>, scalar_prefetch = 0 : i64, scratch_operands = 0 : i64, tpu.core_type = #tpu.core_type<tc>, window_params = [{transform_indices = @transform_0, window_bounds = array<i64: 1024, 3>}, {pipeline_mode = #tpu.pipeline_mode<synchronous>, transform_indices = @transform_1, window_bounds = array<i64: 3, 64>}, {pipeline_mode = #tpu.pipeline_mode<synchronous>, transform_indices = @transform_2, window_bounds = array<i64: 1, 64>}, {pipeline_mode = #tpu.pipeline_mode<synchronous>, transform_indices = @transform_3, window_bounds = array<i64: 64, 64>}, {pipeline_mode = #tpu.pipeline_mode<synchronous>, transform_indices = @transform_4, window_bounds = array<i64: 1, 64>}, {pipeline_mode = #tpu.pipeline_mode<synchronous>, transform_indices = @transform_5, window_bounds = array<i64: 64, 128>}, {pipeline_mode = #tpu.pipeline_mode<synchronous>, transform_indices = @transform_6, window_bounds = array<i64: 1, 128>}, {transform_indices = @transform_7, window_bounds = array<i64: 64, 128>}]} {
    %c0 = arith.constant 0 : index
    %c0_0 = arith.constant 0 : index
    %0 = vector.load %arg1[%c0, %c0_0] : memref<1024x3xf32, #tpu.memory_space<vmem>>, vector<1024x1xf32>
    %c0_1 = arith.constant 0 : index
    %c0_2 = arith.constant 0 : index
    %1 = vector.load %arg2[%c0_1, %c0_2] : memref<3x64xbf16, #tpu.memory_space<vmem>>, vector<1x64xbf16>
    %2 = arith.extf %1 : vector<1x64xbf16> to vector<1x64xf32>
    %3 = vector.broadcast %0 : vector<1024x1xf32> to vector<1024x64xf32>
    %4 = vector.broadcast %2 : vector<1x64xf32> to vector<1024x64xf32>
    %5 = arith.mulf %3, %4 : vector<1024x64xf32>
    %c0_3 = arith.constant 0 : index
    %c1 = arith.constant 1 : index
    %6 = vector.load %arg1[%c0_3, %c1] : memref<1024x3xf32, #tpu.memory_space<vmem>>, vector<1024x1xf32>
    %c1_4 = arith.constant 1 : index
    %c0_5 = arith.constant 0 : index
    %7 = vector.load %arg2[%c1_4, %c0_5] : memref<3x64xbf16, #tpu.memory_space<vmem>>, vector<1x64xbf16>
    %8 = arith.extf %7 : vector<1x64xbf16> to vector<1x64xf32>
    %9 = vector.broadcast %6 : vector<1024x1xf32> to vector<1024x64xf32>
    %10 = vector.broadcast %8 : vector<1x64xf32> to vector<1024x64xf32>
    %11 = arith.mulf %9, %10 : vector<1024x64xf32>
    %12 = arith.addf %5, %11 : vector<1024x64xf32>
    %c0_6 = arith.constant 0 : index
    %c2 = arith.constant 2 : index
    %13 = vector.load %arg1[%c0_6, %c2] : memref<1024x3xf32, #tpu.memory_space<vmem>>, vector<1024x1xf32>
    %c2_7 = arith.constant 2 : index
    %c0_8 = arith.constant 0 : index
    %14 = vector.load %arg2[%c2_7, %c0_8] : memref<3x64xbf16, #tpu.memory_space<vmem>>, vector<1x64xbf16>
    %15 = arith.extf %14 : vector<1x64xbf16> to vector<1x64xf32>
    %16 = vector.broadcast %13 : vector<1024x1xf32> to vector<1024x64xf32>
    %17 = vector.broadcast %15 : vector<1x64xf32> to vector<1024x64xf32>
    %18 = arith.mulf %16, %17 : vector<1024x64xf32>
    %19 = arith.addf %12, %18 : vector<1024x64xf32>
    %c0_9 = arith.constant 0 : index
    %c0_10 = arith.constant 0 : index
    %20 = vector.load %arg3[%c0_9, %c0_10] : memref<1x64xf32, #tpu.memory_space<vmem>>, vector<1x64xf32>
    %21 = vector.broadcast %20 : vector<1x64xf32> to vector<1024x64xf32>
    %22 = arith.addf %19, %21 : vector<1024x64xf32>
    %cst = arith.constant 0.000000e+00 : f32
    %23 = vector.broadcast %cst : f32 to vector<1024x64xf32>
    %24 = arith.maximumf %22, %23 : vector<1024x64xf32>
    %25 = arith.truncf %24 : vector<1024x64xf32> to vector<1024x64xbf16>
    %c0_11 = arith.constant 0 : index
    %c0_12 = arith.constant 0 : index
    %26 = vector.load %arg4[%c0_11, %c0_12] : memref<64x64xbf16, #tpu.memory_space<vmem>>, vector<64x64xbf16>
    %cst_13 = arith.constant dense<0.000000e+00> : vector<1024x64xf32>
    %27 = tpu.matmul %25, %26, %cst_13 {dimension_numbers = #tpu.dot_dimension_numbers<[1], [0], [0], [1], [0, 0, 1, 1], [], []>} : vector<1024x64xbf16>, vector<64x64xbf16>, vector<1024x64xf32> -> vector<1024x64xf32>
    %c0_14 = arith.constant 0 : index
    %c0_15 = arith.constant 0 : index
    %28 = vector.load %arg5[%c0_14, %c0_15] : memref<1x64xf32, #tpu.memory_space<vmem>>, vector<1x64xf32>
    %29 = vector.broadcast %28 : vector<1x64xf32> to vector<1024x64xf32>
    %30 = arith.addf %27, %29 : vector<1024x64xf32>
    %cst_16 = arith.constant 0.000000e+00 : f32
    %31 = vector.broadcast %cst_16 : f32 to vector<1024x64xf32>
    %32 = arith.maximumf %30, %31 : vector<1024x64xf32>
    %33 = arith.truncf %32 : vector<1024x64xf32> to vector<1024x64xbf16>
    %c0_17 = arith.constant 0 : index
    %c0_18 = arith.constant 0 : index
    %34 = vector.load %arg6[%c0_17, %c0_18] : memref<64x128xbf16, #tpu.memory_space<vmem>>, vector<64x128xbf16>
    %cst_19 = arith.constant dense<0.000000e+00> : vector<1024x128xf32>
    %35 = tpu.matmul %33, %34, %cst_19 {dimension_numbers = #tpu.dot_dimension_numbers<[1], [0], [0], [1], [0, 0, 1, 1], [], []>} : vector<1024x64xbf16>, vector<64x128xbf16>, vector<1024x128xf32> -> vector<1024x128xf32>
    %c0_20 = arith.constant 0 : index
    %c0_21 = arith.constant 0 : index
    %36 = vector.load %arg7[%c0_20, %c0_21] : memref<1x128xf32, #tpu.memory_space<vmem>>, vector<1x128xf32>
    %37 = vector.broadcast %36 : vector<1x128xf32> to vector<1024x128xf32>
    %38 = arith.addf %35, %37 : vector<1024x128xf32>
    %cst_22 = arith.constant 0.000000e+00 : f32
    %39 = vector.broadcast %cst_22 : f32 to vector<1024x128xf32>
    %40 = arith.maximumf %38, %39 : vector<1024x128xf32>
    %41 = vector.shape_cast %40 : vector<1024x128xf32> to vector<64x16x128xf32>
    %cst_23 = arith.constant dense<0xFF800000> : vector<64x128xf32>
    %42 = vector.multi_reduction <maximumf>, %41, %cst_23 [1] : vector<64x16x128xf32> to vector<64x128xf32>
    %43 = arith.truncf %42 : vector<64x128xf32> to vector<64x128xbf16>
    %c0_24 = arith.constant 0 : index
    %c0_25 = arith.constant 0 : index
    %44 = vector.load %arg8[%c0_24, %c0_25] : memref<64x128xbf16, #tpu.memory_space<vmem>>, vector<64x128xbf16>
    tpu.vector_store %arg8[%c0_24, %c0_25], %43 {strides = array<i32>} : memref<64x128xbf16, #tpu.memory_space<vmem>>, vector<64x128xbf16>,
    return
  }
  func.func @transform_0(%arg0: i32) -> (i32, i32) {
    %c0_i32 = arith.constant 0 : i32
    %c0_i32_0 = arith.constant 0 : i32
    return %arg0, %c0_i32 : i32, i32
  }
  func.func @transform_1(%arg0: i32) -> (i32, i32) {
    %c0_i32 = arith.constant 0 : i32
    %c0_i32_0 = arith.constant 0 : i32
    %c0_i32_1 = arith.constant 0 : i32
    return %c0_i32, %c0_i32_0 : i32, i32
  }
  func.func @transform_2(%arg0: i32) -> (i32, i32) {
    %c0_i32 = arith.constant 0 : i32
    %c0_i32_0 = arith.constant 0 : i32
    %c0_i32_1 = arith.constant 0 : i32
    return %c0_i32, %c0_i32_0 : i32, i32
  }
  func.func @transform_3(%arg0: i32) -> (i32, i32) {
    %c0_i32 = arith.constant 0 : i32
    %c0_i32_0 = arith.constant 0 : i32
    %c0_i32_1 = arith.constant 0 : i32
    return %c0_i32, %c0_i32_0 : i32, i32
  }
  func.func @transform_4(%arg0: i32) -> (i32, i32) {
    %c0_i32 = arith.constant 0 : i32
    %c0_i32_0 = arith.constant 0 : i32
    %c0_i32_1 = arith.constant 0 : i32
    return %c0_i32, %c0_i32_0 : i32, i32
  }
  func.func @transform_5(%arg0: i32) -> (i32, i32) {
    %c0_i32 = arith.constant 0 : i32
    %c0_i32_0 = arith.constant 0 : i32
    %c0_i32_1 = arith.constant 0 : i32
    return %c0_i32, %c0_i32_0 : i32, i32
  }
  func.func @transform_6(%arg0: i32) -> (i32, i32) {
    %c0_i32 = arith.constant 0 : i32
    %c0_i32_0 = arith.constant 0 : i32
    %c0_i32_1 = arith.constant 0 : i32
    return %c0_i32, %c0_i32_0 : i32, i32
  }
  func.func @transform_7(%arg0: i32) -> (i32, i32) {
    %c0_i32 = arith.constant 0 : i32
    %c0_i32_0 = arith.constant 0 : i32
    return %arg0, %c0_i32 : i32, i32
  }
}

module attributes {stable_mosaic.version = 11 : i64} {
  func.func @_sa2_kernel(%arg0: i32, %arg1: memref<512x3xf32, #tpu.memory_space<vmem>>, %arg2: memref<512x128xbf16, #tpu.memory_space<vmem>>, %arg3: memref<3x128xbf16, #tpu.memory_space<vmem>>, %arg4: memref<128x128xbf16, #tpu.memory_space<vmem>>, %arg5: memref<1x128xf32, #tpu.memory_space<vmem>>, %arg6: memref<128x128xbf16, #tpu.memory_space<vmem>>, %arg7: memref<1x128xf32, #tpu.memory_space<vmem>>, %arg8: memref<128x256xbf16, #tpu.memory_space<vmem>>, %arg9: memref<1x256xf32, #tpu.memory_space<vmem>>, %arg10: memref<32x256xbf16, #tpu.memory_space<vmem>>) attributes {dimension_semantics = [#tpu.dimension_semantics<parallel>], iteration_bounds = array<i64: 1>, scalar_prefetch = 0 : i64, scratch_operands = 0 : i64, tpu.core_type = #tpu.core_type<tc>, window_params = [{transform_indices = @transform_0, window_bounds = array<i64: 512, 3>}, {transform_indices = @transform_1, window_bounds = array<i64: 512, 128>}, {pipeline_mode = #tpu.pipeline_mode<synchronous>, transform_indices = @transform_2, window_bounds = array<i64: 3, 128>}, {pipeline_mode = #tpu.pipeline_mode<synchronous>, transform_indices = @transform_3, window_bounds = array<i64: 128, 128>}, {pipeline_mode = #tpu.pipeline_mode<synchronous>, transform_indices = @transform_4, window_bounds = array<i64: 1, 128>}, {pipeline_mode = #tpu.pipeline_mode<synchronous>, transform_indices = @transform_5, window_bounds = array<i64: 128, 128>}, {pipeline_mode = #tpu.pipeline_mode<synchronous>, transform_indices = @transform_6, window_bounds = array<i64: 1, 128>}, {pipeline_mode = #tpu.pipeline_mode<synchronous>, transform_indices = @transform_7, window_bounds = array<i64: 128, 256>}, {pipeline_mode = #tpu.pipeline_mode<synchronous>, transform_indices = @transform_8, window_bounds = array<i64: 1, 256>}, {transform_indices = @transform_9, window_bounds = array<i64: 32, 256>}]} {
    %c0 = arith.constant 0 : index
    %c0_0 = arith.constant 0 : index
    %0 = vector.load %arg1[%c0, %c0_0] : memref<512x3xf32, #tpu.memory_space<vmem>>, vector<512x1xf32>
    %c0_1 = arith.constant 0 : index
    %c0_2 = arith.constant 0 : index
    %1 = vector.load %arg3[%c0_1, %c0_2] : memref<3x128xbf16, #tpu.memory_space<vmem>>, vector<1x128xbf16>
    %2 = arith.extf %1 : vector<1x128xbf16> to vector<1x128xf32>
    %3 = vector.broadcast %0 : vector<512x1xf32> to vector<512x128xf32>
    %4 = vector.broadcast %2 : vector<1x128xf32> to vector<512x128xf32>
    %5 = arith.mulf %3, %4 : vector<512x128xf32>
    %c0_3 = arith.constant 0 : index
    %c1 = arith.constant 1 : index
    %6 = vector.load %arg1[%c0_3, %c1] : memref<512x3xf32, #tpu.memory_space<vmem>>, vector<512x1xf32>
    %c1_4 = arith.constant 1 : index
    %c0_5 = arith.constant 0 : index
    %7 = vector.load %arg3[%c1_4, %c0_5] : memref<3x128xbf16, #tpu.memory_space<vmem>>, vector<1x128xbf16>
    %8 = arith.extf %7 : vector<1x128xbf16> to vector<1x128xf32>
    %9 = vector.broadcast %6 : vector<512x1xf32> to vector<512x128xf32>
    %10 = vector.broadcast %8 : vector<1x128xf32> to vector<512x128xf32>
    %11 = arith.mulf %9, %10 : vector<512x128xf32>
    %12 = arith.addf %5, %11 : vector<512x128xf32>
    %c0_6 = arith.constant 0 : index
    %c2 = arith.constant 2 : index
    %13 = vector.load %arg1[%c0_6, %c2] : memref<512x3xf32, #tpu.memory_space<vmem>>, vector<512x1xf32>
    %c2_7 = arith.constant 2 : index
    %c0_8 = arith.constant 0 : index
    %14 = vector.load %arg3[%c2_7, %c0_8] : memref<3x128xbf16, #tpu.memory_space<vmem>>, vector<1x128xbf16>
    %15 = arith.extf %14 : vector<1x128xbf16> to vector<1x128xf32>
    %16 = vector.broadcast %13 : vector<512x1xf32> to vector<512x128xf32>
    %17 = vector.broadcast %15 : vector<1x128xf32> to vector<512x128xf32>
    %18 = arith.mulf %16, %17 : vector<512x128xf32>
    %19 = arith.addf %12, %18 : vector<512x128xf32>
    %c0_9 = arith.constant 0 : index
    %c0_10 = arith.constant 0 : index
    %20 = vector.load %arg2[%c0_9, %c0_10] : memref<512x128xbf16, #tpu.memory_space<vmem>>, vector<512x128xbf16>
    %c0_11 = arith.constant 0 : index
    %c0_12 = arith.constant 0 : index
    %21 = vector.load %arg4[%c0_11, %c0_12] : memref<128x128xbf16, #tpu.memory_space<vmem>>, vector<128x128xbf16>
    %cst = arith.constant dense<0.000000e+00> : vector<512x128xf32>
    %22 = tpu.matmul %20, %21, %cst {dimension_numbers = #tpu.dot_dimension_numbers<[1], [0], [0], [1], [0, 0, 1, 1], [], []>} : vector<512x128xbf16>, vector<128x128xbf16>, vector<512x128xf32> -> vector<512x128xf32>
    %23 = arith.addf %19, %22 : vector<512x128xf32>
    %c0_13 = arith.constant 0 : index
    %c0_14 = arith.constant 0 : index
    %24 = vector.load %arg5[%c0_13, %c0_14] : memref<1x128xf32, #tpu.memory_space<vmem>>, vector<1x128xf32>
    %25 = vector.broadcast %24 : vector<1x128xf32> to vector<512x128xf32>
    %26 = arith.addf %23, %25 : vector<512x128xf32>
    %cst_15 = arith.constant 0.000000e+00 : f32
    %27 = vector.broadcast %cst_15 : f32 to vector<512x128xf32>
    %28 = arith.maximumf %26, %27 : vector<512x128xf32>
    %29 = arith.truncf %28 : vector<512x128xf32> to vector<512x128xbf16>
    %c0_16 = arith.constant 0 : index
    %c0_17 = arith.constant 0 : index
    %30 = vector.load %arg6[%c0_16, %c0_17] : memref<128x128xbf16, #tpu.memory_space<vmem>>, vector<128x128xbf16>
    %cst_18 = arith.constant dense<0.000000e+00> : vector<512x128xf32>
    %31 = tpu.matmul %29, %30, %cst_18 {dimension_numbers = #tpu.dot_dimension_numbers<[1], [0], [0], [1], [0, 0, 1, 1], [], []>} : vector<512x128xbf16>, vector<128x128xbf16>, vector<512x128xf32> -> vector<512x128xf32>
    %c0_19 = arith.constant 0 : index
    %c0_20 = arith.constant 0 : index
    %32 = vector.load %arg7[%c0_19, %c0_20] : memref<1x128xf32, #tpu.memory_space<vmem>>, vector<1x128xf32>
    %33 = vector.broadcast %32 : vector<1x128xf32> to vector<512x128xf32>
    %34 = arith.addf %31, %33 : vector<512x128xf32>
    %cst_21 = arith.constant 0.000000e+00 : f32
    %35 = vector.broadcast %cst_21 : f32 to vector<512x128xf32>
    %36 = arith.maximumf %34, %35 : vector<512x128xf32>
    %37 = arith.truncf %36 : vector<512x128xf32> to vector<512x128xbf16>
    %c0_22 = arith.constant 0 : index
    %c0_23 = arith.constant 0 : index
    %38 = vector.load %arg8[%c0_22, %c0_23] : memref<128x256xbf16, #tpu.memory_space<vmem>>, vector<128x256xbf16>
    %cst_24 = arith.constant dense<0.000000e+00> : vector<512x256xf32>
    %39 = tpu.matmul %37, %38, %cst_24 {dimension_numbers = #tpu.dot_dimension_numbers<[1], [0], [0], [1], [0, 0, 1, 1], [], []>} : vector<512x128xbf16>, vector<128x256xbf16>, vector<512x256xf32> -> vector<512x256xf32>
    %c0_25 = arith.constant 0 : index
    %c0_26 = arith.constant 0 : index
    %40 = vector.load %arg9[%c0_25, %c0_26] : memref<1x256xf32, #tpu.memory_space<vmem>>, vector<1x256xf32>
    %41 = vector.broadcast %40 : vector<1x256xf32> to vector<512x256xf32>
    %42 = arith.addf %39, %41 : vector<512x256xf32>
    %cst_27 = arith.constant 0.000000e+00 : f32
    %43 = vector.broadcast %cst_27 : f32 to vector<512x256xf32>
    %44 = arith.maximumf %42, %43 : vector<512x256xf32>
    %45 = vector.shape_cast %44 : vector<512x256xf32> to vector<32x16x256xf32>
    %cst_28 = arith.constant dense<0xFF800000> : vector<32x256xf32>
    %46 = vector.multi_reduction <maximumf>, %45, %cst_28 [1] : vector<32x16x256xf32> to vector<32x256xf32>
    %47 = arith.truncf %46 : vector<32x256xf32> to vector<32x256xbf16>
    %c0_29 = arith.constant 0 : index
    %c0_30 = arith.constant 0 : index
    %48 = vector.load %arg10[%c0_29, %c0_30] : memref<32x256xbf16, #tpu.memory_space<vmem>>, vector<32x256xbf16>
    tpu.vector_store %arg10[%c0_29, %c0_30], %47 {strides = array<i32>} : memref<32x256xbf16, #tpu.memory_space<vmem>>, vector<32x256xbf16>,
    return
  }
  func.func @transform_0(%arg0: i32) -> (i32, i32) {
    %c0_i32 = arith.constant 0 : i32
    %c0_i32_0 = arith.constant 0 : i32
    return %arg0, %c0_i32 : i32, i32
  }
  func.func @transform_1(%arg0: i32) -> (i32, i32) {
    %c0_i32 = arith.constant 0 : i32
    %c0_i32_0 = arith.constant 0 : i32
    return %arg0, %c0_i32 : i32, i32
  }
  func.func @transform_2(%arg0: i32) -> (i32, i32) {
    %c0_i32 = arith.constant 0 : i32
    %c0_i32_0 = arith.constant 0 : i32
    %c0_i32_1 = arith.constant 0 : i32
    return %c0_i32, %c0_i32_0 : i32, i32
  }
  func.func @transform_3(%arg0: i32) -> (i32, i32) {
    %c0_i32 = arith.constant 0 : i32
    %c0_i32_0 = arith.constant 0 : i32
    %c0_i32_1 = arith.constant 0 : i32
    return %c0_i32, %c0_i32_0 : i32, i32
  }
  func.func @transform_4(%arg0: i32) -> (i32, i32) {
    %c0_i32 = arith.constant 0 : i32
    %c0_i32_0 = arith.constant 0 : i32
    %c0_i32_1 = arith.constant 0 : i32
    return %c0_i32, %c0_i32_0 : i32, i32
  }
  func.func @transform_5(%arg0: i32) -> (i32, i32) {
    %c0_i32 = arith.constant 0 : i32
    %c0_i32_0 = arith.constant 0 : i32
    %c0_i32_1 = arith.constant 0 : i32
    return %c0_i32, %c0_i32_0 : i32, i32
  }
  func.func @transform_6(%arg0: i32) -> (i32, i32) {
    %c0_i32 = arith.constant 0 : i32
    %c0_i32_0 = arith.constant 0 : i32
    %c0_i32_1 = arith.constant 0 : i32
    return %c0_i32, %c0_i32_0 : i32, i32
  }
  func.func @transform_7(%arg0: i32) -> (i32, i32) {
    %c0_i32 = arith.constant 0 : i32
    %c0_i32_0 = arith.constant 0 : i32
    %c0_i32_1 = arith.constant 0 : i32
    return %c0_i32, %c0_i32_0 : i32, i32
  }
  func.func @transform_8(%arg0: i32) -> (i32, i32) {
    %c0_i32 = arith.constant 0 : i32
    %c0_i32_0 = arith.constant 0 : i32
    %c0_i32_1 = arith.constant 0 : i32
    return %c0_i32, %c0_i32_0 : i32, i32
  }
  func.func @transform_9(%arg0: i32) -> (i32, i32) {
    %c0_i32 = arith.constant 0 : i32
    %c0_i32_0 = arith.constant 0 : i32
    return %arg0, %c0_i32 : i32, i32
  }
}

module attributes {stable_mosaic.version = 11 : i64} {
  func.func @_sa3_head_kernel(%arg0: i32, %arg1: i32, %arg2: memref<32x3xf32, #tpu.memory_space<vmem>>, %arg3: memref<32x256xbf16, #tpu.memory_space<vmem>>, %arg4: memref<3x256xbf16, #tpu.memory_space<vmem>>, %arg5: memref<256x256xbf16, #tpu.memory_space<vmem>>, %arg6: memref<1x256xf32, #tpu.memory_space<vmem>>, %arg7: memref<256x512xbf16, #tpu.memory_space<vmem>>, %arg8: memref<1x512xf32, #tpu.memory_space<vmem>>, %arg9: memref<512x256xbf16, #tpu.memory_space<vmem>>, %arg10: memref<1x256xf32, #tpu.memory_space<vmem>>, %arg11: memref<256x128xbf16, #tpu.memory_space<vmem>>, %arg12: memref<1x128xf32, #tpu.memory_space<vmem>>, %arg13: memref<2x1x128xf32, #tpu.memory_space<vmem>>, %arg14: memref<32x512xf32, #tpu.memory_space<vmem>>) attributes {dimension_semantics = [#tpu.dimension_semantics<parallel>, #tpu.dimension_semantics<arbitrary>], iteration_bounds = array<i64: 1, 4>, scalar_prefetch = 0 : i64, scratch_operands = 1 : i64, tpu.core_type = #tpu.core_type<tc>, window_params = [{transform_indices = @transform_0, window_bounds = array<i64: 32, 3>}, {transform_indices = @transform_1, window_bounds = array<i64: 32, 256>}, {pipeline_mode = #tpu.pipeline_mode<synchronous>, transform_indices = @transform_2, window_bounds = array<i64: 3, 256>}, {pipeline_mode = #tpu.pipeline_mode<synchronous>, transform_indices = @transform_3, window_bounds = array<i64: 256, 256>}, {pipeline_mode = #tpu.pipeline_mode<synchronous>, transform_indices = @transform_4, window_bounds = array<i64: 1, 256>}, {pipeline_mode = #tpu.pipeline_mode<synchronous>, transform_indices = @transform_5, window_bounds = array<i64: 256, 512>}, {pipeline_mode = #tpu.pipeline_mode<synchronous>, transform_indices = @transform_6, window_bounds = array<i64: 1, 512>}, {transform_indices = @transform_7, window_bounds = array<i64: 512, 256>}, {transform_indices = @transform_8, window_bounds = array<i64: 1, 256>}, {transform_indices = @transform_9, window_bounds = array<i64: 256, 128>}, {pipeline_mode = #tpu.pipeline_mode<synchronous>, transform_indices = @transform_10, window_bounds = array<i64: 1, 128>}, {transform_indices = @transform_11, window_bounds = array<i64: 2, 1, 128>}]} {
    %c0_i32 = arith.constant 0 : i32
    %0 = arith.cmpi eq, %arg1, %c0_i32 : i32
    %1 = arith.extui %0 : i1 to i32
    %c0_i32_0 = arith.constant 0 : i32
    %2 = arith.cmpi ne, %1, %c0_i32_0 : i32
    scf.if %2 {
      %c0_17 = arith.constant 0 : index
      %c0_18 = arith.constant 0 : index
      %21 = vector.load %arg2[%c0_17, %c0_18] : memref<32x3xf32, #tpu.memory_space<vmem>>, vector<32x1xf32>
      %c0_19 = arith.constant 0 : index
      %c0_20 = arith.constant 0 : index
      %22 = vector.load %arg4[%c0_19, %c0_20] : memref<3x256xbf16, #tpu.memory_space<vmem>>, vector<1x256xbf16>
      %23 = arith.extf %22 : vector<1x256xbf16> to vector<1x256xf32>
      %24 = vector.broadcast %21 : vector<32x1xf32> to vector<32x256xf32>
      %25 = vector.broadcast %23 : vector<1x256xf32> to vector<32x256xf32>
      %26 = arith.mulf %24, %25 : vector<32x256xf32>
      %c0_21 = arith.constant 0 : index
      %c1 = arith.constant 1 : index
      %27 = vector.load %arg2[%c0_21, %c1] : memref<32x3xf32, #tpu.memory_space<vmem>>, vector<32x1xf32>
      %c1_22 = arith.constant 1 : index
      %c0_23 = arith.constant 0 : index
      %28 = vector.load %arg4[%c1_22, %c0_23] : memref<3x256xbf16, #tpu.memory_space<vmem>>, vector<1x256xbf16>
      %29 = arith.extf %28 : vector<1x256xbf16> to vector<1x256xf32>
      %30 = vector.broadcast %27 : vector<32x1xf32> to vector<32x256xf32>
      %31 = vector.broadcast %29 : vector<1x256xf32> to vector<32x256xf32>
      %32 = arith.mulf %30, %31 : vector<32x256xf32>
      %33 = arith.addf %26, %32 : vector<32x256xf32>
      %c0_24 = arith.constant 0 : index
      %c2 = arith.constant 2 : index
      %34 = vector.load %arg2[%c0_24, %c2] : memref<32x3xf32, #tpu.memory_space<vmem>>, vector<32x1xf32>
      %c2_25 = arith.constant 2 : index
      %c0_26 = arith.constant 0 : index
      %35 = vector.load %arg4[%c2_25, %c0_26] : memref<3x256xbf16, #tpu.memory_space<vmem>>, vector<1x256xbf16>
      %36 = arith.extf %35 : vector<1x256xbf16> to vector<1x256xf32>
      %37 = vector.broadcast %34 : vector<32x1xf32> to vector<32x256xf32>
      %38 = vector.broadcast %36 : vector<1x256xf32> to vector<32x256xf32>
      %39 = arith.mulf %37, %38 : vector<32x256xf32>
      %40 = arith.addf %33, %39 : vector<32x256xf32>
      %c0_27 = arith.constant 0 : index
      %c0_28 = arith.constant 0 : index
      %41 = vector.load %arg3[%c0_27, %c0_28] : memref<32x256xbf16, #tpu.memory_space<vmem>>, vector<32x256xbf16>
      %c0_29 = arith.constant 0 : index
      %c0_30 = arith.constant 0 : index
      %42 = vector.load %arg5[%c0_29, %c0_30] : memref<256x256xbf16, #tpu.memory_space<vmem>>, vector<256x256xbf16>
      %cst_31 = arith.constant dense<0.000000e+00> : vector<32x256xf32>
      %43 = tpu.matmul %41, %42, %cst_31 {dimension_numbers = #tpu.dot_dimension_numbers<[1], [0], [0], [1], [0, 0, 1, 1], [], []>} : vector<32x256xbf16>, vector<256x256xbf16>, vector<32x256xf32> -> vector<32x256xf32>
      %44 = arith.addf %40, %43 : vector<32x256xf32>
      %c0_32 = arith.constant 0 : index
      %c0_33 = arith.constant 0 : index
      %45 = vector.load %arg6[%c0_32, %c0_33] : memref<1x256xf32, #tpu.memory_space<vmem>>, vector<1x256xf32>
      %46 = vector.broadcast %45 : vector<1x256xf32> to vector<32x256xf32>
      %47 = arith.addf %44, %46 : vector<32x256xf32>
      %cst_34 = arith.constant 0.000000e+00 : f32
      %48 = vector.broadcast %cst_34 : f32 to vector<32x256xf32>
      %49 = arith.maximumf %47, %48 : vector<32x256xf32>
      %50 = arith.truncf %49 : vector<32x256xf32> to vector<32x256xbf16>
      %c0_35 = arith.constant 0 : index
      %c0_36 = arith.constant 0 : index
      %51 = vector.load %arg7[%c0_35, %c0_36] : memref<256x512xbf16, #tpu.memory_space<vmem>>, vector<256x512xbf16>
      %cst_37 = arith.constant dense<0.000000e+00> : vector<32x512xf32>
      %52 = tpu.matmul %50, %51, %cst_37 {dimension_numbers = #tpu.dot_dimension_numbers<[1], [0], [0], [1], [0, 0, 1, 1], [], []>} : vector<32x256xbf16>, vector<256x512xbf16>, vector<32x512xf32> -> vector<32x512xf32>
      %c0_38 = arith.constant 0 : index
      %c0_39 = arith.constant 0 : index
      %53 = vector.load %arg8[%c0_38, %c0_39] : memref<1x512xf32, #tpu.memory_space<vmem>>, vector<1x512xf32>
      %54 = vector.broadcast %53 : vector<1x512xf32> to vector<32x512xf32>
      %55 = arith.addf %52, %54 : vector<32x512xf32>
      %cst_40 = arith.constant 0.000000e+00 : f32
      %56 = vector.broadcast %cst_40 : f32 to vector<32x512xf32>
      %57 = arith.maximumf %55, %56 : vector<32x512xf32>
      %c0_41 = arith.constant 0 : index
      %c0_42 = arith.constant 0 : index
      %58 = vector.load %arg14[%c0_41, %c0_42] : memref<32x512xf32, #tpu.memory_space<vmem>>, vector<32x512xf32>
      tpu.vector_store %arg14[%c0_41, %c0_42], %57 {strides = array<i32>} : memref<32x512xf32, #tpu.memory_space<vmem>>, vector<32x512xf32>,
      %c0_43 = arith.constant 0 : index
      %c0_44 = arith.constant 0 : index
      %59 = vector.load %arg12[%c0_43, %c0_44] : memref<1x128xf32, #tpu.memory_space<vmem>>, vector<1x128xf32>
      %60 = vector.shape_cast %59 : vector<1x128xf32> to vector<1x1x128xf32>
      %61 = vector.shape_cast %60 : vector<1x1x128xf32> to vector<1x1x128xf32>
      %62 = vector.broadcast %61 : vector<1x1x128xf32> to vector<2x1x128xf32>
      %c0_45 = arith.constant 0 : index
      %c0_46 = arith.constant 0 : index
      %c0_47 = arith.constant 0 : index
      %63 = vector.load %arg13[%c0_45, %c0_46, %c0_47] : memref<2x1x128xf32, #tpu.memory_space<vmem>>, vector<2x1x128xf32>
      tpu.vector_store %arg13[%c0_45, %c0_46, %c0_47], %62 {strides = array<i32>} : memref<2x1x128xf32, #tpu.memory_space<vmem>>, vector<2x1x128xf32>,
    } else {
    }
    %c0 = arith.constant 0 : index
    %c0_1 = arith.constant 0 : index
    %3 = vector.load %arg14[%c0, %c0_1] : memref<32x512xf32, #tpu.memory_space<vmem>>, vector<32x512xf32>
    %4 = arith.truncf %3 : vector<32x512xf32> to vector<32x512xbf16>
    %c0_2 = arith.constant 0 : index
    %c0_3 = arith.constant 0 : index
    %5 = vector.load %arg9[%c0_2, %c0_3] : memref<512x256xbf16, #tpu.memory_space<vmem>>, vector<512x256xbf16>
    %cst = arith.constant dense<0.000000e+00> : vector<32x256xf32>
    %6 = tpu.matmul %4, %5, %cst {dimension_numbers = #tpu.dot_dimension_numbers<[1], [0], [0], [1], [0, 0, 1, 1], [], []>} : vector<32x512xbf16>, vector<512x256xbf16>, vector<32x256xf32> -> vector<32x256xf32>
    %c0_4 = arith.constant 0 : index
    %c0_5 = arith.constant 0 : index
    %7 = vector.load %arg10[%c0_4, %c0_5] : memref<1x256xf32, #tpu.memory_space<vmem>>, vector<1x256xf32>
    %8 = vector.broadcast %7 : vector<1x256xf32> to vector<32x256xf32>
    %9 = arith.addf %6, %8 : vector<32x256xf32>
    %cst_6 = arith.constant 0.000000e+00 : f32
    %10 = vector.broadcast %cst_6 : f32 to vector<32x256xf32>
    %11 = arith.maximumf %9, %10 : vector<32x256xf32>
    %12 = vector.shape_cast %11 : vector<32x256xf32> to vector<2x16x256xf32>
    %cst_7 = arith.constant dense<0xFF800000> : vector<2x256xf32>
    %13 = vector.multi_reduction <maximumf>, %12, %cst_7 [1] : vector<2x16x256xf32> to vector<2x256xf32>
    %c0_8 = arith.constant 0 : index
    %c0_9 = arith.constant 0 : index
    %c0_10 = arith.constant 0 : index
    %14 = vector.load %arg13[%c0_8, %c0_9, %c0_10] : memref<2x1x128xf32, #tpu.memory_space<vmem>>, vector<2x1x128xf32>
    %15 = arith.truncf %13 : vector<2x256xf32> to vector<2x256xbf16>
    %c0_11 = arith.constant 0 : index
    %c0_12 = arith.constant 0 : index
    %16 = vector.load %arg11[%c0_11, %c0_12] : memref<256x128xbf16, #tpu.memory_space<vmem>>, vector<256x128xbf16>
    %cst_13 = arith.constant dense<0.000000e+00> : vector<2x128xf32>
    %17 = tpu.matmul %15, %16, %cst_13 {dimension_numbers = #tpu.dot_dimension_numbers<[1], [0], [0], [1], [0, 0, 1, 1], [], []>} : vector<2x256xbf16>, vector<256x128xbf16>, vector<2x128xf32> -> vector<2x128xf32>
    %18 = vector.shape_cast %17 : vector<2x128xf32> to vector<2x1x128xf32>
    %19 = arith.addf %14, %18 : vector<2x1x128xf32>
    %c0_14 = arith.constant 0 : index
    %c0_15 = arith.constant 0 : index
    %c0_16 = arith.constant 0 : index
    %20 = vector.load %arg13[%c0_14, %c0_15, %c0_16] : memref<2x1x128xf32, #tpu.memory_space<vmem>>, vector<2x1x128xf32>
    tpu.vector_store %arg13[%c0_14, %c0_15, %c0_16], %19 {strides = array<i32>} : memref<2x1x128xf32, #tpu.memory_space<vmem>>, vector<2x1x128xf32>,
    return
  }
  func.func @transform_0(%arg0: i32, %arg1: i32) -> (i32, i32) {
    %c0_i32 = arith.constant 0 : i32
    %c0_i32_0 = arith.constant 0 : i32
    return %arg0, %c0_i32 : i32, i32
  }
  func.func @transform_1(%arg0: i32, %arg1: i32) -> (i32, i32) {
    %c0_i32 = arith.constant 0 : i32
    %c0_i32_0 = arith.constant 0 : i32
    return %arg0, %c0_i32 : i32, i32
  }
  func.func @transform_2(%arg0: i32, %arg1: i32) -> (i32, i32) {
    %c0_i32 = arith.constant 0 : i32
    %c0_i32_0 = arith.constant 0 : i32
    %c0_i32_1 = arith.constant 0 : i32
    return %c0_i32, %c0_i32_0 : i32, i32
  }
  func.func @transform_3(%arg0: i32, %arg1: i32) -> (i32, i32) {
    %c0_i32 = arith.constant 0 : i32
    %c0_i32_0 = arith.constant 0 : i32
    %c0_i32_1 = arith.constant 0 : i32
    return %c0_i32, %c0_i32_0 : i32, i32
  }
  func.func @transform_4(%arg0: i32, %arg1: i32) -> (i32, i32) {
    %c0_i32 = arith.constant 0 : i32
    %c0_i32_0 = arith.constant 0 : i32
    %c0_i32_1 = arith.constant 0 : i32
    return %c0_i32, %c0_i32_0 : i32, i32
  }
  func.func @transform_5(%arg0: i32, %arg1: i32) -> (i32, i32) {
    %c0_i32 = arith.constant 0 : i32
    %c0_i32_0 = arith.constant 0 : i32
    %c0_i32_1 = arith.constant 0 : i32
    return %c0_i32, %c0_i32_0 : i32, i32
  }
  func.func @transform_6(%arg0: i32, %arg1: i32) -> (i32, i32) {
    %c0_i32 = arith.constant 0 : i32
    %c0_i32_0 = arith.constant 0 : i32
    %c0_i32_1 = arith.constant 0 : i32
    return %c0_i32, %c0_i32_0 : i32, i32
  }
  func.func @transform_7(%arg0: i32, %arg1: i32) -> (i32, i32) {
    %c0_i32 = arith.constant 0 : i32
    %c0_i32_0 = arith.constant 0 : i32
    return %c0_i32, %arg1 : i32, i32
  }
  func.func @transform_8(%arg0: i32, %arg1: i32) -> (i32, i32) {
    %c0_i32 = arith.constant 0 : i32
    %c0_i32_0 = arith.constant 0 : i32
    return %c0_i32, %arg1 : i32, i32
  }
  func.func @transform_9(%arg0: i32, %arg1: i32) -> (i32, i32) {
    %c0_i32 = arith.constant 0 : i32
    %c0_i32_0 = arith.constant 0 : i32
    return %arg1, %c0_i32 : i32, i32
  }
  func.func @transform_10(%arg0: i32, %arg1: i32) -> (i32, i32) {
    %c0_i32 = arith.constant 0 : i32
    %c0_i32_0 = arith.constant 0 : i32
    %c0_i32_1 = arith.constant 0 : i32
    return %c0_i32, %c0_i32_0 : i32, i32
  }
  func.func @transform_11(%arg0: i32, %arg1: i32) -> (i32, i32, i32) {
    %c0_i32 = arith.constant 0 : i32
    %c0_i32_0 = arith.constant 0 : i32
    %c0_i32_1 = arith.constant 0 : i32
    return %arg0, %c0_i32, %c0_i32_0 : i32, i32, i32
  }
}

</mosaic_0001>

<llo_original>
// kernel: custom-call.14
$region0: #{custom-call.14}
  %s0 = inlined_call_operand.vmem [shape: f32[2,128], index: 0, kind: output, shape index: {}]

// kernel: custom-call.15
$region0: #{custom-call.15}
  %s0 = inlined_call_operand.vmem [shape: f32[2,32], index: 0, kind: output, shape index: {}]

// kernel: pointnetv2_linear_forward.3
$region0: #{pointnetv2_linear_forward.3}
  #allocation0 [shape = 'u32[]', space=smem, size = 0x4, offset = 0x4, fixed_abs, tag = 'smem constant byte address 0x4 - core index']
  #allocation1 [shape = 'u32[144,128]{1,0:T(1,128)}', space=vmem, size = 0x12000, scoped, tag = 'internal scratch']
  %s0 = inlined_call_operand.vmem [shape: f32[1024,3], index: 0, kind: input, shape index: {}]
  %s1 = inlined_call_operand.vmem [shape: bf16[3,64], index: 1, kind: input, shape index: {}]
  %s2 = inlined_call_operand.vmem [shape: f32[1,64], index: 2, kind: input, shape index: {}, may-alias: {2,4}]
  %s3 = inlined_call_operand.vmem [shape: bf16[64,64], index: 3, kind: input, shape index: {}]
  %s4 = inlined_call_operand.vmem [shape: f32[1,64], index: 4, kind: input, shape index: {}, may-alias: {2,4}]
  %s5 = inlined_call_operand.vmem [shape: bf16[64,128], index: 5, kind: input, shape index: {}]
  %s6 = inlined_call_operand.vmem [shape: f32[1,128], index: 6, kind: input, shape index: {}]
  %s7 = inlined_call_operand.vmem [shape: bf16[64,128], index: 7, kind: output, shape index: {}]
  %s8 = sld [smem:[#allocation0]]
  $region38: #{pointnetv2_linear_forward.3} parent=0
    _
  %s10 = ssub.s32 1, %s8
  %s11 = scalar_select 0, %s10, %s8
  // Predicated region
  $region2: #{pointnetv2_linear_forward.3} parent=0 // pred_check
    _
  $region3: #{pointnetv2_linear_forward.3} parent=0 // pred_check_branch
    %13 = sbr.rel (0) target = $region5
  $region4: #{pointnetv2_linear_forward.3} parent=0 // pred_region
    _
  $region5: #{pointnetv2_linear_forward.3} parent=0 // pred_fallthru
    _
  // Predicated region
  $region6: #{pointnetv2_linear_forward.3} parent=0 // pred_check
    _
  $region7: #{pointnetv2_linear_forward.3} parent=0 // pred_check_branch
    %15 = sbr.rel (0) target = $region9
  $region8: #{pointnetv2_linear_forward.3} parent=0 // pred_region
    _
  $region9: #{pointnetv2_linear_forward.3} parent=0 // pred_fallthru
    _
  // Predicated region
  $region10: #{pointnetv2_linear_forward.3} parent=0 // pred_check
    _
  $region11: #{pointnetv2_linear_forward.3} parent=0 // pred_check_branch
    %17 = sbr.rel (0) target = $region13
  $region12: #{pointnetv2_linear_forward.3} parent=0 // pred_region
    _
  $region13: #{pointnetv2_linear_forward.3} parent=0 // pred_fallthru
    _
  // Predicated region
  $region14: #{pointnetv2_linear_forward.3} parent=0 // pred_check
    _
  $region15: #{pointnetv2_linear_forward.3} parent=0 // pred_check_branch
    %19 = sbr.rel (0) target = $region17
  $region16: #{pointnetv2_linear_forward.3} parent=0 // pred_region
    _
  $region17: #{pointnetv2_linear_forward.3} parent=0 // pred_fallthru
    _
  // Predicated region
  $region18: #{pointnetv2_linear_forward.3} parent=0 // pred_check
    _
  $region19: #{pointnetv2_linear_forward.3} parent=0 // pred_check_branch
    %21 = sbr.rel (0) target = $region21
  $region20: #{pointnetv2_linear_forward.3} parent=0 // pred_region
    _
  $region21: #{pointnetv2_linear_forward.3} parent=0 // pred_fallthru
    _
  // Predicated region
  $region22: #{pointnetv2_linear_forward.3} parent=0 // pred_check
    _
  $region23: #{pointnetv2_linear_forward.3} parent=0 // pred_check_branch
    %23 = sbr.rel (0) target = $region25
  $region24: #{pointnetv2_linear_forward.3} parent=0 // pred_region
    _
  $region25: #{pointnetv2_linear_forward.3} parent=0 // pred_fallthru
    _
  // Predicated region
  $region26: #{pointnetv2_linear_forward.3} parent=0 // pred_check
    _
  $region27: #{pointnetv2_linear_forward.3} parent=0 // pred_check_branch
    %25 = sbr.rel (0) target = $region29
  $region28: #{pointnetv2_linear_forward.3} parent=0 // pred_region
    _
  $region29: #{pointnetv2_linear_forward.3} parent=0 // pred_fallthru
    _
  %v27 = vld [vmem:[%s0] sm:$0xff]
  %v28 = vld [vmem:[%s0 + $0x8] sm:$0xff]
  %v29 = vld [vmem:[%s0 + $0x10] sm:$0xff]
  %v30 = vld [vmem:[%s0 + $0x18] sm:$0xff]
  %v31 = vld [vmem:[%s0 + $0x20] sm:$0xff]
  %v32 = vld [vmem:[%s0 + $0x28] sm:$0xff]
  %v33 = vld [vmem:[%s0 + $0x30] sm:$0xff]
  %v34 = vld [vmem:[%s0 + $0x38] sm:$0xff]
  %v35 = vld [vmem:[%s0 + $0x40] sm:$0xff]
  %v36 = vld [vmem:[%s0 + $0x48] sm:$0xff]
  %v37 = vld [vmem:[%s0 + $0x50] sm:$0xff]
  %v38 = vld [vmem:[%s0 + $0x58] sm:$0xff]
  %v39 = vld [vmem:[%s0 + $0x60] sm:$0xff]
  %v40 = vld [vmem:[%s0 + $0x68] sm:$0xff]
  %v41 = vld [vmem:[%s0 + $0x70] sm:$0xff]
  %v42 = vld [vmem:[%s0 + $0x78] sm:$0xff]
  %v43 = vld [vmem:[%s0 + $0x80] sm:$0xff]
  %v44 = vld [vmem:[%s0 + $0x88] sm:$0xff]
  %v45 = vld [vmem:[%s0 + $0x90] sm:$0xff]
  %v46 = vld [vmem:[%s0 + $0x98] sm:$0xff]
  %v47 = vld [vmem:[%s0 + $0xa0] sm:$0xff]
  %v48 = vld [vmem:[%s0 + $0xa8] sm:$0xff]
  %v49 = vld [vmem:[%s0 + $0xb0] sm:$0xff]
  %v50 = vld [vmem:[%s0 + $0xb8] sm:$0xff]
  %v51 = vld [vmem:[%s0 + $0xc0] sm:$0xff]
  %v52 = vld [vmem:[%s0 + $0xc8] sm:$0xff]
  %v53 = vld [vmem:[%s0 + $0xd0] sm:$0xff]
  %v54 = vld [vmem:[%s0 + $0xd8] sm:$0xff]
  %v55 = vld [vmem:[%s0 + $0xe0] sm:$0xff]
  %v56 = vld [vmem:[%s0 + $0xe8] sm:$0xff]
  %v57 = vld [vmem:[%s0 + $0xf0] sm:$0xff]
  %v58 = vld [vmem:[%s0 + $0xf8] sm:$0xff]
  %v59 = vld [vmem:[%s0 + $0x100] sm:$0xff]
  %v60 = vld [vmem:[%s0 + $0x108] sm:$0xff]
  %v61 = vld [vmem:[%s0 + $0x110] sm:$0xff]
  %v62 = vld [vmem:[%s0 + $0x118] sm:$0xff]
  %v63 = vld [vmem:[%s0 + $0x120] sm:$0xff]
  %v64 = vld [vmem:[%s0 + $0x128] sm:$0xff]
  %v65 = vld [vmem:[%s0 + $0x130] sm:$0xff]
  %v66 = vld [vmem:[%s0 + $0x138] sm:$0xff]
  %v67 = vld [vmem:[%s0 + $0x140] sm:$0xff]
  %v68 = vld [vmem:[%s0 + $0x148] sm:$0xff]
  %v69 = vld [vmem:[%s0 + $0x150] sm:$0xff]
  %v70 = vld [vmem:[%s0 + $0x158] sm:$0xff]
  %v71 = vld [vmem:[%s0 + $0x160] sm:$0xff]
  %v72 = vld [vmem:[%s0 + $0x168] sm:$0xff]
  %v73 = vld [vmem:[%s0 + $0x170] sm:$0xff]
  %v74 = vld [vmem:[%s0 + $0x178] sm:$0xff]
  %v75 = vld [vmem:[%s0 + $0x180] sm:$0xff]
  %v76 = vld [vmem:[%s0 + $0x188] sm:$0xff]
  %v77 = vld [vmem:[%s0 + $0x190] sm:$0xff]
  %v78 = vld [vmem:[%s0 + $0x198] sm:$0xff]
  %v79 = vld [vmem:[%s0 + $0x1a0] sm:$0xff]
  %v80 = vld [vmem:[%s0 + $0x1a8] sm:$0xff]
  %v81 = vld [vmem:[%s0 + $0x1b0] sm:$0xff]
  %v82 = vld [vmem:[%s0 + $0x1b8] sm:$0xff]
  %v83 = vld [vmem:[%s0 + $0x1c0] sm:$0xff]
  %v84 = vld [vmem:[%s0 + $0x1c8] sm:$0xff]
  %v85 = vld [vmem:[%s0 + $0x1d0] sm:$0xff]
  %v86 = vld [vmem:[%s0 + $0x1d8] sm:$0xff]
  %v87 = vld [vmem:[%s0 + $0x1e0] sm:$0xff]
  %v88 = vld [vmem:[%s0 + $0x1e8] sm:$0xff]
  %v89 = vld [vmem:[%s0 + $0x1f0] sm:$0xff]
  %v90 = vld [vmem:[%s0 + $0x1f8] sm:$0xff]
  %v91 = vld [vmem:[%s0 + $0x200] sm:$0xff]
  %v92 = vld [vmem:[%s0 + $0x208] sm:$0xff]
  %v93 = vld [vmem:[%s0 + $0x210] sm:$0xff]
  %v94 = vld [vmem:[%s0 + $0x218] sm:$0xff]
  %v95 = vld [vmem:[%s0 + $0x220] sm:$0xff]
  %v96 = vld [vmem:[%s0 + $0x228] sm:$0xff]
  %v97 = vld [vmem:[%s0 + $0x230] sm:$0xff]
  %v98 = vld [vmem:[%s0 + $0x238] sm:$0xff]
  %v99 = vld [vmem:[%s0 + $0x240] sm:$0xff]
  %v100 = vld [vmem:[%s0 + $0x248] sm:$0xff]
  %v101 = vld [vmem:[%s0 + $0x250] sm:$0xff]
  %v102 = vld [vmem:[%s0 + $0x258] sm:$0xff]
  %v103 = vld [vmem:[%s0 + $0x260] sm:$0xff]
  %v104 = vld [vmem:[%s0 + $0x268] sm:$0xff]
  %v105 = vld [vmem:[%s0 + $0x270] sm:$0xff]
  %v106 = vld [vmem:[%s0 + $0x278] sm:$0xff]
  %v107 = vld [vmem:[%s0 + $0x280] sm:$0xff]
  %v108 = vld [vmem:[%s0 + $0x288] sm:$0xff]
  %v109 = vld [vmem:[%s0 + $0x290] sm:$0xff]
  %v110 = vld [vmem:[%s0 + $0x298] sm:$0xff]
  %v111 = vld [vmem:[%s0 + $0x2a0] sm:$0xff]
  %v112 = vld [vmem:[%s0 + $0x2a8] sm:$0xff]
  %v113 = vld [vmem:[%s0 + $0x2b0] sm:$0xff]
  %v114 = vld [vmem:[%s0 + $0x2b8] sm:$0xff]
  %v115 = vld [vmem:[%s0 + $0x2c0] sm:$0xff]
  %v116 = vld [vmem:[%s0 + $0x2c8] sm:$0xff]
  %v117 = vld [vmem:[%s0 + $0x2d0] sm:$0xff]
  %v118 = vld [vmem:[%s0 + $0x2d8] sm:$0xff]
  %v119 = vld [vmem:[%s0 + $0x2e0] sm:$0xff]
  %v120 = vld [vmem:[%s0 + $0x2e8] sm:$0xff]
  %v121 = vld [vmem:[%s0 + $0x2f0] sm:$0xff]
  %v122 = vld [vmem:[%s0 + $0x2f8] sm:$0xff]
  %v123 = vld [vmem:[%s0 + $0x300] sm:$0xff]
  %v124 = vld [vmem:[%s0 + $0x308] sm:$0xff]
  %v125 = vld [vmem:[%s0 + $0x310] sm:$0xff]
  %v126 = vld [vmem:[%s0 + $0x318] sm:$0xff]
  %v127 = vld [vmem:[%s0 + $0x320] sm:$0xff]
  %v128 = vld [vmem:[%s0 + $0x328] sm:$0xff]
  %v129 = vld [vmem:[%s0 + $0x330] sm:$0xff]
  %v130 = vld [vmem:[%s0 + $0x338] sm:$0xff]
  %v131 = vld [vmem:[%s0 + $0x340] sm:$0xff]
  %v132 = vld [vmem:[%s0 + $0x348] sm:$0xff]
  %v133 = vld [vmem:[%s0 + $0x350] sm:$0xff]
  %v134 = vld [vmem:[%s0 + $0x358] sm:$0xff]
  %v135 = vld [vmem:[%s0 + $0x360] sm:$0xff]
  %v136 = vld [vmem:[%s0 + $0x368] sm:$0xff]
  %v137 = vld [vmem:[%s0 + $0x370] sm:$0xff]
  %v138 = vld [vmem:[%s0 + $0x378] sm:$0xff]
  %v139 = vld [vmem:[%s0 + $0x380] sm:$0xff]
  %v140 = vld [vmem:[%s0 + $0x388] sm:$0xff]
  %v141 = vld [vmem:[%s0 + $0x390] sm:$0xff]
  %v142 = vld [vmem:[%s0 + $0x398] sm:$0xff]
  %v143 = vld [vmem:[%s0 + $0x3a0] sm:$0xff]
  %v144 = vld [vmem:[%s0 + $0x3a8] sm:$0xff]
  %v145 = vld [vmem:[%s0 + $0x3b0] sm:$0xff]
  %v146 = vld [vmem:[%s0 + $0x3b8] sm:$0xff]
  %v147 = vld [vmem:[%s0 + $0x3c0] sm:$0xff]
  %v148 = vld [vmem:[%s0 + $0x3c8] sm:$0xff]
  %v149 = vld [vmem:[%s0 + $0x3d0] sm:$0xff]
  %v150 = vld [vmem:[%s0 + $0x3d8] sm:$0xff]
  %v151 = vld [vmem:[%s0 + $0x3e0] sm:$0xff]
  %v152 = vld [vmem:[%s0 + $0x3e8] sm:$0xff]
  %v153 = vld [vmem:[%s0 + $0x3f0] sm:$0xff]
  %v154 = vld [vmem:[%s0 + $0x3f8] sm:$0xff]
  %v155 = vld [vmem:[%s1] sm:$0x1]
  %v156 = vunpack.c.l.bf16 %v155
  %158 = vset.pattern.permute.xlu0 0
  %159 = vperm.xlu0 %158, %v27
  %v160 = vpop.permute.xlu0 %159
  %163 = vset.pattern.permute.xlu0 0
  %164 = vperm.xlu0 %163, %v28
  %v165 = vpop.permute.xlu0 %164
  %168 = vset.pattern.permute.xlu0 0
  %169 = vperm.xlu0 %168, %v29
  %v170 = vpop.permute.xlu0 %169
  %173 = vset.pattern.permute.xlu0 0
  %174 = vperm.xlu0 %173, %v30
  %v175 = vpop.permute.xlu0 %174
  %178 = vset.pattern.permute.xlu0 0
  %179 = vperm.xlu0 %178, %v31
  %v180 = vpop.permute.xlu0 %179
  %183 = vset.pattern.permute.xlu0 0
  %184 = vperm.xlu0 %183, %v32
  %v185 = vpop.permute.xlu0 %184
  %188 = vset.pattern.permute.xlu0 0
  %189 = vperm.xlu0 %188, %v33
  %v190 = vpop.permute.xlu0 %189
  %193 = vset.pattern.permute.xlu0 0
  %194 = vperm.xlu0 %193, %v34
  %v195 = vpop.permute.xlu0 %194
  %198 = vset.pattern.permute.xlu0 0
  %199 = vperm.xlu0 %198, %v35
  %v200 = vpop.permute.xlu0 %199
  %203 = vset.pattern.permute.xlu0 0
  %204 = vperm.xlu0 %203, %v36
  %v205 = vpop.permute.xlu0 %204
  %208 = vset.pattern.permute.xlu0 0
  %209 = vperm.xlu0 %208, %v37
  %v210 = vpop.permute.xlu0 %209
  %213 = vset.pattern.permute.xlu0 0
  %214 = vperm.xlu0 %213, %v38
  %v215 = vpop.permute.xlu0 %214
  %218 = vset.pattern.permute.xlu0 0
  %219 = vperm.xlu0 %218, %v39
  %v220 = vpop.permute.xlu0 %219
  %223 = vset.pattern.permute.xlu0 0
  %224 = vperm.xlu0 %223, %v40
  %v225 = vpop.permute.xlu0 %224
  %228 = vset.pattern.permute.xlu0 0
  %229 = vperm.xlu0 %228, %v41
  %v230 = vpop.permute.xlu0 %229
  %233 = vset.pattern.permute.xlu0 0
  %234 = vperm.xlu0 %233, %v42
  %v235 = vpop.permute.xlu0 %234
  %238 = vset.pattern.permute.xlu0 0
  %239 = vperm.xlu0 %238, %v43
  %v240 = vpop.permute.xlu0 %239
  %243 = vset.pattern.permute.xlu0 0
  %244 = vperm.xlu0 %243, %v44
  %v245 = vpop.permute.xlu0 %244
  %248 = vset.pattern.permute.xlu0 0
  %249 = vperm.xlu0 %248, %v45
  %v250 = vpop.permute.xlu0 %249
  %253 = vset.pattern.permute.xlu0 0
  %254 = vperm.xlu0 %253, %v46
  %v255 = vpop.permute.xlu0 %254
  %258 = vset.pattern.permute.xlu0 0
  %259 = vperm.xlu0 %258, %v47
  %v260 = vpop.permute.xlu0 %259
  %263 = vset.pattern.permute.xlu0 0
  %264 = vperm.xlu0 %263, %v48
  %v265 = vpop.permute.xlu0 %264
  %268 = vset.pattern.permute.xlu0 0
  %269 = vperm.xlu0 %268, %v49
  %v270 = vpop.permute.xlu0 %269
  %273 = vset.pattern.permute.xlu0 0
  %274 = vperm.xlu0 %273, %v50
  %v275 = vpop.permute.xlu0 %274
  %278 = vset.pattern.permute.xlu0 0
  %279 = vperm.xlu0 %278, %v51
  %v280 = vpop.permute.xlu0 %279
  %283 = vset.pattern.permute.xlu0 0
  %284 = vperm.xlu0 %283, %v52
  %v285 = vpop.permute.xlu0 %284
  %288 = vset.pattern.permute.xlu0 0
  %289 = vperm.xlu0 %288, %v53
  %v290 = vpop.permute.xlu0 %289
  %293 = vset.pattern.permute.xlu0 0
  %294 = vperm.xlu0 %293, %v54
  %v295 = vpop.permute.xlu0 %294
  %298 = vset.pattern.permute.xlu0 0
  %299 = vperm.xlu0 %298, %v55
  %v300 = vpop.permute.xlu0 %299
  %303 = vset.pattern.permute.xlu0 0
  %304 = vperm.xlu0 %303, %v56
  %v305 = vpop.permute.xlu0 %304
  %308 = vset.pattern.permute.xlu0 0
  %309 = vperm.xlu0 %308, %v57
  %v310 = vpop.permute.xlu0 %309
  %313 = vset.pattern.permute.xlu0 0
  %314 = vperm.xlu0 %313, %v58
  %v315 = vpop.permute.xlu0 %314
  %318 = vset.pattern.permute.xlu0 0
  %319 = vperm.xlu0 %318, %v59
  %v320 = vpop.permute.xlu0 %319
  %323 = vset.pattern.permute.xlu0 0
  %324 = vperm.xlu0 %323, %v60
  %v325 = vpop.permute.xlu0 %324
  %328 = vset.pattern.permute.xlu0 0
  %329 = vperm.xlu0 %328, %v61
  %v330 = vpop.permute.xlu0 %329
  %333 = vset.pattern.permute.xlu0 0
  %334 = vperm.xlu0 %333, %v62
  %v335 = vpop.permute.xlu0 %334
  %338 = vset.pattern.permute.xlu0 0
  %339 = vperm.xlu0 %338, %v63
  %v340 = vpop.permute.xlu0 %339
  %343 = vset.pattern.permute.xlu0 0
  %344 = vperm.xlu0 %343, %v64
  %v345 = vpop.permute.xlu0 %344
  %348 = vset.pattern.permute.xlu0 0
  %349 = vperm.xlu0 %348, %v65
  %v350 = vpop.permute.xlu0 %349
  %353 = vset.pattern.permute.xlu0 0
  %354 = vperm.xlu0 %353, %v66
  %v355 = vpop.permute.xlu0 %354
  %358 = vset.pattern.permute.xlu0 0
  %359 = vperm.xlu0 %358, %v67
  %v360 = vpop.permute.xlu0 %359
  %363 = vset.pattern.permute.xlu0 0
  %364 = vperm.xlu0 %363, %v68
  %v365 = vpop.permute.xlu0 %364
  %368 = vset.pattern.permute.xlu0 0
  %369 = vperm.xlu0 %368, %v69
  %v370 = vpop.permute.xlu0 %369
  %373 = vset.pattern.permute.xlu0 0
  %374 = vperm.xlu0 %373, %v70
  %v375 = vpop.permute.xlu0 %374
  %378 = vset.pattern.permute.xlu0 0
  %379 = vperm.xlu0 %378, %v71
  %v380 = vpop.permute.xlu0 %379
  %383 = vset.pattern.permute.xlu0 0
  %384 = vperm.xlu0 %383, %v72
  %v385 = vpop.permute.xlu0 %384
  %388 = vset.pattern.permute.xlu0 0
  %389 = vperm.xlu0 %388, %v73
  %v390 = vpop.permute.xlu0 %389
  %393 = vset.pattern.permute.xlu0 0
  %394 = vperm.xlu0 %393, %v74
  %v395 = vpop.permute.xlu0 %394
  %398 = vset.pattern.permute.xlu0 0
  %399 = vperm.xlu0 %398, %v75
  %v400 = vpop.permute.xlu0 %399
  %403 = vset.pattern.permute.xlu0 0
  %404 = vperm.xlu0 %403, %v76
  %v405 = vpop.permute.xlu0 %404
  %408 = vset.pattern.permute.xlu0 0
  %409 = vperm.xlu0 %408, %v77
  %v410 = vpop.permute.xlu0 %409
  %413 = vset.pattern.permute.xlu0 0
  %414 = vperm.xlu0 %413, %v78
  %v415 = vpop.permute.xlu0 %414
  %418 = vset.pattern.permute.xlu0 0
  %419 = vperm.xlu0 %418, %v79
  %v420 = vpop.permute.xlu0 %419
  %423 = vset.pattern.permute.xlu0 0
  %424 = vperm.xlu0 %423, %v80
  %v425 = vpop.permute.xlu0 %424
  %428 = vset.pattern.permute.xlu0 0
  %429 = vperm.xlu0 %428, %v81
  %v430 = vpop.permute.xlu0 %429
  %433 = vset.pattern.permute.xlu0 0
  %434 = vperm.xlu0 %433, %v82
  %v435 = vpop.permute.xlu0 %434
  %438 = vset.pattern.permute.xlu0 0
  %439 = vperm.xlu0 %438, %v83
  %v440 = vpop.permute.xlu0 %439
  %443 = vset.pattern.permute.xlu0 0
  %444 = vperm.xlu0 %443, %v84
  %v445 = vpop.permute.xlu0 %444
  %448 = vset.pattern.permute.xlu0 0
  %449 = vperm.xlu0 %448, %v85
  %v450 = vpop.permute.xlu0 %449
  %453 = vset.pattern.permute.xlu0 0
  %454 = vperm.xlu0 %453, %v86
  %v455 = vpop.permute.xlu0 %454
  %458 = vset.pattern.permute.xlu0 0
  %459 = vperm.xlu0 %458, %v87
  %v460 = vpop.permute.xlu0 %459
  %463 = vset.pattern.permute.xlu0 0
  %464 = vperm.xlu0 %463, %v88
  %v465 = vpop.permute.xlu0 %464
  %468 = vset.pattern.permute.xlu0 0
  %469 = vperm.xlu0 %468, %v89
  %v470 = vpop.permute.xlu0 %469
  %473 = vset.pattern.permute.xlu0 0
  %474 = vperm.xlu0 %473, %v90
  %v475 = vpop.permute.xlu0 %474
  %478 = vset.pattern.permute.xlu0 0
  %479 = vperm.xlu0 %478, %v91
  %v480 = vpop.permute.xlu0 %479
  %483 = vset.pattern.permute.xlu0 0
  %484 = vperm.xlu0 %483, %v92
  %v485 = vpop.permute.xlu0 %484
  %488 = vset.pattern.permute.xlu0 0
  %489 = vperm.xlu0 %488, %v93
  %v490 = vpop.permute.xlu0 %489
  %493 = vset.pattern.permute.xlu0 0
  %494 = vperm.xlu0 %493, %v94
  %v495 = vpop.permute.xlu0 %494
  %498 = vset.pattern.permute.xlu0 0
  %499 = vperm.xlu0 %498, %v95
  %v500 = vpop.permute.xlu0 %499
  %503 = vset.pattern.permute.xlu0 0
  %504 = vperm.xlu0 %503, %v96
  %v505 = vpop.permute.xlu0 %504
  %508 = vset.pattern.permute.xlu0 0
  %509 = vperm.xlu0 %508, %v97
  %v510 = vpop.permute.xlu0 %509
  %513 = vset.pattern.permute.xlu0 0
  %514 = vperm.xlu0 %513, %v98
  %v515 = vpop.permute.xlu0 %514
  %518 = vset.pattern.permute.xlu0 0
  %519 = vperm.xlu0 %518, %v99
  %v520 = vpop.permute.xlu0 %519
  %523 = vset.pattern.permute.xlu0 0
  %524 = vperm.xlu0 %523, %v100
  %v525 = vpop.permute.xlu0 %524
  %528 = vset.pattern.permute.xlu0 0
  %529 = vperm.xlu0 %528, %v101
  %v530 = vpop.permute.xlu0 %529
  %533 = vset.pattern.permute.xlu0 0
  %534 = vperm.xlu0 %533, %v102
  %v535 = vpop.permute.xlu0 %534
  %538 = vset.pattern.permute.xlu0 0
  %539 = vperm.xlu0 %538, %v103
  %v540 = vpop.permute.xlu0 %539
  %543 = vset.pattern.permute.xlu0 0
  %544 = vperm.xlu0 %543, %v104
  %v545 = vpop.permute.xlu0 %544
  %548 = vset.pattern.permute.xlu0 0
  %549 = vperm.xlu0 %548, %v105
  %v550 = vpop.permute.xlu0 %549
  %553 = vset.pattern.permute.xlu0 0
  %554 = vperm.xlu0 %553, %v106
  %v555 = vpop.permute.xlu0 %554
  %558 = vset.pattern.permute.xlu0 0
  %559 = vperm.xlu0 %558, %v107
  %v560 = vpop.permute.xlu0 %559
  %563 = vset.pattern.permute.xlu0 0
  %564 = vperm.xlu0 %563, %v108
  %v565 = vpop.permute.xlu0 %564
  %568 = vset.pattern.permute.xlu0 0
  %569 = vperm.xlu0 %568, %v109
  %v570 = vpop.permute.xlu0 %569
  %573 = vset.pattern.permute.xlu0 0
  %574 = vperm.xlu0 %573, %v110
  %v575 = vpop.permute.xlu0 %574
  %578 = vset.pattern.permute.xlu0 0
  %579 = vperm.xlu0 %578, %v111
  %v580 = vpop.permute.xlu0 %579
  %583 = vset.pattern.permute.xlu0 0
  %584 = vperm.xlu0 %583, %v112
  %v585 = vpop.permute.xlu0 %584
  %588 = vset.pattern.permute.xlu0 0
  %589 = vperm.xlu0 %588, %v113
  %v590 = vpop.permute.xlu0 %589
  %593 = vset.pattern.permute.xlu0 0
  %594 = vperm.xlu0 %593, %v114
  %v595 = vpop.permute.xlu0 %594
  %598 = vset.pattern.permute.xlu0 0
  %599 = vperm.xlu0 %598, %v115
  %v600 = vpop.permute.xlu0 %599
  %603 = vset.pattern.permute.xlu0 0
  %604 = vperm.xlu0 %603, %v116
  %v605 = vpop.permute.xlu0 %604
  %608 = vset.pattern.permute.xlu0 0
  %609 = vperm.xlu0 %608, %v117
  %v610 = vpop.permute.xlu0 %609
  %613 = vset.pattern.permute.xlu0 0
  %614 = vperm.xlu0 %613, %v118
  %v615 = vpop.permute.xlu0 %614
  %618 = vset.pattern.permute.xlu0 0
  %619 = vperm.xlu0 %618, %v119
  %v620 = vpop.permute.xlu0 %619
  %623 = vset.pattern.permute.xlu0 0
  %624 = vperm.xlu0 %623, %v120
  %v625 = vpop.permute.xlu0 %624
  %628 = vset.pattern.permute.xlu0 0
  %629 = vperm.xlu0 %628, %v121
  %v630 = vpop.permute.xlu0 %629
  %633 = vset.pattern.permute.xlu0 0
  %634 = vperm.xlu0 %633, %v122
  %v635 = vpop.permute.xlu0 %634
  %638 = vset.pattern.permute.xlu0 0
  %639 = vperm.xlu0 %638, %v123
  %v640 = vpop.permute.xlu0 %639
  %643 = vset.pattern.permute.xlu0 0
  %644 = vperm.xlu0 %643, %v124
  %v645 = vpop.permute.xlu0 %644
  %648 = vset.pattern.permute.xlu0 0
  %649 = vperm.xlu0 %648, %v125
  %v650 = vpop.permute.xlu0 %649
  %653 = vset.pattern.permute.xlu0 0
  %654 = vperm.xlu0 %653, %v126
  %v655 = vpop.permute.xlu0 %654
  %658 = vset.pattern.permute.xlu0 0
  %659 = vperm.xlu0 %658, %v127
  %v660 = vpop.permute.xlu0 %659
  %663 = vset.pattern.permute.xlu0 0
  %664 = vperm.xlu0 %663, %v128
  %v665 = vpop.permute.xlu0 %664
  %668 = vset.pattern.permute.xlu0 0
  %669 = vperm.xlu0 %668, %v129
  %v670 = vpop.permute.xlu0 %669
  %673 = vset.pattern.permute.xlu0 0
  %674 = vperm.xlu0 %673, %v130
  %v675 = vpop.permute.xlu0 %674
  %678 = vset.pattern.permute.xlu0 0
  %679 = vperm.xlu0 %678, %v131
  %v680 = vpop.permute.xlu0 %679
  %683 = vset.pattern.permute.xlu0 0
  %684 = vperm.xlu0 %683, %v132
  %v685 = vpop.permute.xlu0 %684
  %688 = vset.pattern.permute.xlu0 0
  %689 = vperm.xlu0 %688, %v133
  %v690 = vpop.permute.xlu0 %689
  %693 = vset.pattern.permute.xlu0 0
  %694 = vperm.xlu0 %693, %v134
  %v695 = vpop.permute.xlu0 %694
  %698 = vset.pattern.permute.xlu0 0
  %699 = vperm.xlu0 %698, %v135
  %v700 = vpop.permute.xlu0 %699
  %703 = vset.pattern.permute.xlu0 0
  %704 = vperm.xlu0 %703, %v136
  %v705 = vpop.permute.xlu0 %704
  %708 = vset.pattern.permute.xlu0 0
  %709 = vperm.xlu0 %708, %v137
  %v710 = vpop.permute.xlu0 %709
  %713 = vset.pattern.permute.xlu0 0
  %714 = vperm.xlu0 %713, %v138
  %v715 = vpop.permute.xlu0 %714
  %718 = vset.pattern.permute.xlu0 0
  %719 = vperm.xlu0 %718, %v139
  %v720 = vpop.permute.xlu0 %719
  %723 = vset.pattern.permute.xlu0 0
  %724 = vperm.xlu0 %723, %v140
  %v725 = vpop.permute.xlu0 %724
  %728 = vset.pattern.permute.xlu0 0
  %729 = vperm.xlu0 %728, %v141
  %v730 = vpop.permute.xlu0 %729
  %733 = vset.pattern.permute.xlu0 0
  %734 = vperm.xlu0 %733, %v142
  %v735 = vpop.permute.xlu0 %734
  %738 = vset.pattern.permute.xlu0 0
  %739 = vperm.xlu0 %738, %v143
  %v740 = vpop.permute.xlu0 %739
  %743 = vset.pattern.permute.xlu0 0
  %744 = vperm.xlu0 %743, %v144
  %v745 = vpop.permute.xlu0 %744
  %748 = vset.pattern.permute.xlu0 0
  %749 = vperm.xlu0 %748, %v145
  %v750 = vpop.permute.xlu0 %749
  %753 = vset.pattern.permute.xlu0 0
  %754 = vperm.xlu0 %753, %v146
  %v755 = vpop.permute.xlu0 %754
  %758 = vset.pattern.permute.xlu0 0
  %759 = vperm.xlu0 %758, %v147
  %v760 = vpop.permute.xlu0 %759
  %763 = vset.pattern.permute.xlu0 0
  %764 = vperm.xlu0 %763, %v148
  %v765 = vpop.permute.xlu0 %764
  %768 = vset.pattern.permute.xlu0 0
  %769 = vperm.xlu0 %768, %v149
  %v770 = vpop.permute.xlu0 %769
  %773 = vset.pattern.permute.xlu0 0
  %774 = vperm.xlu0 %773, %v150
  %v775 = vpop.permute.xlu0 %774
  %778 = vset.pattern.permute.xlu0 0
  %779 = vperm.xlu0 %778, %v151
  %v780 = vpop.permute.xlu0 %779
  %783 = vset.pattern.permute.xlu0 0
  %784 = vperm.xlu0 %783, %v152
  %v785 = vpop.permute.xlu0 %784
  %788 = vset.pattern.permute.xlu0 0
  %789 = vperm.xlu0 %788, %v153
  %v790 = vpop.permute.xlu0 %789
  %793 = vset.pattern.permute.xlu0 0
  %794 = vperm.xlu0 %793, %v154
  %v795 = vpop.permute.xlu0 %794
  %v797 = vlaneseq
  %v798 = vshrl.u32 %v797, 7
  %v799 = vsub.s32 0, %v798
  %v800 = vrot.slane %v156, %v799
  %v801 = vmul.f32 %v160, %v800
  %v802 = vmul.f32 %v165, %v800
  %v803 = vmul.f32 %v170, %v800
  %v804 = vmul.f32 %v175, %v800
  %v805 = vmul.f32 %v180, %v800
  %v806 = vmul.f32 %v185, %v800
  %v807 = vmul.f32 %v190, %v800
  %v808 = vmul.f32 %v195, %v800
  %v809 = vmul.f32 %v200, %v800
  %v810 = vmul.f32 %v205, %v800
  %v811 = vmul.f32 %v210, %v800
  %v812 = vmul.f32 %v215, %v800
  %v813 = vmul.f32 %v220, %v800
  %v814 = vmul.f32 %v225, %v800
  %v815 = vmul.f32 %v230, %v800
  %v816 = vmul.f32 %v235, %v800
  %v817 = vmul.f32 %v240, %v800
  %v818 = vmul.f32 %v245, %v800
  %v819 = vmul.f32 %v250, %v800
  %v820 = vmul.f32 %v255, %v800
  %v821 = vmul.f32 %v260, %v800
  %v822 = vmul.f32 %v265, %v800
  %v823 = vmul.f32 %v270, %v800
  %v824 = vmul.f32 %v275, %v800
  %v825 = vmul.f32 %v280, %v800
  %v826 = vmul.f32 %v285, %v800
  %v827 = vmul.f32 %v290, %v800
  %v828 = vmul.f32 %v295, %v800
  %v829 = vmul.f32 %v300, %v800
  %v830 = vmul.f32 %v305, %v800
  %v831 = vmul.f32 %v310, %v800
  %v832 = vmul.f32 %v315, %v800
  %v833 = vmul.f32 %v320, %v800
  %v834 = vmul.f32 %v325, %v800
  %v835 = vmul.f32 %v330, %v800
  %v836 = vmul.f32 %v335, %v800
  %v837 = vmul.f32 %v340, %v800
  %v838 = vmul.f32 %v345, %v800
  %v839 = vmul.f32 %v350, %v800
  %v840 = vmul.f32 %v355, %v800
  %v841 = vmul.f32 %v360, %v800
  %v842 = vmul.f32 %v365, %v800
  %v843 = vmul.f32 %v370, %v800
  %v844 = vmul.f32 %v375, %v800
  %v845 = vmul.f32 %v380, %v800
  %v846 = vmul.f32 %v385, %v800
  %v847 = vmul.f32 %v390, %v800
  %v848 = vmul.f32 %v395, %v800
  %v849 = vmul.f32 %v400, %v800
  %v850 = vmul.f32 %v405, %v800
  %v851 = vmul.f32 %v410, %v800
  %v852 = vmul.f32 %v415, %v800
  %v853 = vmul.f32 %v420, %v800
  %v854 = vmul.f32 %v425, %v800
  %v855 = vmul.f32 %v430, %v800
  %v856 = vmul.f32 %v435, %v800
  %v857 = vmul.f32 %v440, %v800
  %v858 = vmul.f32 %v445, %v800
  %v859 = vmul.f32 %v450, %v800
  %v860 = vmul.f32 %v455, %v800
  %v861 = vmul.f32 %v460, %v800
  %v862 = vmul.f32 %v465, %v800
  %v863 = vmul.f32 %v470, %v800
  %v864 = vmul.f32 %v475, %v800
  %v865 = vmul.f32 %v480, %v800
  %v866 = vmul.f32 %v485, %v800
  %v867 = vmul.f32 %v490, %v800
  %v868 = vmul.f32 %v495, %v800
  %v869 = vmul.f32 %v500, %v800
  %v870 = vmul.f32 %v505, %v800
  %v871 = vmul.f32 %v510, %v800
  %v872 = vmul.f32 %v515, %v800
  %v873 = vmul.f32 %v520, %v800
  %v874 = vmul.f32 %v525, %v800
  %v875 = vmul.f32 %v530, %v800
  %v876 = vmul.f32 %v535, %v800
  %v877 = vmul.f32 %v540, %v800
  %v878 = vmul.f32 %v545, %v800
  %v879 = vmul.f32 %v550, %v800
  %v880 = vmul.f32 %v555, %v800
  %v881 = vmul.f32 %v560, %v800
  %v882 = vmul.f32 %v565, %v800
  %v883 = vmul.f32 %v570, %v800
  %v884 = vmul.f32 %v575, %v800
  %v885 = vmul.f32 %v580, %v800
  %v886 = vmul.f32 %v585, %v800
  %v887 = vmul.f32 %v590, %v800
  %v888 = vmul.f32 %v595, %v800
  %v889 = vmul.f32 %v600, %v800
  %v890 = vmul.f32 %v605, %v800
  %v891 = vmul.f32 %v610, %v800
  %v892 = vmul.f32 %v615, %v800
  %v893 = vmul.f32 %v620, %v800
  %v894 = vmul.f32 %v625, %v800
  %v895 = vmul.f32 %v630, %v800
  %v896 = vmul.f32 %v635, %v800
  %v897 = vmul.f32 %v640, %v800
  %v898 = vmul.f32 %v645, %v800
  %v899 = vmul.f32 %v650, %v800
  %v900 = vmul.f32 %v655, %v800
  %v901 = vmul.f32 %v660, %v800
  %v902 = vmul.f32 %v665, %v800
  %v903 = vmul.f32 %v670, %v800
  %v904 = vmul.f32 %v675, %v800
  %v905 = vmul.f32 %v680, %v800
  %v906 = vmul.f32 %v685, %v800
  %v907 = vmul.f32 %v690, %v800
  %v908 = vmul.f32 %v695, %v800
  %v909 = vmul.f32 %v700, %v800
  %v910 = vmul.f32 %v705, %v800
  %v911 = vmul.f32 %v710, %v800
  %v912 = vmul.f32 %v715, %v800
  %v913 = vmul.f32 %v720, %v800
  %v914 = vmul.f32 %v725, %v800
  %v915 = vmul.f32 %v730, %v800
  %v916 = vmul.f32 %v735, %v800
  %v917 = vmul.f32 %v740, %v800
  %v918 = vmul.f32 %v745, %v800
  %v919 = vmul.f32 %v750, %v800
  %v920 = vmul.f32 %v755, %v800
  %v921 = vmul.f32 %v760, %v800
  %v922 = vmul.f32 %v765, %v800
  %v923 = vmul.f32 %v770, %v800
  %v924 = vmul.f32 %v775, %v800
  %v925 = vmul.f32 %v780, %v800
  %v926 = vmul.f32 %v785, %v800
  %v927 = vmul.f32 %v790, %v800
  %v928 = vmul.f32 %v795, %v800
  %929 = vset.pattern.permute.xlu0 1
  %930 = vperm.xlu0 %929, %v27
  %v931 = vpop.permute.xlu0 %930
  %933 = vset.pattern.permute.xlu0 1
  %934 = vperm.xlu0 %933, %v28
  %v935 = vpop.permute.xlu0 %934
  %937 = vset.pattern.permute.xlu0 1
  %938 = vperm.xlu0 %937, %v29
  %v939 = vpop.permute.xlu0 %938
  %941 = vset.pattern.permute.xlu0 1
  %942 = vperm.xlu0 %941, %v30
  %v943 = vpop.permute.xlu0 %942
  %945 = vset.pattern.permute.xlu0 1
  %946 = vperm.xlu0 %945, %v31
  %v947 = vpop.permute.xlu0 %946
  %949 = vset.pattern.permute.xlu0 1
  %950 = vperm.xlu0 %949, %v32
  %v951 = vpop.permute.xlu0 %950
  %953 = vset.pattern.permute.xlu0 1
  %954 = vperm.xlu0 %953, %v33
  %v955 = vpop.permute.xlu0 %954
  %957 = vset.pattern.permute.xlu0 1
  %958 = vperm.xlu0 %957, %v34
  %v959 = vpop.permute.xlu0 %958
  %961 = vset.pattern.permute.xlu0 1
  %962 = vperm.xlu0 %961, %v35
  %v963 = vpop.permute.xlu0 %962
  %965 = vset.pattern.permute.xlu0 1
  %966 = vperm.xlu0 %965, %v36
  %v967 = vpop.permute.xlu0 %966
  %969 = vset.pattern.permute.xlu0 1
  %970 = vperm.xlu0 %969, %v37
  %v971 = vpop.permute.xlu0 %970
  %973 = vset.pattern.permute.xlu0 1
  %974 = vperm.xlu0 %973, %v38
  %v975 = vpop.permute.xlu0 %974
  %977 = vset.pattern.permute.xlu0 1
  %978 = vperm.xlu0 %977, %v39
  %v979 = vpop.permute.xlu0 %978
  %981 = vset.pattern.permute.xlu0 1
  %982 = vperm.xlu0 %981, %v40
  %v983 = vpop.permute.xlu0 %982
  %985 = vset.pattern.permute.xlu0 1
  %986 = vperm.xlu0 %985, %v41
  %v987 = vpop.permute.xlu0 %986
  %989 = vset.pattern.permute.xlu0 1
  %990 = vperm.xlu0 %989, %v42
  %v991 = vpop.permute.xlu0 %990
  %993 = vset.pattern.permute.xlu0 1
  %994 = vperm.xlu0 %993, %v43
  %v995 = vpop.permute.xlu0 %994
  %997 = vset.pattern.permute.xlu0 1
  %998 = vperm.xlu0 %997, %v44
  %v999 = vpop.permute.xlu0 %998
  %1001 = vset.pattern.permute.xlu0 1
  %1002 = vperm.xlu0 %1001, %v45
  %v1003 = vpop.permute.xlu0 %1002
  %1005 = vset.pattern.permute.xlu0 1
  %1006 = vperm.xlu0 %1005, %v46
  %v1007 = vpop.permute.xlu0 %1006
  %1009 = vset.pattern.permute.xlu0 1
  %1010 = vperm.xlu0 %1009, %v47
  %v1011 = vpop.permute.xlu0 %1010
  %1013 = vset.pattern.permute.xlu0 1
  %1014 = vperm.xlu0 %1013, %v48
  %v1015 = vpop.permute.xlu0 %1014
  %1017 = vset.pattern.permute.xlu0 1
  %1018 = vperm.xlu0 %1017, %v49
  %v1019 = vpop.permute.xlu0 %1018
  %1021 = vset.pattern.permute.xlu0 1
  %1022 = vperm.xlu0 %1021, %v50
  %v1023 = vpop.permute.xlu0 %1022
  %1025 = vset.pattern.permute.xlu0 1
  %1026 = vperm.xlu0 %1025, %v51
  %v1027 = vpop.permute.xlu0 %1026
  %1029 = vset.pattern.permute.xlu0 1
  %1030 = vperm.xlu0 %1029, %v52
  %v1031 = vpop.permute.xlu0 %1030
  %1033 = vset.pattern.permute.xlu0 1
  %1034 = vperm.xlu0 %1033, %v53
  %v1035 = vpop.permute.xlu0 %1034
  %1037 = vset.pattern.permute.xlu0 1
  %1038 = vperm.xlu0 %1037, %v54
  %v1039 = vpop.permute.xlu0 %1038
  %1041 = vset.pattern.permute.xlu0 1
  %1042 = vperm.xlu0 %1041, %v55
  %v1043 = vpop.permute.xlu0 %1042
  %1045 = vset.pattern.permute.xlu0 1
  %1046 = vperm.xlu0 %1045, %v56
  %v1047 = vpop.permute.xlu0 %1046
  %1049 = vset.pattern.permute.xlu0 1
  %1050 = vperm.xlu0 %1049, %v57
  %v1051 = vpop.permute.xlu0 %1050
  %1053 = vset.pattern.permute.xlu0 1
  %1054 = vperm.xlu0 %1053, %v58
  %v1055 = vpop.permute.xlu0 %1054
  %1057 = vset.pattern.permute.xlu0 1
  %1058 = vperm.xlu0 %1057, %v59
  %v1059 = vpop.permute.xlu0 %1058
  %1061 = vset.pattern.permute.xlu0 1
  %1062 = vperm.xlu0 %1061, %v60
  %v1063 = vpop.permute.xlu0 %1062
  %1065 = vset.pattern.permute.xlu0 1
  %1066 = vperm.xlu0 %1065, %v61
  %v1067 = vpop.permute.xlu0 %1066
  %1069 = vset.pattern.permute.xlu0 1
  %1070 = vperm.xlu0 %1069, %v62
  %v1071 = vpop.permute.xlu0 %1070
  %1073 = vset.pattern.permute.xlu0 1
  %1074 = vperm.xlu0 %1073, %v63
  %v1075 = vpop.permute.xlu0 %1074
  %1077 = vset.pattern.permute.xlu0 1
  %1078 = vperm.xlu0 %1077, %v64
  %v1079 = vpop.permute.xlu0 %1078
  %1081 = vset.pattern.permute.xlu0 1
  %1082 = vperm.xlu0 %1081, %v65
  %v1083 = vpop.permute.xlu0 %1082
  %1085 = vset.pattern.permute.xlu0 1
  %1086 = vperm.xlu0 %1085, %v66
  %v1087 = vpop.permute.xlu0 %1086
  %1089 = vset.pattern.permute.xlu0 1
  %1090 = vperm.xlu0 %1089, %v67
  %v1091 = vpop.permute.xlu0 %1090
  %1093 = vset.pattern.permute.xlu0 1
  %1094 = vperm.xlu0 %1093, %v68
  %v1095 = vpop.permute.xlu0 %1094
  %1097 = vset.pattern.permute.xlu0 1
  %1098 = vperm.xlu0 %1097, %v69
  %v1099 = vpop.permute.xlu0 %1098
  %1101 = vset.pattern.permute.xlu0 1
  %1102 = vperm.xlu0 %1101, %v70
  %v1103 = vpop.permute.xlu0 %1102
  %1105 = vset.pattern.permute.xlu0 1
  %1106 = vperm.xlu0 %1105, %v71
  %v1107 = vpop.permute.xlu0 %1106
  %1109 = vset.pattern.permute.xlu0 1
  %1110 = vperm.xlu0 %1109, %v72
  %v1111 = vpop.permute.xlu0 %1110
  %1113 = vset.pattern.permute.xlu0 1
  %1114 = vperm.xlu0 %1113, %v73
  %v1115 = vpop.permute.xlu0 %1114
  %1117 = vset.pattern.permute.xlu0 1
  %1118 = vperm.xlu0 %1117, %v74
  %v1119 = vpop.permute.xlu0 %1118
  %1121 = vset.pattern.permute.xlu0 1
  %1122 = vperm.xlu0 %1121, %v75
  %v1123 = vpop.permute.xlu0 %1122
  %1125 = vset.pattern.permute.xlu0 1
  %1126 = vperm.xlu0 %1125, %v76
  %v1127 = vpop.permute.xlu0 %1126
  %1129 = vset.pattern.permute.xlu0 1
  %1130 = vperm.xlu0 %1129, %v77
  %v1131 = vpop.permute.xlu0 %1130
  %1133 = vset.pattern.permute.xlu0 1
  %1134 = vperm.xlu0 %1133, %v78
  %v1135 = vpop.permute.xlu0 %1134
  %1137 = vset.pattern.permute.xlu0 1
  %1138 = vperm.xlu0 %1137, %v79
  %v1139 = vpop.permute.xlu0 %1138
  %1141 = vset.pattern.permute.xlu0 1
  %1142 = vperm.xlu0 %1141, %v80
  %v1143 = vpop.permute.xlu0 %1142
  %1145 = vset.pattern.permute.xlu0 1
  %1146 = vperm.xlu0 %1145, %v81
  %v1147 = vpop.permute.xlu0 %1146
  %1149 = vset.pattern.permute.xlu0 1
  %1150 = vperm.xlu0 %1149, %v82
  %v1151 = vpop.permute.xlu0 %1150
  %1153 = vset.pattern.permute.xlu0 1
  %1154 = vperm.xlu0 %1153, %v83
  %v1155 = vpop.permute.xlu0 %1154
  %1157 = vset.pattern.permute.xlu0 1
  %1158 = vperm.xlu0 %1157, %v84
  %v1159 = vpop.permute.xlu0 %1158
  %1161 = vset.pattern.permute.xlu0 1
  %1162 = vperm.xlu0 %1161, %v85
  %v1163 = vpop.permute.xlu0 %1162
  %1165 = vset.pattern.permute.xlu0 1
  %1166 = vperm.xlu0 %1165, %v86
  %v1167 = vpop.permute.xlu0 %1166
  %1169 = vset.pattern.permute.xlu0 1
  %1170 = vperm.xlu0 %1169, %v87
  %v1171 = vpop.permute.xlu0 %1170
  %1173 = vset.pattern.permute.xlu0 1
  %1174 = vperm.xlu0 %1173, %v88
  %v1175 = vpop.permute.xlu0 %1174
  %1177 = vset.pattern.permute.xlu0 1
  %1178 = vperm.xlu0 %1177, %v89
  %v1179 = vpop.permute.xlu0 %1178
  %1181 = vset.pattern.permute.xlu0 1
  %1182 = vperm.xlu0 %1181, %v90
  %v1183 = vpop.permute.xlu0 %1182
  %1185 = vset.pattern.permute.xlu0 1
  %1186 = vperm.xlu0 %1185, %v91
  %v1187 = vpop.permute.xlu0 %1186
  %1189 = vset.pattern.permute.xlu0 1
  %1190 = vperm.xlu0 %1189, %v92
  %v1191 = vpop.permute.xlu0 %1190
  %1193 = vset.pattern.permute.xlu0 1
  %1194 = vperm.xlu0 %1193, %v93
  %v1195 = vpop.permute.xlu0 %1194
  %1197 = vset.pattern.permute.xlu0 1
  %1198 = vperm.xlu0 %1197, %v94
  %v1199 = vpop.permute.xlu0 %1198
  %1201 = vset.pattern.permute.xlu0 1
  %1202 = vperm.xlu0 %1201, %v95
  %v1203 = vpop.permute.xlu0 %1202
  %1205 = vset.pattern.permute.xlu0 1
  %1206 = vperm.xlu0 %1205, %v96
  %v1207 = vpop.permute.xlu0 %1206
  %1209 = vset.pattern.permute.xlu0 1
  %1210 = vperm.xlu0 %1209, %v97
  %v1211 = vpop.permute.xlu0 %1210
  %1213 = vset.pattern.permute.xlu0 1
  %1214 = vperm.xlu0 %1213, %v98
  %v1215 = vpop.permute.xlu0 %1214
  %1217 = vset.pattern.permute.xlu0 1
  %1218 = vperm.xlu0 %1217, %v99
  %v1219 = vpop.permute.xlu0 %1218
  %1221 = vset.pattern.permute.xlu0 1
  %1222 = vperm.xlu0 %1221, %v100
  %v1223 = vpop.permute.xlu0 %1222
  %1225 = vset.pattern.permute.xlu0 1
  %1226 = vperm.xlu0 %1225, %v101
  %v1227 = vpop.permute.xlu0 %1226
  %1229 = vset.pattern.permute.xlu0 1
  %1230 = vperm.xlu0 %1229, %v102
  %v1231 = vpop.permute.xlu0 %1230
  %1233 = vset.pattern.permute.xlu0 1
  %1234 = vperm.xlu0 %1233, %v103
  %v1235 = vpop.permute.xlu0 %1234
  %1237 = vset.pattern.permute.xlu0 1
  %1238 = vperm.xlu0 %1237, %v104
  %v1239 = vpop.permute.xlu0 %1238
  %1241 = vset.pattern.permute.xlu0 1
  %1242 = vperm.xlu0 %1241, %v105
  %v1243 = vpop.permute.xlu0 %1242
  %1245 = vset.pattern.permute.xlu0 1
  %1246 = vperm.xlu0 %1245, %v106
  %v1247 = vpop.permute.xlu0 %1246
  %1249 = vset.pattern.permute.xlu0 1
  %1250 = vperm.xlu0 %1249, %v107
  %v1251 = vpop.permute.xlu0 %1250
  %1253 = vset.pattern.permute.xlu0 1
  %1254 = vperm.xlu0 %1253, %v108
  %v1255 = vpop.permute.xlu0 %1254
  %1257 = vset.pattern.permute.xlu0 1
  %1258 = vperm.xlu0 %1257, %v109
  %v1259 = vpop.permute.xlu0 %1258
  %1261 = vset.pattern.permute.xlu0 1
  %1262 = vperm.xlu0 %1261, %v110
  %v1263 = vpop.permute.xlu0 %1262
  %1265 = vset.pattern.permute.xlu0 1
  %1266 = vperm.xlu0 %1265, %v111
  %v1267 = vpop.permute.xlu0 %1266
  %1269 = vset.pattern.permute.xlu0 1
  %1270 = vperm.xlu0 %1269, %v112
  %v1271 = vpop.permute.xlu0 %1270
  %1273 = vset.pattern.permute.xlu0 1
  %1274 = vperm.xlu0 %1273, %v113
  %v1275 = vpop.permute.xlu0 %1274
  %1277 = vset.pattern.permute.xlu0 1
  %1278 = vperm.xlu0 %1277, %v114
  %v1279 = vpop.permute.xlu0 %1278
  %1281 = vset.pattern.permute.xlu0 1
  %1282 = vperm.xlu0 %1281, %v115
  %v1283 = vpop.permute.xlu0 %1282
  %1285 = vset.pattern.permute.xlu0 1
  %1286 = vperm.xlu0 %1285, %v116
  %v1287 = vpop.permute.xlu0 %1286
  %1289 = vset.pattern.permute.xlu0 1
  %1290 = vperm.xlu0 %1289, %v117
  %v1291 = vpop.permute.xlu0 %1290
  %1293 = vset.pattern.permute.xlu0 1
  %1294 = vperm.xlu0 %1293, %v118
  %v1295 = vpop.permute.xlu0 %1294
  %1297 = vset.pattern.permute.xlu0 1
  %1298 = vperm.xlu0 %1297, %v119
  %v1299 = vpop.permute.xlu0 %1298
  %1301 = vset.pattern.permute.xlu0 1
  %1302 = vperm.xlu0 %1301, %v120
  %v1303 = vpop.permute.xlu0 %1302
  %1305 = vset.pattern.permute.xlu0 1
  %1306 = vperm.xlu0 %1305, %v121
  %v1307 = vpop.permute.xlu0 %1306
  %1309 = vset.pattern.permute.xlu0 1
  %1310 = vperm.xlu0 %1309, %v122
  %v1311 = vpop.permute.xlu0 %1310
  %1313 = vset.pattern.permute.xlu0 1
  %1314 = vperm.xlu0 %1313, %v123
  %v1315 = vpop.permute.xlu0 %1314
  %1317 = vset.pattern.permute.xlu0 1
  %1318 = vperm.xlu0 %1317, %v124
  %v1319 = vpop.permute.xlu0 %1318
  %1321 = vset.pattern.permute.xlu0 1
  %1322 = vperm.xlu0 %1321, %v125
  %v1323 = vpop.permute.xlu0 %1322
  %1325 = vset.pattern.permute.xlu0 1
  %1326 = vperm.xlu0 %1325, %v126
  %v1327 = vpop.permute.xlu0 %1326
  %1329 = vset.pattern.permute.xlu0 1
  %1330 = vperm.xlu0 %1329, %v127
  %v1331 = vpop.permute.xlu0 %1330
  %1333 = vset.pattern.permute.xlu0 1
  %1334 = vperm.xlu0 %1333, %v128
  %v1335 = vpop.permute.xlu0 %1334
  %1337 = vset.pattern.permute.xlu0 1
  %1338 = vperm.xlu0 %1337, %v129
  %v1339 = vpop.permute.xlu0 %1338
  %1341 = vset.pattern.permute.xlu0 1
  %1342 = vperm.xlu0 %1341, %v130
  %v1343 = vpop.permute.xlu0 %1342
  %1345 = vset.pattern.permute.xlu0 1
  %1346 = vperm.xlu0 %1345, %v131
  %v1347 = vpop.permute.xlu0 %1346
  %1349 = vset.pattern.permute.xlu0 1
  %1350 = vperm.xlu0 %1349, %v132
  %v1351 = vpop.permute.xlu0 %1350
  %1353 = vset.pattern.permute.xlu0 1
  %1354 = vperm.xlu0 %1353, %v133
  %v1355 = vpop.permute.xlu0 %1354
  %1357 = vset.pattern.permute.xlu0 1
  %1358 = vperm.xlu0 %1357, %v134
  %v1359 = vpop.permute.xlu0 %1358
  %1361 = vset.pattern.permute.xlu0 1
  %1362 = vperm.xlu0 %1361, %v135
  %v1363 = vpop.permute.xlu0 %1362
  %1365 = vset.pattern.permute.xlu0 1
  %1366 = vperm.xlu0 %1365, %v136
  %v1367 = vpop.permute.xlu0 %1366
  %1369 = vset.pattern.permute.xlu0 1
  %1370 = vperm.xlu0 %1369, %v137
  %v1371 = vpop.permute.xlu0 %1370
  %1373 = vset.pattern.permute.xlu0 1
  %1374 = vperm.xlu0 %1373, %v138
  %v1375 = vpop.permute.xlu0 %1374
  %1377 = vset.pattern.permute.xlu0 1
  %1378 = vperm.xlu0 %1377, %v139
  %v1379 = vpop.permute.xlu0 %1378
  %1381 = vset.pattern.permute.xlu0 1
  %1382 = vperm.xlu0 %1381, %v140
  %v1383 = vpop.permute.xlu0 %1382
  %1385 = vset.pattern.permute.xlu0 1
  %1386 = vperm.xlu0 %1385, %v141
  %v1387 = vpop.permute.xlu0 %1386
  %1389 = vset.pattern.permute.xlu0 1
  %1390 = vperm.xlu0 %1389, %v142
  %v1391 = vpop.permute.xlu0 %1390
  %1393 = vset.pattern.permute.xlu0 1
  %1394 = vperm.xlu0 %1393, %v143
  %v1395 = vpop.permute.xlu0 %1394
  %1397 = vset.pattern.permute.xlu0 1
  %1398 = vperm.xlu0 %1397, %v144
  %v1399 = vpop.permute.xlu0 %1398
  %1401 = vset.pattern.permute.xlu0 1
  %1402 = vperm.xlu0 %1401, %v145
  %v1403 = vpop.permute.xlu0 %1402
  %1405 = vset.pattern.permute.xlu0 1
  %1406 = vperm.xlu0 %1405, %v146
  %v1407 = vpop.permute.xlu0 %1406
  %1409 = vset.pattern.permute.xlu0 1
  %1410 = vperm.xlu0 %1409, %v147
  %v1411 = vpop.permute.xlu0 %1410
  %1413 = vset.pattern.permute.xlu0 1
  %1414 = vperm.xlu0 %1413, %v148
  %v1415 = vpop.permute.xlu0 %1414
  %1417 = vset.pattern.permute.xlu0 1
  %1418 = vperm.xlu0 %1417, %v149
  %v1419 = vpop.permute.xlu0 %1418
  %1421 = vset.pattern.permute.xlu0 1
  %1422 = vperm.xlu0 %1421, %v150
  %v1423 = vpop.permute.xlu0 %1422
  %1425 = vset.pattern.permute.xlu0 1
  %1426 = vperm.xlu0 %1425, %v151
  %v1427 = vpop.permute.xlu0 %1426
  %1429 = vset.pattern.permute.xlu0 1
  %1430 = vperm.xlu0 %1429, %v152
  %v1431 = vpop.permute.xlu0 %1430
  %1433 = vset.pattern.permute.xlu0 1
  %1434 = vperm.xlu0 %1433, %v153
  %v1435 = vpop.permute.xlu0 %1434
  %1437 = vset.pattern.permute.xlu0 1
  %1438 = vperm.xlu0 %1437, %v154
  %v1439 = vpop.permute.xlu0 %1438
  %v1441 = vlaneseq
  %v1442 = vshrl.u32 %v1441, 7
  %v1443 = vsub.s32 1, %v1442
  %v1444 = vrot.slane %v156, %v1443
  %v1445 = vmul.f32 %v931, %v1444
  %v1446 = vmul.f32 %v935, %v1444
  %v1447 = vmul.f32 %v939, %v1444
  %v1448 = vmul.f32 %v943, %v1444
  %v1449 = vmul.f32 %v947, %v1444
  %v1450 = vmul.f32 %v951, %v1444
  %v1451 = vmul.f32 %v955, %v1444
  %v1452 = vmul.f32 %v959, %v1444
  %v1453 = vmul.f32 %v963, %v1444
  %v1454 = vmul.f32 %v967, %v1444
  %v1455 = vmul.f32 %v971, %v1444
  %v1456 = vmul.f32 %v975, %v1444
  %v1457 = vmul.f32 %v979, %v1444
  %v1458 = vmul.f32 %v983, %v1444
  %v1459 = vmul.f32 %v987, %v1444
  %v1460 = vmul.f32 %v991, %v1444
  %v1461 = vmul.f32 %v995, %v1444
  %v1462 = vmul.f32 %v999, %v1444
  %v1463 = vmul.f32 %v1003, %v1444
  %v1464 = vmul.f32 %v1007, %v1444
  %v1465 = vmul.f32 %v1011, %v1444
  %v1466 = vmul.f32 %v1015, %v1444
  %v1467 = vmul.f32 %v1019, %v1444
  %v1468 = vmul.f32 %v1023, %v1444
  %v1469 = vmul.f32 %v1027, %v1444
  %v1470 = vmul.f32 %v1031, %v1444
  %v1471 = vmul.f32 %v1035, %v1444
  %v1472 = vmul.f32 %v1039, %v1444
  %v1473 = vmul.f32 %v1043, %v1444
  %v1474 = vmul.f32 %v1047, %v1444
  %v1475 = vmul.f32 %v1051, %v1444
  %v1476 = vmul.f32 %v1055, %v1444
  %v1477 = vmul.f32 %v1059, %v1444
  %v1478 = vmul.f32 %v1063, %v1444
  %v1479 = vmul.f32 %v1067, %v1444
  %v1480 = vmul.f32 %v1071, %v1444
  %v1481 = vmul.f32 %v1075, %v1444
  %v1482 = vmul.f32 %v1079, %v1444
  %v1483 = vmul.f32 %v1083, %v1444
  %v1484 = vmul.f32 %v1087, %v1444
  %v1485 = vmul.f32 %v1091, %v1444
  %v1486 = vmul.f32 %v1095, %v1444
  %v1487 = vmul.f32 %v1099, %v1444
  %v1488 = vmul.f32 %v1103, %v1444
  %v1489 = vmul.f32 %v1107, %v1444
  %v1490 = vmul.f32 %v1111, %v1444
  %v1491 = vmul.f32 %v1115, %v1444
  %v1492 = vmul.f32 %v1119, %v1444
  %v1493 = vmul.f32 %v1123, %v1444
  %v1494 = vmul.f32 %v1127, %v1444
  %v1495 = vmul.f32 %v1131, %v1444
  %v1496 = vmul.f32 %v1135, %v1444
  %v1497 = vmul.f32 %v1139, %v1444
  %v1498 = vmul.f32 %v1143, %v1444
  %v1499 = vmul.f32 %v1147, %v1444
  %v1500 = vmul.f32 %v1151, %v1444
  %v1501 = vmul.f32 %v1155, %v1444
  %v1502 = vmul.f32 %v1159, %v1444
  %v1503 = vmul.f32 %v1163, %v1444
  %v1504 = vmul.f32 %v1167, %v1444
  %v1505 = vmul.f32 %v1171, %v1444
  %v1506 = vmul.f32 %v1175, %v1444
  %v1507 = vmul.f32 %v1179, %v1444
  %v1508 = vmul.f32 %v1183, %v1444
  %v1509 = vmul.f32 %v1187, %v1444
  %v1510 = vmul.f32 %v1191, %v1444
  %v1511 = vmul.f32 %v1195, %v1444
  %v1512 = vmul.f32 %v1199, %v1444
  %v1513 = vmul.f32 %v1203, %v1444
  %v1514 = vmul.f32 %v1207, %v1444
  %v1515 = vmul.f32 %v1211, %v1444
  %v1516 = vmul.f32 %v1215, %v1444
  %v1517 = vmul.f32 %v1219, %v1444
  %v1518 = vmul.f32 %v1223, %v1444
  %v1519 = vmul.f32 %v1227, %v1444
  %v1520 = vmul.f32 %v1231, %v1444
  %v1521 = vmul.f32 %v1235, %v1444
  %v1522 = vmul.f32 %v1239, %v1444
  %v1523 = vmul.f32 %v1243, %v1444
  %v1524 = vmul.f32 %v1247, %v1444
  %v1525 = vmul.f32 %v1251, %v1444
  %v1526 = vmul.f32 %v1255, %v1444
  %v1527 = vmul.f32 %v1259, %v1444
  %v1528 = vmul.f32 %v1263, %v1444
  %v1529 = vmul.f32 %v1267, %v1444
  %v1530 = vmul.f32 %v1271, %v1444
  %v1531 = vmul.f32 %v1275, %v1444
  %v1532 = vmul.f32 %v1279, %v1444
  %v1533 = vmul.f32 %v1283, %v1444
  %v1534 = vmul.f32 %v1287, %v1444
  %v1535 = vmul.f32 %v1291, %v1444
  %v1536 = vmul.f32 %v1295, %v1444
  %v1537 = vmul.f32 %v1299, %v1444
  %v1538 = vmul.f32 %v1303, %v1444
  %v1539 = vmul.f32 %v1307, %v1444
  %v1540 = vmul.f32 %v1311, %v1444
  %v1541 = vmul.f32 %v1315, %v1444
  %v1542 = vmul.f32 %v1319, %v1444
  %v1543 = vmul.f32 %v1323, %v1444
  %v1544 = vmul.f32 %v1327, %v1444
  %v1545 = vmul.f32 %v1331, %v1444
  %v1546 = vmul.f32 %v1335, %v1444
  %v1547 = vmul.f32 %v1339, %v1444
  %v1548 = vmul.f32 %v1343, %v1444
  %v1549 = vmul.f32 %v1347, %v1444
  %v1550 = vmul.f32 %v1351, %v1444
  %v1551 = vmul.f32 %v1355, %v1444
  %v1552 = vmul.f32 %v1359, %v1444
  %v1553 = vmul.f32 %v1363, %v1444
  %v1554 = vmul.f32 %v1367, %v1444
  %v1555 = vmul.f32 %v1371, %v1444
  %v1556 = vmul.f32 %v1375, %v1444
  %v1557 = vmul.f32 %v1379, %v1444
  %v1558 = vmul.f32 %v1383, %v1444
  %v1559 = vmul.f32 %v1387, %v1444
  %v1560 = vmul.f32 %v1391, %v1444
  %v1561 = vmul.f32 %v1395, %v1444
  %v1562 = vmul.f32 %v1399, %v1444
  %v1563 = vmul.f32 %v1403, %v1444
  %v1564 = vmul.f32 %v1407, %v1444
  %v1565 = vmul.f32 %v1411, %v1444
  %v1566 = vmul.f32 %v1415, %v1444
  %v1567 = vmul.f32 %v1419, %v1444
  %v1568 = vmul.f32 %v1423, %v1444
  %v1569 = vmul.f32 %v1427, %v1444
  %v1570 = vmul.f32 %v1431, %v1444
  %v1571 = vmul.f32 %v1435, %v1444
  %v1572 = vmul.f32 %v1439, %v1444
  %v1573 = vadd.f32 %v801, %v1445
  %v1574 = vadd.f32 %v802, %v1446
  %v1575 = vadd.f32 %v803, %v1447
  %v1576 = vadd.f32 %v804, %v1448
  %v1577 = vadd.f32 %v805, %v1449
  %v1578 = vadd.f32 %v806, %v1450
  %v1579 = vadd.f32 %v807, %v1451
  %v1580 = vadd.f32 %v808, %v1452
  %v1581 = vadd.f32 %v809, %v1453
  %v1582 = vadd.f32 %v810, %v1454
  %v1583 = vadd.f32 %v811, %v1455
  %v1584 = vadd.f32 %v812, %v1456
  %v1585 = vadd.f32 %v813, %v1457
  %v1586 = vadd.f32 %v814, %v1458
  %v1587 = vadd.f32 %v815, %v1459
  %v1588 = vadd.f32 %v816, %v1460
  %v1589 = vadd.f32 %v817, %v1461
  %v1590 = vadd.f32 %v818, %v1462
  %v1591 = vadd.f32 %v819, %v1463
  %v1592 = vadd.f32 %v820, %v1464
  %v1593 = vadd.f32 %v821, %v1465
  %v1594 = vadd.f32 %v822, %v1466
  %v1595 = vadd.f32 %v823, %v1467
  %v1596 = vadd.f32 %v824, %v1468
  %v1597 = vadd.f32 %v825, %v1469
  %v1598 = vadd.f32 %v826, %v1470
  %v1599 = vadd.f32 %v827, %v1471
  %v1600 = vadd.f32 %v828, %v1472
  %v1601 = vadd.f32 %v829, %v1473
  %v1602 = vadd.f32 %v830, %v1474
  %v1603 = vadd.f32 %v831, %v1475
  %v1604 = vadd.f32 %v832, %v1476
  %v1605 = vadd.f32 %v833, %v1477
  %v1606 = vadd.f32 %v834, %v1478
  %v1607 = vadd.f32 %v835, %v1479
  %v1608 = vadd.f32 %v836, %v1480
  %v1609 = vadd.f32 %v837, %v1481
  %v1610 = vadd.f32 %v838, %v1482
  %v1611 = vadd.f32 %v839, %v1483
  %v1612 = vadd.f32 %v840, %v1484
  %v1613 = vadd.f32 %v841, %v1485
  %v1614 = vadd.f32 %v842, %v1486
  %v1615 = vadd.f32 %v843, %v1487
  %v1616 = vadd.f32 %v844, %v1488
  %v1617 = vadd.f32 %v845, %v1489
  %v1618 = vadd.f32 %v846, %v1490
  %v1619 = vadd.f32 %v847, %v1491
  %v1620 = vadd.f32 %v848, %v1492
  %v1621 = vadd.f32 %v849, %v1493
  %v1622 = vadd.f32 %v850, %v1494
  %v1623 = vadd.f32 %v851, %v1495
  %v1624 = vadd.f32 %v852, %v1496
  %v1625 = vadd.f32 %v853, %v1497
  %v1626 = vadd.f32 %v854, %v1498
  %v1627 = vadd.f32 %v855, %v1499
  %v1628 = vadd.f32 %v856, %v1500
  %v1629 = vadd.f32 %v857, %v1501
  %v1630 = vadd.f32 %v858, %v1502
  %v1631 = vadd.f32 %v859, %v1503
  %v1632 = vadd.f32 %v860, %v1504
  %v1633 = vadd.f32 %v861, %v1505
  %v1634 = vadd.f32 %v862, %v1506
  %v1635 = vadd.f32 %v863, %v1507
  %v1636 = vadd.f32 %v864, %v1508
  %v1637 = vadd.f32 %v865, %v1509
  %v1638 = vadd.f32 %v866, %v1510
  %v1639 = vadd.f32 %v867, %v1511
  %v1640 = vadd.f32 %v868, %v1512
  %v1641 = vadd.f32 %v869, %v1513
  %v1642 = vadd.f32 %v870, %v1514
  %v1643 = vadd.f32 %v871, %v1515
  %v1644 = vadd.f32 %v872, %v1516
  %v1645 = vadd.f32 %v873, %v1517
  %v1646 = vadd.f32 %v874, %v1518
  %v1647 = vadd.f32 %v875, %v1519
  %v1648 = vadd.f32 %v876, %v1520
  %v1649 = vadd.f32 %v877, %v1521
  %v1650 = vadd.f32 %v878, %v1522
  %v1651 = vadd.f32 %v879, %v1523
  %v1652 = vadd.f32 %v880, %v1524
  %v1653 = vadd.f32 %v881, %v1525
  %v1654 = vadd.f32 %v882, %v1526
  %v1655 = vadd.f32 %v883, %v1527
  %v1656 = vadd.f32 %v884, %v1528
  %v1657 = vadd.f32 %v885, %v1529
  %v1658 = vadd.f32 %v886, %v1530
  %v1659 = vadd.f32 %v887, %v1531
  %v1660 = vadd.f32 %v888, %v1532
  %v1661 = vadd.f32 %v889, %v1533
  %v1662 = vadd.f32 %v890, %v1534
  %v1663 = vadd.f32 %v891, %v1535
  %v1664 = vadd.f32 %v892, %v1536
  %v1665 = vadd.f32 %v893, %v1537
  %v1666 = vadd.f32 %v894, %v1538
  %v1667 = vadd.f32 %v895, %v1539
  %v1668 = vadd.f32 %v896, %v1540
  %v1669 = vadd.f32 %v897, %v1541
  %v1670 = vadd.f32 %v898, %v1542
  %v1671 = vadd.f32 %v899, %v1543
  %v1672 = vadd.f32 %v900, %v1544
  %v1673 = vadd.f32 %v901, %v1545
  %v1674 = vadd.f32 %v902, %v1546
  %v1675 = vadd.f32 %v903, %v1547
  %v1676 = vadd.f32 %v904, %v1548
  %v1677 = vadd.f32 %v905, %v1549
  %v1678 = vadd.f32 %v906, %v1550
  %v1679 = vadd.f32 %v907, %v1551
  %v1680 = vadd.f32 %v908, %v1552
  %v1681 = vadd.f32 %v909, %v1553
  %v1682 = vadd.f32 %v910, %v1554
  %v1683 = vadd.f32 %v911, %v1555
  %v1684 = vadd.f32 %v912, %v1556
  %v1685 = vadd.f32 %v913, %v1557
  %v1686 = vadd.f32 %v914, %v1558
  %v1687 = vadd.f32 %v915, %v1559
  %v1688 = vadd.f32 %v916, %v1560
  %v1689 = vadd.f32 %v917, %v1561
  %v1690 = vadd.f32 %v918, %v1562
  %v1691 = vadd.f32 %v919, %v1563
  %v1692 = vadd.f32 %v920, %v1564
  %v1693 = vadd.f32 %v921, %v1565
  %v1694 = vadd.f32 %v922, %v1566
  %v1695 = vadd.f32 %v923, %v1567
  %v1696 = vadd.f32 %v924, %v1568
  %v1697 = vadd.f32 %v925, %v1569
  %v1698 = vadd.f32 %v926, %v1570
  %v1699 = vadd.f32 %v927, %v1571
  %v1700 = vadd.f32 %v928, %v1572
  %v1701 = vld [vmem:[%s1] sm:$0x2]
  %v1702 = vunpack.c.l.bf16 %v1701
  %1703 = vset.pattern.permute.xlu0 2
  %1704 = vperm.xlu0 %1703, %v27
  %v1705 = vpop.permute.xlu0 %1704
  %1707 = vset.pattern.permute.xlu0 2
  %1708 = vperm.xlu0 %1707, %v28
  %v1709 = vpop.permute.xlu0 %1708
  %1711 = vset.pattern.permute.xlu0 2
  %1712 = vperm.xlu0 %1711, %v29
  %v1713 = vpop.permute.xlu0 %1712
  %1715 = vset.pattern.permute.xlu0 2
  %1716 = vperm.xlu0 %1715, %v30
  %v1717 = vpop.permute.xlu0 %1716
  %1719 = vset.pattern.permute.xlu0 2
  %1720 = vperm.xlu0 %1719, %v31
  %v1721 = vpop.permute.xlu0 %1720
  %1723 = vset.pattern.permute.xlu0 2
  %1724 = vperm.xlu0 %1723, %v32
  %v1725 = vpop.permute.xlu0 %1724
  %1727 = vset.pattern.permute.xlu0 2
  %1728 = vperm.xlu0 %1727, %v33
  %v1729 = vpop.permute.xlu0 %1728
  %1731 = vset.pattern.permute.xlu0 2
  %1732 = vperm.xlu0 %1731, %v34
  %v1733 = vpop.permute.xlu0 %1732
  %1735 = vset.pattern.permute.xlu0 2
  %1736 = vperm.xlu0 %1735, %v35
  %v1737 = vpop.permute.xlu0 %1736
  %1739 = vset.pattern.permute.xlu0 2
  %1740 = vperm.xlu0 %1739, %v36
  %v1741 = vpop.permute.xlu0 %1740
  %1743 = vset.pattern.permute.xlu0 2
  %1744 = vperm.xlu0 %1743, %v37
  %v1745 = vpop.permute.xlu0 %1744
  %1747 = vset.pattern.permute.xlu0 2
  %1748 = vperm.xlu0 %1747, %v38
  %v1749 = vpop.permute.xlu0 %1748
  %1751 = vset.pattern.permute.xlu0 2
  %1752 = vperm.xlu0 %1751, %v39
  %v1753 = vpop.permute.xlu0 %1752
  %1755 = vset.pattern.permute.xlu0 2
  %1756 = vperm.xlu0 %1755, %v40
  %v1757 = vpop.permute.xlu0 %1756
  %1759 = vset.pattern.permute.xlu0 2
  %1760 = vperm.xlu0 %1759, %v41
  %v1761 = vpop.permute.xlu0 %1760
  %1763 = vset.pattern.permute.xlu0 2
  %1764 = vperm.xlu0 %1763, %v42
  %v1765 = vpop.permute.xlu0 %1764
  %1767 = vset.pattern.permute.xlu0 2
  %1768 = vperm.xlu0 %1767, %v43
  %v1769 = vpop.permute.xlu0 %1768
  %1771 = vset.pattern.permute.xlu0 2
  %1772 = vperm.xlu0 %1771, %v44
  %v1773 = vpop.permute.xlu0 %1772
  %1775 = vset.pattern.permute.xlu0 2
  %1776 = vperm.xlu0 %1775, %v45
  %v1777 = vpop.permute.xlu0 %1776
  %1779 = vset.pattern.permute.xlu0 2
  %1780 = vperm.xlu0 %1779, %v46
  %v1781 = vpop.permute.xlu0 %1780
  %1783 = vset.pattern.permute.xlu0 2
  %1784 = vperm.xlu0 %1783, %v47
  %v1785 = vpop.permute.xlu0 %1784
  %1787 = vset.pattern.permute.xlu0 2
  %1788 = vperm.xlu0 %1787, %v48
  %v1789 = vpop.permute.xlu0 %1788
  %1791 = vset.pattern.permute.xlu0 2
  %1792 = vperm.xlu0 %1791, %v49
  %v1793 = vpop.permute.xlu0 %1792
  %1795 = vset.pattern.permute.xlu0 2
  %1796 = vperm.xlu0 %1795, %v50
  %v1797 = vpop.permute.xlu0 %1796
  %1799 = vset.pattern.permute.xlu0 2
  %1800 = vperm.xlu0 %1799, %v51
  %v1801 = vpop.permute.xlu0 %1800
  %1803 = vset.pattern.permute.xlu0 2
  %1804 = vperm.xlu0 %1803, %v52
  %v1805 = vpop.permute.xlu0 %1804
  %1807 = vset.pattern.permute.xlu0 2
  %1808 = vperm.xlu0 %1807, %v53
  %v1809 = vpop.permute.xlu0 %1808
  %1811 = vset.pattern.permute.xlu0 2
  %1812 = vperm.xlu0 %1811, %v54
  %v1813 = vpop.permute.xlu0 %1812
  %1815 = vset.pattern.permute.xlu0 2
  %1816 = vperm.xlu0 %1815, %v55
  %v1817 = vpop.permute.xlu0 %1816
  %1819 = vset.pattern.permute.xlu0 2
  %1820 = vperm.xlu0 %1819, %v56
  %v1821 = vpop.permute.xlu0 %1820
  %1823 = vset.pattern.permute.xlu0 2
  %1824 = vperm.xlu0 %1823, %v57
  %v1825 = vpop.permute.xlu0 %1824
  %1827 = vset.pattern.permute.xlu0 2
  %1828 = vperm.xlu0 %1827, %v58
  %v1829 = vpop.permute.xlu0 %1828
  %1831 = vset.pattern.permute.xlu0 2
  %1832 = vperm.xlu0 %1831, %v59
  %v1833 = vpop.permute.xlu0 %1832
  %1835 = vset.pattern.permute.xlu0 2
  %1836 = vperm.xlu0 %1835, %v60
  %v1837 = vpop.permute.xlu0 %1836
  %1839 = vset.pattern.permute.xlu0 2
  %1840 = vperm.xlu0 %1839, %v61
  %v1841 = vpop.permute.xlu0 %1840
  %1843 = vset.pattern.permute.xlu0 2
  %1844 = vperm.xlu0 %1843, %v62
  %v1845 = vpop.permute.xlu0 %1844
  %1847 = vset.pattern.permute.xlu0 2
  %1848 = vperm.xlu0 %1847, %v63
  %v1849 = vpop.permute.xlu0 %1848
  %1851 = vset.pattern.permute.xlu0 2
  %1852 = vperm.xlu0 %1851, %v64
  %v1853 = vpop.permute.xlu0 %1852
  %1855 = vset.pattern.permute.xlu0 2
  %1856 = vperm.xlu0 %1855, %v65
  %v1857 = vpop.permute.xlu0 %1856
  %1859 = vset.pattern.permute.xlu0 2
  %1860 = vperm.xlu0 %1859, %v66
  %v1861 = vpop.permute.xlu0 %1860
  %1863 = vset.pattern.permute.xlu0 2
  %1864 = vperm.xlu0 %1863, %v67
  %v1865 = vpop.permute.xlu0 %1864
  %1867 = vset.pattern.permute.xlu0 2
  %1868 = vperm.xlu0 %1867, %v68
  %v1869 = vpop.permute.xlu0 %1868
  %1871 = vset.pattern.permute.xlu0 2
  %1872 = vperm.xlu0 %1871, %v69
  %v1873 = vpop.permute.xlu0 %1872
  %1875 = vset.pattern.permute.xlu0 2
  %1876 = vperm.xlu0 %1875, %v70
  %v1877 = vpop.permute.xlu0 %1876
  %1879 = vset.pattern.permute.xlu0 2
  %1880 = vperm.xlu0 %1879, %v71
  %v1881 = vpop.permute.xlu0 %1880
  %1883 = vset.pattern.permute.xlu0 2
  %1884 = vperm.xlu0 %1883, %v72
  %v1885 = vpop.permute.xlu0 %1884
  %1887 = vset.pattern.permute.xlu0 2
  %1888 = vperm.xlu0 %1887, %v73
  %v1889 = vpop.permute.xlu0 %1888
  %1891 = vset.pattern.permute.xlu0 2
  %1892 = vperm.xlu0 %1891, %v74
  %v1893 = vpop.permute.xlu0 %1892
  %1895 = vset.pattern.permute.xlu0 2
  %1896 = vperm.xlu0 %1895, %v75
  %v1897 = vpop.permute.xlu0 %1896
  %1899 = vset.pattern.permute.xlu0 2
  %1900 = vperm.xlu0 %1899, %v76
  %v1901 = vpop.permute.xlu0 %1900
  %1903 = vset.pattern.permute.xlu0 2
  %1904 = vperm.xlu0 %1903, %v77
  %v1905 = vpop.permute.xlu0 %1904
  %1907 = vset.pattern.permute.xlu0 2
  %1908 = vperm.xlu0 %1907, %v78
  %v1909 = vpop.permute.xlu0 %1908
  %1911 = vset.pattern.permute.xlu0 2
  %1912 = vperm.xlu0 %1911, %v79
  %v1913 = vpop.permute.xlu0 %1912
  %1915 = vset.pattern.permute.xlu0 2
  %1916 = vperm.xlu0 %1915, %v80
  %v1917 = vpop.permute.xlu0 %1916
  %1919 = vset.pattern.permute.xlu0 2
  %1920 = vperm.xlu0 %1919, %v81
  %v1921 = vpop.permute.xlu0 %1920
  %1923 = vset.pattern.permute.xlu0 2
  %1924 = vperm.xlu0 %1923, %v82
  %v1925 = vpop.permute.xlu0 %1924
  %1927 = vset.pattern.permute.xlu0 2
  %1928 = vperm.xlu0 %1927, %v83
  %v1929 = vpop.permute.xlu0 %1928
  %1931 = vset.pattern.permute.xlu0 2
  %1932 = vperm.xlu0 %1931, %v84
  %v1933 = vpop.permute.xlu0 %1932
  %1935 = vset.pattern.permute.xlu0 2
  %1936 = vperm.xlu0 %1935, %v85
  %v1937 = vpop.permute.xlu0 %1936
  %1939 = vset.pattern.permute.xlu0 2
  %1940 = vperm.xlu0 %1939, %v86
  %v1941 = vpop.permute.xlu0 %1940
  %1943 = vset.pattern.permute.xlu0 2
  %1944 = vperm.xlu0 %1943, %v87
  %v1945 = vpop.permute.xlu0 %1944
  %1947 = vset.pattern.permute.xlu0 2
  %1948 = vperm.xlu0 %1947, %v88
  %v1949 = vpop.permute.xlu0 %1948
  %1951 = vset.pattern.permute.xlu0 2
  %1952 = vperm.xlu0 %1951, %v89
  %v1953 = vpop.permute.xlu0 %1952
  %1955 = vset.pattern.permute.xlu0 2
  %1956 = vperm.xlu0 %1955, %v90
  %v1957 = vpop.permute.xlu0 %1956
  %1959 = vset.pattern.permute.xlu0 2
  %1960 = vperm.xlu0 %1959, %v91
  %v1961 = vpop.permute.xlu0 %1960
  %1963 = vset.pattern.permute.xlu0 2
  %1964 = vperm.xlu0 %1963, %v92
  %v1965 = vpop.permute.xlu0 %1964
  %1967 = vset.pattern.permute.xlu0 2
  %1968 = vperm.xlu0 %1967, %v93
  %v1969 = vpop.permute.xlu0 %1968
  %1971 = vset.pattern.permute.xlu0 2
  %1972 = vperm.xlu0 %1971, %v94
  %v1973 = vpop.permute.xlu0 %1972
  %1975 = vset.pattern.permute.xlu0 2
  %1976 = vperm.xlu0 %1975, %v95
  %v1977 = vpop.permute.xlu0 %1976
  %1979 = vset.pattern.permute.xlu0 2
  %1980 = vperm.xlu0 %1979, %v96
  %v1981 = vpop.permute.xlu0 %1980
  %1983 = vset.pattern.permute.xlu0 2
  %1984 = vperm.xlu0 %1983, %v97
  %v1985 = vpop.permute.xlu0 %1984
  %1987 = vset.pattern.permute.xlu0 2
  %1988 = vperm.xlu0 %1987, %v98
  %v1989 = vpop.permute.xlu0 %1988
  %1991 = vset.pattern.permute.xlu0 2
  %1992 = vperm.xlu0 %1991, %v99
  %v1993 = vpop.permute.xlu0 %1992
  %1995 = vset.pattern.permute.xlu0 2
  %1996 = vperm.xlu0 %1995, %v100
  %v1997 = vpop.permute.xlu0 %1996
  %1999 = vset.pattern.permute.xlu0 2
  %2000 = vperm.xlu0 %1999, %v101
  %v2001 = vpop.permute.xlu0 %2000
  %2003 = vset.pattern.permute.xlu0 2
  %2004 = vperm.xlu0 %2003, %v102
  %v2005 = vpop.permute.xlu0 %2004
  %2007 = vset.pattern.permute.xlu0 2
  %2008 = vperm.xlu0 %2007, %v103
  %v2009 = vpop.permute.xlu0 %2008
  %2011 = vset.pattern.permute.xlu0 2
  %2012 = vperm.xlu0 %2011, %v104
  %v2013 = vpop.permute.xlu0 %2012
  %2015 = vset.pattern.permute.xlu0 2
  %2016 = vperm.xlu0 %2015, %v105
  %v2017 = vpop.permute.xlu0 %2016
  %2019 = vset.pattern.permute.xlu0 2
  %2020 = vperm.xlu0 %2019, %v106
  %v2021 = vpop.permute.xlu0 %2020
  %2023 = vset.pattern.permute.xlu0 2
  %2024 = vperm.xlu0 %2023, %v107
  %v2025 = vpop.permute.xlu0 %2024
  %2027 = vset.pattern.permute.xlu0 2
  %2028 = vperm.xlu0 %2027, %v108
  %v2029 = vpop.permute.xlu0 %2028
  %2031 = vset.pattern.permute.xlu0 2
  %2032 = vperm.xlu0 %2031, %v109
  %v2033 = vpop.permute.xlu0 %2032
  %2035 = vset.pattern.permute.xlu0 2
  %2036 = vperm.xlu0 %2035, %v110
  %v2037 = vpop.permute.xlu0 %2036
  %2039 = vset.pattern.permute.xlu0 2
  %2040 = vperm.xlu0 %2039, %v111
  %v2041 = vpop.permute.xlu0 %2040
  %2043 = vset.pattern.permute.xlu0 2
  %2044 = vperm.xlu0 %2043, %v112
  %v2045 = vpop.permute.xlu0 %2044
  %2047 = vset.pattern.permute.xlu0 2
  %2048 = vperm.xlu0 %2047, %v113
  %v2049 = vpop.permute.xlu0 %2048
  %2051 = vset.pattern.permute.xlu0 2
  %2052 = vperm.xlu0 %2051, %v114
  %v2053 = vpop.permute.xlu0 %2052
  %2055 = vset.pattern.permute.xlu0 2
  %2056 = vperm.xlu0 %2055, %v115
  %v2057 = vpop.permute.xlu0 %2056
  %2059 = vset.pattern.permute.xlu0 2
  %2060 = vperm.xlu0 %2059, %v116
  %v2061 = vpop.permute.xlu0 %2060
  %2063 = vset.pattern.permute.xlu0 2
  %2064 = vperm.xlu0 %2063, %v117
  %v2065 = vpop.permute.xlu0 %2064
  %2067 = vset.pattern.permute.xlu0 2
  %2068 = vperm.xlu0 %2067, %v118
  %v2069 = vpop.permute.xlu0 %2068
  %2071 = vset.pattern.permute.xlu0 2
  %2072 = vperm.xlu0 %2071, %v119
  %v2073 = vpop.permute.xlu0 %2072
  %2075 = vset.pattern.permute.xlu0 2
  %2076 = vperm.xlu0 %2075, %v120
  %v2077 = vpop.permute.xlu0 %2076
  %2079 = vset.pattern.permute.xlu0 2
  %2080 = vperm.xlu0 %2079, %v121
  %v2081 = vpop.permute.xlu0 %2080
  %2083 = vset.pattern.permute.xlu0 2
  %2084 = vperm.xlu0 %2083, %v122
  %v2085 = vpop.permute.xlu0 %2084
  %2087 = vset.pattern.permute.xlu0 2
  %2088 = vperm.xlu0 %2087, %v123
  %v2089 = vpop.permute.xlu0 %2088
  %2091 = vset.pattern.permute.xlu0 2
  %2092 = vperm.xlu0 %2091, %v124
  %v2093 = vpop.permute.xlu0 %2092
  %2095 = vset.pattern.permute.xlu0 2
  %2096 = vperm.xlu0 %2095, %v125
  %v2097 = vpop.permute.xlu0 %2096
  %2099 = vset.pattern.permute.xlu0 2
  %2100 = vperm.xlu0 %2099, %v126
  %v2101 = vpop.permute.xlu0 %2100
  %2103 = vset.pattern.permute.xlu0 2
  %2104 = vperm.xlu0 %2103, %v127
  %v2105 = vpop.permute.xlu0 %2104
  %2107 = vset.pattern.permute.xlu0 2
  %2108 = vperm.xlu0 %2107, %v128
  %v2109 = vpop.permute.xlu0 %2108
  %2111 = vset.pattern.permute.xlu0 2
  %2112 = vperm.xlu0 %2111, %v129
  %v2113 = vpop.permute.xlu0 %2112
  %2115 = vset.pattern.permute.xlu0 2
  %2116 = vperm.xlu0 %2115, %v130
  %v2117 = vpop.permute.xlu0 %2116
  %2119 = vset.pattern.permute.xlu0 2
  %2120 = vperm.xlu0 %2119, %v131
  %v2121 = vpop.permute.xlu0 %2120
  %2123 = vset.pattern.permute.xlu0 2
  %2124 = vperm.xlu0 %2123, %v132
  %v2125 = vpop.permute.xlu0 %2124
  %2127 = vset.pattern.permute.xlu0 2
  %2128 = vperm.xlu0 %2127, %v133
  %v2129 = vpop.permute.xlu0 %2128
  %2131 = vset.pattern.permute.xlu0 2
  %2132 = vperm.xlu0 %2131, %v134
  %v2133 = vpop.permute.xlu0 %2132
  %2135 = vset.pattern.permute.xlu0 2
  %2136 = vperm.xlu0 %2135, %v135
  %v2137 = vpop.permute.xlu0 %2136
  %2139 = vset.pattern.permute.xlu0 2
  %2140 = vperm.xlu0 %2139, %v136
  %v2141 = vpop.permute.xlu0 %2140
  %2143 = vset.pattern.permute.xlu0 2
  %2144 = vperm.xlu0 %2143, %v137
  %v2145 = vpop.permute.xlu0 %2144
  %2147 = vset.pattern.permute.xlu0 2
  %2148 = vperm.xlu0 %2147, %v138
  %v2149 = vpop.permute.xlu0 %2148
  %2151 = vset.pattern.permute.xlu0 2
  %2152 = vperm.xlu0 %2151, %v139
  %v2153 = vpop.permute.xlu0 %2152
  %2155 = vset.pattern.permute.xlu0 2
  %2156 = vperm.xlu0 %2155, %v140
  %v2157 = vpop.permute.xlu0 %2156
  %2159 = vset.pattern.permute.xlu0 2
  %2160 = vperm.xlu0 %2159, %v141
  %v2161 = vpop.permute.xlu0 %2160
  %2163 = vset.pattern.permute.xlu0 2
  %2164 = vperm.xlu0 %2163, %v142
  %v2165 = vpop.permute.xlu0 %2164
  %2167 = vset.pattern.permute.xlu0 2
  %2168 = vperm.xlu0 %2167, %v143
  %v2169 = vpop.permute.xlu0 %2168
  %2171 = vset.pattern.permute.xlu0 2
  %2172 = vperm.xlu0 %2171, %v144
  %v2173 = vpop.permute.xlu0 %2172
  %2175 = vset.pattern.permute.xlu0 2
  %2176 = vperm.xlu0 %2175, %v145
  %v2177 = vpop.permute.xlu0 %2176
  %2179 = vset.pattern.permute.xlu0 2
  %2180 = vperm.xlu0 %2179, %v146
  %v2181 = vpop.permute.xlu0 %2180
  %2183 = vset.pattern.permute.xlu0 2
  %2184 = vperm.xlu0 %2183, %v147
  %v2185 = vpop.permute.xlu0 %2184
  %2187 = vset.pattern.permute.xlu0 2
  %2188 = vperm.xlu0 %2187, %v148
  %v2189 = vpop.permute.xlu0 %2188
  %2191 = vset.pattern.permute.xlu0 2
  %2192 = vperm.xlu0 %2191, %v149
  %v2193 = vpop.permute.xlu0 %2192
  %2195 = vset.pattern.permute.xlu0 2
  %2196 = vperm.xlu0 %2195, %v150
  %v2197 = vpop.permute.xlu0 %2196
  %2199 = vset.pattern.permute.xlu0 2
  %2200 = vperm.xlu0 %2199, %v151
  %v2201 = vpop.permute.xlu0 %2200
  %2203 = vset.pattern.permute.xlu0 2
  %2204 = vperm.xlu0 %2203, %v152
  %v2205 = vpop.permute.xlu0 %2204
  %2207 = vset.pattern.permute.xlu0 2
  %2208 = vperm.xlu0 %2207, %v153
  %v2209 = vpop.permute.xlu0 %2208
  %2211 = vset.pattern.permute.xlu0 2
  %2212 = vperm.xlu0 %2211, %v154
  %v2213 = vpop.permute.xlu0 %2212
  %v2215 = vlaneseq
  %v2216 = vshrl.u32 %v2215, 7
  %v2217 = vsub.s32 2, %v2216
  %v2218 = vrot.slane %v1702, %v2217
  %v2219 = vmul.f32 %v1705, %v2218
  %v2220 = vmul.f32 %v1709, %v2218
  %v2221 = vmul.f32 %v1713, %v2218
  %v2222 = vmul.f32 %v1717, %v2218
  %v2223 = vmul.f32 %v1721, %v2218
  %v2224 = vmul.f32 %v1725, %v2218
  %v2225 = vmul.f32 %v1729, %v2218
  %v2226 = vmul.f32 %v1733, %v2218
  %v2227 = vmul.f32 %v1737, %v2218
  %v2228 = vmul.f32 %v1741, %v2218
  %v2229 = vmul.f32 %v1745, %v2218
  %v2230 = vmul.f32 %v1749, %v2218
  %v2231 = vmul.f32 %v1753, %v2218
  %v2232 = vmul.f32 %v1757, %v2218
  %v2233 = vmul.f32 %v1761, %v2218
  %v2234 = vmul.f32 %v1765, %v2218
  %v2235 = vmul.f32 %v1769, %v2218
  %v2236 = vmul.f32 %v1773, %v2218
  %v2237 = vmul.f32 %v1777, %v2218
  %v2238 = vmul.f32 %v1781, %v2218
  %v2239 = vmul.f32 %v1785, %v2218
  %v2240 = vmul.f32 %v1789, %v2218
  %v2241 = vmul.f32 %v1793, %v2218
  %v2242 = vmul.f32 %v1797, %v2218
  %v2243 = vmul.f32 %v1801, %v2218
  %v2244 = vmul.f32 %v1805, %v2218
  %v2245 = vmul.f32 %v1809, %v2218
  %v2246 = vmul.f32 %v1813, %v2218
  %v2247 = vmul.f32 %v1817, %v2218
  %v2248 = vmul.f32 %v1821, %v2218
  %v2249 = vmul.f32 %v1825, %v2218
  %v2250 = vmul.f32 %v1829, %v2218
  %v2251 = vmul.f32 %v1833, %v2218
  %v2252 = vmul.f32 %v1837, %v2218
  %v2253 = vmul.f32 %v1841, %v2218
  %v2254 = vmul.f32 %v1845, %v2218
  %v2255 = vmul.f32 %v1849, %v2218
  %v2256 = vmul.f32 %v1853, %v2218
  %v2257 = vmul.f32 %v1857, %v2218
  %v2258 = vmul.f32 %v1861, %v2218
  %v2259 = vmul.f32 %v1865, %v2218
  %v2260 = vmul.f32 %v1869, %v2218
  %v2261 = vmul.f32 %v1873, %v2218
  %v2262 = vmul.f32 %v1877, %v2218
  %v2263 = vmul.f32 %v1881, %v2218
  %v2264 = vmul.f32 %v1885, %v2218
  %v2265 = vmul.f32 %v1889, %v2218
  %v2266 = vmul.f32 %v1893, %v2218
  %v2267 = vmul.f32 %v1897, %v2218
  %v2268 = vmul.f32 %v1901, %v2218
  %v2269 = vmul.f32 %v1905, %v2218
  %v2270 = vmul.f32 %v1909, %v2218
  %v2271 = vmul.f32 %v1913, %v2218
  %v2272 = vmul.f32 %v1917, %v2218
  %v2273 = vmul.f32 %v1921, %v2218
  %v2274 = vmul.f32 %v1925, %v2218
  %v2275 = vmul.f32 %v1929, %v2218
  %v2276 = vmul.f32 %v1933, %v2218
  %v2277 = vmul.f32 %v1937, %v2218
  %v2278 = vmul.f32 %v1941, %v2218
  %v2279 = vmul.f32 %v1945, %v2218
  %v2280 = vmul.f32 %v1949, %v2218
  %v2281 = vmul.f32 %v1953, %v2218
  %v2282 = vmul.f32 %v1957, %v2218
  %v2283 = vmul.f32 %v1961, %v2218
  %v2284 = vmul.f32 %v1965, %v2218
  %v2285 = vmul.f32 %v1969, %v2218
  %v2286 = vmul.f32 %v1973, %v2218
  %v2287 = vmul.f32 %v1977, %v2218
  %v2288 = vmul.f32 %v1981, %v2218
  %v2289 = vmul.f32 %v1985, %v2218
  %v2290 = vmul.f32 %v1989, %v2218
  %v2291 = vmul.f32 %v1993, %v2218
  %v2292 = vmul.f32 %v1997, %v2218
  %v2293 = vmul.f32 %v2001, %v2218
  %v2294 = vmul.f32 %v2005, %v2218
  %v2295 = vmul.f32 %v2009, %v2218
  %v2296 = vmul.f32 %v2013, %v2218
  %v2297 = vmul.f32 %v2017, %v2218
  %v2298 = vmul.f32 %v2021, %v2218
  %v2299 = vmul.f32 %v2025, %v2218
  %v2300 = vmul.f32 %v2029, %v2218
  %v2301 = vmul.f32 %v2033, %v2218
  %v2302 = vmul.f32 %v2037, %v2218
  %v2303 = vmul.f32 %v2041, %v2218
  %v2304 = vmul.f32 %v2045, %v2218
  %v2305 = vmul.f32 %v2049, %v2218
  %v2306 = vmul.f32 %v2053, %v2218
  %v2307 = vmul.f32 %v2057, %v2218
  %v2308 = vmul.f32 %v2061, %v2218
  %v2309 = vmul.f32 %v2065, %v2218
  %v2310 = vmul.f32 %v2069, %v2218
  %v2311 = vmul.f32 %v2073, %v2218
  %v2312 = vmul.f32 %v2077, %v2218
  %v2313 = vmul.f32 %v2081, %v2218
  %v2314 = vmul.f32 %v2085, %v2218
  %v2315 = vmul.f32 %v2089, %v2218
  %v2316 = vmul.f32 %v2093, %v2218
  %v2317 = vmul.f32 %v2097, %v2218
  %v2318 = vmul.f32 %v2101, %v2218
  %v2319 = vmul.f32 %v2105, %v2218
  %v2320 = vmul.f32 %v2109, %v2218
  %v2321 = vmul.f32 %v2113, %v2218
  %v2322 = vmul.f32 %v2117, %v2218
  %v2323 = vmul.f32 %v2121, %v2218
  %v2324 = vmul.f32 %v2125, %v2218
  %v2325 = vmul.f32 %v2129, %v2218
  %v2326 = vmul.f32 %v2133, %v2218
  %v2327 = vmul.f32 %v2137, %v2218
  %v2328 = vmul.f32 %v2141, %v2218
  %v2329 = vmul.f32 %v2145, %v2218
  %v2330 = vmul.f32 %v2149, %v2218
  %v2331 = vmul.f32 %v2153, %v2218
  %v2332 = vmul.f32 %v2157, %v2218
  %v2333 = vmul.f32 %v2161, %v2218
  %v2334 = vmul.f32 %v2165, %v2218
  %v2335 = vmul.f32 %v2169, %v2218
  %v2336 = vmul.f32 %v2173, %v2218
  %v2337 = vmul.f32 %v2177, %v2218
  %v2338 = vmul.f32 %v2181, %v2218
  %v2339 = vmul.f32 %v2185, %v2218
  %v2340 = vmul.f32 %v2189, %v2218
  %v2341 = vmul.f32 %v2193, %v2218
  %v2342 = vmul.f32 %v2197, %v2218
  %v2343 = vmul.f32 %v2201, %v2218
  %v2344 = vmul.f32 %v2205, %v2218
  %v2345 = vmul.f32 %v2209, %v2218
  %v2346 = vmul.f32 %v2213, %v2218
  %v2347 = vadd.f32 %v1573, %v2219
  %v2348 = vadd.f32 %v1574, %v2220
  %v2349 = vadd.f32 %v1575, %v2221
  %v2350 = vadd.f32 %v1576, %v2222
  %v2351 = vadd.f32 %v1577, %v2223
  %v2352 = vadd.f32 %v1578, %v2224
  %v2353 = vadd.f32 %v1579, %v2225
  %v2354 = vadd.f32 %v1580, %v2226
  %v2355 = vadd.f32 %v1581, %v2227
  %v2356 = vadd.f32 %v1582, %v2228
  %v2357 = vadd.f32 %v1583, %v2229
  %v2358 = vadd.f32 %v1584, %v2230
  %v2359 = vadd.f32 %v1585, %v2231
  %v2360 = vadd.f32 %v1586, %v2232
  %v2361 = vadd.f32 %v1587, %v2233
  %v2362 = vadd.f32 %v1588, %v2234
  %v2363 = vadd.f32 %v1589, %v2235
  %v2364 = vadd.f32 %v1590, %v2236
  %v2365 = vadd.f32 %v1591, %v2237
  %v2366 = vadd.f32 %v1592, %v2238
  %v2367 = vadd.f32 %v1593, %v2239
  %v2368 = vadd.f32 %v1594, %v2240
  %v2369 = vadd.f32 %v1595, %v2241
  %v2370 = vadd.f32 %v1596, %v2242
  %v2371 = vadd.f32 %v1597, %v2243
  %v2372 = vadd.f32 %v1598, %v2244
  %v2373 = vadd.f32 %v1599, %v2245
  %v2374 = vadd.f32 %v1600, %v2246
  %v2375 = vadd.f32 %v1601, %v2247
  %v2376 = vadd.f32 %v1602, %v2248
  %v2377 = vadd.f32 %v1603, %v2249
  %v2378 = vadd.f32 %v1604, %v2250
  %v2379 = vadd.f32 %v1605, %v2251
  %v2380 = vadd.f32 %v1606, %v2252
  %v2381 = vadd.f32 %v1607, %v2253
  %v2382 = vadd.f32 %v1608, %v2254
  %v2383 = vadd.f32 %v1609, %v2255
  %v2384 = vadd.f32 %v1610, %v2256
  %v2385 = vadd.f32 %v1611, %v2257
  %v2386 = vadd.f32 %v1612, %v2258
  %v2387 = vadd.f32 %v1613, %v2259
  %v2388 = vadd.f32 %v1614, %v2260
  %v2389 = vadd.f32 %v1615, %v2261
  %v2390 = vadd.f32 %v1616, %v2262
  %v2391 = vadd.f32 %v1617, %v2263
  %v2392 = vadd.f32 %v1618, %v2264
  %v2393 = vadd.f32 %v1619, %v2265
  %v2394 = vadd.f32 %v1620, %v2266
  %v2395 = vadd.f32 %v1621, %v2267
  %v2396 = vadd.f32 %v1622, %v2268
  %v2397 = vadd.f32 %v1623, %v2269
  %v2398 = vadd.f32 %v1624, %v2270
  %v2399 = vadd.f32 %v1625, %v2271
  %v2400 = vadd.f32 %v1626, %v2272
  %v2401 = vadd.f32 %v1627, %v2273
  %v2402 = vadd.f32 %v1628, %v2274
  %v2403 = vadd.f32 %v1629, %v2275
  %v2404 = vadd.f32 %v1630, %v2276
  %v2405 = vadd.f32 %v1631, %v2277
  %v2406 = vadd.f32 %v1632, %v2278
  %v2407 = vadd.f32 %v1633, %v2279
  %v2408 = vadd.f32 %v1634, %v2280
  %v2409 = vadd.f32 %v1635, %v2281
  %v2410 = vadd.f32 %v1636, %v2282
  %v2411 = vadd.f32 %v1637, %v2283
  %v2412 = vadd.f32 %v1638, %v2284
  %v2413 = vadd.f32 %v1639, %v2285
  %v2414 = vadd.f32 %v1640, %v2286
  %v2415 = vadd.f32 %v1641, %v2287
  %v2416 = vadd.f32 %v1642, %v2288
  %v2417 = vadd.f32 %v1643, %v2289
  %v2418 = vadd.f32 %v1644, %v2290
  %v2419 = vadd.f32 %v1645, %v2291
  %v2420 = vadd.f32 %v1646, %v2292
  %v2421 = vadd.f32 %v1647, %v2293
  %v2422 = vadd.f32 %v1648, %v2294
  %v2423 = vadd.f32 %v1649, %v2295
  %v2424 = vadd.f32 %v1650, %v2296
  %v2425 = vadd.f32 %v1651, %v2297
  %v2426 = vadd.f32 %v1652, %v2298
  %v2427 = vadd.f32 %v1653, %v2299
  %v2428 = vadd.f32 %v1654, %v2300
  %v2429 = vadd.f32 %v1655, %v2301
  %v2430 = vadd.f32 %v1656, %v2302
  %v2431 = vadd.f32 %v1657, %v2303
  %v2432 = vadd.f32 %v1658, %v2304
  %v2433 = vadd.f32 %v1659, %v2305
  %v2434 = vadd.f32 %v1660, %v2306
  %v2435 = vadd.f32 %v1661, %v2307
  %v2436 = vadd.f32 %v1662, %v2308
  %v2437 = vadd.f32 %v1663, %v2309
  %v2438 = vadd.f32 %v1664, %v2310
  %v2439 = vadd.f32 %v1665, %v2311
  %v2440 = vadd.f32 %v1666, %v2312
  %v2441 = vadd.f32 %v1667, %v2313
  %v2442 = vadd.f32 %v1668, %v2314
  %v2443 = vadd.f32 %v1669, %v2315
  %v2444 = vadd.f32 %v1670, %v2316
  %v2445 = vadd.f32 %v1671, %v2317
  %v2446 = vadd.f32 %v1672, %v2318
  %v2447 = vadd.f32 %v1673, %v2319
  %v2448 = vadd.f32 %v1674, %v2320
  %v2449 = vadd.f32 %v1675, %v2321
  %v2450 = vadd.f32 %v1676, %v2322
  %v2451 = vadd.f32 %v1677, %v2323
  %v2452 = vadd.f32 %v1678, %v2324
  %v2453 = vadd.f32 %v1679, %v2325
  %v2454 = vadd.f32 %v1680, %v2326
  %v2455 = vadd.f32 %v1681, %v2327
  %v2456 = vadd.f32 %v1682, %v2328
  %v2457 = vadd.f32 %v1683, %v2329
  %v2458 = vadd.f32 %v1684, %v2330
  %v2459 = vadd.f32 %v1685, %v2331
  %v2460 = vadd.f32 %v1686, %v2332
  %v2461 = vadd.f32 %v1687, %v2333
  %v2462 = vadd.f32 %v1688, %v2334
  %v2463 = vadd.f32 %v1689, %v2335
  %v2464 = vadd.f32 %v1690, %v2336
  %v2465 = vadd.f32 %v1691, %v2337
  %v2466 = vadd.f32 %v1692, %v2338
  %v2467 = vadd.f32 %v1693, %v2339
  %v2468 = vadd.f32 %v1694, %v2340
  %v2469 = vadd.f32 %v1695, %v2341
  %v2470 = vadd.f32 %v1696, %v2342
  %v2471 = vadd.f32 %v1697, %v2343
  %v2472 = vadd.f32 %v1698, %v2344
  %v2473 = vadd.f32 %v1699, %v2345
  %v2474 = vadd.f32 %v1700, %v2346
  %v2475 = vld [vmem:[%s2] sm:$0x1]
  %v2477 = vlaneseq
  %v2478 = vshrl.u32 %v2477, 7
  %v2479 = vsub.s32 0, %v2478
  %v2480 = vrot.slane %v2475, %v2479
  %v2482 = vadd.f32 %v2347, %v2480
  %v2483 = vadd.f32 %v2348, %v2480
  %v2484 = vadd.f32 %v2349, %v2480
  %v2485 = vadd.f32 %v2350, %v2480
  %v2486 = vadd.f32 %v2351, %v2480
  %v2487 = vadd.f32 %v2352, %v2480
  %v2488 = vadd.f32 %v2353, %v2480
  %v2489 = vadd.f32 %v2354, %v2480
  %v2490 = vadd.f32 %v2355, %v2480
  %v2491 = vadd.f32 %v2356, %v2480
  %v2492 = vadd.f32 %v2357, %v2480
  %v2493 = vadd.f32 %v2358, %v2480
  %v2494 = vadd.f32 %v2359, %v2480
  %v2495 = vadd.f32 %v2360, %v2480
  %v2496 = vadd.f32 %v2361, %v2480
  %v2497 = vadd.f32 %v2362, %v2480
  %v2498 = vadd.f32 %v2363, %v2480
  %v2499 = vadd.f32 %v2364, %v2480
  %v2500 = vadd.f32 %v2365, %v2480
  %v2501 = vadd.f32 %v2366, %v2480
  %v2502 = vadd.f32 %v2367, %v2480
  %v2503 = vadd.f32 %v2368, %v2480
  %v2504 = vadd.f32 %v2369, %v2480
  %v2505 = vadd.f32 %v2370, %v2480
  %v2506 = vadd.f32 %v2371, %v2480
  %v2507 = vadd.f32 %v2372, %v2480
  %v2508 = vadd.f32 %v2373, %v2480
  %v2509 = vadd.f32 %v2374, %v2480
  %v2510 = vadd.f32 %v2375, %v2480
  %v2511 = vadd.f32 %v2376, %v2480
  %v2512 = vadd.f32 %v2377, %v2480
  %v2513 = vadd.f32 %v2378, %v2480
  %v2514 = vadd.f32 %v2379, %v2480
  %v2515 = vadd.f32 %v2380, %v2480
  %v2516 = vadd.f32 %v2381, %v2480
  %v2517 = vadd.f32 %v2382, %v2480
  %v2518 = vadd.f32 %v2383, %v2480
  %v2519 = vadd.f32 %v2384, %v2480
  %v2520 = vadd.f32 %v2385, %v2480
  %v2521 = vadd.f32 %v2386, %v2480
  %v2522 = vadd.f32 %v2387, %v2480
  %v2523 = vadd.f32 %v2388, %v2480
  %v2524 = vadd.f32 %v2389, %v2480
  %v2525 = vadd.f32 %v2390, %v2480
  %v2526 = vadd.f32 %v2391, %v2480
  %v2527 = vadd.f32 %v2392, %v2480
  %v2528 = vadd.f32 %v2393, %v2480
  %v2529 = vadd.f32 %v2394, %v2480
  %v2530 = vadd.f32 %v2395, %v2480
  %v2531 = vadd.f32 %v2396, %v2480
  %v2532 = vadd.f32 %v2397, %v2480
  %v2533 = vadd.f32 %v2398, %v2480
  %v2534 = vadd.f32 %v2399, %v2480
  %v2535 = vadd.f32 %v2400, %v2480
  %v2536 = vadd.f32 %v2401, %v2480
  %v2537 = vadd.f32 %v2402, %v2480
  %v2538 = vadd.f32 %v2403, %v2480
  %v2539 = vadd.f32 %v2404, %v2480
  %v2540 = vadd.f32 %v2405, %v2480
  %v2541 = vadd.f32 %v2406, %v2480
  %v2542 = vadd.f32 %v2407, %v2480
  %v2543 = vadd.f32 %v2408, %v2480
  %v2544 = vadd.f32 %v2409, %v2480
  %v2545 = vadd.f32 %v2410, %v2480
  %v2546 = vadd.f32 %v2411, %v2480
  %v2547 = vadd.f32 %v2412, %v2480
  %v2548 = vadd.f32 %v2413, %v2480
  %v2549 = vadd.f32 %v2414, %v2480
  %v2550 = vadd.f32 %v2415, %v2480
  %v2551 = vadd.f32 %v2416, %v2480
  %v2552 = vadd.f32 %v2417, %v2480
  %v2553 = vadd.f32 %v2418, %v2480
  %v2554 = vadd.f32 %v2419, %v2480
  %v2555 = vadd.f32 %v2420, %v2480
  %v2556 = vadd.f32 %v2421, %v2480
  %v2557 = vadd.f32 %v2422, %v2480
  %v2558 = vadd.f32 %v2423, %v2480
  %v2559 = vadd.f32 %v2424, %v2480
  %v2560 = vadd.f32 %v2425, %v2480
  %v2561 = vadd.f32 %v2426, %v2480
  %v2562 = vadd.f32 %v2427, %v2480
  %v2563 = vadd.f32 %v2428, %v2480
  %v2564 = vadd.f32 %v2429, %v2480
  %v2565 = vadd.f32 %v2430, %v2480
  %v2566 = vadd.f32 %v2431, %v2480
  %v2567 = vadd.f32 %v2432, %v2480
  %v2568 = vadd.f32 %v2433, %v2480
  %v2569 = vadd.f32 %v2434, %v2480
  %v2570 = vadd.f32 %v2435, %v2480
  %v2571 = vadd.f32 %v2436, %v2480
  %v2572 = vadd.f32 %v2437, %v2480
  %v2573 = vadd.f32 %v2438, %v2480
  %v2574 = vadd.f32 %v2439, %v2480
  %v2575 = vadd.f32 %v2440, %v2480
  %v2576 = vadd.f32 %v2441, %v2480
  %v2577 = vadd.f32 %v2442, %v2480
  %v2578 = vadd.f32 %v2443, %v2480
  %v2579 = vadd.f32 %v2444, %v2480
  %v2580 = vadd.f32 %v2445, %v2480
  %v2581 = vadd.f32 %v2446, %v2480
  %v2582 = vadd.f32 %v2447, %v2480
  %v2583 = vadd.f32 %v2448, %v2480
  %v2584 = vadd.f32 %v2449, %v2480
  %v2585 = vadd.f32 %v2450, %v2480
  %v2586 = vadd.f32 %v2451, %v2480
  %v2587 = vadd.f32 %v2452, %v2480
  %v2588 = vadd.f32 %v2453, %v2480
  %v2589 = vadd.f32 %v2454, %v2480
  %v2590 = vadd.f32 %v2455, %v2480
  %v2591 = vadd.f32 %v2456, %v2480
  %v2592 = vadd.f32 %v2457, %v2480
  %v2593 = vadd.f32 %v2458, %v2480
  %v2594 = vadd.f32 %v2459, %v2480
  %v2595 = vadd.f32 %v2460, %v2480
  %v2596 = vadd.f32 %v2461, %v2480
  %v2597 = vadd.f32 %v2462, %v2480
  %v2598 = vadd.f32 %v2463, %v2480
  %v2599 = vadd.f32 %v2464, %v2480
  %v2600 = vadd.f32 %v2465, %v2480
  %v2601 = vadd.f32 %v2466, %v2480
  %v2602 = vadd.f32 %v2467, %v2480
  %v2603 = vadd.f32 %v2468, %v2480
  %v2604 = vadd.f32 %v2469, %v2480
  %v2605 = vadd.f32 %v2470, %v2480
  %v2606 = vadd.f32 %v2471, %v2480
  %v2607 = vadd.f32 %v2472, %v2480
  %v2608 = vadd.f32 %v2473, %v2480
  %v2609 = vadd.f32 %v2474, %v2480
  %v2610 = vmax.f32 %v2482, 0.0
  %v2611 = vmax.f32 %v2483, 0.0
  %v2612 = vmax.f32 %v2484, 0.0
  %v2613 = vmax.f32 %v2485, 0.0
  %v2614 = vmax.f32 %v2486, 0.0
  %v2615 = vmax.f32 %v2487, 0.0
  %v2616 = vmax.f32 %v2488, 0.0
  %v2617 = vmax.f32 %v2489, 0.0
  %v2618 = vmax.f32 %v2490, 0.0
  %v2619 = vmax.f32 %v2491, 0.0
  %v2620 = vmax.f32 %v2492, 0.0
  %v2621 = vmax.f32 %v2493, 0.0
  %v2622 = vmax.f32 %v2494, 0.0
  %v2623 = vmax.f32 %v2495, 0.0
  %v2624 = vmax.f32 %v2496, 0.0
  %v2625 = vmax.f32 %v2497, 0.0
  %v2626 = vmax.f32 %v2498, 0.0
  %v2627 = vmax.f32 %v2499, 0.0
  %v2628 = vmax.f32 %v2500, 0.0
  %v2629 = vmax.f32 %v2501, 0.0
  %v2630 = vmax.f32 %v2502, 0.0
  %v2631 = vmax.f32 %v2503, 0.0
  %v2632 = vmax.f32 %v2504, 0.0
  %v2633 = vmax.f32 %v2505, 0.0
  %v2634 = vmax.f32 %v2506, 0.0
  %v2635 = vmax.f32 %v2507, 0.0
  %v2636 = vmax.f32 %v2508, 0.0
  %v2637 = vmax.f32 %v2509, 0.0
  %v2638 = vmax.f32 %v2510, 0.0
  %v2639 = vmax.f32 %v2511, 0.0
  %v2640 = vmax.f32 %v2512, 0.0
  %v2641 = vmax.f32 %v2513, 0.0
  %v2642 = vmax.f32 %v2514, 0.0
  %v2643 = vmax.f32 %v2515, 0.0
  %v2644 = vmax.f32 %v2516, 0.0
  %v2645 = vmax.f32 %v2517, 0.0
  %v2646 = vmax.f32 %v2518, 0.0
  %v2647 = vmax.f32 %v2519, 0.0
  %v2648 = vmax.f32 %v2520, 0.0
  %v2649 = vmax.f32 %v2521, 0.0
  %v2650 = vmax.f32 %v2522, 0.0
  %v2651 = vmax.f32 %v2523, 0.0
  %v2652 = vmax.f32 %v2524, 0.0
  %v2653 = vmax.f32 %v2525, 0.0
  %v2654 = vmax.f32 %v2526, 0.0
  %v2655 = vmax.f32 %v2527, 0.0
  %v2656 = vmax.f32 %v2528, 0.0
  %v2657 = vmax.f32 %v2529, 0.0
  %v2658 = vmax.f32 %v2530, 0.0
  %v2659 = vmax.f32 %v2531, 0.0
  %v2660 = vmax.f32 %v2532, 0.0
  %v2661 = vmax.f32 %v2533, 0.0
  %v2662 = vmax.f32 %v2534, 0.0
  %v2663 = vmax.f32 %v2535, 0.0
  %v2664 = vmax.f32 %v2536, 0.0
  %v2665 = vmax.f32 %v2537, 0.0
  %v2666 = vmax.f32 %v2538, 0.0
  %v2667 = vmax.f32 %v2539, 0.0
  %v2668 = vmax.f32 %v2540, 0.0
  %v2669 = vmax.f32 %v2541, 0.0
  %v2670 = vmax.f32 %v2542, 0.0
  %v2671 = vmax.f32 %v2543, 0.0
  %v2672 = vmax.f32 %v2544, 0.0
  %v2673 = vmax.f32 %v2545, 0.0
  %v2674 = vmax.f32 %v2546, 0.0
  %v2675 = vmax.f32 %v2547, 0.0
  %v2676 = vmax.f32 %v2548, 0.0
  %v2677 = vmax.f32 %v2549, 0.0
  %v2678 = vmax.f32 %v2550, 0.0
  %v2679 = vmax.f32 %v2551, 0.0
  %v2680 = vmax.f32 %v2552, 0.0
  %v2681 = vmax.f32 %v2553, 0.0
  %v2682 = vmax.f32 %v2554, 0.0
  %v2683 = vmax.f32 %v2555, 0.0
  %v2684 = vmax.f32 %v2556, 0.0
  %v2685 = vmax.f32 %v2557, 0.0
  %v2686 = vmax.f32 %v2558, 0.0
  %v2687 = vmax.f32 %v2559, 0.0
  %v2688 = vmax.f32 %v2560, 0.0
  %v2689 = vmax.f32 %v2561, 0.0
  %v2690 = vmax.f32 %v2562, 0.0
  %v2691 = vmax.f32 %v2563, 0.0
  %v2692 = vmax.f32 %v2564, 0.0
  %v2693 = vmax.f32 %v2565, 0.0
  %v2694 = vmax.f32 %v2566, 0.0
  %v2695 = vmax.f32 %v2567, 0.0
  %v2696 = vmax.f32 %v2568, 0.0
  %v2697 = vmax.f32 %v2569, 0.0
  %v2698 = vmax.f32 %v2570, 0.0
  %v2699 = vmax.f32 %v2571, 0.0
  %v2700 = vmax.f32 %v2572, 0.0
  %v2701 = vmax.f32 %v2573, 0.0
  %v2702 = vmax.f32 %v2574, 0.0
  %v2703 = vmax.f32 %v2575, 0.0
  %v2704 = vmax.f32 %v2576, 0.0
  %v2705 = vmax.f32 %v2577, 0.0
  %v2706 = vmax.f32 %v2578, 0.0
  %v2707 = vmax.f32 %v2579, 0.0
  %v2708 = vmax.f32 %v2580, 0.0
  %v2709 = vmax.f32 %v2581, 0.0
  %v2710 = vmax.f32 %v2582, 0.0
  %v2711 = vmax.f32 %v2583, 0.0
  %v2712 = vmax.f32 %v2584, 0.0
  %v2713 = vmax.f32 %v2585, 0.0
  %v2714 = vmax.f32 %v2586, 0.0
  %v2715 = vmax.f32 %v2587, 0.0
  %v2716 = vmax.f32 %v2588, 0.0
  %v2717 = vmax.f32 %v2589, 0.0
  %v2718 = vmax.f32 %v2590, 0.0
  %v2719 = vmax.f32 %v2591, 0.0
  %v2720 = vmax.f32 %v2592, 0.0
  %v2721 = vmax.f32 %v2593, 0.0
  %v2722 = vmax.f32 %v2594, 0.0
  %v2723 = vmax.f32 %v2595, 0.0
  %v2724 = vmax.f32 %v2596, 0.0
  %v2725 = vmax.f32 %v2597, 0.0
  %v2726 = vmax.f32 %v2598, 0.0
  %v2727 = vmax.f32 %v2599, 0.0
  %v2728 = vmax.f32 %v2600, 0.0
  %v2729 = vmax.f32 %v2601, 0.0
  %v2730 = vmax.f32 %v2602, 0.0
  %v2731 = vmax.f32 %v2603, 0.0
  %v2732 = vmax.f32 %v2604, 0.0
  %v2733 = vmax.f32 %v2605, 0.0
  %v2734 = vmax.f32 %v2606, 0.0
  %v2735 = vmax.f32 %v2607, 0.0
  %v2736 = vmax.f32 %v2608, 0.0
  %v2737 = vmax.f32 %v2609, 0.0
  %v2738 = vpack.c.bf16 %v2611, %v2610
  %v2739 = vpack.c.bf16 %v2613, %v2612
  %v2740 = vpack.c.bf16 %v2615, %v2614
  %v2741 = vpack.c.bf16 %v2617, %v2616
  %v2742 = vpack.c.bf16 %v2619, %v2618
  %v2743 = vpack.c.bf16 %v2621, %v2620
  %v2744 = vpack.c.bf16 %v2623, %v2622
  %v2745 = vpack.c.bf16 %v2625, %v2624
  %v2746 = vpack.c.bf16 %v2627, %v2626
  %v2747 = vpack.c.bf16 %v2629, %v2628
  %v2748 = vpack.c.bf16 %v2631, %v2630
  %v2749 = vpack.c.bf16 %v2633, %v2632
  %v2750 = vpack.c.bf16 %v2635, %v2634
  %v2751 = vpack.c.bf16 %v2637, %v2636
  %v2752 = vpack.c.bf16 %v2639, %v2638
  %v2753 = vpack.c.bf16 %v2641, %v2640
  %v2754 = vpack.c.bf16 %v2643, %v2642
  %v2755 = vpack.c.bf16 %v2645, %v2644
  %v2756 = vpack.c.bf16 %v2647, %v2646
  %v2757 = vpack.c.bf16 %v2649, %v2648
  %v2758 = vpack.c.bf16 %v2651, %v2650
  %v2759 = vpack.c.bf16 %v2653, %v2652
  %v2760 = vpack.c.bf16 %v2655, %v2654
  %v2761 = vpack.c.bf16 %v2657, %v2656
  %v2762 = vpack.c.bf16 %v2659, %v2658
  %v2763 = vpack.c.bf16 %v2661, %v2660
  %v2764 = vpack.c.bf16 %v2663, %v2662
  %v2765 = vpack.c.bf16 %v2665, %v2664
  %v2766 = vpack.c.bf16 %v2667, %v2666
  %v2767 = vpack.c.bf16 %v2669, %v2668
  %v2768 = vpack.c.bf16 %v2671, %v2670
  %v2769 = vpack.c.bf16 %v2673, %v2672
  %v2770 = vpack.c.bf16 %v2675, %v2674
  %v2771 = vpack.c.bf16 %v2677, %v2676
  %v2772 = vpack.c.bf16 %v2679, %v2678
  %v2773 = vpack.c.bf16 %v2681, %v2680
  %v2774 = vpack.c.bf16 %v2683, %v2682
  %v2775 = vpack.c.bf16 %v2685, %v2684
  %v2776 = vpack.c.bf16 %v2687, %v2686
  %v2777 = vpack.c.bf16 %v2689, %v2688
  %v2778 = vpack.c.bf16 %v2691, %v2690
  %v2779 = vpack.c.bf16 %v2693, %v2692
  %v2780 = vpack.c.bf16 %v2695, %v2694
  %v2781 = vpack.c.bf16 %v2697, %v2696
  %v2782 = vpack.c.bf16 %v2699, %v2698
  %v2783 = vpack.c.bf16 %v2701, %v2700
  %v2784 = vpack.c.bf16 %v2703, %v2702
  %v2785 = vpack.c.bf16 %v2705, %v2704
  %v2786 = vpack.c.bf16 %v2707, %v2706
  %v2787 = vpack.c.bf16 %v2709, %v2708
  %v2788 = vpack.c.bf16 %v2711, %v2710
  %v2789 = vpack.c.bf16 %v2713, %v2712
  %v2790 = vpack.c.bf16 %v2715, %v2714
  %v2791 = vpack.c.bf16 %v2717, %v2716
  %v2792 = vpack.c.bf16 %v2719, %v2718
  %v2793 = vpack.c.bf16 %v2721, %v2720
  %v2794 = vpack.c.bf16 %v2723, %v2722
  %v2795 = vpack.c.bf16 %v2725, %v2724
  %v2796 = vpack.c.bf16 %v2727, %v2726
  %v2797 = vpack.c.bf16 %v2729, %v2728
  %v2798 = vpack.c.bf16 %v2731, %v2730
  %v2799 = vpack.c.bf16 %v2733, %v2732
  %v2800 = vpack.c.bf16 %v2735, %v2734
  %v2801 = vpack.c.bf16 %v2737, %v2736
  %v2802 = vld [vmem:[%s3] sm:$0xf]
  %v2803 = vld [vmem:[%s3 + $0x4] sm:$0xf]
  %v2804 = vld [vmem:[%s3 + $0x8] sm:$0xf]
  %v2805 = vld [vmem:[%s3 + $0xc] sm:$0xf]
  %v2806 = vld [vmem:[%s3 + $0x10] sm:$0xf]
  %v2807 = vld [vmem:[%s3 + $0x14] sm:$0xf]
  %v2808 = vld [vmem:[%s3 + $0x18] sm:$0xf]
  %v2809 = vld [vmem:[%s3 + $0x1c] sm:$0xf]
  %v2810 = vld [vmem:[%s4] sm:$0x1]
  %v2812 = vlaneseq
  %v2813 = vshrl.u32 %v2812, 7
  %v2814 = vsub.s32 0, %v2813
  %v2815 = vrot.slane %v2810, %v2814
  %v2825 = vunpack.c.l.b16 %v2802
  %v2826 = vunpack.c.l.b16 %v2803
  %v2827 = vunpack.c.l.b16 %v2804
  %v2828 = vunpack.c.l.b16 %v2805
  %v2829 = vunpack.c.l.b16 %v2806
  %v2830 = vunpack.c.l.b16 %v2807
  %v2831 = vunpack.c.l.b16 %v2808
  %v2832 = vunpack.c.l.b16 %v2809
  %v2833 = vpack.c.b16 %v2826, %v2825
  %v2834 = vpack.c.b16 %v2828, %v2827
  %v2835 = vpack.c.b16 %v2830, %v2829
  %v2836 = vpack.c.b16 %v2832, %v2831
  %vm2841 = vcmask 523264
  %v2843 = vsel %vm2841, %v2738, 0
  %v2846 = vsel %vm2841, %v2739, 0
  %v2849 = vsel %vm2841, %v2740, 0
  %v2852 = vsel %vm2841, %v2741, 0
  %v2855 = vsel %vm2841, %v2742, 0
  %v2858 = vsel %vm2841, %v2743, 0
  %v2861 = vsel %vm2841, %v2744, 0
  %v2864 = vsel %vm2841, %v2745, 0
  %v2867 = vsel %vm2841, %v2746, 0
  %v2870 = vsel %vm2841, %v2747, 0
  %v2873 = vsel %vm2841, %v2748, 0
  %v2876 = vsel %vm2841, %v2749, 0
  %v2879 = vsel %vm2841, %v2750, 0
  %v2882 = vsel %vm2841, %v2751, 0
  %v2885 = vsel %vm2841, %v2752, 0
  %v2888 = vsel %vm2841, %v2753, 0
  %v2891 = vsel %vm2841, %v2754, 0
  %v2894 = vsel %vm2841, %v2755, 0
  %v2897 = vsel %vm2841, %v2756, 0
  %v2900 = vsel %vm2841, %v2757, 0
  %v2903 = vsel %vm2841, %v2758, 0
  %v2906 = vsel %vm2841, %v2759, 0
  %v2909 = vsel %vm2841, %v2760, 0
  %v2912 = vsel %vm2841, %v2761, 0
  %v2915 = vsel %vm2841, %v2762, 0
  %v2918 = vsel %vm2841, %v2763, 0
  %v2921 = vsel %vm2841, %v2764, 0
  %v2924 = vsel %vm2841, %v2765, 0
  %v2927 = vsel %vm2841, %v2766, 0
  %v2930 = vsel %vm2841, %v2767, 0
  %v2933 = vsel %vm2841, %v2768, 0
  %v2936 = vsel %vm2841, %v2769, 0
  %v2939 = vsel %vm2841, %v2770, 0
  %v2942 = vsel %vm2841, %v2771, 0
  %v2945 = vsel %vm2841, %v2772, 0
  %v2948 = vsel %vm2841, %v2773, 0
  %v2951 = vsel %vm2841, %v2774, 0
  %v2954 = vsel %vm2841, %v2775, 0
  %v2957 = vsel %vm2841, %v2776, 0
  %v2960 = vsel %vm2841, %v2777, 0
  %v2963 = vsel %vm2841, %v2778, 0
  %v2966 = vsel %vm2841, %v2779, 0
  %v2969 = vsel %vm2841, %v2780, 0
  %v2972 = vsel %vm2841, %v2781, 0
  %v2975 = vsel %vm2841, %v2782, 0
  %v2978 = vsel %vm2841, %v2783, 0
  %v2981 = vsel %vm2841, %v2784, 0
  %v2984 = vsel %vm2841, %v2785, 0
  %v2987 = vsel %vm2841, %v2786, 0
  %v2990 = vsel %vm2841, %v2787, 0
  %v2993 = vsel %vm2841, %v2788, 0
  %v2996 = vsel %vm2841, %v2789, 0
  %v2999 = vsel %vm2841, %v2790, 0
  %v3002 = vsel %vm2841, %v2791, 0
  %v3005 = vsel %vm2841, %v2792, 0
  %v3008 = vsel %vm2841, %v2793, 0
  %v3011 = vsel %vm2841, %v2794, 0
  %v3014 = vsel %vm2841, %v2795, 0
  %v3017 = vsel %vm2841, %v2796, 0
  %v3020 = vsel %vm2841, %v2797, 0
  %v3023 = vsel %vm2841, %v2798, 0
  %v3026 = vsel %vm2841, %v2799, 0
  %v3029 = vsel %vm2841, %v2800, 0
  %v3032 = vsel %vm2841, %v2801, 0
  %3034 = vmatprep.subr.bf16.mxu0 0
  %3035 = vmatpush1.bf16.msra.mxu0 %v2833
  %3036 = vmatprep.subr.bf16.mxu0 0
  %3037 = vmatpush1.bf16.msra.mxu0 %v2834
  %3038 = vmatprep.subr.bf16.mxu0 0
  %3039 = vmatpush1.bf16.msra.mxu0 %v2835
  %3040 = vmatprep.subr.bf16.mxu0 0
  %3041 = vmatpush1.bf16.msra.mxu0 %v2836
  %3042 = vmatprep.subr.bf16.mxu0 0
  %3043 = vmatpush1.bf16.msra.mxu0 0
  %3044 = vmatprep.subr.bf16.mxu0 0
  %3045 = vmatpush1.bf16.msra.mxu0 0
  %3046 = vmatprep.subr.bf16.mxu0 0
  %3047 = vmatpush1.bf16.msra.mxu0 0
  %3048 = vmatprep.subr.bf16.mxu0 0
  %3049 = vmatpush1.bf16.msra.mxu0 0
  %3050 = vmatprep.subr.bf16.mxu0 0
  %3051 = vmatpush1.bf16.msra.mxu0 0
  %3052 = vmatprep.subr.bf16.mxu0 0
  %3053 = vmatpush1.bf16.msra.mxu0 0
  %3054 = vmatprep.subr.bf16.mxu0 0
  %3055 = vmatpush1.bf16.msra.mxu0 0
  %3056 = vmatprep.subr.bf16.mxu0 0
  %3057 = vmatpush1.bf16.msra.mxu0 0
  %3058 = vmatprep.subr.bf16.mxu0 0
  %3059 = vmatpush1.bf16.msra.mxu0 0
  %3060 = vmatprep.subr.bf16.mxu0 0
  %3061 = vmatpush1.bf16.msra.mxu0 0
  %3062 = vmatprep.subr.bf16.mxu0 0
  %3063 = vmatpush1.bf16.msra.mxu0 0
  %3064 = vmatprep.subr.bf16.mxu0 0
  %3065 = vmatpush1.bf16.msra.mxu0 0
  %3066 = vmatprep.mubr.bf16.mxu0 0
  %3067 = vmatmul.mubr.bf16.gmra.mrb[0].mxu0 %v2843
  %v3068 = vpop.f32.mrb[0].mxu0
  %v3069 = vadd.f32 %v2815, %v3068
  %v3070 = vpop.f32.mrb[0].mxu0
  %v3071 = vpop.f32.mrb[0].mxu0
  %v3072 = vadd.f32 %v2815, %v3071
  %v3073 = vpop.f32.mrb[0].mxu0
  %3074 = vmatprep.mubr.bf16.mxu0 0
  %3075 = vmatmul.mubr.bf16.gmra.mrb[0].mxu0 %v2846
  %v3076 = vpop.f32.mrb[0].mxu0
  %v3077 = vadd.f32 %v2815, %v3076
  %v3078 = vpop.f32.mrb[0].mxu0
  %v3079 = vpop.f32.mrb[0].mxu0
  %v3080 = vadd.f32 %v2815, %v3079
  %v3081 = vpop.f32.mrb[0].mxu0
  %3082 = vmatprep.mubr.bf16.mxu0 0
  %3083 = vmatmul.mubr.bf16.gmra.mrb[0].mxu0 %v2849
  %v3084 = vpop.f32.mrb[0].mxu0
  %v3085 = vadd.f32 %v2815, %v3084
  %v3086 = vpop.f32.mrb[0].mxu0
  %v3087 = vpop.f32.mrb[0].mxu0
  %v3088 = vadd.f32 %v2815, %v3087
  %v3089 = vpop.f32.mrb[0].mxu0
  %3090 = vmatprep.mubr.bf16.mxu0 0
  %3091 = vmatmul.mubr.bf16.gmra.mrb[0].mxu0 %v2852
  %v3092 = vpop.f32.mrb[0].mxu0
  %v3093 = vadd.f32 %v2815, %v3092
  %v3094 = vpop.f32.mrb[0].mxu0
  %v3095 = vpop.f32.mrb[0].mxu0
  %v3096 = vadd.f32 %v2815, %v3095
  %v3097 = vpop.f32.mrb[0].mxu0
  %3098 = vmatprep.mubr.bf16.mxu0 0
  %3099 = vmatmul.mubr.bf16.gmra.mrb[0].mxu0 %v2855
  %v3100 = vpop.f32.mrb[0].mxu0
  %v3101 = vadd.f32 %v2815, %v3100
  %v3102 = vpop.f32.mrb[0].mxu0
  %v3103 = vpop.f32.mrb[0].mxu0
  %v3104 = vadd.f32 %v2815, %v3103
  %v3105 = vpop.f32.mrb[0].mxu0
  %3106 = vmatprep.mubr.bf16.mxu0 0
  %3107 = vmatmul.mubr.bf16.gmra.mrb[0].mxu0 %v2858
  %v3108 = vpop.f32.mrb[0].mxu0
  %v3109 = vadd.f32 %v2815, %v3108
  %v3110 = vpop.f32.mrb[0].mxu0
  %v3111 = vpop.f32.mrb[0].mxu0
  %v3112 = vadd.f32 %v2815, %v3111
  %v3113 = vpop.f32.mrb[0].mxu0
  %3114 = vmatprep.mubr.bf16.mxu0 0
  %3115 = vmatmul.mubr.bf16.gmra.mrb[0].mxu0 %v2861
  %v3116 = vpop.f32.mrb[0].mxu0
  %v3117 = vadd.f32 %v2815, %v3116
  %v3118 = vpop.f32.mrb[0].mxu0
  %v3119 = vpop.f32.mrb[0].mxu0
  %v3120 = vadd.f32 %v2815, %v3119
  %v3121 = vpop.f32.mrb[0].mxu0
  %3122 = vmatprep.mubr.bf16.mxu0 0
  %3123 = vmatmul.mubr.bf16.gmra.mrb[0].mxu0 %v2864
  %v3124 = vpop.f32.mrb[0].mxu0
  %v3125 = vadd.f32 %v2815, %v3124
  %v3126 = vpop.f32.mrb[0].mxu0
  %v3127 = vpop.f32.mrb[0].mxu0
  %v3128 = vadd.f32 %v2815, %v3127
  %v3129 = vpop.f32.mrb[0].mxu0
  %3130 = vmatprep.mubr.bf16.mxu0 0
  %3131 = vmatmul.mubr.bf16.gmra.mrb[0].mxu0 %v2867
  %v3132 = vpop.f32.mrb[0].mxu0
  %v3133 = vadd.f32 %v2815, %v3132
  %v3134 = vpop.f32.mrb[0].mxu0
  %v3135 = vpop.f32.mrb[0].mxu0
  %v3136 = vadd.f32 %v2815, %v3135
  %v3137 = vpop.f32.mrb[0].mxu0
  %3138 = vmatprep.mubr.bf16.mxu0 0
  %3139 = vmatmul.mubr.bf16.gmra.mrb[0].mxu0 %v2870
  %v3140 = vpop.f32.mrb[0].mxu0
  %v3141 = vadd.f32 %v2815, %v3140
  %v3142 = vpop.f32.mrb[0].mxu0
  %v3143 = vpop.f32.mrb[0].mxu0
  %v3144 = vadd.f32 %v2815, %v3143
  %v3145 = vpop.f32.mrb[0].mxu0
  %3146 = vmatprep.mubr.bf16.mxu0 0
  %3147 = vmatmul.mubr.bf16.gmra.mrb[0].mxu0 %v2873
  %v3148 = vpop.f32.mrb[0].mxu0
  %v3149 = vadd.f32 %v2815, %v3148
  %v3150 = vpop.f32.mrb[0].mxu0
  %v3151 = vpop.f32.mrb[0].mxu0
  %v3152 = vadd.f32 %v2815, %v3151
  %v3153 = vpop.f32.mrb[0].mxu0
  %3154 = vmatprep.mubr.bf16.mxu0 0
  %3155 = vmatmul.mubr.bf16.gmra.mrb[0].mxu0 %v2876
  %v3156 = vpop.f32.mrb[0].mxu0
  %v3157 = vadd.f32 %v2815, %v3156
  %v3158 = vpop.f32.mrb[0].mxu0
  %v3159 = vpop.f32.mrb[0].mxu0
  %v3160 = vadd.f32 %v2815, %v3159
  %v3161 = vpop.f32.mrb[0].mxu0
  %3162 = vmatprep.mubr.bf16.mxu0 0
  %3163 = vmatmul.mubr.bf16.gmra.mrb[0].mxu0 %v2879
  %v3164 = vpop.f32.mrb[0].mxu0
  %v3165 = vadd.f32 %v2815, %v3164
  %v3166 = vpop.f32.mrb[0].mxu0
  %v3167 = vpop.f32.mrb[0].mxu0
  %v3168 = vadd.f32 %v2815, %v3167
  %v3169 = vpop.f32.mrb[0].mxu0
  %3170 = vmatprep.mubr.bf16.mxu0 0
  %3171 = vmatmul.mubr.bf16.gmra.mrb[0].mxu0 %v2882
  %v3172 = vpop.f32.mrb[0].mxu0
  %v3173 = vadd.f32 %v2815, %v3172
  %v3174 = vpop.f32.mrb[0].mxu0
  %v3175 = vpop.f32.mrb[0].mxu0
  %v3176 = vadd.f32 %v2815, %v3175
  %v3177 = vpop.f32.mrb[0].mxu0
  %3178 = vmatprep.mubr.bf16.mxu0 0
  %3179 = vmatmul.mubr.bf16.gmra.mrb[0].mxu0 %v2885
  %v3180 = vpop.f32.mrb[0].mxu0
  %v3181 = vadd.f32 %v2815, %v3180
  %v3182 = vpop.f32.mrb[0].mxu0
  %v3183 = vpop.f32.mrb[0].mxu0
  %v3184 = vadd.f32 %v2815, %v3183
  %v3185 = vpop.f32.mrb[0].mxu0
  %3186 = vmatprep.mubr.bf16.mxu0 0
  %3187 = vmatmul.mubr.bf16.gmra.mrb[0].mxu0 %v2888
  %v3188 = vpop.f32.mrb[0].mxu0
  %v3189 = vadd.f32 %v2815, %v3188
  %v3190 = vpop.f32.mrb[0].mxu0
  %v3191 = vpop.f32.mrb[0].mxu0
  %v3192 = vadd.f32 %v2815, %v3191
  %v3193 = vpop.f32.mrb[0].mxu0
  %3194 = vmatprep.mubr.bf16.mxu0 0
  %3195 = vmatmul.mubr.bf16.gmra.mrb[0].mxu0 %v2891
  %v3196 = vpop.f32.mrb[0].mxu0
  %v3197 = vadd.f32 %v2815, %v3196
  %v3198 = vpop.f32.mrb[0].mxu0
  %v3199 = vpop.f32.mrb[0].mxu0
  %v3200 = vadd.f32 %v2815, %v3199
  %v3201 = vpop.f32.mrb[0].mxu0
  %3202 = vmatprep.mubr.bf16.mxu0 0
  %3203 = vmatmul.mubr.bf16.gmra.mrb[0].mxu0 %v2894
  %v3204 = vpop.f32.mrb[0].mxu0
  %v3205 = vadd.f32 %v2815, %v3204
  %v3206 = vpop.f32.mrb[0].mxu0
  %v3207 = vpop.f32.mrb[0].mxu0
  %v3208 = vadd.f32 %v2815, %v3207
  %v3209 = vpop.f32.mrb[0].mxu0
  %3210 = vmatprep.mubr.bf16.mxu0 0
  %3211 = vmatmul.mubr.bf16.gmra.mrb[0].mxu0 %v2897
  %v3212 = vpop.f32.mrb[0].mxu0
  %v3213 = vadd.f32 %v2815, %v3212
  %v3214 = vpop.f32.mrb[0].mxu0
  %v3215 = vpop.f32.mrb[0].mxu0
  %v3216 = vadd.f32 %v2815, %v3215
  %v3217 = vpop.f32.mrb[0].mxu0
  %3218 = vmatprep.mubr.bf16.mxu0 0
  %3219 = vmatmul.mubr.bf16.gmra.mrb[0].mxu0 %v2900
  %v3220 = vpop.f32.mrb[0].mxu0
  %v3221 = vadd.f32 %v2815, %v3220
  %v3222 = vpop.f32.mrb[0].mxu0
  %v3223 = vpop.f32.mrb[0].mxu0
  %v3224 = vadd.f32 %v2815, %v3223
  %v3225 = vpop.f32.mrb[0].mxu0
  %3226 = vmatprep.mubr.bf16.mxu0 0
  %3227 = vmatmul.mubr.bf16.gmra.mrb[0].mxu0 %v2903
  %v3228 = vpop.f32.mrb[0].mxu0
  %v3229 = vadd.f32 %v2815, %v3228
  %v3230 = vpop.f32.mrb[0].mxu0
  %v3231 = vpop.f32.mrb[0].mxu0
  %v3232 = vadd.f32 %v2815, %v3231
  %v3233 = vpop.f32.mrb[0].mxu0
  %3234 = vmatprep.mubr.bf16.mxu0 0
  %3235 = vmatmul.mubr.bf16.gmra.mrb[0].mxu0 %v2906
  %v3236 = vpop.f32.mrb[0].mxu0
  %v3237 = vadd.f32 %v2815, %v3236
  %v3238 = vpop.f32.mrb[0].mxu0
  %v3239 = vpop.f32.mrb[0].mxu0
  %v3240 = vadd.f32 %v2815, %v3239
  %v3241 = vpop.f32.mrb[0].mxu0
  %3242 = vmatprep.mubr.bf16.mxu0 0
  %3243 = vmatmul.mubr.bf16.gmra.mrb[0].mxu0 %v2909
  %v3244 = vpop.f32.mrb[0].mxu0
  %v3245 = vadd.f32 %v2815, %v3244
  %v3246 = vpop.f32.mrb[0].mxu0
  %v3247 = vpop.f32.mrb[0].mxu0
  %v3248 = vadd.f32 %v2815, %v3247
  %v3249 = vpop.f32.mrb[0].mxu0
  %3250 = vmatprep.mubr.bf16.mxu0 0
  %3251 = vmatmul.mubr.bf16.gmra.mrb[0].mxu0 %v2912
  %v3252 = vpop.f32.mrb[0].mxu0
  %v3253 = vadd.f32 %v2815, %v3252
  %v3254 = vpop.f32.mrb[0].mxu0
  %v3255 = vpop.f32.mrb[0].mxu0
  %v3256 = vadd.f32 %v2815, %v3255
  %v3257 = vpop.f32.mrb[0].mxu0
  %3258 = vmatprep.mubr.bf16.mxu0 0
  %3259 = vmatmul.mubr.bf16.gmra.mrb[0].mxu0 %v2915
  %v3260 = vpop.f32.mrb[0].mxu0
  %v3261 = vadd.f32 %v2815, %v3260
  %v3262 = vpop.f32.mrb[0].mxu0
  %v3263 = vpop.f32.mrb[0].mxu0
  %v3264 = vadd.f32 %v2815, %v3263
  %v3265 = vpop.f32.mrb[0].mxu0
  %3266 = vmatprep.mubr.bf16.mxu0 0
  %3267 = vmatmul.mubr.bf16.gmra.mrb[0].mxu0 %v2918
  %v3268 = vpop.f32.mrb[0].mxu0
  %v3269 = vadd.f32 %v2815, %v3268
  %v3270 = vpop.f32.mrb[0].mxu0
  %v3271 = vpop.f32.mrb[0].mxu0
  %v3272 = vadd.f32 %v2815, %v3271
  %v3273 = vpop.f32.mrb[0].mxu0
  %3274 = vmatprep.mubr.bf16.mxu0 0
  %3275 = vmatmul.mubr.bf16.gmra.mrb[0].mxu0 %v2921
  %v3276 = vpop.f32.mrb[0].mxu0
  %v3277 = vadd.f32 %v2815, %v3276
  %v3278 = vpop.f32.mrb[0].mxu0
  %v3279 = vpop.f32.mrb[0].mxu0
  %v3280 = vadd.f32 %v2815, %v3279
  %v3281 = vpop.f32.mrb[0].mxu0
  %3282 = vmatprep.mubr.bf16.mxu0 0
  %3283 = vmatmul.mubr.bf16.gmra.mrb[0].mxu0 %v2924
  %v3284 = vpop.f32.mrb[0].mxu0
  %v3285 = vadd.f32 %v2815, %v3284
  %v3286 = vpop.f32.mrb[0].mxu0
  %v3287 = vpop.f32.mrb[0].mxu0
  %v3288 = vadd.f32 %v2815, %v3287
  %v3289 = vpop.f32.mrb[0].mxu0
  %3290 = vmatprep.mubr.bf16.mxu0 0
  %3291 = vmatmul.mubr.bf16.gmra.mrb[0].mxu0 %v2927
  %v3292 = vpop.f32.mrb[0].mxu0
  %v3293 = vadd.f32 %v2815, %v3292
  %v3294 = vpop.f32.mrb[0].mxu0
  %v3295 = vpop.f32.mrb[0].mxu0
  %v3296 = vadd.f32 %v2815, %v3295
  %v3297 = vpop.f32.mrb[0].mxu0
  %3298 = vmatprep.mubr.bf16.mxu0 0
  %3299 = vmatmul.mubr.bf16.gmra.mrb[0].mxu0 %v2930
  %v3300 = vpop.f32.mrb[0].mxu0
  %v3301 = vadd.f32 %v2815, %v3300
  %v3302 = vpop.f32.mrb[0].mxu0
  %v3303 = vpop.f32.mrb[0].mxu0
  %v3304 = vadd.f32 %v2815, %v3303
  %v3305 = vpop.f32.mrb[0].mxu0
  %3306 = vmatprep.mubr.bf16.mxu0 0
  %3307 = vmatmul.mubr.bf16.gmra.mrb[0].mxu0 %v2933
  %v3308 = vpop.f32.mrb[0].mxu0
  %v3309 = vadd.f32 %v2815, %v3308
  %v3310 = vpop.f32.mrb[0].mxu0
  %v3311 = vpop.f32.mrb[0].mxu0
  %v3312 = vadd.f32 %v2815, %v3311
  %v3313 = vpop.f32.mrb[0].mxu0
  %3314 = vmatprep.mubr.bf16.mxu0 0
  %3315 = vmatmul.mubr.bf16.gmra.mrb[0].mxu0 %v2936
  %v3316 = vpop.f32.mrb[0].mxu0
  %v3317 = vadd.f32 %v2815, %v3316
  %v3318 = vpop.f32.mrb[0].mxu0
  %v3319 = vpop.f32.mrb[0].mxu0
  %v3320 = vadd.f32 %v2815, %v3319
  %v3321 = vpop.f32.mrb[0].mxu0
  %3322 = vmatprep.mubr.bf16.mxu0 0
  %3323 = vmatmul.mubr.bf16.gmra.mrb[0].mxu0 %v2939
  %v3324 = vpop.f32.mrb[0].mxu0
  %v3325 = vadd.f32 %v2815, %v3324
  %v3326 = vpop.f32.mrb[0].mxu0
  %v3327 = vpop.f32.mrb[0].mxu0
  %v3328 = vadd.f32 %v2815, %v3327
  %v3329 = vpop.f32.mrb[0].mxu0
  %3330 = vmatprep.mubr.bf16.mxu0 0
  %3331 = vmatmul.mubr.bf16.gmra.mrb[0].mxu0 %v2942
  %v3332 = vpop.f32.mrb[0].mxu0
  %v3333 = vadd.f32 %v2815, %v3332
  %v3334 = vpop.f32.mrb[0].mxu0
  %v3335 = vpop.f32.mrb[0].mxu0
  %v3336 = vadd.f32 %v2815, %v3335
  %v3337 = vpop.f32.mrb[0].mxu0
  %3338 = vmatprep.mubr.bf16.mxu0 0
  %3339 = vmatmul.mubr.bf16.gmra.mrb[0].mxu0 %v2945
  %v3340 = vpop.f32.mrb[0].mxu0
  %v3341 = vadd.f32 %v2815, %v3340
  %v3342 = vpop.f32.mrb[0].mxu0
  %v3343 = vpop.f32.mrb[0].mxu0
  %v3344 = vadd.f32 %v2815, %v3343
  %v3345 = vpop.f32.mrb[0].mxu0
  %3346 = vmatprep.mubr.bf16.mxu0 0
  %3347 = vmatmul.mubr.bf16.gmra.mrb[0].mxu0 %v2948
  %v3348 = vpop.f32.mrb[0].mxu0
  %v3349 = vadd.f32 %v2815, %v3348
  %v3350 = vpop.f32.mrb[0].mxu0
  %v3351 = vpop.f32.mrb[0].mxu0
  %v3352 = vadd.f32 %v2815, %v3351
  %v3353 = vpop.f32.mrb[0].mxu0
  %3354 = vmatprep.mubr.bf16.mxu0 0
  %3355 = vmatmul.mubr.bf16.gmra.mrb[0].mxu0 %v2951
  %v3356 = vpop.f32.mrb[0].mxu0
  %v3357 = vadd.f32 %v2815, %v3356
  %v3358 = vpop.f32.mrb[0].mxu0
  %v3359 = vpop.f32.mrb[0].mxu0
  %v3360 = vadd.f32 %v2815, %v3359
  %v3361 = vpop.f32.mrb[0].mxu0
  %3362 = vmatprep.mubr.bf16.mxu0 0
  %3363 = vmatmul.mubr.bf16.gmra.mrb[0].mxu0 %v2954
  %v3364 = vpop.f32.mrb[0].mxu0
  %v3365 = vadd.f32 %v2815, %v3364
  %v3366 = vpop.f32.mrb[0].mxu0
  %v3367 = vpop.f32.mrb[0].mxu0
  %v3368 = vadd.f32 %v2815, %v3367
  %v3369 = vpop.f32.mrb[0].mxu0
  %3370 = vmatprep.mubr.bf16.mxu0 0
  %3371 = vmatmul.mubr.bf16.gmra.mrb[0].mxu0 %v2957
  %v3372 = vpop.f32.mrb[0].mxu0
  %v3373 = vadd.f32 %v2815, %v3372
  %v3374 = vpop.f32.mrb[0].mxu0
  %v3375 = vpop.f32.mrb[0].mxu0
  %v3376 = vadd.f32 %v2815, %v3375
  %v3377 = vpop.f32.mrb[0].mxu0
  %3378 = vmatprep.mubr.bf16.mxu0 0
  %3379 = vmatmul.mubr.bf16.gmra.mrb[0].mxu0 %v2960
  %v3380 = vpop.f32.mrb[0].mxu0
  %v3381 = vadd.f32 %v2815, %v3380
  %v3382 = vpop.f32.mrb[0].mxu0
  %v3383 = vpop.f32.mrb[0].mxu0
  %v3384 = vadd.f32 %v2815, %v3383
  %v3385 = vpop.f32.mrb[0].mxu0
  %3386 = vmatprep.mubr.bf16.mxu0 0
  %3387 = vmatmul.mubr.bf16.gmra.mrb[0].mxu0 %v2963
  %v3388 = vpop.f32.mrb[0].mxu0
  %v3389 = vadd.f32 %v2815, %v3388
  %v3390 = vpop.f32.mrb[0].mxu0
  %v3391 = vpop.f32.mrb[0].mxu0
  %v3392 = vadd.f32 %v2815, %v3391
  %v3393 = vpop.f32.mrb[0].mxu0
  %3394 = vmatprep.mubr.bf16.mxu0 0
  %3395 = vmatmul.mubr.bf16.gmra.mrb[0].mxu0 %v2966
  %v3396 = vpop.f32.mrb[0].mxu0
  %v3397 = vadd.f32 %v2815, %v3396
  %v3398 = vpop.f32.mrb[0].mxu0
  %v3399 = vpop.f32.mrb[0].mxu0
  %v3400 = vadd.f32 %v2815, %v3399
  %v3401 = vpop.f32.mrb[0].mxu0
  %3402 = vmatprep.mubr.bf16.mxu0 0
  %3403 = vmatmul.mubr.bf16.gmra.mrb[0].mxu0 %v2969
  %v3404 = vpop.f32.mrb[0].mxu0
  %v3405 = vadd.f32 %v2815, %v3404
  %v3406 = vpop.f32.mrb[0].mxu0
  %v3407 = vpop.f32.mrb[0].mxu0
  %v3408 = vadd.f32 %v2815, %v3407
  %v3409 = vpop.f32.mrb[0].mxu0
  %3410 = vmatprep.mubr.bf16.mxu0 0
  %3411 = vmatmul.mubr.bf16.gmra.mrb[0].mxu0 %v2972
  %v3412 = vpop.f32.mrb[0].mxu0
  %v3413 = vadd.f32 %v2815, %v3412
  %v3414 = vpop.f32.mrb[0].mxu0
  %v3415 = vpop.f32.mrb[0].mxu0
  %v3416 = vadd.f32 %v2815, %v3415
  %v3417 = vpop.f32.mrb[0].mxu0
  %3418 = vmatprep.mubr.bf16.mxu0 0
  %3419 = vmatmul.mubr.bf16.gmra.mrb[0].mxu0 %v2975
  %v3420 = vpop.f32.mrb[0].mxu0
  %v3421 = vadd.f32 %v2815, %v3420
  %v3422 = vpop.f32.mrb[0].mxu0
  %v3423 = vpop.f32.mrb[0].mxu0
  %v3424 = vadd.f32 %v2815, %v3423
  %v3425 = vpop.f32.mrb[0].mxu0
  %3426 = vmatprep.mubr.bf16.mxu0 0
  %3427 = vmatmul.mubr.bf16.gmra.mrb[0].mxu0 %v2978
  %v3428 = vpop.f32.mrb[0].mxu0
  %v3429 = vadd.f32 %v2815, %v3428
  %v3430 = vpop.f32.mrb[0].mxu0
  %v3431 = vpop.f32.mrb[0].mxu0
  %v3432 = vadd.f32 %v2815, %v3431
  %v3433 = vpop.f32.mrb[0].mxu0
  %3434 = vmatprep.mubr.bf16.mxu0 0
  %3435 = vmatmul.mubr.bf16.gmra.mrb[0].mxu0 %v2981
  %v3436 = vpop.f32.mrb[0].mxu0
  %v3437 = vadd.f32 %v2815, %v3436
  %v3438 = vpop.f32.mrb[0].mxu0
  %v3439 = vpop.f32.mrb[0].mxu0
  %v3440 = vadd.f32 %v2815, %v3439
  %v3441 = vpop.f32.mrb[0].mxu0
  %3442 = vmatprep.mubr.bf16.mxu0 0
  %3443 = vmatmul.mubr.bf16.gmra.mrb[0].mxu0 %v2984
  %v3444 = vpop.f32.mrb[0].mxu0
  %v3445 = vadd.f32 %v2815, %v3444
  %v3446 = vpop.f32.mrb[0].mxu0
  %v3447 = vpop.f32.mrb[0].mxu0
  %v3448 = vadd.f32 %v2815, %v3447
  %v3449 = vpop.f32.mrb[0].mxu0
  %3450 = vmatprep.mubr.bf16.mxu0 0
  %3451 = vmatmul.mubr.bf16.gmra.mrb[0].mxu0 %v2987
  %v3452 = vpop.f32.mrb[0].mxu0
  %v3453 = vadd.f32 %v2815, %v3452
  %v3454 = vpop.f32.mrb[0].mxu0
  %v3455 = vpop.f32.mrb[0].mxu0
  %v3456 = vadd.f32 %v2815, %v3455
  %v3457 = vpop.f32.mrb[0].mxu0
  %3458 = vmatprep.mubr.bf16.mxu0 0
  %3459 = vmatmul.mubr.bf16.gmra.mrb[0].mxu0 %v2990
  %v3460 = vpop.f32.mrb[0].mxu0
  %v3461 = vadd.f32 %v2815, %v3460
  %v3462 = vpop.f32.mrb[0].mxu0
  %v3463 = vpop.f32.mrb[0].mxu0
  %v3464 = vadd.f32 %v2815, %v3463
  %v3465 = vpop.f32.mrb[0].mxu0
  %3466 = vmatprep.mubr.bf16.mxu0 0
  %3467 = vmatmul.mubr.bf16.gmra.mrb[0].mxu0 %v2993
  %v3468 = vpop.f32.mrb[0].mxu0
  %v3469 = vadd.f32 %v2815, %v3468
  %v3470 = vpop.f32.mrb[0].mxu0
  %v3471 = vpop.f32.mrb[0].mxu0
  %v3472 = vadd.f32 %v2815, %v3471
  %v3473 = vpop.f32.mrb[0].mxu0
  %3474 = vmatprep.mubr.bf16.mxu0 0
  %3475 = vmatmul.mubr.bf16.gmra.mrb[0].mxu0 %v2996
  %v3476 = vpop.f32.mrb[0].mxu0
  %v3477 = vadd.f32 %v2815, %v3476
  %v3478 = vpop.f32.mrb[0].mxu0
  %v3479 = vpop.f32.mrb[0].mxu0
  %v3480 = vadd.f32 %v2815, %v3479
  %v3481 = vpop.f32.mrb[0].mxu0
  %3482 = vmatprep.mubr.bf16.mxu0 0
  %3483 = vmatmul.mubr.bf16.gmra.mrb[0].mxu0 %v2999
  %v3484 = vpop.f32.mrb[0].mxu0
  %v3485 = vadd.f32 %v2815, %v3484
  %v3486 = vpop.f32.mrb[0].mxu0
  %v3487 = vpop.f32.mrb[0].mxu0
  %v3488 = vadd.f32 %v2815, %v3487
  %v3489 = vpop.f32.mrb[0].mxu0
  %3490 = vmatprep.mubr.bf16.mxu0 0
  %3491 = vmatmul.mubr.bf16.gmra.mrb[0].mxu0 %v3002
  %v3492 = vpop.f32.mrb[0].mxu0
  %v3493 = vadd.f32 %v2815, %v3492
  %v3494 = vpop.f32.mrb[0].mxu0
  %v3495 = vpop.f32.mrb[0].mxu0
  %v3496 = vadd.f32 %v2815, %v3495
  %v3497 = vpop.f32.mrb[0].mxu0
  %3498 = vmatprep.mubr.bf16.mxu0 0
  %3499 = vmatmul.mubr.bf16.gmra.mrb[0].mxu0 %v3005
  %v3500 = vpop.f32.mrb[0].mxu0
  %v3501 = vadd.f32 %v2815, %v3500
  %v3502 = vpop.f32.mrb[0].mxu0
  %v3503 = vpop.f32.mrb[0].mxu0
  %v3504 = vadd.f32 %v2815, %v3503
  %v3505 = vpop.f32.mrb[0].mxu0
  %3506 = vmatprep.mubr.bf16.mxu0 0
  %3507 = vmatmul.mubr.bf16.gmra.mrb[0].mxu0 %v3008
  %v3508 = vpop.f32.mrb[0].mxu0
  %v3509 = vadd.f32 %v2815, %v3508
  %v3510 = vpop.f32.mrb[0].mxu0
  %v3511 = vpop.f32.mrb[0].mxu0
  %v3512 = vadd.f32 %v2815, %v3511
  %v3513 = vpop.f32.mrb[0].mxu0
  %3514 = vmatprep.mubr.bf16.mxu0 0
  %3515 = vmatmul.mubr.bf16.gmra.mrb[0].mxu0 %v3011
  %v3516 = vpop.f32.mrb[0].mxu0
  %v3517 = vadd.f32 %v2815, %v3516
  %v3518 = vpop.f32.mrb[0].mxu0
  %v3519 = vpop.f32.mrb[0].mxu0
  %v3520 = vadd.f32 %v2815, %v3519
  %v3521 = vpop.f32.mrb[0].mxu0
  %3522 = vmatprep.mubr.bf16.mxu0 0
  %3523 = vmatmul.mubr.bf16.gmra.mrb[0].mxu0 %v3014
  %v3524 = vpop.f32.mrb[0].mxu0
  %v3525 = vadd.f32 %v2815, %v3524
  %v3526 = vpop.f32.mrb[0].mxu0
  %v3527 = vpop.f32.mrb[0].mxu0
  %v3528 = vadd.f32 %v2815, %v3527
  %v3529 = vpop.f32.mrb[0].mxu0
  %3530 = vmatprep.mubr.bf16.mxu0 0
  %3531 = vmatmul.mubr.bf16.gmra.mrb[0].mxu0 %v3017
  %v3532 = vpop.f32.mrb[0].mxu0
  %v3533 = vadd.f32 %v2815, %v3532
  %v3534 = vpop.f32.mrb[0].mxu0
  %v3535 = vpop.f32.mrb[0].mxu0
  %v3536 = vadd.f32 %v2815, %v3535
  %v3537 = vpop.f32.mrb[0].mxu0
  %3538 = vmatprep.mubr.bf16.mxu0 0
  %3539 = vmatmul.mubr.bf16.gmra.mrb[0].mxu0 %v3020
  %v3540 = vpop.f32.mrb[0].mxu0
  %v3541 = vadd.f32 %v2815, %v3540
  %v3542 = vpop.f32.mrb[0].mxu0
  %v3543 = vpop.f32.mrb[0].mxu0
  %v3544 = vadd.f32 %v2815, %v3543
  %v3545 = vpop.f32.mrb[0].mxu0
  %3546 = vmatprep.mubr.bf16.mxu0 0
  %3547 = vmatmul.mubr.bf16.gmra.mrb[0].mxu0 %v3023
  %v3548 = vpop.f32.mrb[0].mxu0
  %v3549 = vadd.f32 %v2815, %v3548
  %v3550 = vpop.f32.mrb[0].mxu0
  %v3551 = vpop.f32.mrb[0].mxu0
  %v3552 = vadd.f32 %v2815, %v3551
  %v3553 = vpop.f32.mrb[0].mxu0
  %3554 = vmatprep.mubr.bf16.mxu0 0
  %3555 = vmatmul.mubr.bf16.gmra.mrb[0].mxu0 %v3026
  %v3556 = vpop.f32.mrb[0].mxu0
  %v3557 = vadd.f32 %v2815, %v3556
  %v3558 = vpop.f32.mrb[0].mxu0
  %v3559 = vpop.f32.mrb[0].mxu0
  %v3560 = vadd.f32 %v2815, %v3559
  %v3561 = vpop.f32.mrb[0].mxu0
  %3562 = vmatprep.mubr.bf16.mxu0 0
  %3563 = vmatmul.mubr.bf16.gmra.mrb[0].mxu0 %v3029
  %v3564 = vpop.f32.mrb[0].mxu0
  %v3565 = vadd.f32 %v2815, %v3564
  %v3566 = vpop.f32.mrb[0].mxu0
  %v3567 = vpop.f32.mrb[0].mxu0
  %v3568 = vadd.f32 %v2815, %v3567
  %v3569 = vpop.f32.mrb[0].mxu0
  %3570 = vmatprep.mubr.bf16.mxu0 0
  %3571 = vmatmul.mubr.bf16.gmra.mrb[0].mxu0 %v3032
  %v3572 = vpop.f32.mrb[0].mxu0
  %v3573 = vadd.f32 %v2815, %v3572
  %v3574 = vpop.f32.mrb[0].mxu0
  %v3575 = vpop.f32.mrb[0].mxu0
  %v3576 = vadd.f32 %v2815, %v3575
  %v3577 = vpop.f32.mrb[0].mxu0
  %3578 = vdwg.mxu0
  %v3579 = vmax.f32 %v3069, 0.0
  %v3580 = vmax.f32 %v3072, 0.0
  %v3581 = vmax.f32 %v3077, 0.0
  %v3582 = vmax.f32 %v3080, 0.0
  %v3583 = vmax.f32 %v3085, 0.0
  %v3584 = vmax.f32 %v3088, 0.0
  %v3585 = vmax.f32 %v3093, 0.0
  %v3586 = vmax.f32 %v3096, 0.0
  %v3587 = vmax.f32 %v3101, 0.0
  %v3588 = vmax.f32 %v3104, 0.0
  %v3589 = vmax.f32 %v3109, 0.0
  %v3590 = vmax.f32 %v3112, 0.0
  %v3591 = vmax.f32 %v3117, 0.0
  %v3592 = vmax.f32 %v3120, 0.0
  %v3593 = vmax.f32 %v3125, 0.0
  %v3594 = vmax.f32 %v3128, 0.0
  %v3595 = vmax.f32 %v3133, 0.0
  %v3596 = vmax.f32 %v3136, 0.0
  %v3597 = vmax.f32 %v3141, 0.0
  %v3598 = vmax.f32 %v3144, 0.0
  %v3599 = vmax.f32 %v3149, 0.0
  %v3600 = vmax.f32 %v3152, 0.0
  %v3601 = vmax.f32 %v3157, 0.0
  %v3602 = vmax.f32 %v3160, 0.0
  %v3603 = vmax.f32 %v3165, 0.0
  %v3604 = vmax.f32 %v3168, 0.0
  %v3605 = vmax.f32 %v3173, 0.0
  %v3606 = vmax.f32 %v3176, 0.0
  %v3607 = vmax.f32 %v3181, 0.0
  %v3608 = vmax.f32 %v3184, 0.0
  %v3609 = vmax.f32 %v3189, 0.0
  %v3610 = vmax.f32 %v3192, 0.0
  %v3611 = vmax.f32 %v3197, 0.0
  %v3612 = vmax.f32 %v3200, 0.0
  %v3613 = vmax.f32 %v3205, 0.0
  %v3614 = vmax.f32 %v3208, 0.0
  %v3615 = vmax.f32 %v3213, 0.0
  %v3616 = vmax.f32 %v3216, 0.0
  %v3617 = vmax.f32 %v3221, 0.0
  %v3618 = vmax.f32 %v3224, 0.0
  %v3619 = vmax.f32 %v3229, 0.0
  %v3620 = vmax.f32 %v3232, 0.0
  %v3621 = vmax.f32 %v3237, 0.0
  %v3622 = vmax.f32 %v3240, 0.0
  %v3623 = vmax.f32 %v3245, 0.0
  %v3624 = vmax.f32 %v3248, 0.0
  %v3625 = vmax.f32 %v3253, 0.0
  %v3626 = vmax.f32 %v3256, 0.0
  %v3627 = vmax.f32 %v3261, 0.0
  %v3628 = vmax.f32 %v3264, 0.0
  %v3629 = vmax.f32 %v3269, 0.0
  %v3630 = vmax.f32 %v3272, 0.0
  %v3631 = vmax.f32 %v3277, 0.0
  %v3632 = vmax.f32 %v3280, 0.0
  %v3633 = vmax.f32 %v3285, 0.0
  %v3634 = vmax.f32 %v3288, 0.0
  %v3635 = vmax.f32 %v3293, 0.0
  %v3636 = vmax.f32 %v3296, 0.0
  %v3637 = vmax.f32 %v3301, 0.0
  %v3638 = vmax.f32 %v3304, 0.0
  %v3639 = vmax.f32 %v3309, 0.0
  %v3640 = vmax.f32 %v3312, 0.0
  %v3641 = vmax.f32 %v3317, 0.0
  %v3642 = vmax.f32 %v3320, 0.0
  %v3643 = vmax.f32 %v3325, 0.0
  %v3644 = vmax.f32 %v3328, 0.0
  %v3645 = vmax.f32 %v3333, 0.0
  %v3646 = vmax.f32 %v3336, 0.0
  %v3647 = vmax.f32 %v3341, 0.0
  %v3648 = vmax.f32 %v3344, 0.0
  %v3649 = vmax.f32 %v3349, 0.0
  %v3650 = vmax.f32 %v3352, 0.0
  %v3651 = vmax.f32 %v3357, 0.0
  %v3652 = vmax.f32 %v3360, 0.0
  %v3653 = vmax.f32 %v3365, 0.0
  %v3654 = vmax.f32 %v3368, 0.0
  %v3655 = vmax.f32 %v3373, 0.0
  %v3656 = vmax.f32 %v3376, 0.0
  %v3657 = vmax.f32 %v3381, 0.0
  %v3658 = vmax.f32 %v3384, 0.0
  %v3659 = vmax.f32 %v3389, 0.0
  %v3660 = vmax.f32 %v3392, 0.0
  %v3661 = vmax.f32 %v3397, 0.0
  %v3662 = vmax.f32 %v3400, 0.0
  %v3663 = vmax.f32 %v3405, 0.0
  %v3664 = vmax.f32 %v3408, 0.0
  %v3665 = vmax.f32 %v3413, 0.0
  %v3666 = vmax.f32 %v3416, 0.0
  %v3667 = vmax.f32 %v3421, 0.0
  %v3668 = vmax.f32 %v3424, 0.0
  %v3669 = vmax.f32 %v3429, 0.0
  %v3670 = vmax.f32 %v3432, 0.0
  %v3671 = vmax.f32 %v3437, 0.0
  %v3672 = vmax.f32 %v3440, 0.0
  %v3673 = vmax.f32 %v3445, 0.0
  %v3674 = vmax.f32 %v3448, 0.0
  %v3675 = vmax.f32 %v3453, 0.0
  %v3676 = vmax.f32 %v3456, 0.0
  %v3677 = vmax.f32 %v3461, 0.0
  %v3678 = vmax.f32 %v3464, 0.0
  %v3679 = vmax.f32 %v3469, 0.0
  %v3680 = vmax.f32 %v3472, 0.0
  %v3681 = vmax.f32 %v3477, 0.0
  %v3682 = vmax.f32 %v3480, 0.0
  %v3683 = vmax.f32 %v3485, 0.0
  %v3684 = vmax.f32 %v3488, 0.0
  %v3685 = vmax.f32 %v3493, 0.0
  %v3686 = vmax.f32 %v3496, 0.0
  %v3687 = vmax.f32 %v3501, 0.0
  %v3688 = vmax.f32 %v3504, 0.0
  %v3689 = vmax.f32 %v3509, 0.0
  %v3690 = vmax.f32 %v3512, 0.0
  %v3691 = vmax.f32 %v3517, 0.0
  %v3692 = vmax.f32 %v3520, 0.0
  %v3693 = vmax.f32 %v3525, 0.0
  %v3694 = vmax.f32 %v3528, 0.0
  %v3695 = vmax.f32 %v3533, 0.0
  %v3696 = vmax.f32 %v3536, 0.0
  %v3697 = vmax.f32 %v3541, 0.0
  %v3698 = vmax.f32 %v3544, 0.0
  %v3699 = vmax.f32 %v3549, 0.0
  %v3700 = vmax.f32 %v3552, 0.0
  %v3701 = vmax.f32 %v3557, 0.0
  %v3702 = vmax.f32 %v3560, 0.0
  %v3703 = vmax.f32 %v3565, 0.0
  %v3704 = vmax.f32 %v3568, 0.0
  %v3705 = vmax.f32 %v3573, 0.0
  %v3706 = vmax.f32 %v3576, 0.0
  %v3707 = vpack.c.bf16 %v3580, %v3579
  %v3708 = vpack.c.bf16 %v3582, %v3581
  %v3709 = vpack.c.bf16 %v3584, %v3583
  %v3710 = vpack.c.bf16 %v3586, %v3585
  %v3711 = vpack.c.bf16 %v3588, %v3587
  %v3712 = vpack.c.bf16 %v3590, %v3589
  %v3713 = vpack.c.bf16 %v3592, %v3591
  %v3714 = vpack.c.bf16 %v3594, %v3593
  %v3715 = vpack.c.bf16 %v3596, %v3595
  %v3716 = vpack.c.bf16 %v3598, %v3597
  %v3717 = vpack.c.bf16 %v3600, %v3599
  %v3718 = vpack.c.bf16 %v3602, %v3601
  %v3719 = vpack.c.bf16 %v3604, %v3603
  %v3720 = vpack.c.bf16 %v3606, %v3605
  %v3721 = vpack.c.bf16 %v3608, %v3607
  %v3722 = vpack.c.bf16 %v3610, %v3609
  %v3723 = vpack.c.bf16 %v3612, %v3611
  %v3724 = vpack.c.bf16 %v3614, %v3613
  %v3725 = vpack.c.bf16 %v3616, %v3615
  %v3726 = vpack.c.bf16 %v3618, %v3617
  %v3727 = vpack.c.bf16 %v3620, %v3619
  %v3728 = vpack.c.bf16 %v3622, %v3621
  %v3729 = vpack.c.bf16 %v3624, %v3623
  %v3730 = vpack.c.bf16 %v3626, %v3625
  %v3731 = vpack.c.bf16 %v3628, %v3627
  %v3732 = vpack.c.bf16 %v3630, %v3629
  %v3733 = vpack.c.bf16 %v3632, %v3631
  %v3734 = vpack.c.bf16 %v3634, %v3633
  %v3735 = vpack.c.bf16 %v3636, %v3635
  %v3736 = vpack.c.bf16 %v3638, %v3637
  %v3737 = vpack.c.bf16 %v3640, %v3639
  %v3738 = vpack.c.bf16 %v3642, %v3641
  %v3739 = vpack.c.bf16 %v3644, %v3643
  %v3740 = vpack.c.bf16 %v3646, %v3645
  %v3741 = vpack.c.bf16 %v3648, %v3647
  %v3742 = vpack.c.bf16 %v3650, %v3649
  %v3743 = vpack.c.bf16 %v3652, %v3651
  %v3744 = vpack.c.bf16 %v3654, %v3653
  %v3745 = vpack.c.bf16 %v3656, %v3655
  %v3746 = vpack.c.bf16 %v3658, %v3657
  %v3747 = vpack.c.bf16 %v3660, %v3659
  %v3748 = vpack.c.bf16 %v3662, %v3661
  %v3749 = vpack.c.bf16 %v3664, %v3663
  %v3750 = vpack.c.bf16 %v3666, %v3665
  %v3751 = vpack.c.bf16 %v3668, %v3667
  %v3752 = vpack.c.bf16 %v3670, %v3669
  %v3753 = vpack.c.bf16 %v3672, %v3671
  %v3754 = vpack.c.bf16 %v3674, %v3673
  %v3755 = vpack.c.bf16 %v3676, %v3675
  %v3756 = vpack.c.bf16 %v3678, %v3677
  %v3757 = vpack.c.bf16 %v3680, %v3679
  %v3758 = vpack.c.bf16 %v3682, %v3681
  %v3759 = vpack.c.bf16 %v3684, %v3683
  %v3760 = vpack.c.bf16 %v3686, %v3685
  %v3761 = vpack.c.bf16 %v3688, %v3687
  %v3762 = vpack.c.bf16 %v3690, %v3689
  %v3763 = vpack.c.bf16 %v3692, %v3691
  %v3764 = vpack.c.bf16 %v3694, %v3693
  %v3765 = vpack.c.bf16 %v3696, %v3695
  %v3766 = vpack.c.bf16 %v3698, %v3697
  %v3767 = vpack.c.bf16 %v3700, %v3699
  %v3768 = vpack.c.bf16 %v3702, %v3701
  %v3769 = vpack.c.bf16 %v3704, %v3703
  %v3770 = vpack.c.bf16 %v3706, %v3705
  %v3771 = vld [vmem:[%s5] sm:$0xf]
  %v3772 = vld [vmem:[%s5 + $0x4] sm:$0xf]
  %v3773 = vld [vmem:[%s5 + $0x8] sm:$0xf]
  %v3774 = vld [vmem:[%s5 + $0xc] sm:$0xf]
  %v3775 = vld [vmem:[%s5 + $0x10] sm:$0xf]
  %v3776 = vld [vmem:[%s5 + $0x14] sm:$0xf]
  %v3777 = vld [vmem:[%s5 + $0x18] sm:$0xf]
  %v3778 = vld [vmem:[%s5 + $0x1c] sm:$0xf]
  %v3779 = vld [vmem:[%s6] sm:$0x1]
  %v3781 = vlaneseq
  %v3782 = vshrl.u32 %v3781, 7
  %v3783 = vsub.s32 0, %v3782
  %v3784 = vrot.slane %v3779, %v3783
  %v3794 = vunpack.c.l.b16 %v3771
  %v3795 = vunpack.c.l.b16 %v3772
  %v3796 = vunpack.c.l.b16 %v3773
  %v3797 = vunpack.c.l.b16 %v3774
  %v3798 = vunpack.c.l.b16 %v3775
  %v3799 = vunpack.c.l.b16 %v3776
  %v3800 = vunpack.c.l.b16 %v3777
  %v3801 = vunpack.c.l.b16 %v3778
  %v3802 = vpack.c.b16 %v3795, %v3794
  %v3803 = vpack.c.b16 %v3797, %v3796
  %v3804 = vpack.c.b16 %v3799, %v3798
  %v3805 = vpack.c.b16 %v3801, %v3800
  %v3811 = vsel %vm2841, %v3707, 0
  %v3814 = vsel %vm2841, %v3708, 0
  %v3817 = vsel %vm2841, %v3709, 0
  %v3820 = vsel %vm2841, %v3710, 0
  %v3823 = vsel %vm2841, %v3711, 0
  %v3826 = vsel %vm2841, %v3712, 0
  %v3829 = vsel %vm2841, %v3713, 0
  %v3832 = vsel %vm2841, %v3714, 0
  %v3835 = vsel %vm2841, %v3715, 0
  %v3838 = vsel %vm2841, %v3716, 0
  %v3841 = vsel %vm2841, %v3717, 0
  %v3844 = vsel %vm2841, %v3718, 0
  %v3847 = vsel %vm2841, %v3719, 0
  %v3850 = vsel %vm2841, %v3720, 0
  %v3853 = vsel %vm2841, %v3721, 0
  %v3856 = vsel %vm2841, %v3722, 0
  %v3859 = vsel %vm2841, %v3723, 0
  %v3862 = vsel %vm2841, %v3724, 0
  %v3865 = vsel %vm2841, %v3725, 0
  %v3868 = vsel %vm2841, %v3726, 0
  %v3871 = vsel %vm2841, %v3727, 0
  %v3874 = vsel %vm2841, %v3728, 0
  %v3877 = vsel %vm2841, %v3729, 0
  %v3880 = vsel %vm2841, %v3730, 0
  %v3883 = vsel %vm2841, %v3731, 0
  %v3886 = vsel %vm2841, %v3732, 0
  %v3889 = vsel %vm2841, %v3733, 0
  %v3892 = vsel %vm2841, %v3734, 0
  %v3895 = vsel %vm2841, %v3735, 0
  %v3898 = vsel %vm2841, %v3736, 0
  %v3901 = vsel %vm2841, %v3737, 0
  %v3904 = vsel %vm2841, %v3738, 0
  %v3907 = vsel %vm2841, %v3739, 0
  %v3910 = vsel %vm2841, %v3740, 0
  %v3913 = vsel %vm2841, %v3741, 0
  %v3916 = vsel %vm2841, %v3742, 0
  %v3919 = vsel %vm2841, %v3743, 0
  %v3922 = vsel %vm2841, %v3744, 0
  %v3925 = vsel %vm2841, %v3745, 0
  %v3928 = vsel %vm2841, %v3746, 0
  %v3931 = vsel %vm2841, %v3747, 0
  %v3934 = vsel %vm2841, %v3748, 0
  %v3937 = vsel %vm2841, %v3749, 0
  %v3940 = vsel %vm2841, %v3750, 0
  %v3943 = vsel %vm2841, %v3751, 0
  %v3946 = vsel %vm2841, %v3752, 0
  %v3949 = vsel %vm2841, %v3753, 0
  %v3952 = vsel %vm2841, %v3754, 0
  %v3955 = vsel %vm2841, %v3755, 0
  %v3958 = vsel %vm2841, %v3756, 0
  %v3961 = vsel %vm2841, %v3757, 0
  %v3964 = vsel %vm2841, %v3758, 0
  %v3967 = vsel %vm2841, %v3759, 0
  %v3970 = vsel %vm2841, %v3760, 0
  %v3973 = vsel %vm2841, %v3761, 0
  %v3976 = vsel %vm2841, %v3762, 0
  %v3979 = vsel %vm2841, %v3763, 0
  %v3982 = vsel %vm2841, %v3764, 0
  %v3985 = vsel %vm2841, %v3765, 0
  %v3988 = vsel %vm2841, %v3766, 0
  %v3991 = vsel %vm2841, %v3767, 0
  %v3994 = vsel %vm2841, %v3768, 0
  %v3997 = vsel %vm2841, %v3769, 0
  %v4000 = vsel %vm2841, %v3770, 0
  %4002 = vmatprep.subr.bf16.mxu0 0
  %4003 = vmatpush1.bf16.msra.mxu0 %v3802
  %4004 = vmatprep.subr.bf16.mxu0 0
  %4005 = vmatpush1.bf16.msra.mxu0 %v3803
  %4006 = vmatprep.subr.bf16.mxu0 0
  %4007 = vmatpush1.bf16.msra.mxu0 %v3804
  %4008 = vmatprep.subr.bf16.mxu0 0
  %4009 = vmatpush1.bf16.msra.mxu0 %v3805
  %4010 = vmatprep.subr.bf16.mxu0 0
  %4011 = vmatpush1.bf16.msra.mxu0 0
  %4012 = vmatprep.subr.bf16.mxu0 0
  %4013 = vmatpush1.bf16.msra.mxu0 0
  %4014 = vmatprep.subr.bf16.mxu0 0
  %4015 = vmatpush1.bf16.msra.mxu0 0
  %4016 = vmatprep.subr.bf16.mxu0 0
  %4017 = vmatpush1.bf16.msra.mxu0 0
  %4018 = vmatprep.subr.bf16.mxu0 0
  %4019 = vmatpush1.bf16.msra.mxu0 0
  %4020 = vmatprep.subr.bf16.mxu0 0
  %4021 = vmatpush1.bf16.msra.mxu0 0
  %4022 = vmatprep.subr.bf16.mxu0 0
  %4023 = vmatpush1.bf16.msra.mxu0 0
  %4024 = vmatprep.subr.bf16.mxu0 0
  %4025 = vmatpush1.bf16.msra.mxu0 0
  %4026 = vmatprep.subr.bf16.mxu0 0
  %4027 = vmatpush1.bf16.msra.mxu0 0
  %4028 = vmatprep.subr.bf16.mxu0 0
  %4029 = vmatpush1.bf16.msra.mxu0 0
  %4030 = vmatprep.subr.bf16.mxu0 0
  %4031 = vmatpush1.bf16.msra.mxu0 0
  %4032 = vmatprep.subr.bf16.mxu0 0
  %4033 = vmatpush1.bf16.msra.mxu0 0
  %4034 = vmatprep.mubr.bf16.mxu0 0
  %4035 = vmatmul.mubr.bf16.gmra.mrb[0].mxu0 %v3811
  %v4036 = vpop.f32.mrb[0].mxu0
  %v4037 = vadd.f32 %v3784, %v4036
  %v4038 = vpop.f32.mrb[0].mxu0
  %v4039 = vpop.f32.mrb[0].mxu0
  %v4040 = vadd.f32 %v3784, %v4039
  %v4041 = vpop.f32.mrb[0].mxu0
  %4042 = vmatprep.mubr.bf16.mxu0 0
  %4043 = vmatmul.mubr.bf16.gmra.mrb[0].mxu0 %v3814
  %v4044 = vpop.f32.mrb[0].mxu0
  %v4045 = vadd.f32 %v3784, %v4044
  %v4046 = vpop.f32.mrb[0].mxu0
  %v4047 = vpop.f32.mrb[0].mxu0
  %v4048 = vadd.f32 %v3784, %v4047
  %v4049 = vpop.f32.mrb[0].mxu0
  %4050 = vmatprep.mubr.bf16.mxu0 0
  %4051 = vmatmul.mubr.bf16.gmra.mrb[0].mxu0 %v3817
  %v4052 = vpop.f32.mrb[0].mxu0
  %v4053 = vadd.f32 %v3784, %v4052
  %v4054 = vpop.f32.mrb[0].mxu0
  %v4055 = vpop.f32.mrb[0].mxu0
  %v4056 = vadd.f32 %v3784, %v4055
  %v4057 = vpop.f32.mrb[0].mxu0
  %4058 = vmatprep.mubr.bf16.mxu0 0
  %4059 = vmatmul.mubr.bf16.gmra.mrb[0].mxu0 %v3820
  %v4060 = vpop.f32.mrb[0].mxu0
  %v4061 = vadd.f32 %v3784, %v4060
  %v4062 = vpop.f32.mrb[0].mxu0
  %v4063 = vpop.f32.mrb[0].mxu0
  %v4064 = vadd.f32 %v3784, %v4063
  %v4065 = vpop.f32.mrb[0].mxu0
  %4066 = vmatprep.mubr.bf16.mxu0 0
  %4067 = vmatmul.mubr.bf16.gmra.mrb[0].mxu0 %v3823
  %v4068 = vpop.f32.mrb[0].mxu0
  %v4069 = vadd.f32 %v3784, %v4068
  %v4070 = vpop.f32.mrb[0].mxu0
  %v4071 = vpop.f32.mrb[0].mxu0
  %v4072 = vadd.f32 %v3784, %v4071
  %v4073 = vpop.f32.mrb[0].mxu0
  %4074 = vmatprep.mubr.bf16.mxu0 0
  %4075 = vmatmul.mubr.bf16.gmra.mrb[0].mxu0 %v3826
  %v4076 = vpop.f32.mrb[0].mxu0
  %v4077 = vadd.f32 %v3784, %v4076
  %v4078 = vpop.f32.mrb[0].mxu0
  %v4079 = vpop.f32.mrb[0].mxu0
  %v4080 = vadd.f32 %v3784, %v4079
  %v4081 = vpop.f32.mrb[0].mxu0
  %4082 = vmatprep.mubr.bf16.mxu0 0
  %4083 = vmatmul.mubr.bf16.gmra.mrb[0].mxu0 %v3829
  %v4084 = vpop.f32.mrb[0].mxu0
  %v4085 = vadd.f32 %v3784, %v4084
  %v4086 = vpop.f32.mrb[0].mxu0
  %v4087 = vpop.f32.mrb[0].mxu0
  %v4088 = vadd.f32 %v3784, %v4087
  %v4089 = vpop.f32.mrb[0].mxu0
  %4090 = vmatprep.mubr.bf16.mxu0 0
  %4091 = vmatmul.mubr.bf16.gmra.mrb[0].mxu0 %v3832
  %v4092 = vpop.f32.mrb[0].mxu0
  %v4093 = vadd.f32 %v3784, %v4092
  %v4094 = vpop.f32.mrb[0].mxu0
  %v4095 = vpop.f32.mrb[0].mxu0
  %v4096 = vadd.f32 %v3784, %v4095
  %v4097 = vpop.f32.mrb[0].mxu0
  %4098 = vmatprep.mubr.bf16.mxu0 0
  %4099 = vmatmul.mubr.bf16.gmra.mrb[0].mxu0 %v3835
  %v4100 = vpop.f32.mrb[0].mxu0
  %v4101 = vadd.f32 %v3784, %v4100
  %v4102 = vpop.f32.mrb[0].mxu0
  %v4103 = vpop.f32.mrb[0].mxu0
  %v4104 = vadd.f32 %v3784, %v4103
  %v4105 = vpop.f32.mrb[0].mxu0
  %4106 = vmatprep.mubr.bf16.mxu0 0
  %4107 = vmatmul.mubr.bf16.gmra.mrb[0].mxu0 %v3838
  %v4108 = vpop.f32.mrb[0].mxu0
  %v4109 = vadd.f32 %v3784, %v4108
  %v4110 = vpop.f32.mrb[0].mxu0
  %v4111 = vpop.f32.mrb[0].mxu0
  %v4112 = vadd.f32 %v3784, %v4111
  %v4113 = vpop.f32.mrb[0].mxu0
  %4114 = vmatprep.mubr.bf16.mxu0 0
  %4115 = vmatmul.mubr.bf16.gmra.mrb[0].mxu0 %v3841
  %v4116 = vpop.f32.mrb[0].mxu0
  %v4117 = vadd.f32 %v3784, %v4116
  %v4118 = vpop.f32.mrb[0].mxu0
  %v4119 = vpop.f32.mrb[0].mxu0
  %v4120 = vadd.f32 %v3784, %v4119
  %v4121 = vpop.f32.mrb[0].mxu0
  %4122 = vmatprep.mubr.bf16.mxu0 0
  %4123 = vmatmul.mubr.bf16.gmra.mrb[0].mxu0 %v3844
  %v4124 = vpop.f32.mrb[0].mxu0
  %v4125 = vadd.f32 %v3784, %v4124
  %v4126 = vpop.f32.mrb[0].mxu0
  %v4127 = vpop.f32.mrb[0].mxu0
  %v4128 = vadd.f32 %v3784, %v4127
  %v4129 = vpop.f32.mrb[0].mxu0
  %4130 = vmatprep.mubr.bf16.mxu0 0
  %4131 = vmatmul.mubr.bf16.gmra.mrb[0].mxu0 %v3847
  %v4132 = vpop.f32.mrb[0].mxu0
  %v4133 = vadd.f32 %v3784, %v4132
  %v4134 = vpop.f32.mrb[0].mxu0
  %v4135 = vpop.f32.mrb[0].mxu0
  %v4136 = vadd.f32 %v3784, %v4135
  %v4137 = vpop.f32.mrb[0].mxu0
  %4138 = vmatprep.mubr.bf16.mxu0 0
  %4139 = vmatmul.mubr.bf16.gmra.mrb[0].mxu0 %v3850
  %v4140 = vpop.f32.mrb[0].mxu0
  %v4141 = vadd.f32 %v3784, %v4140
  %v4142 = vpop.f32.mrb[0].mxu0
  %v4143 = vpop.f32.mrb[0].mxu0
  %v4144 = vadd.f32 %v3784, %v4143
  %v4145 = vpop.f32.mrb[0].mxu0
  %4146 = vmatprep.mubr.bf16.mxu0 0
  %4147 = vmatmul.mubr.bf16.gmra.mrb[0].mxu0 %v3853
  %v4148 = vpop.f32.mrb[0].mxu0
  %v4149 = vadd.f32 %v3784, %v4148
  %v4150 = vpop.f32.mrb[0].mxu0
  %v4151 = vpop.f32.mrb[0].mxu0
  %v4152 = vadd.f32 %v3784, %v4151
  %v4153 = vpop.f32.mrb[0].mxu0
  %4154 = vmatprep.mubr.bf16.mxu0 0
  %4155 = vmatmul.mubr.bf16.gmra.mrb[0].mxu0 %v3856
  %v4156 = vpop.f32.mrb[0].mxu0
  %v4157 = vadd.f32 %v3784, %v4156
  %v4158 = vpop.f32.mrb[0].mxu0
  %v4159 = vpop.f32.mrb[0].mxu0
  %v4160 = vadd.f32 %v3784, %v4159
  %v4161 = vpop.f32.mrb[0].mxu0
  %4162 = vmatprep.mubr.bf16.mxu0 0
  %4163 = vmatmul.mubr.bf16.gmra.mrb[0].mxu0 %v3859
  %v4164 = vpop.f32.mrb[0].mxu0
  %v4165 = vadd.f32 %v3784, %v4164
  %v4166 = vpop.f32.mrb[0].mxu0
  %v4167 = vpop.f32.mrb[0].mxu0
  %v4168 = vadd.f32 %v3784, %v4167
  %v4169 = vpop.f32.mrb[0].mxu0
  %4170 = vmatprep.mubr.bf16.mxu0 0
  %4171 = vmatmul.mubr.bf16.gmra.mrb[0].mxu0 %v3862
  %v4172 = vpop.f32.mrb[0].mxu0
  %v4173 = vadd.f32 %v3784, %v4172
  %v4174 = vpop.f32.mrb[0].mxu0
  %v4175 = vpop.f32.mrb[0].mxu0
  %v4176 = vadd.f32 %v3784, %v4175
  %v4177 = vpop.f32.mrb[0].mxu0
  %4178 = vmatprep.mubr.bf16.mxu0 0
  %4179 = vmatmul.mubr.bf16.gmra.mrb[0].mxu0 %v3865
  %v4180 = vpop.f32.mrb[0].mxu0
  %v4181 = vadd.f32 %v3784, %v4180
  %v4182 = vpop.f32.mrb[0].mxu0
  %v4183 = vpop.f32.mrb[0].mxu0
  %v4184 = vadd.f32 %v3784, %v4183
  %v4185 = vpop.f32.mrb[0].mxu0
  %4186 = vmatprep.mubr.bf16.mxu0 0
  %4187 = vmatmul.mubr.bf16.gmra.mrb[0].mxu0 %v3868
  %v4188 = vpop.f32.mrb[0].mxu0
  %v4189 = vadd.f32 %v3784, %v4188
  %v4190 = vpop.f32.mrb[0].mxu0
  %v4191 = vpop.f32.mrb[0].mxu0
  %v4192 = vadd.f32 %v3784, %v4191
  %v4193 = vpop.f32.mrb[0].mxu0
  %4194 = vmatprep.mubr.bf16.mxu0 0
  %4195 = vmatmul.mubr.bf16.gmra.mrb[0].mxu0 %v3871
  %v4196 = vpop.f32.mrb[0].mxu0
  %v4197 = vadd.f32 %v3784, %v4196
  %v4198 = vpop.f32.mrb[0].mxu0
  %v4199 = vpop.f32.mrb[0].mxu0
  %v4200 = vadd.f32 %v3784, %v4199
  %v4201 = vpop.f32.mrb[0].mxu0
  %4202 = vmatprep.mubr.bf16.mxu0 0
  %4203 = vmatmul.mubr.bf16.gmra.mrb[0].mxu0 %v3874
  %v4204 = vpop.f32.mrb[0].mxu0
  %v4205 = vadd.f32 %v3784, %v4204
  %v4206 = vpop.f32.mrb[0].mxu0
  %v4207 = vpop.f32.mrb[0].mxu0
  %v4208 = vadd.f32 %v3784, %v4207
  %v4209 = vpop.f32.mrb[0].mxu0
  %4210 = vmatprep.mubr.bf16.mxu0 0
  %4211 = vmatmul.mubr.bf16.gmra.mrb[0].mxu0 %v3877
  %v4212 = vpop.f32.mrb[0].mxu0
  %v4213 = vadd.f32 %v3784, %v4212
  %v4214 = vpop.f32.mrb[0].mxu0
  %v4215 = vpop.f32.mrb[0].mxu0
  %v4216 = vadd.f32 %v3784, %v4215
  %v4217 = vpop.f32.mrb[0].mxu0
  %4218 = vmatprep.mubr.bf16.mxu0 0
  %4219 = vmatmul.mubr.bf16.gmra.mrb[0].mxu0 %v3880
  %v4220 = vpop.f32.mrb[0].mxu0
  %v4221 = vadd.f32 %v3784, %v4220
  %v4222 = vpop.f32.mrb[0].mxu0
  %v4223 = vpop.f32.mrb[0].mxu0
  %v4224 = vadd.f32 %v3784, %v4223
  %v4225 = vpop.f32.mrb[0].mxu0
  %4226 = vmatprep.mubr.bf16.mxu0 0
  %4227 = vmatmul.mubr.bf16.gmra.mrb[0].mxu0 %v3883
  %v4228 = vpop.f32.mrb[0].mxu0
  %v4229 = vadd.f32 %v3784, %v4228
  %v4230 = vpop.f32.mrb[0].mxu0
  %v4231 = vpop.f32.mrb[0].mxu0
  %v4232 = vadd.f32 %v3784, %v4231
  %v4233 = vpop.f32.mrb[0].mxu0
  %4234 = vmatprep.mubr.bf16.mxu0 0
  %4235 = vmatmul.mubr.bf16.gmra.mrb[0].mxu0 %v3886
  %v4236 = vpop.f32.mrb[0].mxu0
  %v4237 = vadd.f32 %v3784, %v4236
  %v4238 = vpop.f32.mrb[0].mxu0
  %v4239 = vpop.f32.mrb[0].mxu0
  %v4240 = vadd.f32 %v3784, %v4239
  %v4241 = vpop.f32.mrb[0].mxu0
  %4242 = vmatprep.mubr.bf16.mxu0 0
  %4243 = vmatmul.mubr.bf16.gmra.mrb[0].mxu0 %v3889
  %v4244 = vpop.f32.mrb[0].mxu0
  %v4245 = vadd.f32 %v3784, %v4244
  %v4246 = vpop.f32.mrb[0].mxu0
  %v4247 = vpop.f32.mrb[0].mxu0
  %v4248 = vadd.f32 %v3784, %v4247
  %v4249 = vpop.f32.mrb[0].mxu0
  %4250 = vmatprep.mubr.bf16.mxu0 0
  %4251 = vmatmul.mubr.bf16.gmra.mrb[0].mxu0 %v3892
  %v4252 = vpop.f32.mrb[0].mxu0
  %v4253 = vadd.f32 %v3784, %v4252
  %v4254 = vpop.f32.mrb[0].mxu0
  %v4255 = vpop.f32.mrb[0].mxu0
  %v4256 = vadd.f32 %v3784, %v4255
  %v4257 = vpop.f32.mrb[0].mxu0
  %4258 = vmatprep.mubr.bf16.mxu0 0
  %4259 = vmatmul.mubr.bf16.gmra.mrb[0].mxu0 %v3895
  %v4260 = vpop.f32.mrb[0].mxu0
  %v4261 = vadd.f32 %v3784, %v4260
  %v4262 = vpop.f32.mrb[0].mxu0
  %v4263 = vpop.f32.mrb[0].mxu0
  %v4264 = vadd.f32 %v3784, %v4263
  %v4265 = vpop.f32.mrb[0].mxu0
  %4266 = vmatprep.mubr.bf16.mxu0 0
  %4267 = vmatmul.mubr.bf16.gmra.mrb[0].mxu0 %v3898
  %v4268 = vpop.f32.mrb[0].mxu0
  %v4269 = vadd.f32 %v3784, %v4268
  %v4270 = vpop.f32.mrb[0].mxu0
  %v4271 = vpop.f32.mrb[0].mxu0
  %v4272 = vadd.f32 %v3784, %v4271
  %v4273 = vpop.f32.mrb[0].mxu0
  %4274 = vmatprep.mubr.bf16.mxu0 0
  %4275 = vmatmul.mubr.bf16.gmra.mrb[0].mxu0 %v3901
  %v4276 = vpop.f32.mrb[0].mxu0
  %v4277 = vadd.f32 %v3784, %v4276
  %v4278 = vpop.f32.mrb[0].mxu0
  %v4279 = vpop.f32.mrb[0].mxu0
  %v4280 = vadd.f32 %v3784, %v4279
  %v4281 = vpop.f32.mrb[0].mxu0
  %4282 = vmatprep.mubr.bf16.mxu0 0
  %4283 = vmatmul.mubr.bf16.gmra.mrb[0].mxu0 %v3904
  %v4284 = vpop.f32.mrb[0].mxu0
  %v4285 = vadd.f32 %v3784, %v4284
  %v4286 = vpop.f32.mrb[0].mxu0
  %v4287 = vpop.f32.mrb[0].mxu0
  %v4288 = vadd.f32 %v3784, %v4287
  %v4289 = vpop.f32.mrb[0].mxu0
  %4290 = vmatprep.mubr.bf16.mxu0 0
  %4291 = vmatmul.mubr.bf16.gmra.mrb[0].mxu0 %v3907
  %v4292 = vpop.f32.mrb[0].mxu0
  %v4293 = vadd.f32 %v3784, %v4292
  %v4294 = vpop.f32.mrb[0].mxu0
  %v4295 = vpop.f32.mrb[0].mxu0
  %v4296 = vadd.f32 %v3784, %v4295
  %v4297 = vpop.f32.mrb[0].mxu0
  %4298 = vmatprep.mubr.bf16.mxu0 0
  %4299 = vmatmul.mubr.bf16.gmra.mrb[0].mxu0 %v3910
  %v4300 = vpop.f32.mrb[0].mxu0
  %v4301 = vadd.f32 %v3784, %v4300
  %v4302 = vpop.f32.mrb[0].mxu0
  %v4303 = vpop.f32.mrb[0].mxu0
  %v4304 = vadd.f32 %v3784, %v4303
  %v4305 = vpop.f32.mrb[0].mxu0
  %4306 = vmatprep.mubr.bf16.mxu0 0
  %4307 = vmatmul.mubr.bf16.gmra.mrb[0].mxu0 %v3913
  %v4308 = vpop.f32.mrb[0].mxu0
  %v4309 = vadd.f32 %v3784, %v4308
  %v4310 = vpop.f32.mrb[0].mxu0
  %v4311 = vpop.f32.mrb[0].mxu0
  %v4312 = vadd.f32 %v3784, %v4311
  %v4313 = vpop.f32.mrb[0].mxu0
  %4314 = vmatprep.mubr.bf16.mxu0 0
  %4315 = vmatmul.mubr.bf16.gmra.mrb[0].mxu0 %v3916
  %v4316 = vpop.f32.mrb[0].mxu0
  %v4317 = vadd.f32 %v3784, %v4316
  %v4318 = vpop.f32.mrb[0].mxu0
  %v4319 = vpop.f32.mrb[0].mxu0
  %v4320 = vadd.f32 %v3784, %v4319
  %v4321 = vpop.f32.mrb[0].mxu0
  %4322 = vmatprep.mubr.bf16.mxu0 0
  %4323 = vmatmul.mubr.bf16.gmra.mrb[0].mxu0 %v3919
  %v4324 = vpop.f32.mrb[0].mxu0
  %v4325 = vadd.f32 %v3784, %v4324
  %v4326 = vpop.f32.mrb[0].mxu0
  %v4327 = vpop.f32.mrb[0].mxu0
  %v4328 = vadd.f32 %v3784, %v4327
  %v4329 = vpop.f32.mrb[0].mxu0
  %4330 = vmatprep.mubr.bf16.mxu0 0
  %4331 = vmatmul.mubr.bf16.gmra.mrb[0].mxu0 %v3922
  %v4332 = vpop.f32.mrb[0].mxu0
  %v4333 = vadd.f32 %v3784, %v4332
  %v4334 = vpop.f32.mrb[0].mxu0
  %v4335 = vpop.f32.mrb[0].mxu0
  %v4336 = vadd.f32 %v3784, %v4335
  %v4337 = vpop.f32.mrb[0].mxu0
  %4338 = vmatprep.mubr.bf16.mxu0 0
  %4339 = vmatmul.mubr.bf16.gmra.mrb[0].mxu0 %v3925
  %v4340 = vpop.f32.mrb[0].mxu0
  %v4341 = vadd.f32 %v3784, %v4340
  %v4342 = vpop.f32.mrb[0].mxu0
  %v4343 = vpop.f32.mrb[0].mxu0
  %v4344 = vadd.f32 %v3784, %v4343
  %v4345 = vpop.f32.mrb[0].mxu0
  %4346 = vmatprep.mubr.bf16.mxu0 0
  %4347 = vmatmul.mubr.bf16.gmra.mrb[0].mxu0 %v3928
  %v4348 = vpop.f32.mrb[0].mxu0
  %v4349 = vadd.f32 %v3784, %v4348
  %v4350 = vpop.f32.mrb[0].mxu0
  %v4351 = vpop.f32.mrb[0].mxu0
  %v4352 = vadd.f32 %v3784, %v4351
  %v4353 = vpop.f32.mrb[0].mxu0
  %4354 = vmatprep.mubr.bf16.mxu0 0
  %4355 = vmatmul.mubr.bf16.gmra.mrb[0].mxu0 %v3931
  %v4356 = vpop.f32.mrb[0].mxu0
  %v4357 = vadd.f32 %v3784, %v4356
  %v4358 = vpop.f32.mrb[0].mxu0
  %v4359 = vpop.f32.mrb[0].mxu0
  %v4360 = vadd.f32 %v3784, %v4359
  %v4361 = vpop.f32.mrb[0].mxu0
  %4362 = vmatprep.mubr.bf16.mxu0 0
  %4363 = vmatmul.mubr.bf16.gmra.mrb[0].mxu0 %v3934
  %v4364 = vpop.f32.mrb[0].mxu0
  %v4365 = vadd.f32 %v3784, %v4364
  %v4366 = vpop.f32.mrb[0].mxu0
  %v4367 = vpop.f32.mrb[0].mxu0
  %v4368 = vadd.f32 %v3784, %v4367
  %v4369 = vpop.f32.mrb[0].mxu0
  %4370 = vmatprep.mubr.bf16.mxu0 0
  %4371 = vmatmul.mubr.bf16.gmra.mrb[0].mxu0 %v3937
  %v4372 = vpop.f32.mrb[0].mxu0
  %v4373 = vadd.f32 %v3784, %v4372
  %v4374 = vpop.f32.mrb[0].mxu0
  %v4375 = vpop.f32.mrb[0].mxu0
  %v4376 = vadd.f32 %v3784, %v4375
  %v4377 = vpop.f32.mrb[0].mxu0
  %4378 = vmatprep.mubr.bf16.mxu0 0
  %4379 = vmatmul.mubr.bf16.gmra.mrb[0].mxu0 %v3940
  %v4380 = vpop.f32.mrb[0].mxu0
  %v4381 = vadd.f32 %v3784, %v4380
  %v4382 = vpop.f32.mrb[0].mxu0
  %v4383 = vpop.f32.mrb[0].mxu0
  %v4384 = vadd.f32 %v3784, %v4383
  %v4385 = vpop.f32.mrb[0].mxu0
  %4386 = vmatprep.mubr.bf16.mxu0 0
  %4387 = vmatmul.mubr.bf16.gmra.mrb[0].mxu0 %v3943
  %v4388 = vpop.f32.mrb[0].mxu0
  %v4389 = vadd.f32 %v3784, %v4388
  %v4390 = vpop.f32.mrb[0].mxu0
  %v4391 = vpop.f32.mrb[0].mxu0
  %v4392 = vadd.f32 %v3784, %v4391
  %v4393 = vpop.f32.mrb[0].mxu0
  %4394 = vmatprep.mubr.bf16.mxu0 0
  %4395 = vmatmul.mubr.bf16.gmra.mrb[0].mxu0 %v3946
  %v4396 = vpop.f32.mrb[0].mxu0
  %v4397 = vadd.f32 %v3784, %v4396
  %v4398 = vpop.f32.mrb[0].mxu0
  %v4399 = vpop.f32.mrb[0].mxu0
  %v4400 = vadd.f32 %v3784, %v4399
  %v4401 = vpop.f32.mrb[0].mxu0
  %4402 = vmatprep.mubr.bf16.mxu0 0
  %4403 = vmatmul.mubr.bf16.gmra.mrb[0].mxu0 %v3949
  %v4404 = vpop.f32.mrb[0].mxu0
  %v4405 = vadd.f32 %v3784, %v4404
  %v4406 = vpop.f32.mrb[0].mxu0
  %v4407 = vpop.f32.mrb[0].mxu0
  %v4408 = vadd.f32 %v3784, %v4407
  %v4409 = vpop.f32.mrb[0].mxu0
  %4410 = vmatprep.mubr.bf16.mxu0 0
  %4411 = vmatmul.mubr.bf16.gmra.mrb[0].mxu0 %v3952
  %v4412 = vpop.f32.mrb[0].mxu0
  %v4413 = vadd.f32 %v3784, %v4412
  %v4414 = vpop.f32.mrb[0].mxu0
  %v4415 = vpop.f32.mrb[0].mxu0
  %v4416 = vadd.f32 %v3784, %v4415
  %v4417 = vpop.f32.mrb[0].mxu0
  %4418 = vmatprep.mubr.bf16.mxu0 0
  %4419 = vmatmul.mubr.bf16.gmra.mrb[0].mxu0 %v3955
  %v4420 = vpop.f32.mrb[0].mxu0
  %v4421 = vadd.f32 %v3784, %v4420
  %v4422 = vpop.f32.mrb[0].mxu0
  %v4423 = vpop.f32.mrb[0].mxu0
  %v4424 = vadd.f32 %v3784, %v4423
  %v4425 = vpop.f32.mrb[0].mxu0
  %4426 = vmatprep.mubr.bf16.mxu0 0
  %4427 = vmatmul.mubr.bf16.gmra.mrb[0].mxu0 %v3958
  %v4428 = vpop.f32.mrb[0].mxu0
  %v4429 = vadd.f32 %v3784, %v4428
  %v4430 = vpop.f32.mrb[0].mxu0
  %v4431 = vpop.f32.mrb[0].mxu0
  %v4432 = vadd.f32 %v3784, %v4431
  %v4433 = vpop.f32.mrb[0].mxu0
  %4434 = vmatprep.mubr.bf16.mxu0 0
  %4435 = vmatmul.mubr.bf16.gmra.mrb[0].mxu0 %v3961
  %v4436 = vpop.f32.mrb[0].mxu0
  %v4437 = vadd.f32 %v3784, %v4436
  %v4438 = vpop.f32.mrb[0].mxu0
  %v4439 = vpop.f32.mrb[0].mxu0
  %v4440 = vadd.f32 %v3784, %v4439
  %v4441 = vpop.f32.mrb[0].mxu0
  %4442 = vmatprep.mubr.bf16.mxu0 0
  %4443 = vmatmul.mubr.bf16.gmra.mrb[0].mxu0 %v3964
  %v4444 = vpop.f32.mrb[0].mxu0
  %v4445 = vadd.f32 %v3784, %v4444
  %v4446 = vpop.f32.mrb[0].mxu0
  %v4447 = vpop.f32.mrb[0].mxu0
  %v4448 = vadd.f32 %v3784, %v4447
  %v4449 = vpop.f32.mrb[0].mxu0
  %4450 = vmatprep.mubr.bf16.mxu0 0
  %4451 = vmatmul.mubr.bf16.gmra.mrb[0].mxu0 %v3967
  %v4452 = vpop.f32.mrb[0].mxu0
  %v4453 = vadd.f32 %v3784, %v4452
  %v4454 = vpop.f32.mrb[0].mxu0
  %v4455 = vpop.f32.mrb[0].mxu0
  %v4456 = vadd.f32 %v3784, %v4455
  %v4457 = vpop.f32.mrb[0].mxu0
  %4458 = vmatprep.mubr.bf16.mxu0 0
  %4459 = vmatmul.mubr.bf16.gmra.mrb[0].mxu0 %v3970
  %v4460 = vpop.f32.mrb[0].mxu0
  %v4461 = vadd.f32 %v3784, %v4460
  %v4462 = vpop.f32.mrb[0].mxu0
  %v4463 = vpop.f32.mrb[0].mxu0
  %v4464 = vadd.f32 %v3784, %v4463
  %v4465 = vpop.f32.mrb[0].mxu0
  %4466 = vmatprep.mubr.bf16.mxu0 0
  %4467 = vmatmul.mubr.bf16.gmra.mrb[0].mxu0 %v3973
  %v4468 = vpop.f32.mrb[0].mxu0
  %v4469 = vadd.f32 %v3784, %v4468
  %v4470 = vpop.f32.mrb[0].mxu0
  %v4471 = vpop.f32.mrb[0].mxu0
  %v4472 = vadd.f32 %v3784, %v4471
  %v4473 = vpop.f32.mrb[0].mxu0
  %4474 = vmatprep.mubr.bf16.mxu0 0
  %4475 = vmatmul.mubr.bf16.gmra.mrb[0].mxu0 %v3976
  %v4476 = vpop.f32.mrb[0].mxu0
  %v4477 = vadd.f32 %v3784, %v4476
  %v4478 = vpop.f32.mrb[0].mxu0
  %v4479 = vpop.f32.mrb[0].mxu0
  %v4480 = vadd.f32 %v3784, %v4479
  %v4481 = vpop.f32.mrb[0].mxu0
  %4482 = vmatprep.mubr.bf16.mxu0 0
  %4483 = vmatmul.mubr.bf16.gmra.mrb[0].mxu0 %v3979
  %v4484 = vpop.f32.mrb[0].mxu0
  %v4485 = vadd.f32 %v3784, %v4484
  %v4486 = vpop.f32.mrb[0].mxu0
  %v4487 = vpop.f32.mrb[0].mxu0
  %v4488 = vadd.f32 %v3784, %v4487
  %v4489 = vpop.f32.mrb[0].mxu0
  %4490 = vmatprep.mubr.bf16.mxu0 0
  %4491 = vmatmul.mubr.bf16.gmra.mrb[0].mxu0 %v3982
  %v4492 = vpop.f32.mrb[0].mxu0
  %v4493 = vadd.f32 %v3784, %v4492
  %v4494 = vpop.f32.mrb[0].mxu0
  %v4495 = vpop.f32.mrb[0].mxu0
  %v4496 = vadd.f32 %v3784, %v4495
  %v4497 = vpop.f32.mrb[0].mxu0
  %4498 = vmatprep.mubr.bf16.mxu0 0
  %4499 = vmatmul.mubr.bf16.gmra.mrb[0].mxu0 %v3985
  %v4500 = vpop.f32.mrb[0].mxu0
  %v4501 = vadd.f32 %v3784, %v4500
  %v4502 = vpop.f32.mrb[0].mxu0
  %v4503 = vpop.f32.mrb[0].mxu0
  %v4504 = vadd.f32 %v3784, %v4503
  %v4505 = vpop.f32.mrb[0].mxu0
  %4506 = vmatprep.mubr.bf16.mxu0 0
  %4507 = vmatmul.mubr.bf16.gmra.mrb[0].mxu0 %v3988
  %v4508 = vpop.f32.mrb[0].mxu0
  %v4509 = vadd.f32 %v3784, %v4508
  %v4510 = vpop.f32.mrb[0].mxu0
  %v4511 = vpop.f32.mrb[0].mxu0
  %v4512 = vadd.f32 %v3784, %v4511
  %v4513 = vpop.f32.mrb[0].mxu0
  %4514 = vmatprep.mubr.bf16.mxu0 0
  %4515 = vmatmul.mubr.bf16.gmra.mrb[0].mxu0 %v3991
  %v4516 = vpop.f32.mrb[0].mxu0
  %v4517 = vadd.f32 %v3784, %v4516
  %v4518 = vpop.f32.mrb[0].mxu0
  %v4519 = vpop.f32.mrb[0].mxu0
  %v4520 = vadd.f32 %v3784, %v4519
  %v4521 = vpop.f32.mrb[0].mxu0
  %4522 = vmatprep.mubr.bf16.mxu0 0
  %4523 = vmatmul.mubr.bf16.gmra.mrb[0].mxu0 %v3994
  %v4524 = vpop.f32.mrb[0].mxu0
  %v4525 = vadd.f32 %v3784, %v4524
  %v4526 = vpop.f32.mrb[0].mxu0
  %v4527 = vpop.f32.mrb[0].mxu0
  %v4528 = vadd.f32 %v3784, %v4527
  %v4529 = vpop.f32.mrb[0].mxu0
  %4530 = vmatprep.mubr.bf16.mxu0 0
  %4531 = vmatmul.mubr.bf16.gmra.mrb[0].mxu0 %v3997
  %v4532 = vpop.f32.mrb[0].mxu0
  %v4533 = vadd.f32 %v3784, %v4532
  %v4534 = vpop.f32.mrb[0].mxu0
  %v4535 = vpop.f32.mrb[0].mxu0
  %v4536 = vadd.f32 %v3784, %v4535
  %v4537 = vpop.f32.mrb[0].mxu0
  %4538 = vmatprep.mubr.bf16.mxu0 0
  %4539 = vmatmul.mubr.bf16.gmra.mrb[0].mxu0 %v4000
  %v4540 = vpop.f32.mrb[0].mxu0
  %v4541 = vadd.f32 %v3784, %v4540
  %v4542 = vpop.f32.mrb[0].mxu0
  %v4543 = vpop.f32.mrb[0].mxu0
  %v4544 = vadd.f32 %v3784, %v4543
  %v4545 = vpop.f32.mrb[0].mxu0
  %4546 = vdwg.mxu0
  %v4547 = vmax.f32 %v4037, 0.0
  %v4548 = vmax.f32 %v4040, 0.0
  %v4549 = vmax.f32 %v4045, 0.0
  %v4550 = vmax.f32 %v4048, 0.0
  %v4551 = vmax.f32 %v4053, 0.0
  %v4552 = vmax.f32 %v4056, 0.0
  %v4553 = vmax.f32 %v4061, 0.0
  %v4554 = vmax.f32 %v4064, 0.0
  %v4555 = vmax.f32 %v4069, 0.0
  %v4556 = vmax.f32 %v4072, 0.0
  %v4557 = vmax.f32 %v4077, 0.0
  %v4558 = vmax.f32 %v4080, 0.0
  %v4559 = vmax.f32 %v4085, 0.0
  %v4560 = vmax.f32 %v4088, 0.0
  %v4561 = vmax.f32 %v4093, 0.0
  %v4562 = vmax.f32 %v4096, 0.0
  %v4563 = vmax.f32 %v4101, 0.0
  %v4564 = vmax.f32 %v4104, 0.0
  %v4565 = vmax.f32 %v4109, 0.0
  %v4566 = vmax.f32 %v4112, 0.0
  %v4567 = vmax.f32 %v4117, 0.0
  %v4568 = vmax.f32 %v4120, 0.0
  %v4569 = vmax.f32 %v4125, 0.0
  %v4570 = vmax.f32 %v4128, 0.0
  %v4571 = vmax.f32 %v4133, 0.0
  %v4572 = vmax.f32 %v4136, 0.0
  %v4573 = vmax.f32 %v4141, 0.0
  %v4574 = vmax.f32 %v4144, 0.0
  %v4575 = vmax.f32 %v4149, 0.0
  %v4576 = vmax.f32 %v4152, 0.0
  %v4577 = vmax.f32 %v4157, 0.0
  %v4578 = vmax.f32 %v4160, 0.0
  %v4579 = vmax.f32 %v4165, 0.0
  %v4580 = vmax.f32 %v4168, 0.0
  %v4581 = vmax.f32 %v4173, 0.0
  %v4582 = vmax.f32 %v4176, 0.0
  %v4583 = vmax.f32 %v4181, 0.0
  %v4584 = vmax.f32 %v4184, 0.0
  %v4585 = vmax.f32 %v4189, 0.0
  %v4586 = vmax.f32 %v4192, 0.0
  %v4587 = vmax.f32 %v4197, 0.0
  %v4588 = vmax.f32 %v4200, 0.0
  %v4589 = vmax.f32 %v4205, 0.0
  %v4590 = vmax.f32 %v4208, 0.0
  %v4591 = vmax.f32 %v4213, 0.0
  %v4592 = vmax.f32 %v4216, 0.0
  %v4593 = vmax.f32 %v4221, 0.0
  %v4594 = vmax.f32 %v4224, 0.0
  %v4595 = vmax.f32 %v4229, 0.0
  %v4596 = vmax.f32 %v4232, 0.0
  %v4597 = vmax.f32 %v4237, 0.0
  %v4598 = vmax.f32 %v4240, 0.0
  %v4599 = vmax.f32 %v4245, 0.0
  %v4600 = vmax.f32 %v4248, 0.0
  %v4601 = vmax.f32 %v4253, 0.0
  %v4602 = vmax.f32 %v4256, 0.0
  %v4603 = vmax.f32 %v4261, 0.0
  %v4604 = vmax.f32 %v4264, 0.0
  %v4605 = vmax.f32 %v4269, 0.0
  %v4606 = vmax.f32 %v4272, 0.0
  %v4607 = vmax.f32 %v4277, 0.0
  %v4608 = vmax.f32 %v4280, 0.0
  %v4609 = vmax.f32 %v4285, 0.0
  %v4610 = vmax.f32 %v4288, 0.0
  %v4611 = vmax.f32 %v4293, 0.0
  %v4612 = vmax.f32 %v4296, 0.0
  %v4613 = vmax.f32 %v4301, 0.0
  %v4614 = vmax.f32 %v4304, 0.0
  %v4615 = vmax.f32 %v4309, 0.0
  %v4616 = vmax.f32 %v4312, 0.0
  %v4617 = vmax.f32 %v4317, 0.0
  %v4618 = vmax.f32 %v4320, 0.0
  %v4619 = vmax.f32 %v4325, 0.0
  %v4620 = vmax.f32 %v4328, 0.0
  %v4621 = vmax.f32 %v4333, 0.0
  %v4622 = vmax.f32 %v4336, 0.0
  %v4623 = vmax.f32 %v4341, 0.0
  %v4624 = vmax.f32 %v4344, 0.0
  %v4625 = vmax.f32 %v4349, 0.0
  %v4626 = vmax.f32 %v4352, 0.0
  %v4627 = vmax.f32 %v4357, 0.0
  %v4628 = vmax.f32 %v4360, 0.0
  %v4629 = vmax.f32 %v4365, 0.0
  %v4630 = vmax.f32 %v4368, 0.0
  %v4631 = vmax.f32 %v4373, 0.0
  %v4632 = vmax.f32 %v4376, 0.0
  %v4633 = vmax.f32 %v4381, 0.0
  %v4634 = vmax.f32 %v4384, 0.0
  %v4635 = vmax.f32 %v4389, 0.0
  %v4636 = vmax.f32 %v4392, 0.0
  %v4637 = vmax.f32 %v4397, 0.0
  %v4638 = vmax.f32 %v4400, 0.0
  %v4639 = vmax.f32 %v4405, 0.0
  %v4640 = vmax.f32 %v4408, 0.0
  %v4641 = vmax.f32 %v4413, 0.0
  %v4642 = vmax.f32 %v4416, 0.0
  %v4643 = vmax.f32 %v4421, 0.0
  %v4644 = vmax.f32 %v4424, 0.0
  %v4645 = vmax.f32 %v4429, 0.0
  %v4646 = vmax.f32 %v4432, 0.0
  %v4647 = vmax.f32 %v4437, 0.0
  %v4648 = vmax.f32 %v4440, 0.0
  %v4649 = vmax.f32 %v4445, 0.0
  %v4650 = vmax.f32 %v4448, 0.0
  %v4651 = vmax.f32 %v4453, 0.0
  %v4652 = vmax.f32 %v4456, 0.0
  %v4653 = vmax.f32 %v4461, 0.0
  %v4654 = vmax.f32 %v4464, 0.0
  %v4655 = vmax.f32 %v4469, 0.0
  %v4656 = vmax.f32 %v4472, 0.0
  %v4657 = vmax.f32 %v4477, 0.0
  %v4658 = vmax.f32 %v4480, 0.0
  %v4659 = vmax.f32 %v4485, 0.0
  %v4660 = vmax.f32 %v4488, 0.0
  %v4661 = vmax.f32 %v4493, 0.0
  %v4662 = vmax.f32 %v4496, 0.0
  %v4663 = vmax.f32 %v4501, 0.0
  %v4664 = vmax.f32 %v4504, 0.0
  %v4665 = vmax.f32 %v4509, 0.0
  %v4666 = vmax.f32 %v4512, 0.0
  %v4667 = vmax.f32 %v4517, 0.0
  %v4668 = vmax.f32 %v4520, 0.0
  %v4669 = vmax.f32 %v4525, 0.0
  %v4670 = vmax.f32 %v4528, 0.0
  %v4671 = vmax.f32 %v4533, 0.0
  %v4672 = vmax.f32 %v4536, 0.0
  %v4673 = vmax.f32 %v4541, 0.0
  %v4674 = vmax.f32 %v4544, 0.0
  %v4675 = vmax.f32 %v4547, %v4548
  %v4676 = vrot.slane %v4675, 4
  %v4677 = vmax.f32 %v4675, %v4676
  %v4678 = vrot.slane %v4677, 2
  %v4679 = vmax.f32 %v4677, %v4678
  %v4680 = vrot.slane %v4679, 1
  %v4681 = vmax.f32 %v4679, %v4680
  %v4682 = vmax.f32 %v4549, %v4550
  %v4683 = vrot.slane %v4682, 4
  %v4684 = vmax.f32 %v4682, %v4683
  %v4685 = vrot.slane %v4684, 2
  %v4686 = vmax.f32 %v4684, %v4685
  %v4687 = vrot.slane %v4686, 1
  %v4688 = vmax.f32 %v4686, %v4687
  %v4689 = vmax.f32 %v4551, %v4552
  %v4690 = vrot.slane %v4689, 4
  %v4691 = vmax.f32 %v4689, %v4690
  %v4692 = vrot.slane %v4691, 2
  %v4693 = vmax.f32 %v4691, %v4692
  %v4694 = vrot.slane %v4693, 1
  %v4695 = vmax.f32 %v4693, %v4694
  %v4696 = vmax.f32 %v4553, %v4554
  %v4697 = vrot.slane %v4696, 4
  %v4698 = vmax.f32 %v4696, %v4697
  %v4699 = vrot.slane %v4698, 2
  %v4700 = vmax.f32 %v4698, %v4699
  %v4701 = vrot.slane %v4700, 1
  %v4702 = vmax.f32 %v4700, %v4701
  %v4703 = vmax.f32 %v4555, %v4556
  %v4704 = vrot.slane %v4703, 4
  %v4705 = vmax.f32 %v4703, %v4704
  %v4706 = vrot.slane %v4705, 2
  %v4707 = vmax.f32 %v4705, %v4706
  %v4708 = vrot.slane %v4707, 1
  %v4709 = vmax.f32 %v4707, %v4708
  %v4710 = vmax.f32 %v4557, %v4558
  %v4711 = vrot.slane %v4710, 4
  %v4712 = vmax.f32 %v4710, %v4711
  %v4713 = vrot.slane %v4712, 2
  %v4714 = vmax.f32 %v4712, %v4713
  %v4715 = vrot.slane %v4714, 1
  %v4716 = vmax.f32 %v4714, %v4715
  %v4717 = vmax.f32 %v4559, %v4560
  %v4718 = vrot.slane %v4717, 4
  %v4719 = vmax.f32 %v4717, %v4718
  %v4720 = vrot.slane %v4719, 2
  %v4721 = vmax.f32 %v4719, %v4720
  %v4722 = vrot.slane %v4721, 1
  %v4723 = vmax.f32 %v4721, %v4722
  %v4724 = vmax.f32 %v4561, %v4562
  %v4725 = vrot.slane %v4724, 4
  %v4726 = vmax.f32 %v4724, %v4725
  %v4727 = vrot.slane %v4726, 2
  %v4728 = vmax.f32 %v4726, %v4727
  %v4729 = vrot.slane %v4728, 1
  %v4730 = vmax.f32 %v4728, %v4729
  %v4731 = vmax.f32 %v4563, %v4564
  %v4732 = vrot.slane %v4731, 4
  %v4733 = vmax.f32 %v4731, %v4732
  %v4734 = vrot.slane %v4733, 2
  %v4735 = vmax.f32 %v4733, %v4734
  %v4736 = vrot.slane %v4735, 1
  %v4737 = vmax.f32 %v4735, %v4736
  %v4738 = vmax.f32 %v4565, %v4566
  %v4739 = vrot.slane %v4738, 4
  %v4740 = vmax.f32 %v4738, %v4739
  %v4741 = vrot.slane %v4740, 2
  %v4742 = vmax.f32 %v4740, %v4741
  %v4743 = vrot.slane %v4742, 1
  %v4744 = vmax.f32 %v4742, %v4743
  %v4745 = vmax.f32 %v4567, %v4568
  %v4746 = vrot.slane %v4745, 4
  %v4747 = vmax.f32 %v4745, %v4746
  %v4748 = vrot.slane %v4747, 2
  %v4749 = vmax.f32 %v4747, %v4748
  %v4750 = vrot.slane %v4749, 1
  %v4751 = vmax.f32 %v4749, %v4750
  %v4752 = vmax.f32 %v4569, %v4570
  %v4753 = vrot.slane %v4752, 4
  %v4754 = vmax.f32 %v4752, %v4753
  %v4755 = vrot.slane %v4754, 2
  %v4756 = vmax.f32 %v4754, %v4755
  %v4757 = vrot.slane %v4756, 1
  %v4758 = vmax.f32 %v4756, %v4757
  %v4759 = vmax.f32 %v4571, %v4572
  %v4760 = vrot.slane %v4759, 4
  %v4761 = vmax.f32 %v4759, %v4760
  %v4762 = vrot.slane %v4761, 2
  %v4763 = vmax.f32 %v4761, %v4762
  %v4764 = vrot.slane %v4763, 1
  %v4765 = vmax.f32 %v4763, %v4764
  %v4766 = vmax.f32 %v4573, %v4574
  %v4767 = vrot.slane %v4766, 4
  %v4768 = vmax.f32 %v4766, %v4767
  %v4769 = vrot.slane %v4768, 2
  %v4770 = vmax.f32 %v4768, %v4769
  %v4771 = vrot.slane %v4770, 1
  %v4772 = vmax.f32 %v4770, %v4771
  %v4773 = vmax.f32 %v4575, %v4576
  %v4774 = vrot.slane %v4773, 4
  %v4775 = vmax.f32 %v4773, %v4774
  %v4776 = vrot.slane %v4775, 2
  %v4777 = vmax.f32 %v4775, %v4776
  %v4778 = vrot.slane %v4777, 1
  %v4779 = vmax.f32 %v4777, %v4778
  %v4780 = vmax.f32 %v4577, %v4578
  %v4781 = vrot.slane %v4780, 4
  %v4782 = vmax.f32 %v4780, %v4781
  %v4783 = vrot.slane %v4782, 2
  %v4784 = vmax.f32 %v4782, %v4783
  %v4785 = vrot.slane %v4784, 1
  %v4786 = vmax.f32 %v4784, %v4785
  %v4787 = vmax.f32 %v4579, %v4580
  %v4788 = vrot.slane %v4787, 4
  %v4789 = vmax.f32 %v4787, %v4788
  %v4790 = vrot.slane %v4789, 2
  %v4791 = vmax.f32 %v4789, %v4790
  %v4792 = vrot.slane %v4791, 1
  %v4793 = vmax.f32 %v4791, %v4792
  %v4794 = vmax.f32 %v4581, %v4582
  %v4795 = vrot.slane %v4794, 4
  %v4796 = vmax.f32 %v4794, %v4795
  %v4797 = vrot.slane %v4796, 2
  %v4798 = vmax.f32 %v4796, %v4797
  %v4799 = vrot.slane %v4798, 1
  %v4800 = vmax.f32 %v4798, %v4799
  %v4801 = vmax.f32 %v4583, %v4584
  %v4802 = vrot.slane %v4801, 4
  %v4803 = vmax.f32 %v4801, %v4802
  %v4804 = vrot.slane %v4803, 2
  %v4805 = vmax.f32 %v4803, %v4804
  %v4806 = vrot.slane %v4805, 1
  %v4807 = vmax.f32 %v4805, %v4806
  %v4808 = vmax.f32 %v4585, %v4586
  %v4809 = vrot.slane %v4808, 4
  %v4810 = vmax.f32 %v4808, %v4809
  %v4811 = vrot.slane %v4810, 2
  %v4812 = vmax.f32 %v4810, %v4811
  %v4813 = vrot.slane %v4812, 1
  %v4814 = vmax.f32 %v4812, %v4813
  %v4815 = vmax.f32 %v4587, %v4588
  %v4816 = vrot.slane %v4815, 4
  %v4817 = vmax.f32 %v4815, %v4816
  %v4818 = vrot.slane %v4817, 2
  %v4819 = vmax.f32 %v4817, %v4818
  %v4820 = vrot.slane %v4819, 1
  %v4821 = vmax.f32 %v4819, %v4820
  %v4822 = vmax.f32 %v4589, %v4590
  %v4823 = vrot.slane %v4822, 4
  %v4824 = vmax.f32 %v4822, %v4823
  %v4825 = vrot.slane %v4824, 2
  %v4826 = vmax.f32 %v4824, %v4825
  %v4827 = vrot.slane %v4826, 1
  %v4828 = vmax.f32 %v4826, %v4827
  %v4829 = vmax.f32 %v4591, %v4592
  %v4830 = vrot.slane %v4829, 4
  %v4831 = vmax.f32 %v4829, %v4830
  %v4832 = vrot.slane %v4831, 2
  %v4833 = vmax.f32 %v4831, %v4832
  %v4834 = vrot.slane %v4833, 1
  %v4835 = vmax.f32 %v4833, %v4834
  %v4836 = vmax.f32 %v4593, %v4594
  %v4837 = vrot.slane %v4836, 4
  %v4838 = vmax.f32 %v4836, %v4837
  %v4839 = vrot.slane %v4838, 2
  %v4840 = vmax.f32 %v4838, %v4839
  %v4841 = vrot.slane %v4840, 1
  %v4842 = vmax.f32 %v4840, %v4841
  %v4843 = vmax.f32 %v4595, %v4596
  %v4844 = vrot.slane %v4843, 4
  %v4845 = vmax.f32 %v4843, %v4844
  %v4846 = vrot.slane %v4845, 2
  %v4847 = vmax.f32 %v4845, %v4846
  %v4848 = vrot.slane %v4847, 1
  %v4849 = vmax.f32 %v4847, %v4848
  %v4850 = vmax.f32 %v4597, %v4598
  %v4851 = vrot.slane %v4850, 4
  %v4852 = vmax.f32 %v4850, %v4851
  %v4853 = vrot.slane %v4852, 2
  %v4854 = vmax.f32 %v4852, %v4853
  %v4855 = vrot.slane %v4854, 1
  %v4856 = vmax.f32 %v4854, %v4855
  %v4857 = vmax.f32 %v4599, %v4600
  %v4858 = vrot.slane %v4857, 4
  %v4859 = vmax.f32 %v4857, %v4858
  %v4860 = vrot.slane %v4859, 2
  %v4861 = vmax.f32 %v4859, %v4860
  %v4862 = vrot.slane %v4861, 1
  %v4863 = vmax.f32 %v4861, %v4862
  %v4864 = vmax.f32 %v4601, %v4602
  %v4865 = vrot.slane %v4864, 4
  %v4866 = vmax.f32 %v4864, %v4865
  %v4867 = vrot.slane %v4866, 2
  %v4868 = vmax.f32 %v4866, %v4867
  %v4869 = vrot.slane %v4868, 1
  %v4870 = vmax.f32 %v4868, %v4869
  %v4871 = vmax.f32 %v4603, %v4604
  %v4872 = vrot.slane %v4871, 4
  %v4873 = vmax.f32 %v4871, %v4872
  %v4874 = vrot.slane %v4873, 2
  %v4875 = vmax.f32 %v4873, %v4874
  %v4876 = vrot.slane %v4875, 1
  %v4877 = vmax.f32 %v4875, %v4876
  %v4878 = vmax.f32 %v4605, %v4606
  %v4879 = vrot.slane %v4878, 4
  %v4880 = vmax.f32 %v4878, %v4879
  %v4881 = vrot.slane %v4880, 2
  %v4882 = vmax.f32 %v4880, %v4881
  %v4883 = vrot.slane %v4882, 1
  %v4884 = vmax.f32 %v4882, %v4883
  %v4885 = vmax.f32 %v4607, %v4608
  %v4886 = vrot.slane %v4885, 4
  %v4887 = vmax.f32 %v4885, %v4886
  %v4888 = vrot.slane %v4887, 2
  %v4889 = vmax.f32 %v4887, %v4888
  %v4890 = vrot.slane %v4889, 1
  %v4891 = vmax.f32 %v4889, %v4890
  %v4892 = vmax.f32 %v4609, %v4610
  %v4893 = vrot.slane %v4892, 4
  %v4894 = vmax.f32 %v4892, %v4893
  %v4895 = vrot.slane %v4894, 2
  %v4896 = vmax.f32 %v4894, %v4895
  %v4897 = vrot.slane %v4896, 1
  %v4898 = vmax.f32 %v4896, %v4897
  %v4899 = vmax.f32 %v4611, %v4612
  %v4900 = vrot.slane %v4899, 4
  %v4901 = vmax.f32 %v4899, %v4900
  %v4902 = vrot.slane %v4901, 2
  %v4903 = vmax.f32 %v4901, %v4902
  %v4904 = vrot.slane %v4903, 1
  %v4905 = vmax.f32 %v4903, %v4904
  %v4906 = vmax.f32 %v4613, %v4614
  %v4907 = vrot.slane %v4906, 4
  %v4908 = vmax.f32 %v4906, %v4907
  %v4909 = vrot.slane %v4908, 2
  %v4910 = vmax.f32 %v4908, %v4909
  %v4911 = vrot.slane %v4910, 1
  %v4912 = vmax.f32 %v4910, %v4911
  %v4913 = vmax.f32 %v4615, %v4616
  %v4914 = vrot.slane %v4913, 4
  %v4915 = vmax.f32 %v4913, %v4914
  %v4916 = vrot.slane %v4915, 2
  %v4917 = vmax.f32 %v4915, %v4916
  %v4918 = vrot.slane %v4917, 1
  %v4919 = vmax.f32 %v4917, %v4918
  %v4920 = vmax.f32 %v4617, %v4618
  %v4921 = vrot.slane %v4920, 4
  %v4922 = vmax.f32 %v4920, %v4921
  %v4923 = vrot.slane %v4922, 2
  %v4924 = vmax.f32 %v4922, %v4923
  %v4925 = vrot.slane %v4924, 1
  %v4926 = vmax.f32 %v4924, %v4925
  %v4927 = vmax.f32 %v4619, %v4620
  %v4928 = vrot.slane %v4927, 4
  %v4929 = vmax.f32 %v4927, %v4928
  %v4930 = vrot.slane %v4929, 2
  %v4931 = vmax.f32 %v4929, %v4930
  %v4932 = vrot.slane %v4931, 1
  %v4933 = vmax.f32 %v4931, %v4932
  %v4934 = vmax.f32 %v4621, %v4622
  %v4935 = vrot.slane %v4934, 4
  %v4936 = vmax.f32 %v4934, %v4935
  %v4937 = vrot.slane %v4936, 2
  %v4938 = vmax.f32 %v4936, %v4937
  %v4939 = vrot.slane %v4938, 1
  %v4940 = vmax.f32 %v4938, %v4939
  %v4941 = vmax.f32 %v4623, %v4624
  %v4942 = vrot.slane %v4941, 4
  %v4943 = vmax.f32 %v4941, %v4942
  %v4944 = vrot.slane %v4943, 2
  %v4945 = vmax.f32 %v4943, %v4944
  %v4946 = vrot.slane %v4945, 1
  %v4947 = vmax.f32 %v4945, %v4946
  %v4948 = vmax.f32 %v4625, %v4626
  %v4949 = vrot.slane %v4948, 4
  %v4950 = vmax.f32 %v4948, %v4949
  %v4951 = vrot.slane %v4950, 2
  %v4952 = vmax.f32 %v4950, %v4951
  %v4953 = vrot.slane %v4952, 1
  %v4954 = vmax.f32 %v4952, %v4953
  %v4955 = vmax.f32 %v4627, %v4628
  %v4956 = vrot.slane %v4955, 4
  %v4957 = vmax.f32 %v4955, %v4956
  %v4958 = vrot.slane %v4957, 2
  %v4959 = vmax.f32 %v4957, %v4958
  %v4960 = vrot.slane %v4959, 1
  %v4961 = vmax.f32 %v4959, %v4960
  %v4962 = vmax.f32 %v4629, %v4630
  %v4963 = vrot.slane %v4962, 4
  %v4964 = vmax.f32 %v4962, %v4963
  %v4965 = vrot.slane %v4964, 2
  %v4966 = vmax.f32 %v4964, %v4965
  %v4967 = vrot.slane %v4966, 1
  %v4968 = vmax.f32 %v4966, %v4967
  %v4969 = vmax.f32 %v4631, %v4632
  %v4970 = vrot.slane %v4969, 4
  %v4971 = vmax.f32 %v4969, %v4970
  %v4972 = vrot.slane %v4971, 2
  %v4973 = vmax.f32 %v4971, %v4972
  %v4974 = vrot.slane %v4973, 1
  %v4975 = vmax.f32 %v4973, %v4974
  %v4976 = vmax.f32 %v4633, %v4634
  %v4977 = vrot.slane %v4976, 4
  %v4978 = vmax.f32 %v4976, %v4977
  %v4979 = vrot.slane %v4978, 2
  %v4980 = vmax.f32 %v4978, %v4979
  %v4981 = vrot.slane %v4980, 1
  %v4982 = vmax.f32 %v4980, %v4981
  %v4983 = vmax.f32 %v4635, %v4636
  %v4984 = vrot.slane %v4983, 4
  %v4985 = vmax.f32 %v4983, %v4984
  %v4986 = vrot.slane %v4985, 2
  %v4987 = vmax.f32 %v4985, %v4986
  %v4988 = vrot.slane %v4987, 1
  %v4989 = vmax.f32 %v4987, %v4988
  %v4990 = vmax.f32 %v4637, %v4638
  %v4991 = vrot.slane %v4990, 4
  %v4992 = vmax.f32 %v4990, %v4991
  %v4993 = vrot.slane %v4992, 2
  %v4994 = vmax.f32 %v4992, %v4993
  %v4995 = vrot.slane %v4994, 1
  %v4996 = vmax.f32 %v4994, %v4995
  %v4997 = vmax.f32 %v4639, %v4640
  %v4998 = vrot.slane %v4997, 4
  %v4999 = vmax.f32 %v4997, %v4998
  %v5000 = vrot.slane %v4999, 2
  %v5001 = vmax.f32 %v4999, %v5000
  %v5002 = vrot.slane %v5001, 1
  %v5003 = vmax.f32 %v5001, %v5002
  %v5004 = vmax.f32 %v4641, %v4642
  %v5005 = vrot.slane %v5004, 4
  %v5006 = vmax.f32 %v5004, %v5005
  %v5007 = vrot.slane %v5006, 2
  %v5008 = vmax.f32 %v5006, %v5007
  %v5009 = vrot.slane %v5008, 1
  %v5010 = vmax.f32 %v5008, %v5009
  %v5011 = vmax.f32 %v4643, %v4644
  %v5012 = vrot.slane %v5011, 4
  %v5013 = vmax.f32 %v5011, %v5012
  %v5014 = vrot.slane %v5013, 2
  %v5015 = vmax.f32 %v5013, %v5014
  %v5016 = vrot.slane %v5015, 1
  %v5017 = vmax.f32 %v5015, %v5016
  %v5018 = vmax.f32 %v4645, %v4646
  %v5019 = vrot.slane %v5018, 4
  %v5020 = vmax.f32 %v5018, %v5019
  %v5021 = vrot.slane %v5020, 2
  %v5022 = vmax.f32 %v5020, %v5021
  %v5023 = vrot.slane %v5022, 1
  %v5024 = vmax.f32 %v5022, %v5023
  %v5025 = vmax.f32 %v4647, %v4648
  %v5026 = vrot.slane %v5025, 4
  %v5027 = vmax.f32 %v5025, %v5026
  %v5028 = vrot.slane %v5027, 2
  %v5029 = vmax.f32 %v5027, %v5028
  %v5030 = vrot.slane %v5029, 1
  %v5031 = vmax.f32 %v5029, %v5030
  %v5032 = vmax.f32 %v4649, %v4650
  %v5033 = vrot.slane %v5032, 4
  %v5034 = vmax.f32 %v5032, %v5033
  %v5035 = vrot.slane %v5034, 2
  %v5036 = vmax.f32 %v5034, %v5035
  %v5037 = vrot.slane %v5036, 1
  %v5038 = vmax.f32 %v5036, %v5037
  %v5039 = vmax.f32 %v4651, %v4652
  %v5040 = vrot.slane %v5039, 4
  %v5041 = vmax.f32 %v5039, %v5040
  %v5042 = vrot.slane %v5041, 2
  %v5043 = vmax.f32 %v5041, %v5042
  %v5044 = vrot.slane %v5043, 1
  %v5045 = vmax.f32 %v5043, %v5044
  %v5046 = vmax.f32 %v4653, %v4654
  %v5047 = vrot.slane %v5046, 4
  %v5048 = vmax.f32 %v5046, %v5047
  %v5049 = vrot.slane %v5048, 2
  %v5050 = vmax.f32 %v5048, %v5049
  %v5051 = vrot.slane %v5050, 1
  %v5052 = vmax.f32 %v5050, %v5051
  %v5053 = vmax.f32 %v4655, %v4656
  %v5054 = vrot.slane %v5053, 4
  %v5055 = vmax.f32 %v5053, %v5054
  %v5056 = vrot.slane %v5055, 2
  %v5057 = vmax.f32 %v5055, %v5056
  %v5058 = vrot.slane %v5057, 1
  %v5059 = vmax.f32 %v5057, %v5058
  %v5060 = vmax.f32 %v4657, %v4658
  %v5061 = vrot.slane %v5060, 4
  %v5062 = vmax.f32 %v5060, %v5061
  %v5063 = vrot.slane %v5062, 2
  %v5064 = vmax.f32 %v5062, %v5063
  %v5065 = vrot.slane %v5064, 1
  %v5066 = vmax.f32 %v5064, %v5065
  %v5067 = vmax.f32 %v4659, %v4660
  %v5068 = vrot.slane %v5067, 4
  %v5069 = vmax.f32 %v5067, %v5068
  %v5070 = vrot.slane %v5069, 2
  %v5071 = vmax.f32 %v5069, %v5070
  %v5072 = vrot.slane %v5071, 1
  %v5073 = vmax.f32 %v5071, %v5072
  %v5074 = vmax.f32 %v4661, %v4662
  %v5075 = vrot.slane %v5074, 4
  %v5076 = vmax.f32 %v5074, %v5075
  %v5077 = vrot.slane %v5076, 2
  %v5078 = vmax.f32 %v5076, %v5077
  %v5079 = vrot.slane %v5078, 1
  %v5080 = vmax.f32 %v5078, %v5079
  %v5081 = vmax.f32 %v4663, %v4664
  %v5082 = vrot.slane %v5081, 4
  %v5083 = vmax.f32 %v5081, %v5082
  %v5084 = vrot.slane %v5083, 2
  %v5085 = vmax.f32 %v5083, %v5084
  %v5086 = vrot.slane %v5085, 1
  %v5087 = vmax.f32 %v5085, %v5086
  %v5088 = vmax.f32 %v4665, %v4666
  %v5089 = vrot.slane %v5088, 4
  %v5090 = vmax.f32 %v5088, %v5089
  %v5091 = vrot.slane %v5090, 2
  %v5092 = vmax.f32 %v5090, %v5091
  %v5093 = vrot.slane %v5092, 1
  %v5094 = vmax.f32 %v5092, %v5093
  %v5095 = vmax.f32 %v4667, %v4668
  %v5096 = vrot.slane %v5095, 4
  %v5097 = vmax.f32 %v5095, %v5096
  %v5098 = vrot.slane %v5097, 2
  %v5099 = vmax.f32 %v5097, %v5098
  %v5100 = vrot.slane %v5099, 1
  %v5101 = vmax.f32 %v5099, %v5100
  %v5102 = vmax.f32 %v4669, %v4670
  %v5103 = vrot.slane %v5102, 4
  %v5104 = vmax.f32 %v5102, %v5103
  %v5105 = vrot.slane %v5104, 2
  %v5106 = vmax.f32 %v5104, %v5105
  %v5107 = vrot.slane %v5106, 1
  %v5108 = vmax.f32 %v5106, %v5107
  %v5109 = vmax.f32 %v4671, %v4672
  %v5110 = vrot.slane %v5109, 4
  %v5111 = vmax.f32 %v5109, %v5110
  %v5112 = vrot.slane %v5111, 2
  %v5113 = vmax.f32 %v5111, %v5112
  %v5114 = vrot.slane %v5113, 1
  %v5115 = vmax.f32 %v5113, %v5114
  %v5116 = vmax.f32 %v4673, %v4674
  %v5117 = vrot.slane %v5116, 4
  %v5118 = vmax.f32 %v5116, %v5117
  %v5119 = vrot.slane %v5118, 2
  %v5120 = vmax.f32 %v5118, %v5119
  %v5121 = vrot.slane %v5120, 1
  %v5122 = vmax.f32 %v5120, %v5121
  %v5123 = vpack.c.bf16 %v4681, %v4681
  %v5124 = vpack.c.bf16 %v4688, %v4688
  %v5125 = vpack.c.bf16 %v4695, %v4695
  %v5126 = vpack.c.bf16 %v4702, %v4702
  %v5127 = vpack.c.bf16 %v4709, %v4709
  %v5128 = vpack.c.bf16 %v4716, %v4716
  %v5129 = vpack.c.bf16 %v4723, %v4723
  %v5130 = vpack.c.bf16 %v4730, %v4730
  %v5131 = vpack.c.bf16 %v4737, %v4737
  %v5132 = vpack.c.bf16 %v4744, %v4744
  %v5133 = vpack.c.bf16 %v4751, %v4751
  %v5134 = vpack.c.bf16 %v4758, %v4758
  %v5135 = vpack.c.bf16 %v4765, %v4765
  %v5136 = vpack.c.bf16 %v4772, %v4772
  %v5137 = vpack.c.bf16 %v4779, %v4779
  %v5138 = vpack.c.bf16 %v4786, %v4786
  %v5139 = vpack.c.bf16 %v4793, %v4793
  %v5140 = vpack.c.bf16 %v4800, %v4800
  %v5141 = vpack.c.bf16 %v4807, %v4807
  %v5142 = vpack.c.bf16 %v4814, %v4814
  %v5143 = vpack.c.bf16 %v4821, %v4821
  %v5144 = vpack.c.bf16 %v4828, %v4828
  %v5145 = vpack.c.bf16 %v4835, %v4835
  %v5146 = vpack.c.bf16 %v4842, %v4842
  %v5147 = vpack.c.bf16 %v4849, %v4849
  %v5148 = vpack.c.bf16 %v4856, %v4856
  %v5149 = vpack.c.bf16 %v4863, %v4863
  %v5150 = vpack.c.bf16 %v4870, %v4870
  %v5151 = vpack.c.bf16 %v4877, %v4877
  %v5152 = vpack.c.bf16 %v4884, %v4884
  %v5153 = vpack.c.bf16 %v4891, %v4891
  %v5154 = vpack.c.bf16 %v4898, %v4898
  %v5155 = vpack.c.bf16 %v4905, %v4905
  %v5156 = vpack.c.bf16 %v4912, %v4912
  %v5157 = vpack.c.bf16 %v4919, %v4919
  %v5158 = vpack.c.bf16 %v4926, %v4926
  %v5159 = vpack.c.bf16 %v4933, %v4933
  %v5160 = vpack.c.bf16 %v4940, %v4940
  %v5161 = vpack.c.bf16 %v4947, %v4947
  %v5162 = vpack.c.bf16 %v4954, %v4954
  %v5163 = vpack.c.bf16 %v4961, %v4961
  %v5164 = vpack.c.bf16 %v4968, %v4968
  %v5165 = vpack.c.bf16 %v4975, %v4975
  %v5166 = vpack.c.bf16 %v4982, %v4982
  %v5167 = vpack.c.bf16 %v4989, %v4989
  %v5168 = vpack.c.bf16 %v4996, %v4996
  %v5169 = vpack.c.bf16 %v5003, %v5003
  %v5170 = vpack.c.bf16 %v5010, %v5010
  %v5171 = vpack.c.bf16 %v5017, %v5017
  %v5172 = vpack.c.bf16 %v5024, %v5024
  %v5173 = vpack.c.bf16 %v5031, %v5031
  %v5174 = vpack.c.bf16 %v5038, %v5038
  %v5175 = vpack.c.bf16 %v5045, %v5045
  %v5176 = vpack.c.bf16 %v5052, %v5052
  %v5177 = vpack.c.bf16 %v5059, %v5059
  %v5178 = vpack.c.bf16 %v5066, %v5066
  %v5179 = vpack.c.bf16 %v5073, %v5073
  %v5180 = vpack.c.bf16 %v5080, %v5080
  %v5181 = vpack.c.bf16 %v5087, %v5087
  %v5182 = vpack.c.bf16 %v5094, %v5094
  %v5183 = vpack.c.bf16 %v5101, %v5101
  %v5184 = vpack.c.bf16 %v5108, %v5108
  %v5185 = vpack.c.bf16 %v5115, %v5115
  %v5186 = vpack.c.bf16 %v5122, %v5122
  %v5251 = vunpack.c.l.b16 %v5123
  %v5252 = vunpack.c.l.b16 %v5124
  %v5253 = vunpack.c.l.b16 %v5125
  %v5254 = vunpack.c.l.b16 %v5126
  %v5255 = vunpack.c.l.b16 %v5127
  %v5256 = vunpack.c.l.b16 %v5128
  %v5257 = vunpack.c.l.b16 %v5129
  %v5258 = vunpack.c.l.b16 %v5130
  %v5259 = vunpack.c.l.b16 %v5131
  %v5260 = vunpack.c.l.b16 %v5132
  %v5261 = vunpack.c.l.b16 %v5133
  %v5262 = vunpack.c.l.b16 %v5134
  %v5263 = vunpack.c.l.b16 %v5135
  %v5264 = vunpack.c.l.b16 %v5136
  %v5265 = vunpack.c.l.b16 %v5137
  %v5266 = vunpack.c.l.b16 %v5138
  %v5267 = vunpack.c.l.b16 %v5139
  %v5268 = vunpack.c.l.b16 %v5140
  %v5269 = vunpack.c.l.b16 %v5141
  %v5270 = vunpack.c.l.b16 %v5142
  %v5271 = vunpack.c.l.b16 %v5143
  %v5272 = vunpack.c.l.b16 %v5144
  %v5273 = vunpack.c.l.b16 %v5145
  %v5274 = vunpack.c.l.b16 %v5146
  %v5275 = vunpack.c.l.b16 %v5147
  %v5276 = vunpack.c.l.b16 %v5148
  %v5277 = vunpack.c.l.b16 %v5149
  %v5278 = vunpack.c.l.b16 %v5150
  %v5279 = vunpack.c.l.b16 %v5151
  %v5280 = vunpack.c.l.b16 %v5152
  %v5281 = vunpack.c.l.b16 %v5153
  %v5282 = vunpack.c.l.b16 %v5154
  %v5283 = vunpack.c.l.b16 %v5155
  %v5284 = vunpack.c.l.b16 %v5156
  %v5285 = vunpack.c.l.b16 %v5157
  %v5286 = vunpack.c.l.b16 %v5158
  %v5287 = vunpack.c.l.b16 %v5159
  %v5288 = vunpack.c.l.b16 %v5160
  %v5289 = vunpack.c.l.b16 %v5161
  %v5290 = vunpack.c.l.b16 %v5162
  %v5291 = vunpack.c.l.b16 %v5163
  %v5292 = vunpack.c.l.b16 %v5164
  %v5293 = vunpack.c.l.b16 %v5165
  %v5294 = vunpack.c.l.b16 %v5166
  %v5295 = vunpack.c.l.b16 %v5167
  %v5296 = vunpack.c.l.b16 %v5168
  %v5297 = vunpack.c.l.b16 %v5169
  %v5298 = vunpack.c.l.b16 %v5170
  %v5299 = vunpack.c.l.b16 %v5171
  %v5300 = vunpack.c.l.b16 %v5172
  %v5301 = vunpack.c.l.b16 %v5173
  %v5302 = vunpack.c.l.b16 %v5174
  %v5303 = vunpack.c.l.b16 %v5175
  %v5304 = vunpack.c.l.b16 %v5176
  %v5305 = vunpack.c.l.b16 %v5177
  %v5306 = vunpack.c.l.b16 %v5178
  %v5307 = vunpack.c.l.b16 %v5179
  %v5308 = vunpack.c.l.b16 %v5180
  %v5309 = vunpack.c.l.b16 %v5181
  %v5310 = vunpack.c.l.b16 %v5182
  %v5311 = vunpack.c.l.b16 %v5183
  %v5312 = vunpack.c.l.b16 %v5184
  %v5313 = vunpack.c.l.b16 %v5185
  %v5314 = vunpack.c.l.b16 %v5186
  %v5315 = vpack.c.b16 %v5251, %v5251
  %v5316 = vpack.c.b16 %v5252, %v5252
  %v5317 = vpack.c.b16 %v5253, %v5253
  %v5318 = vpack.c.b16 %v5254, %v5254
  %v5319 = vpack.c.b16 %v5255, %v5255
  %v5320 = vpack.c.b16 %v5256, %v5256
  %v5321 = vpack.c.b16 %v5257, %v5257
  %v5322 = vpack.c.b16 %v5258, %v5258
  %v5323 = vpack.c.b16 %v5259, %v5259
  %v5324 = vpack.c.b16 %v5260, %v5260
  %v5325 = vpack.c.b16 %v5261, %v5261
  %v5326 = vpack.c.b16 %v5262, %v5262
  %v5327 = vpack.c.b16 %v5263, %v5263
  %v5328 = vpack.c.b16 %v5264, %v5264
  %v5329 = vpack.c.b16 %v5265, %v5265
  %v5330 = vpack.c.b16 %v5266, %v5266
  %v5331 = vpack.c.b16 %v5267, %v5267
  %v5332 = vpack.c.b16 %v5268, %v5268
  %v5333 = vpack.c.b16 %v5269, %v5269
  %v5334 = vpack.c.b16 %v5270, %v5270
  %v5335 = vpack.c.b16 %v5271, %v5271
  %v5336 = vpack.c.b16 %v5272, %v5272
  %v5337 = vpack.c.b16 %v5273, %v5273
  %v5338 = vpack.c.b16 %v5274, %v5274
  %v5339 = vpack.c.b16 %v5275, %v5275
  %v5340 = vpack.c.b16 %v5276, %v5276
  %v5341 = vpack.c.b16 %v5277, %v5277
  %v5342 = vpack.c.b16 %v5278, %v5278
  %v5343 = vpack.c.b16 %v5279, %v5279
  %v5344 = vpack.c.b16 %v5280, %v5280
  %v5345 = vpack.c.b16 %v5281, %v5281
  %v5346 = vpack.c.b16 %v5282, %v5282
  %v5347 = vpack.c.b16 %v5283, %v5283
  %v5348 = vpack.c.b16 %v5284, %v5284
  %v5349 = vpack.c.b16 %v5285, %v5285
  %v5350 = vpack.c.b16 %v5286, %v5286
  %v5351 = vpack.c.b16 %v5287, %v5287
  %v5352 = vpack.c.b16 %v5288, %v5288
  %v5353 = vpack.c.b16 %v5289, %v5289
  %v5354 = vpack.c.b16 %v5290, %v5290
  %v5355 = vpack.c.b16 %v5291, %v5291
  %v5356 = vpack.c.b16 %v5292, %v5292
  %v5357 = vpack.c.b16 %v5293, %v5293
  %v5358 = vpack.c.b16 %v5294, %v5294
  %v5359 = vpack.c.b16 %v5295, %v5295
  %v5360 = vpack.c.b16 %v5296, %v5296
  %v5361 = vpack.c.b16 %v5297, %v5297
  %v5362 = vpack.c.b16 %v5298, %v5298
  %v5363 = vpack.c.b16 %v5299, %v5299
  %v5364 = vpack.c.b16 %v5300, %v5300
  %v5365 = vpack.c.b16 %v5301, %v5301
  %v5366 = vpack.c.b16 %v5302, %v5302
  %v5367 = vpack.c.b16 %v5303, %v5303
  %v5368 = vpack.c.b16 %v5304, %v5304
  %v5369 = vpack.c.b16 %v5305, %v5305
  %v5370 = vpack.c.b16 %v5306, %v5306
  %v5371 = vpack.c.b16 %v5307, %v5307
  %v5372 = vpack.c.b16 %v5308, %v5308
  %v5373 = vpack.c.b16 %v5309, %v5309
  %v5374 = vpack.c.b16 %v5310, %v5310
  %v5375 = vpack.c.b16 %v5311, %v5311
  %v5376 = vpack.c.b16 %v5312, %v5312
  %v5377 = vpack.c.b16 %v5313, %v5313
  %v5378 = vpack.c.b16 %v5314, %v5314
  %v5379 = vunpack.c.l.b16 %v5315
  %v5380 = vunpack.c.l.b16 %v5316
  %v5381 = vunpack.c.l.b16 %v5317
  %v5382 = vunpack.c.l.b16 %v5318
  %v5383 = vunpack.c.l.b16 %v5319
  %v5384 = vunpack.c.l.b16 %v5320
  %v5385 = vunpack.c.l.b16 %v5321
  %v5386 = vunpack.c.l.b16 %v5322
  %v5387 = vunpack.c.l.b16 %v5323
  %v5388 = vunpack.c.l.b16 %v5324
  %v5389 = vunpack.c.l.b16 %v5325
  %v5390 = vunpack.c.l.b16 %v5326
  %v5391 = vunpack.c.l.b16 %v5327
  %v5392 = vunpack.c.l.b16 %v5328
  %v5393 = vunpack.c.l.b16 %v5329
  %v5394 = vunpack.c.l.b16 %v5330
  %v5395 = vunpack.c.l.b16 %v5331
  %v5396 = vunpack.c.l.b16 %v5332
  %v5397 = vunpack.c.l.b16 %v5333
  %v5398 = vunpack.c.l.b16 %v5334
  %v5399 = vunpack.c.l.b16 %v5335
  %v5400 = vunpack.c.l.b16 %v5336
  %v5401 = vunpack.c.l.b16 %v5337
  %v5402 = vunpack.c.l.b16 %v5338
  %v5403 = vunpack.c.l.b16 %v5339
  %v5404 = vunpack.c.l.b16 %v5340
  %v5405 = vunpack.c.l.b16 %v5341
  %v5406 = vunpack.c.l.b16 %v5342
  %v5407 = vunpack.c.l.b16 %v5343
  %v5408 = vunpack.c.l.b16 %v5344
  %v5409 = vunpack.c.l.b16 %v5345
  %v5410 = vunpack.c.l.b16 %v5346
  %v5411 = vunpack.c.l.b16 %v5347
  %v5412 = vunpack.c.l.b16 %v5348
  %v5413 = vunpack.c.l.b16 %v5349
  %v5414 = vunpack.c.l.b16 %v5350
  %v5415 = vunpack.c.l.b16 %v5351
  %v5416 = vunpack.c.l.b16 %v5352
  %v5417 = vunpack.c.l.b16 %v5353
  %v5418 = vunpack.c.l.b16 %v5354
  %v5419 = vunpack.c.l.b16 %v5355
  %v5420 = vunpack.c.l.b16 %v5356
  %v5421 = vunpack.c.l.b16 %v5357
  %v5422 = vunpack.c.l.b16 %v5358
  %v5423 = vunpack.c.l.b16 %v5359
  %v5424 = vunpack.c.l.b16 %v5360
  %v5425 = vunpack.c.l.b16 %v5361
  %v5426 = vunpack.c.l.b16 %v5362
  %v5427 = vunpack.c.l.b16 %v5363
  %v5428 = vunpack.c.l.b16 %v5364
  %v5429 = vunpack.c.l.b16 %v5365
  %v5430 = vunpack.c.l.b16 %v5366
  %v5431 = vunpack.c.l.b16 %v5367
  %v5432 = vunpack.c.l.b16 %v5368
  %v5433 = vunpack.c.l.b16 %v5369
  %v5434 = vunpack.c.l.b16 %v5370
  %v5435 = vunpack.c.l.b16 %v5371
  %v5436 = vunpack.c.l.b16 %v5372
  %v5437 = vunpack.c.l.b16 %v5373
  %v5438 = vunpack.c.l.b16 %v5374
  %v5439 = vunpack.c.l.b16 %v5375
  %v5440 = vunpack.c.l.b16 %v5376
  %v5441 = vunpack.c.l.b16 %v5377
  %v5442 = vunpack.c.l.b16 %v5378
  %vm5443 = vcmask 1041409
  %v5444 = vsel %vm5443, %v5380, %v5379
  %vm5445 = vcmask 1042434
  %v5446 = vsel %vm5445, %v5381, %v5444
  %vm5447 = vcmask 1043459
  %v5448 = vsel %vm5447, %v5382, %v5446
  %vm5449 = vcmask 1044484
  %v5450 = vsel %vm5449, %v5383, %v5448
  %vm5451 = vcmask 1045509
  %v5452 = vsel %vm5451, %v5384, %v5450
  %vm5453 = vcmask 1046534
  %v5454 = vsel %vm5453, %v5385, %v5452
  %vm5455 = vcmask 1047559
  %v5456 = vsel %vm5455, %v5386, %v5454
  %v5457 = vsel %vm5443, %v5388, %v5387
  %v5458 = vsel %vm5445, %v5389, %v5457
  %v5459 = vsel %vm5447, %v5390, %v5458
  %v5460 = vsel %vm5449, %v5391, %v5459
  %v5461 = vsel %vm5451, %v5392, %v5460
  %v5462 = vsel %vm5453, %v5393, %v5461
  %v5463 = vsel %vm5455, %v5394, %v5462
  %v5464 = vsel %vm5443, %v5396, %v5395
  %v5465 = vsel %vm5445, %v5397, %v5464
  %v5466 = vsel %vm5447, %v5398, %v5465
  %v5467 = vsel %vm5449, %v5399, %v5466
  %v5468 = vsel %vm5451, %v5400, %v5467
  %v5469 = vsel %vm5453, %v5401, %v5468
  %v5470 = vsel %vm5455, %v5402, %v5469
  %v5471 = vsel %vm5443, %v5404, %v5403
  %v5472 = vsel %vm5445, %v5405, %v5471
  %v5473 = vsel %vm5447, %v5406, %v5472
  %v5474 = vsel %vm5449, %v5407, %v5473
  %v5475 = vsel %vm5451, %v5408, %v5474
  %v5476 = vsel %vm5453, %v5409, %v5475
  %v5477 = vsel %vm5455, %v5410, %v5476
  %v5478 = vsel %vm5443, %v5412, %v5411
  %v5479 = vsel %vm5445, %v5413, %v5478
  %v5480 = vsel %vm5447, %v5414, %v5479
  %v5481 = vsel %vm5449, %v5415, %v5480
  %v5482 = vsel %vm5451, %v5416, %v5481
  %v5483 = vsel %vm5453, %v5417, %v5482
  %v5484 = vsel %vm5455, %v5418, %v5483
  %v5485 = vsel %vm5443, %v5420, %v5419
  %v5486 = vsel %vm5445, %v5421, %v5485
  %v5487 = vsel %vm5447, %v5422, %v5486
  %v5488 = vsel %vm5449, %v5423, %v5487
  %v5489 = vsel %vm5451, %v5424, %v5488
  %v5490 = vsel %vm5453, %v5425, %v5489
  %v5491 = vsel %vm5455, %v5426, %v5490
  %v5492 = vsel %vm5443, %v5428, %v5427
  %v5493 = vsel %vm5445, %v5429, %v5492
  %v5494 = vsel %vm5447, %v5430, %v5493
  %v5495 = vsel %vm5449, %v5431, %v5494
  %v5496 = vsel %vm5451, %v5432, %v5495
  %v5497 = vsel %vm5453, %v5433, %v5496
  %v5498 = vsel %vm5455, %v5434, %v5497
  %v5499 = vsel %vm5443, %v5436, %v5435
  %v5500 = vsel %vm5445, %v5437, %v5499
  %v5501 = vsel %vm5447, %v5438, %v5500
  %v5502 = vsel %vm5449, %v5439, %v5501
  %v5503 = vsel %vm5451, %v5440, %v5502
  %v5504 = vsel %vm5453, %v5441, %v5503
  %v5505 = vsel %vm5455, %v5442, %v5504
  %v5506 = vpack.c.b16 %v5456, %v5456
  %v5507 = vpack.c.b16 %v5463, %v5463
  %v5508 = vpack.c.b16 %v5470, %v5470
  %v5509 = vpack.c.b16 %v5477, %v5477
  %v5510 = vpack.c.b16 %v5484, %v5484
  %v5511 = vpack.c.b16 %v5491, %v5491
  %v5512 = vpack.c.b16 %v5498, %v5498
  %v5513 = vpack.c.b16 %v5505, %v5505
  %5522 = vst [vmem:[%s7] sm:$0xf] %v5506
  %5523 = vst [vmem:[%s7 + $0x4] sm:$0xf] %v5507
  %5524 = vst [vmem:[%s7 + $0x8] sm:$0xf] %v5508
  %5525 = vst [vmem:[%s7 + $0xc] sm:$0xf] %v5509
  %5526 = vst [vmem:[%s7 + $0x10] sm:$0xf] %v5510
  %5527 = vst [vmem:[%s7 + $0x14] sm:$0xf] %v5511
  %5528 = vst [vmem:[%s7 + $0x18] sm:$0xf] %v5512
  %5529 = vst [vmem:[%s7 + $0x1c] sm:$0xf] %v5513
  // Predicated region
  $region30: #{pointnetv2_linear_forward.3} parent=0 // pred_check
    _
  $region31: #{pointnetv2_linear_forward.3} parent=0 // pred_check_branch
    %5531 = sbr.rel (0) target = $region33
  $region32: #{pointnetv2_linear_forward.3} parent=0 // pred_region
    _
  $region33: #{pointnetv2_linear_forward.3} parent=0 // pred_fallthru
    _
  // Predicated region
  $region34: #{pointnetv2_linear_forward.3} parent=0 // pred_check
    _
  $region35: #{pointnetv2_linear_forward.3} parent=0 // pred_check_branch
    %5533 = sbr.rel (0) target = $region37
  $region36: #{pointnetv2_linear_forward.3} parent=0 // pred_region
    _
  $region37: #{pointnetv2_linear_forward.3} parent=0 // pred_fallthru
    _

// kernel: pointnetv2_linear_forward.4
$region0: #{pointnetv2_linear_forward.4}
  #allocation0 [shape = 'u32[]', space=smem, size = 0x4, offset = 0x4, fixed_abs, tag = 'smem constant byte address 0x4 - core index']
  #allocation1 [shape = 'u32[144,128]{1,0:T(1,128)}', space=vmem, size = 0x12000, scoped, tag = 'internal scratch']
  %s0 = inlined_call_operand.vmem [shape: f32[512,3], index: 0, kind: input, shape index: {}]
  %s1 = inlined_call_operand.vmem [shape: bf16[512,128], index: 1, kind: input, shape index: {}]
  %s2 = inlined_call_operand.vmem [shape: bf16[3,128], index: 2, kind: input, shape index: {}]
  %s3 = inlined_call_operand.vmem [shape: bf16[128,128], index: 3, kind: input, shape index: {}]
  %s4 = inlined_call_operand.vmem [shape: f32[1,128], index: 4, kind: input, shape index: {}, may-alias: {4,6}]
  %s5 = inlined_call_operand.vmem [shape: bf16[128,128], index: 5, kind: input, shape index: {}]
  %s6 = inlined_call_operand.vmem [shape: f32[1,128], index: 6, kind: input, shape index: {}, may-alias: {4,6}]
  %s7 = inlined_call_operand.vmem [shape: bf16[128,256], index: 7, kind: input, shape index: {}]
  %s8 = inlined_call_operand.vmem [shape: f32[1,256], index: 8, kind: input, shape index: {}]
  %s9 = inlined_call_operand.vmem [shape: bf16[32,256], index: 9, kind: output, shape index: {}]
  %s10 = sld [smem:[#allocation0]]
  $region46: #{pointnetv2_linear_forward.4} parent=0
    _
  %s12 = ssub.s32 1, %s10
  %s13 = scalar_select 0, %s12, %s10
  // Predicated region
  $region2: #{pointnetv2_linear_forward.4} parent=0 // pred_check
    _
  $region3: #{pointnetv2_linear_forward.4} parent=0 // pred_check_branch
    %15 = sbr.rel (0) target = $region5
  $region4: #{pointnetv2_linear_forward.4} parent=0 // pred_region
    _
  $region5: #{pointnetv2_linear_forward.4} parent=0 // pred_fallthru
    _
  // Predicated region
  $region6: #{pointnetv2_linear_forward.4} parent=0 // pred_check
    _
  $region7: #{pointnetv2_linear_forward.4} parent=0 // pred_check_branch
    %17 = sbr.rel (0) target = $region9
  $region8: #{pointnetv2_linear_forward.4} parent=0 // pred_region
    _
  $region9: #{pointnetv2_linear_forward.4} parent=0 // pred_fallthru
    _
  // Predicated region
  $region10: #{pointnetv2_linear_forward.4} parent=0 // pred_check
    _
  $region11: #{pointnetv2_linear_forward.4} parent=0 // pred_check_branch
    %19 = sbr.rel (0) target = $region13
  $region12: #{pointnetv2_linear_forward.4} parent=0 // pred_region
    _
  $region13: #{pointnetv2_linear_forward.4} parent=0 // pred_fallthru
    _
  // Predicated region
  $region14: #{pointnetv2_linear_forward.4} parent=0 // pred_check
    _
  $region15: #{pointnetv2_linear_forward.4} parent=0 // pred_check_branch
    %21 = sbr.rel (0) target = $region17
  $region16: #{pointnetv2_linear_forward.4} parent=0 // pred_region
    _
  $region17: #{pointnetv2_linear_forward.4} parent=0 // pred_fallthru
    _
  // Predicated region
  $region18: #{pointnetv2_linear_forward.4} parent=0 // pred_check
    _
  $region19: #{pointnetv2_linear_forward.4} parent=0 // pred_check_branch
    %23 = sbr.rel (0) target = $region21
  $region20: #{pointnetv2_linear_forward.4} parent=0 // pred_region
    _
  $region21: #{pointnetv2_linear_forward.4} parent=0 // pred_fallthru
    _
  // Predicated region
  $region22: #{pointnetv2_linear_forward.4} parent=0 // pred_check
    _
  $region23: #{pointnetv2_linear_forward.4} parent=0 // pred_check_branch
    %25 = sbr.rel (0) target = $region25
  $region24: #{pointnetv2_linear_forward.4} parent=0 // pred_region
    _
  $region25: #{pointnetv2_linear_forward.4} parent=0 // pred_fallthru
    _
  // Predicated region
  $region26: #{pointnetv2_linear_forward.4} parent=0 // pred_check
    _
  $region27: #{pointnetv2_linear_forward.4} parent=0 // pred_check_branch
    %27 = sbr.rel (0) target = $region29
  $region28: #{pointnetv2_linear_forward.4} parent=0 // pred_region
    _
  $region29: #{pointnetv2_linear_forward.4} parent=0 // pred_fallthru
    _
  // Predicated region
  $region30: #{pointnetv2_linear_forward.4} parent=0 // pred_check
    _
  $region31: #{pointnetv2_linear_forward.4} parent=0 // pred_check_branch
    %29 = sbr.rel (0) target = $region33
  $region32: #{pointnetv2_linear_forward.4} parent=0 // pred_region
    _
  $region33: #{pointnetv2_linear_forward.4} parent=0 // pred_fallthru
    _
  // Predicated region
  $region34: #{pointnetv2_linear_forward.4} parent=0 // pred_check
    _
  $region35: #{pointnetv2_linear_forward.4} parent=0 // pred_check_branch
    %31 = sbr.rel (0) target = $region37
  $region36: #{pointnetv2_linear_forward.4} parent=0 // pred_region
    _
  $region37: #{pointnetv2_linear_forward.4} parent=0 // pred_fallthru
    _
  %v33 = vld [vmem:[%s0] sm:$0xff]
  %v34 = vld [vmem:[%s0 + $0x8] sm:$0xff]
  %v35 = vld [vmem:[%s0 + $0x10] sm:$0xff]
  %v36 = vld [vmem:[%s0 + $0x18] sm:$0xff]
  %v37 = vld [vmem:[%s0 + $0x20] sm:$0xff]
  %v38 = vld [vmem:[%s0 + $0x28] sm:$0xff]
  %v39 = vld [vmem:[%s0 + $0x30] sm:$0xff]
  %v40 = vld [vmem:[%s0 + $0x38] sm:$0xff]
  %v41 = vld [vmem:[%s0 + $0x40] sm:$0xff]
  %v42 = vld [vmem:[%s0 + $0x48] sm:$0xff]
  %v43 = vld [vmem:[%s0 + $0x50] sm:$0xff]
  %v44 = vld [vmem:[%s0 + $0x58] sm:$0xff]
  %v45 = vld [vmem:[%s0 + $0x60] sm:$0xff]
  %v46 = vld [vmem:[%s0 + $0x68] sm:$0xff]
  %v47 = vld [vmem:[%s0 + $0x70] sm:$0xff]
  %v48 = vld [vmem:[%s0 + $0x78] sm:$0xff]
  %v49 = vld [vmem:[%s0 + $0x80] sm:$0xff]
  %v50 = vld [vmem:[%s0 + $0x88] sm:$0xff]
  %v51 = vld [vmem:[%s0 + $0x90] sm:$0xff]
  %v52 = vld [vmem:[%s0 + $0x98] sm:$0xff]
  %v53 = vld [vmem:[%s0 + $0xa0] sm:$0xff]
  %v54 = vld [vmem:[%s0 + $0xa8] sm:$0xff]
  %v55 = vld [vmem:[%s0 + $0xb0] sm:$0xff]
  %v56 = vld [vmem:[%s0 + $0xb8] sm:$0xff]
  %v57 = vld [vmem:[%s0 + $0xc0] sm:$0xff]
  %v58 = vld [vmem:[%s0 + $0xc8] sm:$0xff]
  %v59 = vld [vmem:[%s0 + $0xd0] sm:$0xff]
  %v60 = vld [vmem:[%s0 + $0xd8] sm:$0xff]
  %v61 = vld [vmem:[%s0 + $0xe0] sm:$0xff]
  %v62 = vld [vmem:[%s0 + $0xe8] sm:$0xff]
  %v63 = vld [vmem:[%s0 + $0xf0] sm:$0xff]
  %v64 = vld [vmem:[%s0 + $0xf8] sm:$0xff]
  %v65 = vld [vmem:[%s0 + $0x100] sm:$0xff]
  %v66 = vld [vmem:[%s0 + $0x108] sm:$0xff]
  %v67 = vld [vmem:[%s0 + $0x110] sm:$0xff]
  %v68 = vld [vmem:[%s0 + $0x118] sm:$0xff]
  %v69 = vld [vmem:[%s0 + $0x120] sm:$0xff]
  %v70 = vld [vmem:[%s0 + $0x128] sm:$0xff]
  %v71 = vld [vmem:[%s0 + $0x130] sm:$0xff]
  %v72 = vld [vmem:[%s0 + $0x138] sm:$0xff]
  %v73 = vld [vmem:[%s0 + $0x140] sm:$0xff]
  %v74 = vld [vmem:[%s0 + $0x148] sm:$0xff]
  %v75 = vld [vmem:[%s0 + $0x150] sm:$0xff]
  %v76 = vld [vmem:[%s0 + $0x158] sm:$0xff]
  %v77 = vld [vmem:[%s0 + $0x160] sm:$0xff]
  %v78 = vld [vmem:[%s0 + $0x168] sm:$0xff]
  %v79 = vld [vmem:[%s0 + $0x170] sm:$0xff]
  %v80 = vld [vmem:[%s0 + $0x178] sm:$0xff]
  %v81 = vld [vmem:[%s0 + $0x180] sm:$0xff]
  %v82 = vld [vmem:[%s0 + $0x188] sm:$0xff]
  %v83 = vld [vmem:[%s0 + $0x190] sm:$0xff]
  %v84 = vld [vmem:[%s0 + $0x198] sm:$0xff]
  %v85 = vld [vmem:[%s0 + $0x1a0] sm:$0xff]
  %v86 = vld [vmem:[%s0 + $0x1a8] sm:$0xff]
  %v87 = vld [vmem:[%s0 + $0x1b0] sm:$0xff]
  %v88 = vld [vmem:[%s0 + $0x1b8] sm:$0xff]
  %v89 = vld [vmem:[%s0 + $0x1c0] sm:$0xff]
  %v90 = vld [vmem:[%s0 + $0x1c8] sm:$0xff]
  %v91 = vld [vmem:[%s0 + $0x1d0] sm:$0xff]
  %v92 = vld [vmem:[%s0 + $0x1d8] sm:$0xff]
  %v93 = vld [vmem:[%s0 + $0x1e0] sm:$0xff]
  %v94 = vld [vmem:[%s0 + $0x1e8] sm:$0xff]
  %v95 = vld [vmem:[%s0 + $0x1f0] sm:$0xff]
  %v96 = vld [vmem:[%s0 + $0x1f8] sm:$0xff]
  %v97 = vld [vmem:[%s2] sm:$0x1]
  %v98 = vunpack.c.l.bf16 %v97
  %100 = vset.pattern.permute.xlu0 0
  %101 = vperm.xlu0 %100, %v33
  %v102 = vpop.permute.xlu0 %101
  %105 = vset.pattern.permute.xlu0 0
  %106 = vperm.xlu0 %105, %v34
  %v107 = vpop.permute.xlu0 %106
  %110 = vset.pattern.permute.xlu0 0
  %111 = vperm.xlu0 %110, %v35
  %v112 = vpop.permute.xlu0 %111
  %115 = vset.pattern.permute.xlu0 0
  %116 = vperm.xlu0 %115, %v36
  %v117 = vpop.permute.xlu0 %116
  %120 = vset.pattern.permute.xlu0 0
  %121 = vperm.xlu0 %120, %v37
  %v122 = vpop.permute.xlu0 %121
  %125 = vset.pattern.permute.xlu0 0
  %126 = vperm.xlu0 %125, %v38
  %v127 = vpop.permute.xlu0 %126
  %130 = vset.pattern.permute.xlu0 0
  %131 = vperm.xlu0 %130, %v39
  %v132 = vpop.permute.xlu0 %131
  %135 = vset.pattern.permute.xlu0 0
  %136 = vperm.xlu0 %135, %v40
  %v137 = vpop.permute.xlu0 %136
  %140 = vset.pattern.permute.xlu0 0
  %141 = vperm.xlu0 %140, %v41
  %v142 = vpop.permute.xlu0 %141
  %145 = vset.pattern.permute.xlu0 0
  %146 = vperm.xlu0 %145, %v42
  %v147 = vpop.permute.xlu0 %146
  %150 = vset.pattern.permute.xlu0 0
  %151 = vperm.xlu0 %150, %v43
  %v152 = vpop.permute.xlu0 %151
  %155 = vset.pattern.permute.xlu0 0
  %156 = vperm.xlu0 %155, %v44
  %v157 = vpop.permute.xlu0 %156
  %160 = vset.pattern.permute.xlu0 0
  %161 = vperm.xlu0 %160, %v45
  %v162 = vpop.permute.xlu0 %161
  %165 = vset.pattern.permute.xlu0 0
  %166 = vperm.xlu0 %165, %v46
  %v167 = vpop.permute.xlu0 %166
  %170 = vset.pattern.permute.xlu0 0
  %171 = vperm.xlu0 %170, %v47
  %v172 = vpop.permute.xlu0 %171
  %175 = vset.pattern.permute.xlu0 0
  %176 = vperm.xlu0 %175, %v48
  %v177 = vpop.permute.xlu0 %176
  %180 = vset.pattern.permute.xlu0 0
  %181 = vperm.xlu0 %180, %v49
  %v182 = vpop.permute.xlu0 %181
  %185 = vset.pattern.permute.xlu0 0
  %186 = vperm.xlu0 %185, %v50
  %v187 = vpop.permute.xlu0 %186
  %190 = vset.pattern.permute.xlu0 0
  %191 = vperm.xlu0 %190, %v51
  %v192 = vpop.permute.xlu0 %191
  %195 = vset.pattern.permute.xlu0 0
  %196 = vperm.xlu0 %195, %v52
  %v197 = vpop.permute.xlu0 %196
  %200 = vset.pattern.permute.xlu0 0
  %201 = vperm.xlu0 %200, %v53
  %v202 = vpop.permute.xlu0 %201
  %205 = vset.pattern.permute.xlu0 0
  %206 = vperm.xlu0 %205, %v54
  %v207 = vpop.permute.xlu0 %206
  %210 = vset.pattern.permute.xlu0 0
  %211 = vperm.xlu0 %210, %v55
  %v212 = vpop.permute.xlu0 %211
  %215 = vset.pattern.permute.xlu0 0
  %216 = vperm.xlu0 %215, %v56
  %v217 = vpop.permute.xlu0 %216
  %220 = vset.pattern.permute.xlu0 0
  %221 = vperm.xlu0 %220, %v57
  %v222 = vpop.permute.xlu0 %221
  %225 = vset.pattern.permute.xlu0 0
  %226 = vperm.xlu0 %225, %v58
  %v227 = vpop.permute.xlu0 %226
  %230 = vset.pattern.permute.xlu0 0
  %231 = vperm.xlu0 %230, %v59
  %v232 = vpop.permute.xlu0 %231
  %235 = vset.pattern.permute.xlu0 0
  %236 = vperm.xlu0 %235, %v60
  %v237 = vpop.permute.xlu0 %236
  %240 = vset.pattern.permute.xlu0 0
  %241 = vperm.xlu0 %240, %v61
  %v242 = vpop.permute.xlu0 %241
  %245 = vset.pattern.permute.xlu0 0
  %246 = vperm.xlu0 %245, %v62
  %v247 = vpop.permute.xlu0 %246
  %250 = vset.pattern.permute.xlu0 0
  %251 = vperm.xlu0 %250, %v63
  %v252 = vpop.permute.xlu0 %251
  %255 = vset.pattern.permute.xlu0 0
  %256 = vperm.xlu0 %255, %v64
  %v257 = vpop.permute.xlu0 %256
  %260 = vset.pattern.permute.xlu0 0
  %261 = vperm.xlu0 %260, %v65
  %v262 = vpop.permute.xlu0 %261
  %265 = vset.pattern.permute.xlu0 0
  %266 = vperm.xlu0 %265, %v66
  %v267 = vpop.permute.xlu0 %266
  %270 = vset.pattern.permute.xlu0 0
  %271 = vperm.xlu0 %270, %v67
  %v272 = vpop.permute.xlu0 %271
  %275 = vset.pattern.permute.xlu0 0
  %276 = vperm.xlu0 %275, %v68
  %v277 = vpop.permute.xlu0 %276
  %280 = vset.pattern.permute.xlu0 0
  %281 = vperm.xlu0 %280, %v69
  %v282 = vpop.permute.xlu0 %281
  %285 = vset.pattern.permute.xlu0 0
  %286 = vperm.xlu0 %285, %v70
  %v287 = vpop.permute.xlu0 %286
  %290 = vset.pattern.permute.xlu0 0
  %291 = vperm.xlu0 %290, %v71
  %v292 = vpop.permute.xlu0 %291
  %295 = vset.pattern.permute.xlu0 0
  %296 = vperm.xlu0 %295, %v72
  %v297 = vpop.permute.xlu0 %296
  %300 = vset.pattern.permute.xlu0 0
  %301 = vperm.xlu0 %300, %v73
  %v302 = vpop.permute.xlu0 %301
  %305 = vset.pattern.permute.xlu0 0
  %306 = vperm.xlu0 %305, %v74
  %v307 = vpop.permute.xlu0 %306
  %310 = vset.pattern.permute.xlu0 0
  %311 = vperm.xlu0 %310, %v75
  %v312 = vpop.permute.xlu0 %311
  %315 = vset.pattern.permute.xlu0 0
  %316 = vperm.xlu0 %315, %v76
  %v317 = vpop.permute.xlu0 %316
  %320 = vset.pattern.permute.xlu0 0
  %321 = vperm.xlu0 %320, %v77
  %v322 = vpop.permute.xlu0 %321
  %325 = vset.pattern.permute.xlu0 0
  %326 = vperm.xlu0 %325, %v78
  %v327 = vpop.permute.xlu0 %326
  %330 = vset.pattern.permute.xlu0 0
  %331 = vperm.xlu0 %330, %v79
  %v332 = vpop.permute.xlu0 %331
  %335 = vset.pattern.permute.xlu0 0
  %336 = vperm.xlu0 %335, %v80
  %v337 = vpop.permute.xlu0 %336
  %340 = vset.pattern.permute.xlu0 0
  %341 = vperm.xlu0 %340, %v81
  %v342 = vpop.permute.xlu0 %341
  %345 = vset.pattern.permute.xlu0 0
  %346 = vperm.xlu0 %345, %v82
  %v347 = vpop.permute.xlu0 %346
  %350 = vset.pattern.permute.xlu0 0
  %351 = vperm.xlu0 %350, %v83
  %v352 = vpop.permute.xlu0 %351
  %355 = vset.pattern.permute.xlu0 0
  %356 = vperm.xlu0 %355, %v84
  %v357 = vpop.permute.xlu0 %356
  %360 = vset.pattern.permute.xlu0 0
  %361 = vperm.xlu0 %360, %v85
  %v362 = vpop.permute.xlu0 %361
  %365 = vset.pattern.permute.xlu0 0
  %366 = vperm.xlu0 %365, %v86
  %v367 = vpop.permute.xlu0 %366
  %370 = vset.pattern.permute.xlu0 0
  %371 = vperm.xlu0 %370, %v87
  %v372 = vpop.permute.xlu0 %371
  %375 = vset.pattern.permute.xlu0 0
  %376 = vperm.xlu0 %375, %v88
  %v377 = vpop.permute.xlu0 %376
  %380 = vset.pattern.permute.xlu0 0
  %381 = vperm.xlu0 %380, %v89
  %v382 = vpop.permute.xlu0 %381
  %385 = vset.pattern.permute.xlu0 0
  %386 = vperm.xlu0 %385, %v90
  %v387 = vpop.permute.xlu0 %386
  %390 = vset.pattern.permute.xlu0 0
  %391 = vperm.xlu0 %390, %v91
  %v392 = vpop.permute.xlu0 %391
  %395 = vset.pattern.permute.xlu0 0
  %396 = vperm.xlu0 %395, %v92
  %v397 = vpop.permute.xlu0 %396
  %400 = vset.pattern.permute.xlu0 0
  %401 = vperm.xlu0 %400, %v93
  %v402 = vpop.permute.xlu0 %401
  %405 = vset.pattern.permute.xlu0 0
  %406 = vperm.xlu0 %405, %v94
  %v407 = vpop.permute.xlu0 %406
  %410 = vset.pattern.permute.xlu0 0
  %411 = vperm.xlu0 %410, %v95
  %v412 = vpop.permute.xlu0 %411
  %415 = vset.pattern.permute.xlu0 0
  %416 = vperm.xlu0 %415, %v96
  %v417 = vpop.permute.xlu0 %416
  %v419 = vlaneseq
  %v420 = vshrl.u32 %v419, 7
  %v421 = vsub.s32 0, %v420
  %v422 = vrot.slane %v98, %v421
  %v423 = vmul.f32 %v102, %v422
  %v424 = vmul.f32 %v107, %v422
  %v425 = vmul.f32 %v112, %v422
  %v426 = vmul.f32 %v117, %v422
  %v427 = vmul.f32 %v122, %v422
  %v428 = vmul.f32 %v127, %v422
  %v429 = vmul.f32 %v132, %v422
  %v430 = vmul.f32 %v137, %v422
  %v431 = vmul.f32 %v142, %v422
  %v432 = vmul.f32 %v147, %v422
  %v433 = vmul.f32 %v152, %v422
  %v434 = vmul.f32 %v157, %v422
  %v435 = vmul.f32 %v162, %v422
  %v436 = vmul.f32 %v167, %v422
  %v437 = vmul.f32 %v172, %v422
  %v438 = vmul.f32 %v177, %v422
  %v439 = vmul.f32 %v182, %v422
  %v440 = vmul.f32 %v187, %v422
  %v441 = vmul.f32 %v192, %v422
  %v442 = vmul.f32 %v197, %v422
  %v443 = vmul.f32 %v202, %v422
  %v444 = vmul.f32 %v207, %v422
  %v445 = vmul.f32 %v212, %v422
  %v446 = vmul.f32 %v217, %v422
  %v447 = vmul.f32 %v222, %v422
  %v448 = vmul.f32 %v227, %v422
  %v449 = vmul.f32 %v232, %v422
  %v450 = vmul.f32 %v237, %v422
  %v451 = vmul.f32 %v242, %v422
  %v452 = vmul.f32 %v247, %v422
  %v453 = vmul.f32 %v252, %v422
  %v454 = vmul.f32 %v257, %v422
  %v455 = vmul.f32 %v262, %v422
  %v456 = vmul.f32 %v267, %v422
  %v457 = vmul.f32 %v272, %v422
  %v458 = vmul.f32 %v277, %v422
  %v459 = vmul.f32 %v282, %v422
  %v460 = vmul.f32 %v287, %v422
  %v461 = vmul.f32 %v292, %v422
  %v462 = vmul.f32 %v297, %v422
  %v463 = vmul.f32 %v302, %v422
  %v464 = vmul.f32 %v307, %v422
  %v465 = vmul.f32 %v312, %v422
  %v466 = vmul.f32 %v317, %v422
  %v467 = vmul.f32 %v322, %v422
  %v468 = vmul.f32 %v327, %v422
  %v469 = vmul.f32 %v332, %v422
  %v470 = vmul.f32 %v337, %v422
  %v471 = vmul.f32 %v342, %v422
  %v472 = vmul.f32 %v347, %v422
  %v473 = vmul.f32 %v352, %v422
  %v474 = vmul.f32 %v357, %v422
  %v475 = vmul.f32 %v362, %v422
  %v476 = vmul.f32 %v367, %v422
  %v477 = vmul.f32 %v372, %v422
  %v478 = vmul.f32 %v377, %v422
  %v479 = vmul.f32 %v382, %v422
  %v480 = vmul.f32 %v387, %v422
  %v481 = vmul.f32 %v392, %v422
  %v482 = vmul.f32 %v397, %v422
  %v483 = vmul.f32 %v402, %v422
  %v484 = vmul.f32 %v407, %v422
  %v485 = vmul.f32 %v412, %v422
  %v486 = vmul.f32 %v417, %v422
  %487 = vset.pattern.permute.xlu0 1
  %488 = vperm.xlu0 %487, %v33
  %v489 = vpop.permute.xlu0 %488
  %491 = vset.pattern.permute.xlu0 1
  %492 = vperm.xlu0 %491, %v34
  %v493 = vpop.permute.xlu0 %492
  %495 = vset.pattern.permute.xlu0 1
  %496 = vperm.xlu0 %495, %v35
  %v497 = vpop.permute.xlu0 %496
  %499 = vset.pattern.permute.xlu0 1
  %500 = vperm.xlu0 %499, %v36
  %v501 = vpop.permute.xlu0 %500
  %503 = vset.pattern.permute.xlu0 1
  %504 = vperm.xlu0 %503, %v37
  %v505 = vpop.permute.xlu0 %504
  %507 = vset.pattern.permute.xlu0 1
  %508 = vperm.xlu0 %507, %v38
  %v509 = vpop.permute.xlu0 %508
  %511 = vset.pattern.permute.xlu0 1
  %512 = vperm.xlu0 %511, %v39
  %v513 = vpop.permute.xlu0 %512
  %515 = vset.pattern.permute.xlu0 1
  %516 = vperm.xlu0 %515, %v40
  %v517 = vpop.permute.xlu0 %516
  %519 = vset.pattern.permute.xlu0 1
  %520 = vperm.xlu0 %519, %v41
  %v521 = vpop.permute.xlu0 %520
  %523 = vset.pattern.permute.xlu0 1
  %524 = vperm.xlu0 %523, %v42
  %v525 = vpop.permute.xlu0 %524
  %527 = vset.pattern.permute.xlu0 1
  %528 = vperm.xlu0 %527, %v43
  %v529 = vpop.permute.xlu0 %528
  %531 = vset.pattern.permute.xlu0 1
  %532 = vperm.xlu0 %531, %v44
  %v533 = vpop.permute.xlu0 %532
  %535 = vset.pattern.permute.xlu0 1
  %536 = vperm.xlu0 %535, %v45
  %v537 = vpop.permute.xlu0 %536
  %539 = vset.pattern.permute.xlu0 1
  %540 = vperm.xlu0 %539, %v46
  %v541 = vpop.permute.xlu0 %540
  %543 = vset.pattern.permute.xlu0 1
  %544 = vperm.xlu0 %543, %v47
  %v545 = vpop.permute.xlu0 %544
  %547 = vset.pattern.permute.xlu0 1
  %548 = vperm.xlu0 %547, %v48
  %v549 = vpop.permute.xlu0 %548
  %551 = vset.pattern.permute.xlu0 1
  %552 = vperm.xlu0 %551, %v49
  %v553 = vpop.permute.xlu0 %552
  %555 = vset.pattern.permute.xlu0 1
  %556 = vperm.xlu0 %555, %v50
  %v557 = vpop.permute.xlu0 %556
  %559 = vset.pattern.permute.xlu0 1
  %560 = vperm.xlu0 %559, %v51
  %v561 = vpop.permute.xlu0 %560
  %563 = vset.pattern.permute.xlu0 1
  %564 = vperm.xlu0 %563, %v52
  %v565 = vpop.permute.xlu0 %564
  %567 = vset.pattern.permute.xlu0 1
  %568 = vperm.xlu0 %567, %v53
  %v569 = vpop.permute.xlu0 %568
  %571 = vset.pattern.permute.xlu0 1
  %572 = vperm.xlu0 %571, %v54
  %v573 = vpop.permute.xlu0 %572
  %575 = vset.pattern.permute.xlu0 1
  %576 = vperm.xlu0 %575, %v55
  %v577 = vpop.permute.xlu0 %576
  %579 = vset.pattern.permute.xlu0 1
  %580 = vperm.xlu0 %579, %v56
  %v581 = vpop.permute.xlu0 %580
  %583 = vset.pattern.permute.xlu0 1
  %584 = vperm.xlu0 %583, %v57
  %v585 = vpop.permute.xlu0 %584
  %587 = vset.pattern.permute.xlu0 1
  %588 = vperm.xlu0 %587, %v58
  %v589 = vpop.permute.xlu0 %588
  %591 = vset.pattern.permute.xlu0 1
  %592 = vperm.xlu0 %591, %v59
  %v593 = vpop.permute.xlu0 %592
  %595 = vset.pattern.permute.xlu0 1
  %596 = vperm.xlu0 %595, %v60
  %v597 = vpop.permute.xlu0 %596
  %599 = vset.pattern.permute.xlu0 1
  %600 = vperm.xlu0 %599, %v61
  %v601 = vpop.permute.xlu0 %600
  %603 = vset.pattern.permute.xlu0 1
  %604 = vperm.xlu0 %603, %v62
  %v605 = vpop.permute.xlu0 %604
  %607 = vset.pattern.permute.xlu0 1
  %608 = vperm.xlu0 %607, %v63
  %v609 = vpop.permute.xlu0 %608
  %611 = vset.pattern.permute.xlu0 1
  %612 = vperm.xlu0 %611, %v64
  %v613 = vpop.permute.xlu0 %612
  %615 = vset.pattern.permute.xlu0 1
  %616 = vperm.xlu0 %615, %v65
  %v617 = vpop.permute.xlu0 %616
  %619 = vset.pattern.permute.xlu0 1
  %620 = vperm.xlu0 %619, %v66
  %v621 = vpop.permute.xlu0 %620
  %623 = vset.pattern.permute.xlu0 1
  %624 = vperm.xlu0 %623, %v67
  %v625 = vpop.permute.xlu0 %624
  %627 = vset.pattern.permute.xlu0 1
  %628 = vperm.xlu0 %627, %v68
  %v629 = vpop.permute.xlu0 %628
  %631 = vset.pattern.permute.xlu0 1
  %632 = vperm.xlu0 %631, %v69
  %v633 = vpop.permute.xlu0 %632
  %635 = vset.pattern.permute.xlu0 1
  %636 = vperm.xlu0 %635, %v70
  %v637 = vpop.permute.xlu0 %636
  %639 = vset.pattern.permute.xlu0 1
  %640 = vperm.xlu0 %639, %v71
  %v641 = vpop.permute.xlu0 %640
  %643 = vset.pattern.permute.xlu0 1
  %644 = vperm.xlu0 %643, %v72
  %v645 = vpop.permute.xlu0 %644
  %647 = vset.pattern.permute.xlu0 1
  %648 = vperm.xlu0 %647, %v73
  %v649 = vpop.permute.xlu0 %648
  %651 = vset.pattern.permute.xlu0 1
  %652 = vperm.xlu0 %651, %v74
  %v653 = vpop.permute.xlu0 %652
  %655 = vset.pattern.permute.xlu0 1
  %656 = vperm.xlu0 %655, %v75
  %v657 = vpop.permute.xlu0 %656
  %659 = vset.pattern.permute.xlu0 1
  %660 = vperm.xlu0 %659, %v76
  %v661 = vpop.permute.xlu0 %660
  %663 = vset.pattern.permute.xlu0 1
  %664 = vperm.xlu0 %663, %v77
  %v665 = vpop.permute.xlu0 %664
  %667 = vset.pattern.permute.xlu0 1
  %668 = vperm.xlu0 %667, %v78
  %v669 = vpop.permute.xlu0 %668
  %671 = vset.pattern.permute.xlu0 1
  %672 = vperm.xlu0 %671, %v79
  %v673 = vpop.permute.xlu0 %672
  %675 = vset.pattern.permute.xlu0 1
  %676 = vperm.xlu0 %675, %v80
  %v677 = vpop.permute.xlu0 %676
  %679 = vset.pattern.permute.xlu0 1
  %680 = vperm.xlu0 %679, %v81
  %v681 = vpop.permute.xlu0 %680
  %683 = vset.pattern.permute.xlu0 1
  %684 = vperm.xlu0 %683, %v82
  %v685 = vpop.permute.xlu0 %684
  %687 = vset.pattern.permute.xlu0 1
  %688 = vperm.xlu0 %687, %v83
  %v689 = vpop.permute.xlu0 %688
  %691 = vset.pattern.permute.xlu0 1
  %692 = vperm.xlu0 %691, %v84
  %v693 = vpop.permute.xlu0 %692
  %695 = vset.pattern.permute.xlu0 1
  %696 = vperm.xlu0 %695, %v85
  %v697 = vpop.permute.xlu0 %696
  %699 = vset.pattern.permute.xlu0 1
  %700 = vperm.xlu0 %699, %v86
  %v701 = vpop.permute.xlu0 %700
  %703 = vset.pattern.permute.xlu0 1
  %704 = vperm.xlu0 %703, %v87
  %v705 = vpop.permute.xlu0 %704
  %707 = vset.pattern.permute.xlu0 1
  %708 = vperm.xlu0 %707, %v88
  %v709 = vpop.permute.xlu0 %708
  %711 = vset.pattern.permute.xlu0 1
  %712 = vperm.xlu0 %711, %v89
  %v713 = vpop.permute.xlu0 %712
  %715 = vset.pattern.permute.xlu0 1
  %716 = vperm.xlu0 %715, %v90
  %v717 = vpop.permute.xlu0 %716
  %719 = vset.pattern.permute.xlu0 1
  %720 = vperm.xlu0 %719, %v91
  %v721 = vpop.permute.xlu0 %720
  %723 = vset.pattern.permute.xlu0 1
  %724 = vperm.xlu0 %723, %v92
  %v725 = vpop.permute.xlu0 %724
  %727 = vset.pattern.permute.xlu0 1
  %728 = vperm.xlu0 %727, %v93
  %v729 = vpop.permute.xlu0 %728
  %731 = vset.pattern.permute.xlu0 1
  %732 = vperm.xlu0 %731, %v94
  %v733 = vpop.permute.xlu0 %732
  %735 = vset.pattern.permute.xlu0 1
  %736 = vperm.xlu0 %735, %v95
  %v737 = vpop.permute.xlu0 %736
  %739 = vset.pattern.permute.xlu0 1
  %740 = vperm.xlu0 %739, %v96
  %v741 = vpop.permute.xlu0 %740
  %v743 = vlaneseq
  %v744 = vshrl.u32 %v743, 7
  %v745 = vsub.s32 1, %v744
  %v746 = vrot.slane %v98, %v745
  %v747 = vmul.f32 %v489, %v746
  %v748 = vmul.f32 %v493, %v746
  %v749 = vmul.f32 %v497, %v746
  %v750 = vmul.f32 %v501, %v746
  %v751 = vmul.f32 %v505, %v746
  %v752 = vmul.f32 %v509, %v746
  %v753 = vmul.f32 %v513, %v746
  %v754 = vmul.f32 %v517, %v746
  %v755 = vmul.f32 %v521, %v746
  %v756 = vmul.f32 %v525, %v746
  %v757 = vmul.f32 %v529, %v746
  %v758 = vmul.f32 %v533, %v746
  %v759 = vmul.f32 %v537, %v746
  %v760 = vmul.f32 %v541, %v746
  %v761 = vmul.f32 %v545, %v746
  %v762 = vmul.f32 %v549, %v746
  %v763 = vmul.f32 %v553, %v746
  %v764 = vmul.f32 %v557, %v746
  %v765 = vmul.f32 %v561, %v746
  %v766 = vmul.f32 %v565, %v746
  %v767 = vmul.f32 %v569, %v746
  %v768 = vmul.f32 %v573, %v746
  %v769 = vmul.f32 %v577, %v746
  %v770 = vmul.f32 %v581, %v746
  %v771 = vmul.f32 %v585, %v746
  %v772 = vmul.f32 %v589, %v746
  %v773 = vmul.f32 %v593, %v746
  %v774 = vmul.f32 %v597, %v746
  %v775 = vmul.f32 %v601, %v746
  %v776 = vmul.f32 %v605, %v746
  %v777 = vmul.f32 %v609, %v746
  %v778 = vmul.f32 %v613, %v746
  %v779 = vmul.f32 %v617, %v746
  %v780 = vmul.f32 %v621, %v746
  %v781 = vmul.f32 %v625, %v746
  %v782 = vmul.f32 %v629, %v746
  %v783 = vmul.f32 %v633, %v746
  %v784 = vmul.f32 %v637, %v746
  %v785 = vmul.f32 %v641, %v746
  %v786 = vmul.f32 %v645, %v746
  %v787 = vmul.f32 %v649, %v746
  %v788 = vmul.f32 %v653, %v746
  %v789 = vmul.f32 %v657, %v746
  %v790 = vmul.f32 %v661, %v746
  %v791 = vmul.f32 %v665, %v746
  %v792 = vmul.f32 %v669, %v746
  %v793 = vmul.f32 %v673, %v746
  %v794 = vmul.f32 %v677, %v746
  %v795 = vmul.f32 %v681, %v746
  %v796 = vmul.f32 %v685, %v746
  %v797 = vmul.f32 %v689, %v746
  %v798 = vmul.f32 %v693, %v746
  %v799 = vmul.f32 %v697, %v746
  %v800 = vmul.f32 %v701, %v746
  %v801 = vmul.f32 %v705, %v746
  %v802 = vmul.f32 %v709, %v746
  %v803 = vmul.f32 %v713, %v746
  %v804 = vmul.f32 %v717, %v746
  %v805 = vmul.f32 %v721, %v746
  %v806 = vmul.f32 %v725, %v746
  %v807 = vmul.f32 %v729, %v746
  %v808 = vmul.f32 %v733, %v746
  %v809 = vmul.f32 %v737, %v746
  %v810 = vmul.f32 %v741, %v746
  %v811 = vadd.f32 %v423, %v747
  %v812 = vadd.f32 %v424, %v748
  %v813 = vadd.f32 %v425, %v749
  %v814 = vadd.f32 %v426, %v750
  %v815 = vadd.f32 %v427, %v751
  %v816 = vadd.f32 %v428, %v752
  %v817 = vadd.f32 %v429, %v753
  %v818 = vadd.f32 %v430, %v754
  %v819 = vadd.f32 %v431, %v755
  %v820 = vadd.f32 %v432, %v756
  %v821 = vadd.f32 %v433, %v757
  %v822 = vadd.f32 %v434, %v758
  %v823 = vadd.f32 %v435, %v759
  %v824 = vadd.f32 %v436, %v760
  %v825 = vadd.f32 %v437, %v761
  %v826 = vadd.f32 %v438, %v762
  %v827 = vadd.f32 %v439, %v763
  %v828 = vadd.f32 %v440, %v764
  %v829 = vadd.f32 %v441, %v765
  %v830 = vadd.f32 %v442, %v766
  %v831 = vadd.f32 %v443, %v767
  %v832 = vadd.f32 %v444, %v768
  %v833 = vadd.f32 %v445, %v769
  %v834 = vadd.f32 %v446, %v770
  %v835 = vadd.f32 %v447, %v771
  %v836 = vadd.f32 %v448, %v772
  %v837 = vadd.f32 %v449, %v773
  %v838 = vadd.f32 %v450, %v774
  %v839 = vadd.f32 %v451, %v775
  %v840 = vadd.f32 %v452, %v776
  %v841 = vadd.f32 %v453, %v777
  %v842 = vadd.f32 %v454, %v778
  %v843 = vadd.f32 %v455, %v779
  %v844 = vadd.f32 %v456, %v780
  %v845 = vadd.f32 %v457, %v781
  %v846 = vadd.f32 %v458, %v782
  %v847 = vadd.f32 %v459, %v783
  %v848 = vadd.f32 %v460, %v784
  %v849 = vadd.f32 %v461, %v785
  %v850 = vadd.f32 %v462, %v786
  %v851 = vadd.f32 %v463, %v787
  %v852 = vadd.f32 %v464, %v788
  %v853 = vadd.f32 %v465, %v789
  %v854 = vadd.f32 %v466, %v790
  %v855 = vadd.f32 %v467, %v791
  %v856 = vadd.f32 %v468, %v792
  %v857 = vadd.f32 %v469, %v793
  %v858 = vadd.f32 %v470, %v794
  %v859 = vadd.f32 %v471, %v795
  %v860 = vadd.f32 %v472, %v796
  %v861 = vadd.f32 %v473, %v797
  %v862 = vadd.f32 %v474, %v798
  %v863 = vadd.f32 %v475, %v799
  %v864 = vadd.f32 %v476, %v800
  %v865 = vadd.f32 %v477, %v801
  %v866 = vadd.f32 %v478, %v802
  %v867 = vadd.f32 %v479, %v803
  %v868 = vadd.f32 %v480, %v804
  %v869 = vadd.f32 %v481, %v805
  %v870 = vadd.f32 %v482, %v806
  %v871 = vadd.f32 %v483, %v807
  %v872 = vadd.f32 %v484, %v808
  %v873 = vadd.f32 %v485, %v809
  %v874 = vadd.f32 %v486, %v810
  %v875 = vld [vmem:[%s2] sm:$0x2]
  %v876 = vunpack.c.l.bf16 %v875
  %877 = vset.pattern.permute.xlu0 2
  %878 = vperm.xlu0 %877, %v33
  %v879 = vpop.permute.xlu0 %878
  %881 = vset.pattern.permute.xlu0 2
  %882 = vperm.xlu0 %881, %v34
  %v883 = vpop.permute.xlu0 %882
  %885 = vset.pattern.permute.xlu0 2
  %886 = vperm.xlu0 %885, %v35
  %v887 = vpop.permute.xlu0 %886
  %889 = vset.pattern.permute.xlu0 2
  %890 = vperm.xlu0 %889, %v36
  %v891 = vpop.permute.xlu0 %890
  %893 = vset.pattern.permute.xlu0 2
  %894 = vperm.xlu0 %893, %v37
  %v895 = vpop.permute.xlu0 %894
  %897 = vset.pattern.permute.xlu0 2
  %898 = vperm.xlu0 %897, %v38
  %v899 = vpop.permute.xlu0 %898
  %901 = vset.pattern.permute.xlu0 2
  %902 = vperm.xlu0 %901, %v39
  %v903 = vpop.permute.xlu0 %902
  %905 = vset.pattern.permute.xlu0 2
  %906 = vperm.xlu0 %905, %v40
  %v907 = vpop.permute.xlu0 %906
  %909 = vset.pattern.permute.xlu0 2
  %910 = vperm.xlu0 %909, %v41
  %v911 = vpop.permute.xlu0 %910
  %913 = vset.pattern.permute.xlu0 2
  %914 = vperm.xlu0 %913, %v42
  %v915 = vpop.permute.xlu0 %914
  %917 = vset.pattern.permute.xlu0 2
  %918 = vperm.xlu0 %917, %v43
  %v919 = vpop.permute.xlu0 %918
  %921 = vset.pattern.permute.xlu0 2
  %922 = vperm.xlu0 %921, %v44
  %v923 = vpop.permute.xlu0 %922
  %925 = vset.pattern.permute.xlu0 2
  %926 = vperm.xlu0 %925, %v45
  %v927 = vpop.permute.xlu0 %926
  %929 = vset.pattern.permute.xlu0 2
  %930 = vperm.xlu0 %929, %v46
  %v931 = vpop.permute.xlu0 %930
  %933 = vset.pattern.permute.xlu0 2
  %934 = vperm.xlu0 %933, %v47
  %v935 = vpop.permute.xlu0 %934
  %937 = vset.pattern.permute.xlu0 2
  %938 = vperm.xlu0 %937, %v48
  %v939 = vpop.permute.xlu0 %938
  %941 = vset.pattern.permute.xlu0 2
  %942 = vperm.xlu0 %941, %v49
  %v943 = vpop.permute.xlu0 %942
  %945 = vset.pattern.permute.xlu0 2
  %946 = vperm.xlu0 %945, %v50
  %v947 = vpop.permute.xlu0 %946
  %949 = vset.pattern.permute.xlu0 2
  %950 = vperm.xlu0 %949, %v51
  %v951 = vpop.permute.xlu0 %950
  %953 = vset.pattern.permute.xlu0 2
  %954 = vperm.xlu0 %953, %v52
  %v955 = vpop.permute.xlu0 %954
  %957 = vset.pattern.permute.xlu0 2
  %958 = vperm.xlu0 %957, %v53
  %v959 = vpop.permute.xlu0 %958
  %961 = vset.pattern.permute.xlu0 2
  %962 = vperm.xlu0 %961, %v54
  %v963 = vpop.permute.xlu0 %962
  %965 = vset.pattern.permute.xlu0 2
  %966 = vperm.xlu0 %965, %v55
  %v967 = vpop.permute.xlu0 %966
  %969 = vset.pattern.permute.xlu0 2
  %970 = vperm.xlu0 %969, %v56
  %v971 = vpop.permute.xlu0 %970
  %973 = vset.pattern.permute.xlu0 2
  %974 = vperm.xlu0 %973, %v57
  %v975 = vpop.permute.xlu0 %974
  %977 = vset.pattern.permute.xlu0 2
  %978 = vperm.xlu0 %977, %v58
  %v979 = vpop.permute.xlu0 %978
  %981 = vset.pattern.permute.xlu0 2
  %982 = vperm.xlu0 %981, %v59
  %v983 = vpop.permute.xlu0 %982
  %985 = vset.pattern.permute.xlu0 2
  %986 = vperm.xlu0 %985, %v60
  %v987 = vpop.permute.xlu0 %986
  %989 = vset.pattern.permute.xlu0 2
  %990 = vperm.xlu0 %989, %v61
  %v991 = vpop.permute.xlu0 %990
  %993 = vset.pattern.permute.xlu0 2
  %994 = vperm.xlu0 %993, %v62
  %v995 = vpop.permute.xlu0 %994
  %997 = vset.pattern.permute.xlu0 2
  %998 = vperm.xlu0 %997, %v63
  %v999 = vpop.permute.xlu0 %998
  %1001 = vset.pattern.permute.xlu0 2
  %1002 = vperm.xlu0 %1001, %v64
  %v1003 = vpop.permute.xlu0 %1002
  %1005 = vset.pattern.permute.xlu0 2
  %1006 = vperm.xlu0 %1005, %v65
  %v1007 = vpop.permute.xlu0 %1006
  %1009 = vset.pattern.permute.xlu0 2
  %1010 = vperm.xlu0 %1009, %v66
  %v1011 = vpop.permute.xlu0 %1010
  %1013 = vset.pattern.permute.xlu0 2
  %1014 = vperm.xlu0 %1013, %v67
  %v1015 = vpop.permute.xlu0 %1014
  %1017 = vset.pattern.permute.xlu0 2
  %1018 = vperm.xlu0 %1017, %v68
  %v1019 = vpop.permute.xlu0 %1018
  %1021 = vset.pattern.permute.xlu0 2
  %1022 = vperm.xlu0 %1021, %v69
  %v1023 = vpop.permute.xlu0 %1022
  %1025 = vset.pattern.permute.xlu0 2
  %1026 = vperm.xlu0 %1025, %v70
  %v1027 = vpop.permute.xlu0 %1026
  %1029 = vset.pattern.permute.xlu0 2
  %1030 = vperm.xlu0 %1029, %v71
  %v1031 = vpop.permute.xlu0 %1030
  %1033 = vset.pattern.permute.xlu0 2
  %1034 = vperm.xlu0 %1033, %v72
  %v1035 = vpop.permute.xlu0 %1034
  %1037 = vset.pattern.permute.xlu0 2
  %1038 = vperm.xlu0 %1037, %v73
  %v1039 = vpop.permute.xlu0 %1038
  %1041 = vset.pattern.permute.xlu0 2
  %1042 = vperm.xlu0 %1041, %v74
  %v1043 = vpop.permute.xlu0 %1042
  %1045 = vset.pattern.permute.xlu0 2
  %1046 = vperm.xlu0 %1045, %v75
  %v1047 = vpop.permute.xlu0 %1046
  %1049 = vset.pattern.permute.xlu0 2
  %1050 = vperm.xlu0 %1049, %v76
  %v1051 = vpop.permute.xlu0 %1050
  %1053 = vset.pattern.permute.xlu0 2
  %1054 = vperm.xlu0 %1053, %v77
  %v1055 = vpop.permute.xlu0 %1054
  %1057 = vset.pattern.permute.xlu0 2
  %1058 = vperm.xlu0 %1057, %v78
  %v1059 = vpop.permute.xlu0 %1058
  %1061 = vset.pattern.permute.xlu0 2
  %1062 = vperm.xlu0 %1061, %v79
  %v1063 = vpop.permute.xlu0 %1062
  %1065 = vset.pattern.permute.xlu0 2
  %1066 = vperm.xlu0 %1065, %v80
  %v1067 = vpop.permute.xlu0 %1066
  %1069 = vset.pattern.permute.xlu0 2
  %1070 = vperm.xlu0 %1069, %v81
  %v1071 = vpop.permute.xlu0 %1070
  %1073 = vset.pattern.permute.xlu0 2
  %1074 = vperm.xlu0 %1073, %v82
  %v1075 = vpop.permute.xlu0 %1074
  %1077 = vset.pattern.permute.xlu0 2
  %1078 = vperm.xlu0 %1077, %v83
  %v1079 = vpop.permute.xlu0 %1078
  %1081 = vset.pattern.permute.xlu0 2
  %1082 = vperm.xlu0 %1081, %v84
  %v1083 = vpop.permute.xlu0 %1082
  %1085 = vset.pattern.permute.xlu0 2
  %1086 = vperm.xlu0 %1085, %v85
  %v1087 = vpop.permute.xlu0 %1086
  %1089 = vset.pattern.permute.xlu0 2
  %1090 = vperm.xlu0 %1089, %v86
  %v1091 = vpop.permute.xlu0 %1090
  %1093 = vset.pattern.permute.xlu0 2
  %1094 = vperm.xlu0 %1093, %v87
  %v1095 = vpop.permute.xlu0 %1094
  %1097 = vset.pattern.permute.xlu0 2
  %1098 = vperm.xlu0 %1097, %v88
  %v1099 = vpop.permute.xlu0 %1098
  %1101 = vset.pattern.permute.xlu0 2
  %1102 = vperm.xlu0 %1101, %v89
  %v1103 = vpop.permute.xlu0 %1102
  %1105 = vset.pattern.permute.xlu0 2
  %1106 = vperm.xlu0 %1105, %v90
  %v1107 = vpop.permute.xlu0 %1106
  %1109 = vset.pattern.permute.xlu0 2
  %1110 = vperm.xlu0 %1109, %v91
  %v1111 = vpop.permute.xlu0 %1110
  %1113 = vset.pattern.permute.xlu0 2
  %1114 = vperm.xlu0 %1113, %v92
  %v1115 = vpop.permute.xlu0 %1114
  %1117 = vset.pattern.permute.xlu0 2
  %1118 = vperm.xlu0 %1117, %v93
  %v1119 = vpop.permute.xlu0 %1118
  %1121 = vset.pattern.permute.xlu0 2
  %1122 = vperm.xlu0 %1121, %v94
  %v1123 = vpop.permute.xlu0 %1122
  %1125 = vset.pattern.permute.xlu0 2
  %1126 = vperm.xlu0 %1125, %v95
  %v1127 = vpop.permute.xlu0 %1126
  %1129 = vset.pattern.permute.xlu0 2
  %1130 = vperm.xlu0 %1129, %v96
  %v1131 = vpop.permute.xlu0 %1130
  %v1133 = vlaneseq
  %v1134 = vshrl.u32 %v1133, 7
  %v1135 = vsub.s32 2, %v1134
  %v1136 = vrot.slane %v876, %v1135
  %v1137 = vmul.f32 %v879, %v1136
  %v1138 = vmul.f32 %v883, %v1136
  %v1139 = vmul.f32 %v887, %v1136
  %v1140 = vmul.f32 %v891, %v1136
  %v1141 = vmul.f32 %v895, %v1136
  %v1142 = vmul.f32 %v899, %v1136
  %v1143 = vmul.f32 %v903, %v1136
  %v1144 = vmul.f32 %v907, %v1136
  %v1145 = vmul.f32 %v911, %v1136
  %v1146 = vmul.f32 %v915, %v1136
  %v1147 = vmul.f32 %v919, %v1136
  %v1148 = vmul.f32 %v923, %v1136
  %v1149 = vmul.f32 %v927, %v1136
  %v1150 = vmul.f32 %v931, %v1136
  %v1151 = vmul.f32 %v935, %v1136
  %v1152 = vmul.f32 %v939, %v1136
  %v1153 = vmul.f32 %v943, %v1136
  %v1154 = vmul.f32 %v947, %v1136
  %v1155 = vmul.f32 %v951, %v1136
  %v1156 = vmul.f32 %v955, %v1136
  %v1157 = vmul.f32 %v959, %v1136
  %v1158 = vmul.f32 %v963, %v1136
  %v1159 = vmul.f32 %v967, %v1136
  %v1160 = vmul.f32 %v971, %v1136
  %v1161 = vmul.f32 %v975, %v1136
  %v1162 = vmul.f32 %v979, %v1136
  %v1163 = vmul.f32 %v983, %v1136
  %v1164 = vmul.f32 %v987, %v1136
  %v1165 = vmul.f32 %v991, %v1136
  %v1166 = vmul.f32 %v995, %v1136
  %v1167 = vmul.f32 %v999, %v1136
  %v1168 = vmul.f32 %v1003, %v1136
  %v1169 = vmul.f32 %v1007, %v1136
  %v1170 = vmul.f32 %v1011, %v1136
  %v1171 = vmul.f32 %v1015, %v1136
  %v1172 = vmul.f32 %v1019, %v1136
  %v1173 = vmul.f32 %v1023, %v1136
  %v1174 = vmul.f32 %v1027, %v1136
  %v1175 = vmul.f32 %v1031, %v1136
  %v1176 = vmul.f32 %v1035, %v1136
  %v1177 = vmul.f32 %v1039, %v1136
  %v1178 = vmul.f32 %v1043, %v1136
  %v1179 = vmul.f32 %v1047, %v1136
  %v1180 = vmul.f32 %v1051, %v1136
  %v1181 = vmul.f32 %v1055, %v1136
  %v1182 = vmul.f32 %v1059, %v1136
  %v1183 = vmul.f32 %v1063, %v1136
  %v1184 = vmul.f32 %v1067, %v1136
  %v1185 = vmul.f32 %v1071, %v1136
  %v1186 = vmul.f32 %v1075, %v1136
  %v1187 = vmul.f32 %v1079, %v1136
  %v1188 = vmul.f32 %v1083, %v1136
  %v1189 = vmul.f32 %v1087, %v1136
  %v1190 = vmul.f32 %v1091, %v1136
  %v1191 = vmul.f32 %v1095, %v1136
  %v1192 = vmul.f32 %v1099, %v1136
  %v1193 = vmul.f32 %v1103, %v1136
  %v1194 = vmul.f32 %v1107, %v1136
  %v1195 = vmul.f32 %v1111, %v1136
  %v1196 = vmul.f32 %v1115, %v1136
  %v1197 = vmul.f32 %v1119, %v1136
  %v1198 = vmul.f32 %v1123, %v1136
  %v1199 = vmul.f32 %v1127, %v1136
  %v1200 = vmul.f32 %v1131, %v1136
  %v1201 = vadd.f32 %v811, %v1137
  %v1202 = vadd.f32 %v812, %v1138
  %v1203 = vadd.f32 %v813, %v1139
  %v1204 = vadd.f32 %v814, %v1140
  %v1205 = vadd.f32 %v815, %v1141
  %v1206 = vadd.f32 %v816, %v1142
  %v1207 = vadd.f32 %v817, %v1143
  %v1208 = vadd.f32 %v818, %v1144
  %v1209 = vadd.f32 %v819, %v1145
  %v1210 = vadd.f32 %v820, %v1146
  %v1211 = vadd.f32 %v821, %v1147
  %v1212 = vadd.f32 %v822, %v1148
  %v1213 = vadd.f32 %v823, %v1149
  %v1214 = vadd.f32 %v824, %v1150
  %v1215 = vadd.f32 %v825, %v1151
  %v1216 = vadd.f32 %v826, %v1152
  %v1217 = vadd.f32 %v827, %v1153
  %v1218 = vadd.f32 %v828, %v1154
  %v1219 = vadd.f32 %v829, %v1155
  %v1220 = vadd.f32 %v830, %v1156
  %v1221 = vadd.f32 %v831, %v1157
  %v1222 = vadd.f32 %v832, %v1158
  %v1223 = vadd.f32 %v833, %v1159
  %v1224 = vadd.f32 %v834, %v1160
  %v1225 = vadd.f32 %v835, %v1161
  %v1226 = vadd.f32 %v836, %v1162
  %v1227 = vadd.f32 %v837, %v1163
  %v1228 = vadd.f32 %v838, %v1164
  %v1229 = vadd.f32 %v839, %v1165
  %v1230 = vadd.f32 %v840, %v1166
  %v1231 = vadd.f32 %v841, %v1167
  %v1232 = vadd.f32 %v842, %v1168
  %v1233 = vadd.f32 %v843, %v1169
  %v1234 = vadd.f32 %v844, %v1170
  %v1235 = vadd.f32 %v845, %v1171
  %v1236 = vadd.f32 %v846, %v1172
  %v1237 = vadd.f32 %v847, %v1173
  %v1238 = vadd.f32 %v848, %v1174
  %v1239 = vadd.f32 %v849, %v1175
  %v1240 = vadd.f32 %v850, %v1176
  %v1241 = vadd.f32 %v851, %v1177
  %v1242 = vadd.f32 %v852, %v1178
  %v1243 = vadd.f32 %v853, %v1179
  %v1244 = vadd.f32 %v854, %v1180
  %v1245 = vadd.f32 %v855, %v1181
  %v1246 = vadd.f32 %v856, %v1182
  %v1247 = vadd.f32 %v857, %v1183
  %v1248 = vadd.f32 %v858, %v1184
  %v1249 = vadd.f32 %v859, %v1185
  %v1250 = vadd.f32 %v860, %v1186
  %v1251 = vadd.f32 %v861, %v1187
  %v1252 = vadd.f32 %v862, %v1188
  %v1253 = vadd.f32 %v863, %v1189
  %v1254 = vadd.f32 %v864, %v1190
  %v1255 = vadd.f32 %v865, %v1191
  %v1256 = vadd.f32 %v866, %v1192
  %v1257 = vadd.f32 %v867, %v1193
  %v1258 = vadd.f32 %v868, %v1194
  %v1259 = vadd.f32 %v869, %v1195
  %v1260 = vadd.f32 %v870, %v1196
  %v1261 = vadd.f32 %v871, %v1197
  %v1262 = vadd.f32 %v872, %v1198
  %v1263 = vadd.f32 %v873, %v1199
  %v1264 = vadd.f32 %v874, %v1200
  %v1265 = vld [vmem:[%s1] sm:$0xf]
  %v1266 = vld [vmem:[%s1 + $0x4] sm:$0xf]
  %v1267 = vld [vmem:[%s1 + $0x8] sm:$0xf]
  %v1268 = vld [vmem:[%s1 + $0xc] sm:$0xf]
  %v1269 = vld [vmem:[%s1 + $0x10] sm:$0xf]
  %v1270 = vld [vmem:[%s1 + $0x14] sm:$0xf]
  %v1271 = vld [vmem:[%s1 + $0x18] sm:$0xf]
  %v1272 = vld [vmem:[%s1 + $0x1c] sm:$0xf]
  %v1273 = vld [vmem:[%s1 + $0x20] sm:$0xf]
  %v1274 = vld [vmem:[%s1 + $0x24] sm:$0xf]
  %v1275 = vld [vmem:[%s1 + $0x28] sm:$0xf]
  %v1276 = vld [vmem:[%s1 + $0x2c] sm:$0xf]
  %v1277 = vld [vmem:[%s1 + $0x30] sm:$0xf]
  %v1278 = vld [vmem:[%s1 + $0x34] sm:$0xf]
  %v1279 = vld [vmem:[%s1 + $0x38] sm:$0xf]
  %v1280 = vld [vmem:[%s1 + $0x3c] sm:$0xf]
  %v1281 = vld [vmem:[%s1 + $0x40] sm:$0xf]
  %v1282 = vld [vmem:[%s1 + $0x44] sm:$0xf]
  %v1283 = vld [vmem:[%s1 + $0x48] sm:$0xf]
  %v1284 = vld [vmem:[%s1 + $0x4c] sm:$0xf]
  %v1285 = vld [vmem:[%s1 + $0x50] sm:$0xf]
  %v1286 = vld [vmem:[%s1 + $0x54] sm:$0xf]
  %v1287 = vld [vmem:[%s1 + $0x58] sm:$0xf]
  %v1288 = vld [vmem:[%s1 + $0x5c] sm:$0xf]
  %v1289 = vld [vmem:[%s1 + $0x60] sm:$0xf]
  %v1290 = vld [vmem:[%s1 + $0x64] sm:$0xf]
  %v1291 = vld [vmem:[%s1 + $0x68] sm:$0xf]
  %v1292 = vld [vmem:[%s1 + $0x6c] sm:$0xf]
  %v1293 = vld [vmem:[%s1 + $0x70] sm:$0xf]
  %v1294 = vld [vmem:[%s1 + $0x74] sm:$0xf]
  %v1295 = vld [vmem:[%s1 + $0x78] sm:$0xf]
  %v1296 = vld [vmem:[%s1 + $0x7c] sm:$0xf]
  %v1297 = vld [vmem:[%s1 + $0x80] sm:$0xf]
  %v1298 = vld [vmem:[%s1 + $0x84] sm:$0xf]
  %v1299 = vld [vmem:[%s1 + $0x88] sm:$0xf]
  %v1300 = vld [vmem:[%s1 + $0x8c] sm:$0xf]
  %v1301 = vld [vmem:[%s1 + $0x90] sm:$0xf]
  %v1302 = vld [vmem:[%s1 + $0x94] sm:$0xf]
  %v1303 = vld [vmem:[%s1 + $0x98] sm:$0xf]
  %v1304 = vld [vmem:[%s1 + $0x9c] sm:$0xf]
  %v1305 = vld [vmem:[%s1 + $0xa0] sm:$0xf]
  %v1306 = vld [vmem:[%s1 + $0xa4] sm:$0xf]
  %v1307 = vld [vmem:[%s1 + $0xa8] sm:$0xf]
  %v1308 = vld [vmem:[%s1 + $0xac] sm:$0xf]
  %v1309 = vld [vmem:[%s1 + $0xb0] sm:$0xf]
  %v1310 = vld [vmem:[%s1 + $0xb4] sm:$0xf]
  %v1311 = vld [vmem:[%s1 + $0xb8] sm:$0xf]
  %v1312 = vld [vmem:[%s1 + $0xbc] sm:$0xf]
  %v1313 = vld [vmem:[%s1 + $0xc0] sm:$0xf]
  %v1314 = vld [vmem:[%s1 + $0xc4] sm:$0xf]
  %v1315 = vld [vmem:[%s1 + $0xc8] sm:$0xf]
  %v1316 = vld [vmem:[%s1 + $0xcc] sm:$0xf]
  %v1317 = vld [vmem:[%s1 + $0xd0] sm:$0xf]
  %v1318 = vld [vmem:[%s1 + $0xd4] sm:$0xf]
  %v1319 = vld [vmem:[%s1 + $0xd8] sm:$0xf]
  %v1320 = vld [vmem:[%s1 + $0xdc] sm:$0xf]
  %v1321 = vld [vmem:[%s1 + $0xe0] sm:$0xf]
  %v1322 = vld [vmem:[%s1 + $0xe4] sm:$0xf]
  %v1323 = vld [vmem:[%s1 + $0xe8] sm:$0xf]
  %v1324 = vld [vmem:[%s1 + $0xec] sm:$0xf]
  %v1325 = vld [vmem:[%s1 + $0xf0] sm:$0xf]
  %v1326 = vld [vmem:[%s1 + $0xf4] sm:$0xf]
  %v1327 = vld [vmem:[%s1 + $0xf8] sm:$0xf]
  %v1328 = vld [vmem:[%s1 + $0xfc] sm:$0xf]
  %v1329 = vld [vmem:[%s3] sm:$0xf]
  %v1330 = vld [vmem:[%s3 + $0x4] sm:$0xf]
  %v1331 = vld [vmem:[%s3 + $0x8] sm:$0xf]
  %v1332 = vld [vmem:[%s3 + $0xc] sm:$0xf]
  %v1333 = vld [vmem:[%s3 + $0x10] sm:$0xf]
  %v1334 = vld [vmem:[%s3 + $0x14] sm:$0xf]
  %v1335 = vld [vmem:[%s3 + $0x18] sm:$0xf]
  %v1336 = vld [vmem:[%s3 + $0x1c] sm:$0xf]
  %v1337 = vld [vmem:[%s3 + $0x20] sm:$0xf]
  %v1338 = vld [vmem:[%s3 + $0x24] sm:$0xf]
  %v1339 = vld [vmem:[%s3 + $0x28] sm:$0xf]
  %v1340 = vld [vmem:[%s3 + $0x2c] sm:$0xf]
  %v1341 = vld [vmem:[%s3 + $0x30] sm:$0xf]
  %v1342 = vld [vmem:[%s3 + $0x34] sm:$0xf]
  %v1343 = vld [vmem:[%s3 + $0x38] sm:$0xf]
  %v1344 = vld [vmem:[%s3 + $0x3c] sm:$0xf]
  %v1409 = vunpack.c.l.b16 %v1265
  %v1410 = vunpack.c.l.b16 %v1266
  %v1411 = vunpack.c.l.b16 %v1267
  %v1412 = vunpack.c.l.b16 %v1268
  %v1413 = vunpack.c.l.b16 %v1269
  %v1414 = vunpack.c.l.b16 %v1270
  %v1415 = vunpack.c.l.b16 %v1271
  %v1416 = vunpack.c.l.b16 %v1272
  %v1417 = vunpack.c.l.b16 %v1273
  %v1418 = vunpack.c.l.b16 %v1274
  %v1419 = vunpack.c.l.b16 %v1275
  %v1420 = vunpack.c.l.b16 %v1276
  %v1421 = vunpack.c.l.b16 %v1277
  %v1422 = vunpack.c.l.b16 %v1278
  %v1423 = vunpack.c.l.b16 %v1279
  %v1424 = vunpack.c.l.b16 %v1280
  %v1425 = vunpack.c.l.b16 %v1281
  %v1426 = vunpack.c.l.b16 %v1282
  %v1427 = vunpack.c.l.b16 %v1283
  %v1428 = vunpack.c.l.b16 %v1284
  %v1429 = vunpack.c.l.b16 %v1285
  %v1430 = vunpack.c.l.b16 %v1286
  %v1431 = vunpack.c.l.b16 %v1287
  %v1432 = vunpack.c.l.b16 %v1288
  %v1433 = vunpack.c.l.b16 %v1289
  %v1434 = vunpack.c.l.b16 %v1290
  %v1435 = vunpack.c.l.b16 %v1291
  %v1436 = vunpack.c.l.b16 %v1292
  %v1437 = vunpack.c.l.b16 %v1293
  %v1438 = vunpack.c.l.b16 %v1294
  %v1439 = vunpack.c.l.b16 %v1295
  %v1440 = vunpack.c.l.b16 %v1296
  %v1441 = vunpack.c.l.b16 %v1297
  %v1442 = vunpack.c.l.b16 %v1298
  %v1443 = vunpack.c.l.b16 %v1299
  %v1444 = vunpack.c.l.b16 %v1300
  %v1445 = vunpack.c.l.b16 %v1301
  %v1446 = vunpack.c.l.b16 %v1302
  %v1447 = vunpack.c.l.b16 %v1303
  %v1448 = vunpack.c.l.b16 %v1304
  %v1449 = vunpack.c.l.b16 %v1305
  %v1450 = vunpack.c.l.b16 %v1306
  %v1451 = vunpack.c.l.b16 %v1307
  %v1452 = vunpack.c.l.b16 %v1308
  %v1453 = vunpack.c.l.b16 %v1309
  %v1454 = vunpack.c.l.b16 %v1310
  %v1455 = vunpack.c.l.b16 %v1311
  %v1456 = vunpack.c.l.b16 %v1312
  %v1457 = vunpack.c.l.b16 %v1313
  %v1458 = vunpack.c.l.b16 %v1314
  %v1459 = vunpack.c.l.b16 %v1315
  %v1460 = vunpack.c.l.b16 %v1316
  %v1461 = vunpack.c.l.b16 %v1317
  %v1462 = vunpack.c.l.b16 %v1318
  %v1463 = vunpack.c.l.b16 %v1319
  %v1464 = vunpack.c.l.b16 %v1320
  %v1465 = vunpack.c.l.b16 %v1321
  %v1466 = vunpack.c.l.b16 %v1322
  %v1467 = vunpack.c.l.b16 %v1323
  %v1468 = vunpack.c.l.b16 %v1324
  %v1469 = vunpack.c.l.b16 %v1325
  %v1470 = vunpack.c.l.b16 %v1326
  %v1471 = vunpack.c.l.b16 %v1327
  %v1472 = vunpack.c.l.b16 %v1328
  %v1473 = vpack.c.b16 %v1410, %v1409
  %v1474 = vpack.c.b16 %v1412, %v1411
  %v1475 = vpack.c.b16 %v1414, %v1413
  %v1476 = vpack.c.b16 %v1416, %v1415
  %v1477 = vpack.c.b16 %v1418, %v1417
  %v1478 = vpack.c.b16 %v1420, %v1419
  %v1479 = vpack.c.b16 %v1422, %v1421
  %v1480 = vpack.c.b16 %v1424, %v1423
  %v1481 = vpack.c.b16 %v1426, %v1425
  %v1482 = vpack.c.b16 %v1428, %v1427
  %v1483 = vpack.c.b16 %v1430, %v1429
  %v1484 = vpack.c.b16 %v1432, %v1431
  %v1485 = vpack.c.b16 %v1434, %v1433
  %v1486 = vpack.c.b16 %v1436, %v1435
  %v1487 = vpack.c.b16 %v1438, %v1437
  %v1488 = vpack.c.b16 %v1440, %v1439
  %v1489 = vpack.c.b16 %v1442, %v1441
  %v1490 = vpack.c.b16 %v1444, %v1443
  %v1491 = vpack.c.b16 %v1446, %v1445
  %v1492 = vpack.c.b16 %v1448, %v1447
  %v1493 = vpack.c.b16 %v1450, %v1449
  %v1494 = vpack.c.b16 %v1452, %v1451
  %v1495 = vpack.c.b16 %v1454, %v1453
  %v1496 = vpack.c.b16 %v1456, %v1455
  %v1497 = vpack.c.b16 %v1458, %v1457
  %v1498 = vpack.c.b16 %v1460, %v1459
  %v1499 = vpack.c.b16 %v1462, %v1461
  %v1500 = vpack.c.b16 %v1464, %v1463
  %v1501 = vpack.c.b16 %v1466, %v1465
  %v1502 = vpack.c.b16 %v1468, %v1467
  %v1503 = vpack.c.b16 %v1470, %v1469
  %v1504 = vpack.c.b16 %v1472, %v1471
  %v1553 = vunpack.c.l.b16 %v1329
  %v1554 = vunpack.c.l.b16 %v1330
  %v1555 = vunpack.c.l.b16 %v1331
  %v1556 = vunpack.c.l.b16 %v1332
  %v1557 = vunpack.c.l.b16 %v1333
  %v1558 = vunpack.c.l.b16 %v1334
  %v1559 = vunpack.c.l.b16 %v1335
  %v1560 = vunpack.c.l.b16 %v1336
  %v1561 = vunpack.c.l.b16 %v1337
  %v1562 = vunpack.c.l.b16 %v1338
  %v1563 = vunpack.c.l.b16 %v1339
  %v1564 = vunpack.c.l.b16 %v1340
  %v1565 = vunpack.c.l.b16 %v1341
  %v1566 = vunpack.c.l.b16 %v1342
  %v1567 = vunpack.c.l.b16 %v1343
  %v1568 = vunpack.c.l.b16 %v1344
  %v1569 = vpack.c.b16 %v1554, %v1553
  %v1570 = vpack.c.b16 %v1556, %v1555
  %v1571 = vpack.c.b16 %v1558, %v1557
  %v1572 = vpack.c.b16 %v1560, %v1559
  %v1573 = vpack.c.b16 %v1562, %v1561
  %v1574 = vpack.c.b16 %v1564, %v1563
  %v1575 = vpack.c.b16 %v1566, %v1565
  %v1576 = vpack.c.b16 %v1568, %v1567
  %1585 = vmatprep.subr.bf16.mxu0 0
  %1586 = vmatpush1.bf16.msra.mxu0 %v1569
  %1587 = vmatprep.subr.bf16.mxu0 0
  %1588 = vmatpush1.bf16.msra.mxu0 %v1570
  %1589 = vmatprep.subr.bf16.mxu0 0
  %1590 = vmatpush1.bf16.msra.mxu0 %v1571
  %1591 = vmatprep.subr.bf16.mxu0 0
  %1592 = vmatpush1.bf16.msra.mxu0 %v1572
  %1593 = vmatprep.subr.bf16.mxu0 0
  %1594 = vmatpush1.bf16.msra.mxu0 %v1573
  %1595 = vmatprep.subr.bf16.mxu0 0
  %1596 = vmatpush1.bf16.msra.mxu0 %v1574
  %1597 = vmatprep.subr.bf16.mxu0 0
  %1598 = vmatpush1.bf16.msra.mxu0 %v1575
  %1599 = vmatprep.subr.bf16.mxu0 0
  %1600 = vmatpush1.bf16.msra.mxu0 %v1576
  %1601 = vmatprep.subr.bf16.mxu0 0
  %1602 = vmatpush1.bf16.msra.mxu0 0
  %1603 = vmatprep.subr.bf16.mxu0 0
  %1604 = vmatpush1.bf16.msra.mxu0 0
  %1605 = vmatprep.subr.bf16.mxu0 0
  %1606 = vmatpush1.bf16.msra.mxu0 0
  %1607 = vmatprep.subr.bf16.mxu0 0
  %1608 = vmatpush1.bf16.msra.mxu0 0
  %1609 = vmatprep.subr.bf16.mxu0 0
  %1610 = vmatpush1.bf16.msra.mxu0 0
  %1611 = vmatprep.subr.bf16.mxu0 0
  %1612 = vmatpush1.bf16.msra.mxu0 0
  %1613 = vmatprep.subr.bf16.mxu0 0
  %1614 = vmatpush1.bf16.msra.mxu0 0
  %1615 = vmatprep.subr.bf16.mxu0 0
  %1616 = vmatpush1.bf16.msra.mxu0 0
  %1617 = vmatprep.mubr.bf16.mxu0 0
  %1618 = vmatmul.mubr.bf16.gmra.mrb[0].mxu0 %v1473
  %v1619 = vpop.f32.mrb[0].mxu0
  %v1620 = vadd.f32 0.0, %v1619
  %v1621 = vpop.f32.mrb[0].mxu0
  %v1622 = vpop.f32.mrb[0].mxu0
  %v1623 = vadd.f32 0.0, %v1622
  %v1624 = vpop.f32.mrb[0].mxu0
  %1625 = vmatprep.mubr.bf16.mxu0 0
  %1626 = vmatmul.mubr.bf16.gmra.mrb[0].mxu0 %v1474
  %v1627 = vpop.f32.mrb[0].mxu0
  %v1628 = vadd.f32 0.0, %v1627
  %v1629 = vpop.f32.mrb[0].mxu0
  %v1630 = vpop.f32.mrb[0].mxu0
  %v1631 = vadd.f32 0.0, %v1630
  %v1632 = vpop.f32.mrb[0].mxu0
  %1633 = vmatprep.mubr.bf16.mxu0 0
  %1634 = vmatmul.mubr.bf16.gmra.mrb[0].mxu0 %v1475
  %v1635 = vpop.f32.mrb[0].mxu0
  %v1636 = vadd.f32 0.0, %v1635
  %v1637 = vpop.f32.mrb[0].mxu0
  %v1638 = vpop.f32.mrb[0].mxu0
  %v1639 = vadd.f32 0.0, %v1638
  %v1640 = vpop.f32.mrb[0].mxu0
  %1641 = vmatprep.mubr.bf16.mxu0 0
  %1642 = vmatmul.mubr.bf16.gmra.mrb[0].mxu0 %v1476
  %v1643 = vpop.f32.mrb[0].mxu0
  %v1644 = vadd.f32 0.0, %v1643
  %v1645 = vpop.f32.mrb[0].mxu0
  %v1646 = vpop.f32.mrb[0].mxu0
  %v1647 = vadd.f32 0.0, %v1646
  %v1648 = vpop.f32.mrb[0].mxu0
  %1649 = vmatprep.mubr.bf16.mxu0 0
  %1650 = vmatmul.mubr.bf16.gmra.mrb[0].mxu0 %v1477
  %v1651 = vpop.f32.mrb[0].mxu0
  %v1652 = vadd.f32 0.0, %v1651
  %v1653 = vpop.f32.mrb[0].mxu0
  %v1654 = vpop.f32.mrb[0].mxu0
  %v1655 = vadd.f32 0.0, %v1654
  %v1656 = vpop.f32.mrb[0].mxu0
  %1657 = vmatprep.mubr.bf16.mxu0 0
  %1658 = vmatmul.mubr.bf16.gmra.mrb[0].mxu0 %v1478
  %v1659 = vpop.f32.mrb[0].mxu0
  %v1660 = vadd.f32 0.0, %v1659
  %v1661 = vpop.f32.mrb[0].mxu0
  %v1662 = vpop.f32.mrb[0].mxu0
  %v1663 = vadd.f32 0.0, %v1662
  %v1664 = vpop.f32.mrb[0].mxu0
  %1665 = vmatprep.mubr.bf16.mxu0 0
  %1666 = vmatmul.mubr.bf16.gmra.mrb[0].mxu0 %v1479
  %v1667 = vpop.f32.mrb[0].mxu0
  %v1668 = vadd.f32 0.0, %v1667
  %v1669 = vpop.f32.mrb[0].mxu0
  %v1670 = vpop.f32.mrb[0].mxu0
  %v1671 = vadd.f32 0.0, %v1670
  %v1672 = vpop.f32.mrb[0].mxu0
  %1673 = vmatprep.mubr.bf16.mxu0 0
  %1674 = vmatmul.mubr.bf16.gmra.mrb[0].mxu0 %v1480
  %v1675 = vpop.f32.mrb[0].mxu0
  %v1676 = vadd.f32 0.0, %v1675
  %v1677 = vpop.f32.mrb[0].mxu0
  %v1678 = vpop.f32.mrb[0].mxu0
  %v1679 = vadd.f32 0.0, %v1678
  %v1680 = vpop.f32.mrb[0].mxu0
  %1681 = vmatprep.mubr.bf16.mxu0 0
  %1682 = vmatmul.mubr.bf16.gmra.mrb[0].mxu0 %v1481
  %v1683 = vpop.f32.mrb[0].mxu0
  %v1684 = vadd.f32 0.0, %v1683
  %v1685 = vpop.f32.mrb[0].mxu0
  %v1686 = vpop.f32.mrb[0].mxu0
  %v1687 = vadd.f32 0.0, %v1686
  %v1688 = vpop.f32.mrb[0].mxu0
  %1689 = vmatprep.mubr.bf16.mxu0 0
  %1690 = vmatmul.mubr.bf16.gmra.mrb[0].mxu0 %v1482
  %v1691 = vpop.f32.mrb[0].mxu0
  %v1692 = vadd.f32 0.0, %v1691
  %v1693 = vpop.f32.mrb[0].mxu0
  %v1694 = vpop.f32.mrb[0].mxu0
  %v1695 = vadd.f32 0.0, %v1694
  %v1696 = vpop.f32.mrb[0].mxu0
  %1697 = vmatprep.mubr.bf16.mxu0 0
  %1698 = vmatmul.mubr.bf16.gmra.mrb[0].mxu0 %v1483
  %v1699 = vpop.f32.mrb[0].mxu0
  %v1700 = vadd.f32 0.0, %v1699
  %v1701 = vpop.f32.mrb[0].mxu0
  %v1702 = vpop.f32.mrb[0].mxu0
  %v1703 = vadd.f32 0.0, %v1702
  %v1704 = vpop.f32.mrb[0].mxu0
  %1705 = vmatprep.mubr.bf16.mxu0 0
  %1706 = vmatmul.mubr.bf16.gmra.mrb[0].mxu0 %v1484
  %v1707 = vpop.f32.mrb[0].mxu0
  %v1708 = vadd.f32 0.0, %v1707
  %v1709 = vpop.f32.mrb[0].mxu0
  %v1710 = vpop.f32.mrb[0].mxu0
  %v1711 = vadd.f32 0.0, %v1710
  %v1712 = vpop.f32.mrb[0].mxu0
  %1713 = vmatprep.mubr.bf16.mxu0 0
  %1714 = vmatmul.mubr.bf16.gmra.mrb[0].mxu0 %v1485
  %v1715 = vpop.f32.mrb[0].mxu0
  %v1716 = vadd.f32 0.0, %v1715
  %v1717 = vpop.f32.mrb[0].mxu0
  %v1718 = vpop.f32.mrb[0].mxu0
  %v1719 = vadd.f32 0.0, %v1718
  %v1720 = vpop.f32.mrb[0].mxu0
  %1721 = vmatprep.mubr.bf16.mxu0 0
  %1722 = vmatmul.mubr.bf16.gmra.mrb[0].mxu0 %v1486
  %v1723 = vpop.f32.mrb[0].mxu0
  %v1724 = vadd.f32 0.0, %v1723
  %v1725 = vpop.f32.mrb[0].mxu0
  %v1726 = vpop.f32.mrb[0].mxu0
  %v1727 = vadd.f32 0.0, %v1726
  %v1728 = vpop.f32.mrb[0].mxu0
  %1729 = vmatprep.mubr.bf16.mxu0 0
  %1730 = vmatmul.mubr.bf16.gmra.mrb[0].mxu0 %v1487
  %v1731 = vpop.f32.mrb[0].mxu0
  %v1732 = vadd.f32 0.0, %v1731
  %v1733 = vpop.f32.mrb[0].mxu0
  %v1734 = vpop.f32.mrb[0].mxu0
  %v1735 = vadd.f32 0.0, %v1734
  %v1736 = vpop.f32.mrb[0].mxu0
  %1737 = vmatprep.mubr.bf16.mxu0 0
  %1738 = vmatmul.mubr.bf16.gmra.mrb[0].mxu0 %v1488
  %v1739 = vpop.f32.mrb[0].mxu0
  %v1740 = vadd.f32 0.0, %v1739
  %v1741 = vpop.f32.mrb[0].mxu0
  %v1742 = vpop.f32.mrb[0].mxu0
  %v1743 = vadd.f32 0.0, %v1742
  %v1744 = vpop.f32.mrb[0].mxu0
  %1745 = vmatprep.mubr.bf16.mxu0 0
  %1746 = vmatmul.mubr.bf16.gmra.mrb[0].mxu0 %v1489
  %v1747 = vpop.f32.mrb[0].mxu0
  %v1748 = vadd.f32 0.0, %v1747
  %v1749 = vpop.f32.mrb[0].mxu0
  %v1750 = vpop.f32.mrb[0].mxu0
  %v1751 = vadd.f32 0.0, %v1750
  %v1752 = vpop.f32.mrb[0].mxu0
  %1753 = vmatprep.mubr.bf16.mxu0 0
  %1754 = vmatmul.mubr.bf16.gmra.mrb[0].mxu0 %v1490
  %v1755 = vpop.f32.mrb[0].mxu0
  %v1756 = vadd.f32 0.0, %v1755
  %v1757 = vpop.f32.mrb[0].mxu0
  %v1758 = vpop.f32.mrb[0].mxu0
  %v1759 = vadd.f32 0.0, %v1758
  %v1760 = vpop.f32.mrb[0].mxu0
  %1761 = vmatprep.mubr.bf16.mxu0 0
  %1762 = vmatmul.mubr.bf16.gmra.mrb[0].mxu0 %v1491
  %v1763 = vpop.f32.mrb[0].mxu0
  %v1764 = vadd.f32 0.0, %v1763
  %v1765 = vpop.f32.mrb[0].mxu0
  %v1766 = vpop.f32.mrb[0].mxu0
  %v1767 = vadd.f32 0.0, %v1766
  %v1768 = vpop.f32.mrb[0].mxu0
  %1769 = vmatprep.mubr.bf16.mxu0 0
  %1770 = vmatmul.mubr.bf16.gmra.mrb[0].mxu0 %v1492
  %v1771 = vpop.f32.mrb[0].mxu0
  %v1772 = vadd.f32 0.0, %v1771
  %v1773 = vpop.f32.mrb[0].mxu0
  %v1774 = vpop.f32.mrb[0].mxu0
  %v1775 = vadd.f32 0.0, %v1774
  %v1776 = vpop.f32.mrb[0].mxu0
  %1777 = vmatprep.mubr.bf16.mxu0 0
  %1778 = vmatmul.mubr.bf16.gmra.mrb[0].mxu0 %v1493
  %v1779 = vpop.f32.mrb[0].mxu0
  %v1780 = vadd.f32 0.0, %v1779
  %v1781 = vpop.f32.mrb[0].mxu0
  %v1782 = vpop.f32.mrb[0].mxu0
  %v1783 = vadd.f32 0.0, %v1782
  %v1784 = vpop.f32.mrb[0].mxu0
  %1785 = vmatprep.mubr.bf16.mxu0 0
  %1786 = vmatmul.mubr.bf16.gmra.mrb[0].mxu0 %v1494
  %v1787 = vpop.f32.mrb[0].mxu0
  %v1788 = vadd.f32 0.0, %v1787
  %v1789 = vpop.f32.mrb[0].mxu0
  %v1790 = vpop.f32.mrb[0].mxu0
  %v1791 = vadd.f32 0.0, %v1790
  %v1792 = vpop.f32.mrb[0].mxu0
  %1793 = vmatprep.mubr.bf16.mxu0 0
  %1794 = vmatmul.mubr.bf16.gmra.mrb[0].mxu0 %v1495
  %v1795 = vpop.f32.mrb[0].mxu0
  %v1796 = vadd.f32 0.0, %v1795
  %v1797 = vpop.f32.mrb[0].mxu0
  %v1798 = vpop.f32.mrb[0].mxu0
  %v1799 = vadd.f32 0.0, %v1798
  %v1800 = vpop.f32.mrb[0].mxu0
  %1801 = vmatprep.mubr.bf16.mxu0 0
  %1802 = vmatmul.mubr.bf16.gmra.mrb[0].mxu0 %v1496
  %v1803 = vpop.f32.mrb[0].mxu0
  %v1804 = vadd.f32 0.0, %v1803
  %v1805 = vpop.f32.mrb[0].mxu0
  %v1806 = vpop.f32.mrb[0].mxu0
  %v1807 = vadd.f32 0.0, %v1806
  %v1808 = vpop.f32.mrb[0].mxu0
  %1809 = vmatprep.mubr.bf16.mxu0 0
  %1810 = vmatmul.mubr.bf16.gmra.mrb[0].mxu0 %v1497
  %v1811 = vpop.f32.mrb[0].mxu0
  %v1812 = vadd.f32 0.0, %v1811
  %v1813 = vpop.f32.mrb[0].mxu0
  %v1814 = vpop.f32.mrb[0].mxu0
  %v1815 = vadd.f32 0.0, %v1814
  %v1816 = vpop.f32.mrb[0].mxu0
  %1817 = vmatprep.mubr.bf16.mxu0 0
  %1818 = vmatmul.mubr.bf16.gmra.mrb[0].mxu0 %v1498
  %v1819 = vpop.f32.mrb[0].mxu0
  %v1820 = vadd.f32 0.0, %v1819
  %v1821 = vpop.f32.mrb[0].mxu0
  %v1822 = vpop.f32.mrb[0].mxu0
  %v1823 = vadd.f32 0.0, %v1822
  %v1824 = vpop.f32.mrb[0].mxu0
  %1825 = vmatprep.mubr.bf16.mxu0 0
  %1826 = vmatmul.mubr.bf16.gmra.mrb[0].mxu0 %v1499
  %v1827 = vpop.f32.mrb[0].mxu0
  %v1828 = vadd.f32 0.0, %v1827
  %v1829 = vpop.f32.mrb[0].mxu0
  %v1830 = vpop.f32.mrb[0].mxu0
  %v1831 = vadd.f32 0.0, %v1830
  %v1832 = vpop.f32.mrb[0].mxu0
  %1833 = vmatprep.mubr.bf16.mxu0 0
  %1834 = vmatmul.mubr.bf16.gmra.mrb[0].mxu0 %v1500
  %v1835 = vpop.f32.mrb[0].mxu0
  %v1836 = vadd.f32 0.0, %v1835
  %v1837 = vpop.f32.mrb[0].mxu0
  %v1838 = vpop.f32.mrb[0].mxu0
  %v1839 = vadd.f32 0.0, %v1838
  %v1840 = vpop.f32.mrb[0].mxu0
  %1841 = vmatprep.mubr.bf16.mxu0 0
  %1842 = vmatmul.mubr.bf16.gmra.mrb[0].mxu0 %v1501
  %v1843 = vpop.f32.mrb[0].mxu0
  %v1844 = vadd.f32 0.0, %v1843
  %v1845 = vpop.f32.mrb[0].mxu0
  %v1846 = vpop.f32.mrb[0].mxu0
  %v1847 = vadd.f32 0.0, %v1846
  %v1848 = vpop.f32.mrb[0].mxu0
  %1849 = vmatprep.mubr.bf16.mxu0 0
  %1850 = vmatmul.mubr.bf16.gmra.mrb[0].mxu0 %v1502
  %v1851 = vpop.f32.mrb[0].mxu0
  %v1852 = vadd.f32 0.0, %v1851
  %v1853 = vpop.f32.mrb[0].mxu0
  %v1854 = vpop.f32.mrb[0].mxu0
  %v1855 = vadd.f32 0.0, %v1854
  %v1856 = vpop.f32.mrb[0].mxu0
  %1857 = vmatprep.mubr.bf16.mxu0 0
  %1858 = vmatmul.mubr.bf16.gmra.mrb[0].mxu0 %v1503
  %v1859 = vpop.f32.mrb[0].mxu0
  %v1860 = vadd.f32 0.0, %v1859
  %v1861 = vpop.f32.mrb[0].mxu0
  %v1862 = vpop.f32.mrb[0].mxu0
  %v1863 = vadd.f32 0.0, %v1862
  %v1864 = vpop.f32.mrb[0].mxu0
  %1865 = vmatprep.mubr.bf16.mxu0 0
  %1866 = vmatmul.mubr.bf16.gmra.mrb[0].mxu0 %v1504
  %v1867 = vpop.f32.mrb[0].mxu0
  %v1868 = vadd.f32 0.0, %v1867
  %v1869 = vpop.f32.mrb[0].mxu0
  %v1870 = vpop.f32.mrb[0].mxu0
  %v1871 = vadd.f32 0.0, %v1870
  %v1872 = vpop.f32.mrb[0].mxu0
  %1873 = vdwg.mxu0
  %v1874 = vadd.f32 %v1201, %v1620
  %v1875 = vadd.f32 %v1202, %v1623
  %v1876 = vadd.f32 %v1203, %v1628
  %v1877 = vadd.f32 %v1204, %v1631
  %v1878 = vadd.f32 %v1205, %v1636
  %v1879 = vadd.f32 %v1206, %v1639
  %v1880 = vadd.f32 %v1207, %v1644
  %v1881 = vadd.f32 %v1208, %v1647
  %v1882 = vadd.f32 %v1209, %v1652
  %v1883 = vadd.f32 %v1210, %v1655
  %v1884 = vadd.f32 %v1211, %v1660
  %v1885 = vadd.f32 %v1212, %v1663
  %v1886 = vadd.f32 %v1213, %v1668
  %v1887 = vadd.f32 %v1214, %v1671
  %v1888 = vadd.f32 %v1215, %v1676
  %v1889 = vadd.f32 %v1216, %v1679
  %v1890 = vadd.f32 %v1217, %v1684
  %v1891 = vadd.f32 %v1218, %v1687
  %v1892 = vadd.f32 %v1219, %v1692
  %v1893 = vadd.f32 %v1220, %v1695
  %v1894 = vadd.f32 %v1221, %v1700
  %v1895 = vadd.f32 %v1222, %v1703
  %v1896 = vadd.f32 %v1223, %v1708
  %v1897 = vadd.f32 %v1224, %v1711
  %v1898 = vadd.f32 %v1225, %v1716
  %v1899 = vadd.f32 %v1226, %v1719
  %v1900 = vadd.f32 %v1227, %v1724
  %v1901 = vadd.f32 %v1228, %v1727
  %v1902 = vadd.f32 %v1229, %v1732
  %v1903 = vadd.f32 %v1230, %v1735
  %v1904 = vadd.f32 %v1231, %v1740
  %v1905 = vadd.f32 %v1232, %v1743
  %v1906 = vadd.f32 %v1233, %v1748
  %v1907 = vadd.f32 %v1234, %v1751
  %v1908 = vadd.f32 %v1235, %v1756
  %v1909 = vadd.f32 %v1236, %v1759
  %v1910 = vadd.f32 %v1237, %v1764
  %v1911 = vadd.f32 %v1238, %v1767
  %v1912 = vadd.f32 %v1239, %v1772
  %v1913 = vadd.f32 %v1240, %v1775
  %v1914 = vadd.f32 %v1241, %v1780
  %v1915 = vadd.f32 %v1242, %v1783
  %v1916 = vadd.f32 %v1243, %v1788
  %v1917 = vadd.f32 %v1244, %v1791
  %v1918 = vadd.f32 %v1245, %v1796
  %v1919 = vadd.f32 %v1246, %v1799
  %v1920 = vadd.f32 %v1247, %v1804
  %v1921 = vadd.f32 %v1248, %v1807
  %v1922 = vadd.f32 %v1249, %v1812
  %v1923 = vadd.f32 %v1250, %v1815
  %v1924 = vadd.f32 %v1251, %v1820
  %v1925 = vadd.f32 %v1252, %v1823
  %v1926 = vadd.f32 %v1253, %v1828
  %v1927 = vadd.f32 %v1254, %v1831
  %v1928 = vadd.f32 %v1255, %v1836
  %v1929 = vadd.f32 %v1256, %v1839
  %v1930 = vadd.f32 %v1257, %v1844
  %v1931 = vadd.f32 %v1258, %v1847
  %v1932 = vadd.f32 %v1259, %v1852
  %v1933 = vadd.f32 %v1260, %v1855
  %v1934 = vadd.f32 %v1261, %v1860
  %v1935 = vadd.f32 %v1262, %v1863
  %v1936 = vadd.f32 %v1263, %v1868
  %v1937 = vadd.f32 %v1264, %v1871
  %v1938 = vld [vmem:[%s4] sm:$0x1]
  %v1940 = vlaneseq
  %v1941 = vshrl.u32 %v1940, 7
  %v1942 = vsub.s32 0, %v1941
  %v1943 = vrot.slane %v1938, %v1942
  %v1945 = vadd.f32 %v1874, %v1943
  %v1946 = vadd.f32 %v1875, %v1943
  %v1947 = vadd.f32 %v1876, %v1943
  %v1948 = vadd.f32 %v1877, %v1943
  %v1949 = vadd.f32 %v1878, %v1943
  %v1950 = vadd.f32 %v1879, %v1943
  %v1951 = vadd.f32 %v1880, %v1943
  %v1952 = vadd.f32 %v1881, %v1943
  %v1953 = vadd.f32 %v1882, %v1943
  %v1954 = vadd.f32 %v1883, %v1943
  %v1955 = vadd.f32 %v1884, %v1943
  %v1956 = vadd.f32 %v1885, %v1943
  %v1957 = vadd.f32 %v1886, %v1943
  %v1958 = vadd.f32 %v1887, %v1943
  %v1959 = vadd.f32 %v1888, %v1943
  %v1960 = vadd.f32 %v1889, %v1943
  %v1961 = vadd.f32 %v1890, %v1943
  %v1962 = vadd.f32 %v1891, %v1943
  %v1963 = vadd.f32 %v1892, %v1943
  %v1964 = vadd.f32 %v1893, %v1943
  %v1965 = vadd.f32 %v1894, %v1943
  %v1966 = vadd.f32 %v1895, %v1943
  %v1967 = vadd.f32 %v1896, %v1943
  %v1968 = vadd.f32 %v1897, %v1943
  %v1969 = vadd.f32 %v1898, %v1943
  %v1970 = vadd.f32 %v1899, %v1943
  %v1971 = vadd.f32 %v1900, %v1943
  %v1972 = vadd.f32 %v1901, %v1943
  %v1973 = vadd.f32 %v1902, %v1943
  %v1974 = vadd.f32 %v1903, %v1943
  %v1975 = vadd.f32 %v1904, %v1943
  %v1976 = vadd.f32 %v1905, %v1943
  %v1977 = vadd.f32 %v1906, %v1943
  %v1978 = vadd.f32 %v1907, %v1943
  %v1979 = vadd.f32 %v1908, %v1943
  %v1980 = vadd.f32 %v1909, %v1943
  %v1981 = vadd.f32 %v1910, %v1943
  %v1982 = vadd.f32 %v1911, %v1943
  %v1983 = vadd.f32 %v1912, %v1943
  %v1984 = vadd.f32 %v1913, %v1943
  %v1985 = vadd.f32 %v1914, %v1943
  %v1986 = vadd.f32 %v1915, %v1943
  %v1987 = vadd.f32 %v1916, %v1943
  %v1988 = vadd.f32 %v1917, %v1943
  %v1989 = vadd.f32 %v1918, %v1943
  %v1990 = vadd.f32 %v1919, %v1943
  %v1991 = vadd.f32 %v1920, %v1943
  %v1992 = vadd.f32 %v1921, %v1943
  %v1993 = vadd.f32 %v1922, %v1943
  %v1994 = vadd.f32 %v1923, %v1943
  %v1995 = vadd.f32 %v1924, %v1943
  %v1996 = vadd.f32 %v1925, %v1943
  %v1997 = vadd.f32 %v1926, %v1943
  %v1998 = vadd.f32 %v1927, %v1943
  %v1999 = vadd.f32 %v1928, %v1943
  %v2000 = vadd.f32 %v1929, %v1943
  %v2001 = vadd.f32 %v1930, %v1943
  %v2002 = vadd.f32 %v1931, %v1943
  %v2003 = vadd.f32 %v1932, %v1943
  %v2004 = vadd.f32 %v1933, %v1943
  %v2005 = vadd.f32 %v1934, %v1943
  %v2006 = vadd.f32 %v1935, %v1943
  %v2007 = vadd.f32 %v1936, %v1943
  %v2008 = vadd.f32 %v1937, %v1943
  %v2009 = vmax.f32 %v1945, 0.0
  %v2010 = vmax.f32 %v1946, 0.0
  %v2011 = vmax.f32 %v1947, 0.0
  %v2012 = vmax.f32 %v1948, 0.0
  %v2013 = vmax.f32 %v1949, 0.0
  %v2014 = vmax.f32 %v1950, 0.0
  %v2015 = vmax.f32 %v1951, 0.0
  %v2016 = vmax.f32 %v1952, 0.0
  %v2017 = vmax.f32 %v1953, 0.0
  %v2018 = vmax.f32 %v1954, 0.0
  %v2019 = vmax.f32 %v1955, 0.0
  %v2020 = vmax.f32 %v1956, 0.0
  %v2021 = vmax.f32 %v1957, 0.0
  %v2022 = vmax.f32 %v1958, 0.0
  %v2023 = vmax.f32 %v1959, 0.0
  %v2024 = vmax.f32 %v1960, 0.0
  %v2025 = vmax.f32 %v1961, 0.0
  %v2026 = vmax.f32 %v1962, 0.0
  %v2027 = vmax.f32 %v1963, 0.0
  %v2028 = vmax.f32 %v1964, 0.0
  %v2029 = vmax.f32 %v1965, 0.0
  %v2030 = vmax.f32 %v1966, 0.0
  %v2031 = vmax.f32 %v1967, 0.0
  %v2032 = vmax.f32 %v1968, 0.0
  %v2033 = vmax.f32 %v1969, 0.0
  %v2034 = vmax.f32 %v1970, 0.0
  %v2035 = vmax.f32 %v1971, 0.0
  %v2036 = vmax.f32 %v1972, 0.0
  %v2037 = vmax.f32 %v1973, 0.0
  %v2038 = vmax.f32 %v1974, 0.0
  %v2039 = vmax.f32 %v1975, 0.0
  %v2040 = vmax.f32 %v1976, 0.0
  %v2041 = vmax.f32 %v1977, 0.0
  %v2042 = vmax.f32 %v1978, 0.0
  %v2043 = vmax.f32 %v1979, 0.0
  %v2044 = vmax.f32 %v1980, 0.0
  %v2045 = vmax.f32 %v1981, 0.0
  %v2046 = vmax.f32 %v1982, 0.0
  %v2047 = vmax.f32 %v1983, 0.0
  %v2048 = vmax.f32 %v1984, 0.0
  %v2049 = vmax.f32 %v1985, 0.0
  %v2050 = vmax.f32 %v1986, 0.0
  %v2051 = vmax.f32 %v1987, 0.0
  %v2052 = vmax.f32 %v1988, 0.0
  %v2053 = vmax.f32 %v1989, 0.0
  %v2054 = vmax.f32 %v1990, 0.0
  %v2055 = vmax.f32 %v1991, 0.0
  %v2056 = vmax.f32 %v1992, 0.0
  %v2057 = vmax.f32 %v1993, 0.0
  %v2058 = vmax.f32 %v1994, 0.0
  %v2059 = vmax.f32 %v1995, 0.0
  %v2060 = vmax.f32 %v1996, 0.0
  %v2061 = vmax.f32 %v1997, 0.0
  %v2062 = vmax.f32 %v1998, 0.0
  %v2063 = vmax.f32 %v1999, 0.0
  %v2064 = vmax.f32 %v2000, 0.0
  %v2065 = vmax.f32 %v2001, 0.0
  %v2066 = vmax.f32 %v2002, 0.0
  %v2067 = vmax.f32 %v2003, 0.0
  %v2068 = vmax.f32 %v2004, 0.0
  %v2069 = vmax.f32 %v2005, 0.0
  %v2070 = vmax.f32 %v2006, 0.0
  %v2071 = vmax.f32 %v2007, 0.0
  %v2072 = vmax.f32 %v2008, 0.0
  %v2073 = vpack.c.bf16 %v2010, %v2009
  %v2074 = vpack.c.bf16 %v2012, %v2011
  %v2075 = vpack.c.bf16 %v2014, %v2013
  %v2076 = vpack.c.bf16 %v2016, %v2015
  %v2077 = vpack.c.bf16 %v2018, %v2017
  %v2078 = vpack.c.bf16 %v2020, %v2019
  %v2079 = vpack.c.bf16 %v2022, %v2021
  %v2080 = vpack.c.bf16 %v2024, %v2023
  %v2081 = vpack.c.bf16 %v2026, %v2025
  %v2082 = vpack.c.bf16 %v2028, %v2027
  %v2083 = vpack.c.bf16 %v2030, %v2029
  %v2084 = vpack.c.bf16 %v2032, %v2031
  %v2085 = vpack.c.bf16 %v2034, %v2033
  %v2086 = vpack.c.bf16 %v2036, %v2035
  %v2087 = vpack.c.bf16 %v2038, %v2037
  %v2088 = vpack.c.bf16 %v2040, %v2039
  %v2089 = vpack.c.bf16 %v2042, %v2041
  %v2090 = vpack.c.bf16 %v2044, %v2043
  %v2091 = vpack.c.bf16 %v2046, %v2045
  %v2092 = vpack.c.bf16 %v2048, %v2047
  %v2093 = vpack.c.bf16 %v2050, %v2049
  %v2094 = vpack.c.bf16 %v2052, %v2051
  %v2095 = vpack.c.bf16 %v2054, %v2053
  %v2096 = vpack.c.bf16 %v2056, %v2055
  %v2097 = vpack.c.bf16 %v2058, %v2057
  %v2098 = vpack.c.bf16 %v2060, %v2059
  %v2099 = vpack.c.bf16 %v2062, %v2061
  %v2100 = vpack.c.bf16 %v2064, %v2063
  %v2101 = vpack.c.bf16 %v2066, %v2065
  %v2102 = vpack.c.bf16 %v2068, %v2067
  %v2103 = vpack.c.bf16 %v2070, %v2069
  %v2104 = vpack.c.bf16 %v2072, %v2071
  %v2105 = vld [vmem:[%s5] sm:$0xf]
  %v2106 = vld [vmem:[%s5 + $0x4] sm:$0xf]
  %v2107 = vld [vmem:[%s5 + $0x8] sm:$0xf]
  %v2108 = vld [vmem:[%s5 + $0xc] sm:$0xf]
  %v2109 = vld [vmem:[%s5 + $0x10] sm:$0xf]
  %v2110 = vld [vmem:[%s5 + $0x14] sm:$0xf]
  %v2111 = vld [vmem:[%s5 + $0x18] sm:$0xf]
  %v2112 = vld [vmem:[%s5 + $0x1c] sm:$0xf]
  %v2113 = vld [vmem:[%s5 + $0x20] sm:$0xf]
  %v2114 = vld [vmem:[%s5 + $0x24] sm:$0xf]
  %v2115 = vld [vmem:[%s5 + $0x28] sm:$0xf]
  %v2116 = vld [vmem:[%s5 + $0x2c] sm:$0xf]
  %v2117 = vld [vmem:[%s5 + $0x30] sm:$0xf]
  %v2118 = vld [vmem:[%s5 + $0x34] sm:$0xf]
  %v2119 = vld [vmem:[%s5 + $0x38] sm:$0xf]
  %v2120 = vld [vmem:[%s5 + $0x3c] sm:$0xf]
  %v2121 = vld [vmem:[%s6] sm:$0x1]
  %v2123 = vlaneseq
  %v2124 = vshrl.u32 %v2123, 7
  %v2125 = vsub.s32 0, %v2124
  %v2126 = vrot.slane %v2121, %v2125
  %v2144 = vunpack.c.l.b16 %v2105
  %v2145 = vunpack.c.l.b16 %v2106
  %v2146 = vunpack.c.l.b16 %v2107
  %v2147 = vunpack.c.l.b16 %v2108
  %v2148 = vunpack.c.l.b16 %v2109
  %v2149 = vunpack.c.l.b16 %v2110
  %v2150 = vunpack.c.l.b16 %v2111
  %v2151 = vunpack.c.l.b16 %v2112
  %v2152 = vunpack.c.l.b16 %v2113
  %v2153 = vunpack.c.l.b16 %v2114
  %v2154 = vunpack.c.l.b16 %v2115
  %v2155 = vunpack.c.l.b16 %v2116
  %v2156 = vunpack.c.l.b16 %v2117
  %v2157 = vunpack.c.l.b16 %v2118
  %v2158 = vunpack.c.l.b16 %v2119
  %v2159 = vunpack.c.l.b16 %v2120
  %v2160 = vpack.c.b16 %v2145, %v2144
  %v2161 = vpack.c.b16 %v2147, %v2146
  %v2162 = vpack.c.b16 %v2149, %v2148
  %v2163 = vpack.c.b16 %v2151, %v2150
  %v2164 = vpack.c.b16 %v2153, %v2152
  %v2165 = vpack.c.b16 %v2155, %v2154
  %v2166 = vpack.c.b16 %v2157, %v2156
  %v2167 = vpack.c.b16 %v2159, %v2158
  %2176 = vmatprep.subr.bf16.mxu0 0
  %2177 = vmatpush1.bf16.msra.mxu0 %v2160
  %2178 = vmatprep.subr.bf16.mxu0 0
  %2179 = vmatpush1.bf16.msra.mxu0 %v2161
  %2180 = vmatprep.subr.bf16.mxu0 0
  %2181 = vmatpush1.bf16.msra.mxu0 %v2162
  %2182 = vmatprep.subr.bf16.mxu0 0
  %2183 = vmatpush1.bf16.msra.mxu0 %v2163
  %2184 = vmatprep.subr.bf16.mxu0 0
  %2185 = vmatpush1.bf16.msra.mxu0 %v2164
  %2186 = vmatprep.subr.bf16.mxu0 0
  %2187 = vmatpush1.bf16.msra.mxu0 %v2165
  %2188 = vmatprep.subr.bf16.mxu0 0
  %2189 = vmatpush1.bf16.msra.mxu0 %v2166
  %2190 = vmatprep.subr.bf16.mxu0 0
  %2191 = vmatpush1.bf16.msra.mxu0 %v2167
  %2192 = vmatprep.subr.bf16.mxu0 0
  %2193 = vmatpush1.bf16.msra.mxu0 0
  %2194 = vmatprep.subr.bf16.mxu0 0
  %2195 = vmatpush1.bf16.msra.mxu0 0
  %2196 = vmatprep.subr.bf16.mxu0 0
  %2197 = vmatpush1.bf16.msra.mxu0 0
  %2198 = vmatprep.subr.bf16.mxu0 0
  %2199 = vmatpush1.bf16.msra.mxu0 0
  %2200 = vmatprep.subr.bf16.mxu0 0
  %2201 = vmatpush1.bf16.msra.mxu0 0
  %2202 = vmatprep.subr.bf16.mxu0 0
  %2203 = vmatpush1.bf16.msra.mxu0 0
  %2204 = vmatprep.subr.bf16.mxu0 0
  %2205 = vmatpush1.bf16.msra.mxu0 0
  %2206 = vmatprep.subr.bf16.mxu0 0
  %2207 = vmatpush1.bf16.msra.mxu0 0
  %2208 = vmatprep.mubr.bf16.mxu0 0
  %2209 = vmatmul.mubr.bf16.gmra.mrb[0].mxu0 %v2073
  %v2210 = vpop.f32.mrb[0].mxu0
  %v2211 = vadd.f32 %v2126, %v2210
  %v2212 = vpop.f32.mrb[0].mxu0
  %v2213 = vpop.f32.mrb[0].mxu0
  %v2214 = vadd.f32 %v2126, %v2213
  %v2215 = vpop.f32.mrb[0].mxu0
  %2216 = vmatprep.mubr.bf16.mxu0 0
  %2217 = vmatmul.mubr.bf16.gmra.mrb[0].mxu0 %v2074
  %v2218 = vpop.f32.mrb[0].mxu0
  %v2219 = vadd.f32 %v2126, %v2218
  %v2220 = vpop.f32.mrb[0].mxu0
  %v2221 = vpop.f32.mrb[0].mxu0
  %v2222 = vadd.f32 %v2126, %v2221
  %v2223 = vpop.f32.mrb[0].mxu0
  %2224 = vmatprep.mubr.bf16.mxu0 0
  %2225 = vmatmul.mubr.bf16.gmra.mrb[0].mxu0 %v2075
  %v2226 = vpop.f32.mrb[0].mxu0
  %v2227 = vadd.f32 %v2126, %v2226
  %v2228 = vpop.f32.mrb[0].mxu0
  %v2229 = vpop.f32.mrb[0].mxu0
  %v2230 = vadd.f32 %v2126, %v2229
  %v2231 = vpop.f32.mrb[0].mxu0
  %2232 = vmatprep.mubr.bf16.mxu0 0
  %2233 = vmatmul.mubr.bf16.gmra.mrb[0].mxu0 %v2076
  %v2234 = vpop.f32.mrb[0].mxu0
  %v2235 = vadd.f32 %v2126, %v2234
  %v2236 = vpop.f32.mrb[0].mxu0
  %v2237 = vpop.f32.mrb[0].mxu0
  %v2238 = vadd.f32 %v2126, %v2237
  %v2239 = vpop.f32.mrb[0].mxu0
  %2240 = vmatprep.mubr.bf16.mxu0 0
  %2241 = vmatmul.mubr.bf16.gmra.mrb[0].mxu0 %v2077
  %v2242 = vpop.f32.mrb[0].mxu0
  %v2243 = vadd.f32 %v2126, %v2242
  %v2244 = vpop.f32.mrb[0].mxu0
  %v2245 = vpop.f32.mrb[0].mxu0
  %v2246 = vadd.f32 %v2126, %v2245
  %v2247 = vpop.f32.mrb[0].mxu0
  %2248 = vmatprep.mubr.bf16.mxu0 0
  %2249 = vmatmul.mubr.bf16.gmra.mrb[0].mxu0 %v2078
  %v2250 = vpop.f32.mrb[0].mxu0
  %v2251 = vadd.f32 %v2126, %v2250
  %v2252 = vpop.f32.mrb[0].mxu0
  %v2253 = vpop.f32.mrb[0].mxu0
  %v2254 = vadd.f32 %v2126, %v2253
  %v2255 = vpop.f32.mrb[0].mxu0
  %2256 = vmatprep.mubr.bf16.mxu0 0
  %2257 = vmatmul.mubr.bf16.gmra.mrb[0].mxu0 %v2079
  %v2258 = vpop.f32.mrb[0].mxu0
  %v2259 = vadd.f32 %v2126, %v2258
  %v2260 = vpop.f32.mrb[0].mxu0
  %v2261 = vpop.f32.mrb[0].mxu0
  %v2262 = vadd.f32 %v2126, %v2261
  %v2263 = vpop.f32.mrb[0].mxu0
  %2264 = vmatprep.mubr.bf16.mxu0 0
  %2265 = vmatmul.mubr.bf16.gmra.mrb[0].mxu0 %v2080
  %v2266 = vpop.f32.mrb[0].mxu0
  %v2267 = vadd.f32 %v2126, %v2266
  %v2268 = vpop.f32.mrb[0].mxu0
  %v2269 = vpop.f32.mrb[0].mxu0
  %v2270 = vadd.f32 %v2126, %v2269
  %v2271 = vpop.f32.mrb[0].mxu0
  %2272 = vmatprep.mubr.bf16.mxu0 0
  %2273 = vmatmul.mubr.bf16.gmra.mrb[0].mxu0 %v2081
  %v2274 = vpop.f32.mrb[0].mxu0
  %v2275 = vadd.f32 %v2126, %v2274
  %v2276 = vpop.f32.mrb[0].mxu0
  %v2277 = vpop.f32.mrb[0].mxu0
  %v2278 = vadd.f32 %v2126, %v2277
  %v2279 = vpop.f32.mrb[0].mxu0
  %2280 = vmatprep.mubr.bf16.mxu0 0
  %2281 = vmatmul.mubr.bf16.gmra.mrb[0].mxu0 %v2082
  %v2282 = vpop.f32.mrb[0].mxu0
  %v2283 = vadd.f32 %v2126, %v2282
  %v2284 = vpop.f32.mrb[0].mxu0
  %v2285 = vpop.f32.mrb[0].mxu0
  %v2286 = vadd.f32 %v2126, %v2285
  %v2287 = vpop.f32.mrb[0].mxu0
  %2288 = vmatprep.mubr.bf16.mxu0 0
  %2289 = vmatmul.mubr.bf16.gmra.mrb[0].mxu0 %v2083
  %v2290 = vpop.f32.mrb[0].mxu0
  %v2291 = vadd.f32 %v2126, %v2290
  %v2292 = vpop.f32.mrb[0].mxu0
  %v2293 = vpop.f32.mrb[0].mxu0
  %v2294 = vadd.f32 %v2126, %v2293
  %v2295 = vpop.f32.mrb[0].mxu0
  %2296 = vmatprep.mubr.bf16.mxu0 0
  %2297 = vmatmul.mubr.bf16.gmra.mrb[0].mxu0 %v2084
  %v2298 = vpop.f32.mrb[0].mxu0
  %v2299 = vadd.f32 %v2126, %v2298
  %v2300 = vpop.f32.mrb[0].mxu0
  %v2301 = vpop.f32.mrb[0].mxu0
  %v2302 = vadd.f32 %v2126, %v2301
  %v2303 = vpop.f32.mrb[0].mxu0
  %2304 = vmatprep.mubr.bf16.mxu0 0
  %2305 = vmatmul.mubr.bf16.gmra.mrb[0].mxu0 %v2085
  %v2306 = vpop.f32.mrb[0].mxu0
  %v2307 = vadd.f32 %v2126, %v2306
  %v2308 = vpop.f32.mrb[0].mxu0
  %v2309 = vpop.f32.mrb[0].mxu0
  %v2310 = vadd.f32 %v2126, %v2309
  %v2311 = vpop.f32.mrb[0].mxu0
  %2312 = vmatprep.mubr.bf16.mxu0 0
  %2313 = vmatmul.mubr.bf16.gmra.mrb[0].mxu0 %v2086
  %v2314 = vpop.f32.mrb[0].mxu0
  %v2315 = vadd.f32 %v2126, %v2314
  %v2316 = vpop.f32.mrb[0].mxu0
  %v2317 = vpop.f32.mrb[0].mxu0
  %v2318 = vadd.f32 %v2126, %v2317
  %v2319 = vpop.f32.mrb[0].mxu0
  %2320 = vmatprep.mubr.bf16.mxu0 0
  %2321 = vmatmul.mubr.bf16.gmra.mrb[0].mxu0 %v2087
  %v2322 = vpop.f32.mrb[0].mxu0
  %v2323 = vadd.f32 %v2126, %v2322
  %v2324 = vpop.f32.mrb[0].mxu0
  %v2325 = vpop.f32.mrb[0].mxu0
  %v2326 = vadd.f32 %v2126, %v2325
  %v2327 = vpop.f32.mrb[0].mxu0
  %2328 = vmatprep.mubr.bf16.mxu0 0
  %2329 = vmatmul.mubr.bf16.gmra.mrb[0].mxu0 %v2088
  %v2330 = vpop.f32.mrb[0].mxu0
  %v2331 = vadd.f32 %v2126, %v2330
  %v2332 = vpop.f32.mrb[0].mxu0
  %v2333 = vpop.f32.mrb[0].mxu0
  %v2334 = vadd.f32 %v2126, %v2333
  %v2335 = vpop.f32.mrb[0].mxu0
  %2336 = vmatprep.mubr.bf16.mxu0 0
  %2337 = vmatmul.mubr.bf16.gmra.mrb[0].mxu0 %v2089
  %v2338 = vpop.f32.mrb[0].mxu0
  %v2339 = vadd.f32 %v2126, %v2338
  %v2340 = vpop.f32.mrb[0].mxu0
  %v2341 = vpop.f32.mrb[0].mxu0
  %v2342 = vadd.f32 %v2126, %v2341
  %v2343 = vpop.f32.mrb[0].mxu0
  %2344 = vmatprep.mubr.bf16.mxu0 0
  %2345 = vmatmul.mubr.bf16.gmra.mrb[0].mxu0 %v2090
  %v2346 = vpop.f32.mrb[0].mxu0
  %v2347 = vadd.f32 %v2126, %v2346
  %v2348 = vpop.f32.mrb[0].mxu0
  %v2349 = vpop.f32.mrb[0].mxu0
  %v2350 = vadd.f32 %v2126, %v2349
  %v2351 = vpop.f32.mrb[0].mxu0
  %2352 = vmatprep.mubr.bf16.mxu0 0
  %2353 = vmatmul.mubr.bf16.gmra.mrb[0].mxu0 %v2091
  %v2354 = vpop.f32.mrb[0].mxu0
  %v2355 = vadd.f32 %v2126, %v2354
  %v2356 = vpop.f32.mrb[0].mxu0
  %v2357 = vpop.f32.mrb[0].mxu0
  %v2358 = vadd.f32 %v2126, %v2357
  %v2359 = vpop.f32.mrb[0].mxu0
  %2360 = vmatprep.mubr.bf16.mxu0 0
  %2361 = vmatmul.mubr.bf16.gmra.mrb[0].mxu0 %v2092
  %v2362 = vpop.f32.mrb[0].mxu0
  %v2363 = vadd.f32 %v2126, %v2362
  %v2364 = vpop.f32.mrb[0].mxu0
  %v2365 = vpop.f32.mrb[0].mxu0
  %v2366 = vadd.f32 %v2126, %v2365
  %v2367 = vpop.f32.mrb[0].mxu0
  %2368 = vmatprep.mubr.bf16.mxu0 0
  %2369 = vmatmul.mubr.bf16.gmra.mrb[0].mxu0 %v2093
  %v2370 = vpop.f32.mrb[0].mxu0
  %v2371 = vadd.f32 %v2126, %v2370
  %v2372 = vpop.f32.mrb[0].mxu0
  %v2373 = vpop.f32.mrb[0].mxu0
  %v2374 = vadd.f32 %v2126, %v2373
  %v2375 = vpop.f32.mrb[0].mxu0
  %2376 = vmatprep.mubr.bf16.mxu0 0
  %2377 = vmatmul.mubr.bf16.gmra.mrb[0].mxu0 %v2094
  %v2378 = vpop.f32.mrb[0].mxu0
  %v2379 = vadd.f32 %v2126, %v2378
  %v2380 = vpop.f32.mrb[0].mxu0
  %v2381 = vpop.f32.mrb[0].mxu0
  %v2382 = vadd.f32 %v2126, %v2381
  %v2383 = vpop.f32.mrb[0].mxu0
  %2384 = vmatprep.mubr.bf16.mxu0 0
  %2385 = vmatmul.mubr.bf16.gmra.mrb[0].mxu0 %v2095
  %v2386 = vpop.f32.mrb[0].mxu0
  %v2387 = vadd.f32 %v2126, %v2386
  %v2388 = vpop.f32.mrb[0].mxu0
  %v2389 = vpop.f32.mrb[0].mxu0
  %v2390 = vadd.f32 %v2126, %v2389
  %v2391 = vpop.f32.mrb[0].mxu0
  %2392 = vmatprep.mubr.bf16.mxu0 0
  %2393 = vmatmul.mubr.bf16.gmra.mrb[0].mxu0 %v2096
  %v2394 = vpop.f32.mrb[0].mxu0
  %v2395 = vadd.f32 %v2126, %v2394
  %v2396 = vpop.f32.mrb[0].mxu0
  %v2397 = vpop.f32.mrb[0].mxu0
  %v2398 = vadd.f32 %v2126, %v2397
  %v2399 = vpop.f32.mrb[0].mxu0
  %2400 = vmatprep.mubr.bf16.mxu0 0
  %2401 = vmatmul.mubr.bf16.gmra.mrb[0].mxu0 %v2097
  %v2402 = vpop.f32.mrb[0].mxu0
  %v2403 = vadd.f32 %v2126, %v2402
  %v2404 = vpop.f32.mrb[0].mxu0
  %v2405 = vpop.f32.mrb[0].mxu0
  %v2406 = vadd.f32 %v2126, %v2405
  %v2407 = vpop.f32.mrb[0].mxu0
  %2408 = vmatprep.mubr.bf16.mxu0 0
  %2409 = vmatmul.mubr.bf16.gmra.mrb[0].mxu0 %v2098
  %v2410 = vpop.f32.mrb[0].mxu0
  %v2411 = vadd.f32 %v2126, %v2410
  %v2412 = vpop.f32.mrb[0].mxu0
  %v2413 = vpop.f32.mrb[0].mxu0
  %v2414 = vadd.f32 %v2126, %v2413
  %v2415 = vpop.f32.mrb[0].mxu0
  %2416 = vmatprep.mubr.bf16.mxu0 0
  %2417 = vmatmul.mubr.bf16.gmra.mrb[0].mxu0 %v2099
  %v2418 = vpop.f32.mrb[0].mxu0
  %v2419 = vadd.f32 %v2126, %v2418
  %v2420 = vpop.f32.mrb[0].mxu0
  %v2421 = vpop.f32.mrb[0].mxu0
  %v2422 = vadd.f32 %v2126, %v2421
  %v2423 = vpop.f32.mrb[0].mxu0
  %2424 = vmatprep.mubr.bf16.mxu0 0
  %2425 = vmatmul.mubr.bf16.gmra.mrb[0].mxu0 %v2100
  %v2426 = vpop.f32.mrb[0].mxu0
  %v2427 = vadd.f32 %v2126, %v2426
  %v2428 = vpop.f32.mrb[0].mxu0
  %v2429 = vpop.f32.mrb[0].mxu0
  %v2430 = vadd.f32 %v2126, %v2429
  %v2431 = vpop.f32.mrb[0].mxu0
  %2432 = vmatprep.mubr.bf16.mxu0 0
  %2433 = vmatmul.mubr.bf16.gmra.mrb[0].mxu0 %v2101
  %v2434 = vpop.f32.mrb[0].mxu0
  %v2435 = vadd.f32 %v2126, %v2434
  %v2436 = vpop.f32.mrb[0].mxu0
  %v2437 = vpop.f32.mrb[0].mxu0
  %v2438 = vadd.f32 %v2126, %v2437
  %v2439 = vpop.f32.mrb[0].mxu0
  %2440 = vmatprep.mubr.bf16.mxu0 0
  %2441 = vmatmul.mubr.bf16.gmra.mrb[0].mxu0 %v2102
  %v2442 = vpop.f32.mrb[0].mxu0
  %v2443 = vadd.f32 %v2126, %v2442
  %v2444 = vpop.f32.mrb[0].mxu0
  %v2445 = vpop.f32.mrb[0].mxu0
  %v2446 = vadd.f32 %v2126, %v2445
  %v2447 = vpop.f32.mrb[0].mxu0
  %2448 = vmatprep.mubr.bf16.mxu0 0
  %2449 = vmatmul.mubr.bf16.gmra.mrb[0].mxu0 %v2103
  %v2450 = vpop.f32.mrb[0].mxu0
  %v2451 = vadd.f32 %v2126, %v2450
  %v2452 = vpop.f32.mrb[0].mxu0
  %v2453 = vpop.f32.mrb[0].mxu0
  %v2454 = vadd.f32 %v2126, %v2453
  %v2455 = vpop.f32.mrb[0].mxu0
  %2456 = vmatprep.mubr.bf16.mxu0 0
  %2457 = vmatmul.mubr.bf16.gmra.mrb[0].mxu0 %v2104
  %v2458 = vpop.f32.mrb[0].mxu0
  %v2459 = vadd.f32 %v2126, %v2458
  %v2460 = vpop.f32.mrb[0].mxu0
  %v2461 = vpop.f32.mrb[0].mxu0
  %v2462 = vadd.f32 %v2126, %v2461
  %v2463 = vpop.f32.mrb[0].mxu0
  %2464 = vdwg.mxu0
  %v2465 = vmax.f32 %v2211, 0.0
  %v2466 = vmax.f32 %v2214, 0.0
  %v2467 = vmax.f32 %v2219, 0.0
  %v2468 = vmax.f32 %v2222, 0.0
  %v2469 = vmax.f32 %v2227, 0.0
  %v2470 = vmax.f32 %v2230, 0.0
  %v2471 = vmax.f32 %v2235, 0.0
  %v2472 = vmax.f32 %v2238, 0.0
  %v2473 = vmax.f32 %v2243, 0.0
  %v2474 = vmax.f32 %v2246, 0.0
  %v2475 = vmax.f32 %v2251, 0.0
  %v2476 = vmax.f32 %v2254, 0.0
  %v2477 = vmax.f32 %v2259, 0.0
  %v2478 = vmax.f32 %v2262, 0.0
  %v2479 = vmax.f32 %v2267, 0.0
  %v2480 = vmax.f32 %v2270, 0.0
  %v2481 = vmax.f32 %v2275, 0.0
  %v2482 = vmax.f32 %v2278, 0.0
  %v2483 = vmax.f32 %v2283, 0.0
  %v2484 = vmax.f32 %v2286, 0.0
  %v2485 = vmax.f32 %v2291, 0.0
  %v2486 = vmax.f32 %v2294, 0.0
  %v2487 = vmax.f32 %v2299, 0.0
  %v2488 = vmax.f32 %v2302, 0.0
  %v2489 = vmax.f32 %v2307, 0.0
  %v2490 = vmax.f32 %v2310, 0.0
  %v2491 = vmax.f32 %v2315, 0.0
  %v2492 = vmax.f32 %v2318, 0.0
  %v2493 = vmax.f32 %v2323, 0.0
  %v2494 = vmax.f32 %v2326, 0.0
  %v2495 = vmax.f32 %v2331, 0.0
  %v2496 = vmax.f32 %v2334, 0.0
  %v2497 = vmax.f32 %v2339, 0.0
  %v2498 = vmax.f32 %v2342, 0.0
  %v2499 = vmax.f32 %v2347, 0.0
  %v2500 = vmax.f32 %v2350, 0.0
  %v2501 = vmax.f32 %v2355, 0.0
  %v2502 = vmax.f32 %v2358, 0.0
  %v2503 = vmax.f32 %v2363, 0.0
  %v2504 = vmax.f32 %v2366, 0.0
  %v2505 = vmax.f32 %v2371, 0.0
  %v2506 = vmax.f32 %v2374, 0.0
  %v2507 = vmax.f32 %v2379, 0.0
  %v2508 = vmax.f32 %v2382, 0.0
  %v2509 = vmax.f32 %v2387, 0.0
  %v2510 = vmax.f32 %v2390, 0.0
  %v2511 = vmax.f32 %v2395, 0.0
  %v2512 = vmax.f32 %v2398, 0.0
  %v2513 = vmax.f32 %v2403, 0.0
  %v2514 = vmax.f32 %v2406, 0.0
  %v2515 = vmax.f32 %v2411, 0.0
  %v2516 = vmax.f32 %v2414, 0.0
  %v2517 = vmax.f32 %v2419, 0.0
  %v2518 = vmax.f32 %v2422, 0.0
  %v2519 = vmax.f32 %v2427, 0.0
  %v2520 = vmax.f32 %v2430, 0.0
  %v2521 = vmax.f32 %v2435, 0.0
  %v2522 = vmax.f32 %v2438, 0.0
  %v2523 = vmax.f32 %v2443, 0.0
  %v2524 = vmax.f32 %v2446, 0.0
  %v2525 = vmax.f32 %v2451, 0.0
  %v2526 = vmax.f32 %v2454, 0.0
  %v2527 = vmax.f32 %v2459, 0.0
  %v2528 = vmax.f32 %v2462, 0.0
  %v2529 = vpack.c.bf16 %v2466, %v2465
  %v2530 = vpack.c.bf16 %v2468, %v2467
  %v2531 = vpack.c.bf16 %v2470, %v2469
  %v2532 = vpack.c.bf16 %v2472, %v2471
  %v2533 = vpack.c.bf16 %v2474, %v2473
  %v2534 = vpack.c.bf16 %v2476, %v2475
  %v2535 = vpack.c.bf16 %v2478, %v2477
  %v2536 = vpack.c.bf16 %v2480, %v2479
  %v2537 = vpack.c.bf16 %v2482, %v2481
  %v2538 = vpack.c.bf16 %v2484, %v2483
  %v2539 = vpack.c.bf16 %v2486, %v2485
  %v2540 = vpack.c.bf16 %v2488, %v2487
  %v2541 = vpack.c.bf16 %v2490, %v2489
  %v2542 = vpack.c.bf16 %v2492, %v2491
  %v2543 = vpack.c.bf16 %v2494, %v2493
  %v2544 = vpack.c.bf16 %v2496, %v2495
  %v2545 = vpack.c.bf16 %v2498, %v2497
  %v2546 = vpack.c.bf16 %v2500, %v2499
  %v2547 = vpack.c.bf16 %v2502, %v2501
  %v2548 = vpack.c.bf16 %v2504, %v2503
  %v2549 = vpack.c.bf16 %v2506, %v2505
  %v2550 = vpack.c.bf16 %v2508, %v2507
  %v2551 = vpack.c.bf16 %v2510, %v2509
  %v2552 = vpack.c.bf16 %v2512, %v2511
  %v2553 = vpack.c.bf16 %v2514, %v2513
  %v2554 = vpack.c.bf16 %v2516, %v2515
  %v2555 = vpack.c.bf16 %v2518, %v2517
  %v2556 = vpack.c.bf16 %v2520, %v2519
  %v2557 = vpack.c.bf16 %v2522, %v2521
  %v2558 = vpack.c.bf16 %v2524, %v2523
  %v2559 = vpack.c.bf16 %v2526, %v2525
  %v2560 = vpack.c.bf16 %v2528, %v2527
  %v2561 = vld [vmem:[%s7] sm:$0xff]
  %v2562 = vld [vmem:[%s7 + $0x8] sm:$0xff]
  %v2563 = vld [vmem:[%s7 + $0x10] sm:$0xff]
  %v2564 = vld [vmem:[%s7 + $0x18] sm:$0xff]
  %v2565 = vld [vmem:[%s7 + $0x20] sm:$0xff]
  %v2566 = vld [vmem:[%s7 + $0x28] sm:$0xff]
  %v2567 = vld [vmem:[%s7 + $0x30] sm:$0xff]
  %v2568 = vld [vmem:[%s7 + $0x38] sm:$0xff]
  %v2569 = vld [vmem:[%s7 + $0x40] sm:$0xff]
  %v2570 = vld [vmem:[%s7 + $0x48] sm:$0xff]
  %v2571 = vld [vmem:[%s7 + $0x50] sm:$0xff]
  %v2572 = vld [vmem:[%s7 + $0x58] sm:$0xff]
  %v2573 = vld [vmem:[%s7 + $0x60] sm:$0xff]
  %v2574 = vld [vmem:[%s7 + $0x68] sm:$0xff]
  %v2575 = vld [vmem:[%s7 + $0x70] sm:$0xff]
  %v2576 = vld [vmem:[%s7 + $0x78] sm:$0xff]
  %v2577 = vld [vmem:[%s8] sm:$0x3]
  %v2579 = vlaneseq
  %v2580 = vshrl.u32 %v2579, 7
  %v2581 = vsub.s32 0, %v2580
  %v2582 = vrot.slane %v2577, %v2581
  %v2583 = vlaneseq
  %v2584 = vshrl.u32 %v2583, 7
  %v2585 = vsub.s32 1, %v2584
  %v2586 = vrot.slane %v2577, %v2585
  %v2605 = vunpack.c.l.b16 %v2561
  %v2606 = vunpack.c.h.b16 %v2561
  %v2607 = vunpack.c.l.b16 %v2562
  %v2608 = vunpack.c.h.b16 %v2562
  %v2609 = vunpack.c.l.b16 %v2563
  %v2610 = vunpack.c.h.b16 %v2563
  %v2611 = vunpack.c.l.b16 %v2564
  %v2612 = vunpack.c.h.b16 %v2564
  %v2613 = vunpack.c.l.b16 %v2565
  %v2614 = vunpack.c.h.b16 %v2565
  %v2615 = vunpack.c.l.b16 %v2566
  %v2616 = vunpack.c.h.b16 %v2566
  %v2617 = vunpack.c.l.b16 %v2567
  %v2618 = vunpack.c.h.b16 %v2567
  %v2619 = vunpack.c.l.b16 %v2568
  %v2620 = vunpack.c.h.b16 %v2568
  %v2621 = vunpack.c.l.b16 %v2569
  %v2622 = vunpack.c.h.b16 %v2569
  %v2623 = vunpack.c.l.b16 %v2570
  %v2624 = vunpack.c.h.b16 %v2570
  %v2625 = vunpack.c.l.b16 %v2571
  %v2626 = vunpack.c.h.b16 %v2571
  %v2627 = vunpack.c.l.b16 %v2572
  %v2628 = vunpack.c.h.b16 %v2572
  %v2629 = vunpack.c.l.b16 %v2573
  %v2630 = vunpack.c.h.b16 %v2573
  %v2631 = vunpack.c.l.b16 %v2574
  %v2632 = vunpack.c.h.b16 %v2574
  %v2633 = vunpack.c.l.b16 %v2575
  %v2634 = vunpack.c.h.b16 %v2575
  %v2635 = vunpack.c.l.b16 %v2576
  %v2636 = vunpack.c.h.b16 %v2576
  %v2637 = vpack.c.b16 %v2607, %v2605
  %v2638 = vpack.c.b16 %v2608, %v2606
  %v2639 = vpack.c.b16 %v2611, %v2609
  %v2640 = vpack.c.b16 %v2612, %v2610
  %v2641 = vpack.c.b16 %v2615, %v2613
  %v2642 = vpack.c.b16 %v2616, %v2614
  %v2643 = vpack.c.b16 %v2619, %v2617
  %v2644 = vpack.c.b16 %v2620, %v2618
  %v2645 = vpack.c.b16 %v2623, %v2621
  %v2646 = vpack.c.b16 %v2624, %v2622
  %v2647 = vpack.c.b16 %v2627, %v2625
  %v2648 = vpack.c.b16 %v2628, %v2626
  %v2649 = vpack.c.b16 %v2631, %v2629
  %v2650 = vpack.c.b16 %v2632, %v2630
  %v2651 = vpack.c.b16 %v2635, %v2633
  %v2652 = vpack.c.b16 %v2636, %v2634
  %2669 = vmatprep.subr.bf16.mxu0 %v2638
  %2670 = vmatpush1.bf16.msra.mxu0 %v2637
  %2671 = vmatprep.subr.bf16.mxu0 %v2640
  %2672 = vmatpush1.bf16.msra.mxu0 %v2639
  %2673 = vmatprep.subr.bf16.mxu0 %v2642
  %2674 = vmatpush1.bf16.msra.mxu0 %v2641
  %2675 = vmatprep.subr.bf16.mxu0 %v2644
  %2676 = vmatpush1.bf16.msra.mxu0 %v2643
  %2677 = vmatprep.subr.bf16.mxu0 %v2646
  %2678 = vmatpush1.bf16.msra.mxu0 %v2645
  %2679 = vmatprep.subr.bf16.mxu0 %v2648
  %2680 = vmatpush1.bf16.msra.mxu0 %v2647
  %2681 = vmatprep.subr.bf16.mxu0 %v2650
  %2682 = vmatpush1.bf16.msra.mxu0 %v2649
  %2683 = vmatprep.subr.bf16.mxu0 %v2652
  %2684 = vmatpush1.bf16.msra.mxu0 %v2651
  %2685 = vmatprep.subr.bf16.mxu0 0
  %2686 = vmatpush1.bf16.msra.mxu0 0
  %2687 = vmatprep.subr.bf16.mxu0 0
  %2688 = vmatpush1.bf16.msra.mxu0 0
  %2689 = vmatprep.subr.bf16.mxu0 0
  %2690 = vmatpush1.bf16.msra.mxu0 0
  %2691 = vmatprep.subr.bf16.mxu0 0
  %2692 = vmatpush1.bf16.msra.mxu0 0
  %2693 = vmatprep.subr.bf16.mxu0 0
  %2694 = vmatpush1.bf16.msra.mxu0 0
  %2695 = vmatprep.subr.bf16.mxu0 0
  %2696 = vmatpush1.bf16.msra.mxu0 0
  %2697 = vmatprep.subr.bf16.mxu0 0
  %2698 = vmatpush1.bf16.msra.mxu0 0
  %2699 = vmatprep.subr.bf16.mxu0 0
  %2700 = vmatpush1.bf16.msra.mxu0 0
  %2701 = vmatprep.mubr.bf16.mxu0 0
  %2702 = vmatmul.mubr.bf16.gmra.mrb[0].mxu0 %v2529
  %v2703 = vpop.f32.mrb[0].mxu0
  %v2704 = vadd.f32 %v2582, %v2703
  %v2705 = vpop.f32.mrb[0].mxu0
  %v2706 = vadd.f32 %v2586, %v2705
  %v2707 = vpop.f32.mrb[0].mxu0
  %v2708 = vadd.f32 %v2582, %v2707
  %v2709 = vpop.f32.mrb[0].mxu0
  %v2710 = vadd.f32 %v2586, %v2709
  %2711 = vmatprep.mubr.bf16.mxu0 0
  %2712 = vmatmul.mubr.bf16.gmra.mrb[0].mxu0 %v2530
  %v2713 = vpop.f32.mrb[0].mxu0
  %v2714 = vadd.f32 %v2582, %v2713
  %v2715 = vpop.f32.mrb[0].mxu0
  %v2716 = vadd.f32 %v2586, %v2715
  %v2717 = vpop.f32.mrb[0].mxu0
  %v2718 = vadd.f32 %v2582, %v2717
  %v2719 = vpop.f32.mrb[0].mxu0
  %v2720 = vadd.f32 %v2586, %v2719
  %2721 = vmatprep.mubr.bf16.mxu0 0
  %2722 = vmatmul.mubr.bf16.gmra.mrb[0].mxu0 %v2531
  %v2723 = vpop.f32.mrb[0].mxu0
  %v2724 = vadd.f32 %v2582, %v2723
  %v2725 = vpop.f32.mrb[0].mxu0
  %v2726 = vadd.f32 %v2586, %v2725
  %v2727 = vpop.f32.mrb[0].mxu0
  %v2728 = vadd.f32 %v2582, %v2727
  %v2729 = vpop.f32.mrb[0].mxu0
  %v2730 = vadd.f32 %v2586, %v2729
  %2731 = vmatprep.mubr.bf16.mxu0 0
  %2732 = vmatmul.mubr.bf16.gmra.mrb[0].mxu0 %v2532
  %v2733 = vpop.f32.mrb[0].mxu0
  %v2734 = vadd.f32 %v2582, %v2733
  %v2735 = vpop.f32.mrb[0].mxu0
  %v2736 = vadd.f32 %v2586, %v2735
  %v2737 = vpop.f32.mrb[0].mxu0
  %v2738 = vadd.f32 %v2582, %v2737
  %v2739 = vpop.f32.mrb[0].mxu0
  %v2740 = vadd.f32 %v2586, %v2739
  %2741 = vmatprep.mubr.bf16.mxu0 0
  %2742 = vmatmul.mubr.bf16.gmra.mrb[0].mxu0 %v2533
  %v2743 = vpop.f32.mrb[0].mxu0
  %v2744 = vadd.f32 %v2582, %v2743
  %v2745 = vpop.f32.mrb[0].mxu0
  %v2746 = vadd.f32 %v2586, %v2745
  %v2747 = vpop.f32.mrb[0].mxu0
  %v2748 = vadd.f32 %v2582, %v2747
  %v2749 = vpop.f32.mrb[0].mxu0
  %v2750 = vadd.f32 %v2586, %v2749
  %2751 = vmatprep.mubr.bf16.mxu0 0
  %2752 = vmatmul.mubr.bf16.gmra.mrb[0].mxu0 %v2534
  %v2753 = vpop.f32.mrb[0].mxu0
  %v2754 = vadd.f32 %v2582, %v2753
  %v2755 = vpop.f32.mrb[0].mxu0
  %v2756 = vadd.f32 %v2586, %v2755
  %v2757 = vpop.f32.mrb[0].mxu0
  %v2758 = vadd.f32 %v2582, %v2757
  %v2759 = vpop.f32.mrb[0].mxu0
  %v2760 = vadd.f32 %v2586, %v2759
  %2761 = vmatprep.mubr.bf16.mxu0 0
  %2762 = vmatmul.mubr.bf16.gmra.mrb[0].mxu0 %v2535
  %v2763 = vpop.f32.mrb[0].mxu0
  %v2764 = vadd.f32 %v2582, %v2763
  %v2765 = vpop.f32.mrb[0].mxu0
  %v2766 = vadd.f32 %v2586, %v2765
  %v2767 = vpop.f32.mrb[0].mxu0
  %v2768 = vadd.f32 %v2582, %v2767
  %v2769 = vpop.f32.mrb[0].mxu0
  %v2770 = vadd.f32 %v2586, %v2769
  %2771 = vmatprep.mubr.bf16.mxu0 0
  %2772 = vmatmul.mubr.bf16.gmra.mrb[0].mxu0 %v2536
  %v2773 = vpop.f32.mrb[0].mxu0
  %v2774 = vadd.f32 %v2582, %v2773
  %v2775 = vpop.f32.mrb[0].mxu0
  %v2776 = vadd.f32 %v2586, %v2775
  %v2777 = vpop.f32.mrb[0].mxu0
  %v2778 = vadd.f32 %v2582, %v2777
  %v2779 = vpop.f32.mrb[0].mxu0
  %v2780 = vadd.f32 %v2586, %v2779
  %2781 = vmatprep.mubr.bf16.mxu0 0
  %2782 = vmatmul.mubr.bf16.gmra.mrb[0].mxu0 %v2537
  %v2783 = vpop.f32.mrb[0].mxu0
  %v2784 = vadd.f32 %v2582, %v2783
  %v2785 = vpop.f32.mrb[0].mxu0
  %v2786 = vadd.f32 %v2586, %v2785
  %v2787 = vpop.f32.mrb[0].mxu0
  %v2788 = vadd.f32 %v2582, %v2787
  %v2789 = vpop.f32.mrb[0].mxu0
  %v2790 = vadd.f32 %v2586, %v2789
  %2791 = vmatprep.mubr.bf16.mxu0 0
  %2792 = vmatmul.mubr.bf16.gmra.mrb[0].mxu0 %v2538
  %v2793 = vpop.f32.mrb[0].mxu0
  %v2794 = vadd.f32 %v2582, %v2793
  %v2795 = vpop.f32.mrb[0].mxu0
  %v2796 = vadd.f32 %v2586, %v2795
  %v2797 = vpop.f32.mrb[0].mxu0
  %v2798 = vadd.f32 %v2582, %v2797
  %v2799 = vpop.f32.mrb[0].mxu0
  %v2800 = vadd.f32 %v2586, %v2799
  %2801 = vmatprep.mubr.bf16.mxu0 0
  %2802 = vmatmul.mubr.bf16.gmra.mrb[0].mxu0 %v2539
  %v2803 = vpop.f32.mrb[0].mxu0
  %v2804 = vadd.f32 %v2582, %v2803
  %v2805 = vpop.f32.mrb[0].mxu0
  %v2806 = vadd.f32 %v2586, %v2805
  %v2807 = vpop.f32.mrb[0].mxu0
  %v2808 = vadd.f32 %v2582, %v2807
  %v2809 = vpop.f32.mrb[0].mxu0
  %v2810 = vadd.f32 %v2586, %v2809
  %2811 = vmatprep.mubr.bf16.mxu0 0
  %2812 = vmatmul.mubr.bf16.gmra.mrb[0].mxu0 %v2540
  %v2813 = vpop.f32.mrb[0].mxu0
  %v2814 = vadd.f32 %v2582, %v2813
  %v2815 = vpop.f32.mrb[0].mxu0
  %v2816 = vadd.f32 %v2586, %v2815
  %v2817 = vpop.f32.mrb[0].mxu0
  %v2818 = vadd.f32 %v2582, %v2817
  %v2819 = vpop.f32.mrb[0].mxu0
  %v2820 = vadd.f32 %v2586, %v2819
  %2821 = vmatprep.mubr.bf16.mxu0 0
  %2822 = vmatmul.mubr.bf16.gmra.mrb[0].mxu0 %v2541
  %v2823 = vpop.f32.mrb[0].mxu0
  %v2824 = vadd.f32 %v2582, %v2823
  %v2825 = vpop.f32.mrb[0].mxu0
  %v2826 = vadd.f32 %v2586, %v2825
  %v2827 = vpop.f32.mrb[0].mxu0
  %v2828 = vadd.f32 %v2582, %v2827
  %v2829 = vpop.f32.mrb[0].mxu0
  %v2830 = vadd.f32 %v2586, %v2829
  %2831 = vmatprep.mubr.bf16.mxu0 0
  %2832 = vmatmul.mubr.bf16.gmra.mrb[0].mxu0 %v2542
  %v2833 = vpop.f32.mrb[0].mxu0
  %v2834 = vadd.f32 %v2582, %v2833
  %v2835 = vpop.f32.mrb[0].mxu0
  %v2836 = vadd.f32 %v2586, %v2835
  %v2837 = vpop.f32.mrb[0].mxu0
  %v2838 = vadd.f32 %v2582, %v2837
  %v2839 = vpop.f32.mrb[0].mxu0
  %v2840 = vadd.f32 %v2586, %v2839
  %2841 = vmatprep.mubr.bf16.mxu0 0
  %2842 = vmatmul.mubr.bf16.gmra.mrb[0].mxu0 %v2543
  %v2843 = vpop.f32.mrb[0].mxu0
  %v2844 = vadd.f32 %v2582, %v2843
  %v2845 = vpop.f32.mrb[0].mxu0
  %v2846 = vadd.f32 %v2586, %v2845
  %v2847 = vpop.f32.mrb[0].mxu0
  %v2848 = vadd.f32 %v2582, %v2847
  %v2849 = vpop.f32.mrb[0].mxu0
  %v2850 = vadd.f32 %v2586, %v2849
  %2851 = vmatprep.mubr.bf16.mxu0 0
  %2852 = vmatmul.mubr.bf16.gmra.mrb[0].mxu0 %v2544
  %v2853 = vpop.f32.mrb[0].mxu0
  %v2854 = vadd.f32 %v2582, %v2853
  %v2855 = vpop.f32.mrb[0].mxu0
  %v2856 = vadd.f32 %v2586, %v2855
  %v2857 = vpop.f32.mrb[0].mxu0
  %v2858 = vadd.f32 %v2582, %v2857
  %v2859 = vpop.f32.mrb[0].mxu0
  %v2860 = vadd.f32 %v2586, %v2859
  %2861 = vmatprep.mubr.bf16.mxu0 0
  %2862 = vmatmul.mubr.bf16.gmra.mrb[0].mxu0 %v2545
  %v2863 = vpop.f32.mrb[0].mxu0
  %v2864 = vadd.f32 %v2582, %v2863
  %v2865 = vpop.f32.mrb[0].mxu0
  %v2866 = vadd.f32 %v2586, %v2865
  %v2867 = vpop.f32.mrb[0].mxu0
  %v2868 = vadd.f32 %v2582, %v2867
  %v2869 = vpop.f32.mrb[0].mxu0
  %v2870 = vadd.f32 %v2586, %v2869
  %2871 = vmatprep.mubr.bf16.mxu0 0
  %2872 = vmatmul.mubr.bf16.gmra.mrb[0].mxu0 %v2546
  %v2873 = vpop.f32.mrb[0].mxu0
  %v2874 = vadd.f32 %v2582, %v2873
  %v2875 = vpop.f32.mrb[0].mxu0
  %v2876 = vadd.f32 %v2586, %v2875
  %v2877 = vpop.f32.mrb[0].mxu0
  %v2878 = vadd.f32 %v2582, %v2877
  %v2879 = vpop.f32.mrb[0].mxu0
  %v2880 = vadd.f32 %v2586, %v2879
  %2881 = vmatprep.mubr.bf16.mxu0 0
  %2882 = vmatmul.mubr.bf16.gmra.mrb[0].mxu0 %v2547
  %v2883 = vpop.f32.mrb[0].mxu0
  %v2884 = vadd.f32 %v2582, %v2883
  %v2885 = vpop.f32.mrb[0].mxu0
  %v2886 = vadd.f32 %v2586, %v2885
  %v2887 = vpop.f32.mrb[0].mxu0
  %v2888 = vadd.f32 %v2582, %v2887
  %v2889 = vpop.f32.mrb[0].mxu0
  %v2890 = vadd.f32 %v2586, %v2889
  %2891 = vmatprep.mubr.bf16.mxu0 0
  %2892 = vmatmul.mubr.bf16.gmra.mrb[0].mxu0 %v2548
  %v2893 = vpop.f32.mrb[0].mxu0
  %v2894 = vadd.f32 %v2582, %v2893
  %v2895 = vpop.f32.mrb[0].mxu0
  %v2896 = vadd.f32 %v2586, %v2895
  %v2897 = vpop.f32.mrb[0].mxu0
  %v2898 = vadd.f32 %v2582, %v2897
  %v2899 = vpop.f32.mrb[0].mxu0
  %v2900 = vadd.f32 %v2586, %v2899
  %2901 = vmatprep.mubr.bf16.mxu0 0
  %2902 = vmatmul.mubr.bf16.gmra.mrb[0].mxu0 %v2549
  %v2903 = vpop.f32.mrb[0].mxu0
  %v2904 = vadd.f32 %v2582, %v2903
  %v2905 = vpop.f32.mrb[0].mxu0
  %v2906 = vadd.f32 %v2586, %v2905
  %v2907 = vpop.f32.mrb[0].mxu0
  %v2908 = vadd.f32 %v2582, %v2907
  %v2909 = vpop.f32.mrb[0].mxu0
  %v2910 = vadd.f32 %v2586, %v2909
  %2911 = vmatprep.mubr.bf16.mxu0 0
  %2912 = vmatmul.mubr.bf16.gmra.mrb[0].mxu0 %v2550
  %v2913 = vpop.f32.mrb[0].mxu0
  %v2914 = vadd.f32 %v2582, %v2913
  %v2915 = vpop.f32.mrb[0].mxu0
  %v2916 = vadd.f32 %v2586, %v2915
  %v2917 = vpop.f32.mrb[0].mxu0
  %v2918 = vadd.f32 %v2582, %v2917
  %v2919 = vpop.f32.mrb[0].mxu0
  %v2920 = vadd.f32 %v2586, %v2919
  %2921 = vmatprep.mubr.bf16.mxu0 0
  %2922 = vmatmul.mubr.bf16.gmra.mrb[0].mxu0 %v2551
  %v2923 = vpop.f32.mrb[0].mxu0
  %v2924 = vadd.f32 %v2582, %v2923
  %v2925 = vpop.f32.mrb[0].mxu0
  %v2926 = vadd.f32 %v2586, %v2925
  %v2927 = vpop.f32.mrb[0].mxu0
  %v2928 = vadd.f32 %v2582, %v2927
  %v2929 = vpop.f32.mrb[0].mxu0
  %v2930 = vadd.f32 %v2586, %v2929
  %2931 = vmatprep.mubr.bf16.mxu0 0
  %2932 = vmatmul.mubr.bf16.gmra.mrb[0].mxu0 %v2552
  %v2933 = vpop.f32.mrb[0].mxu0
  %v2934 = vadd.f32 %v2582, %v2933
  %v2935 = vpop.f32.mrb[0].mxu0
  %v2936 = vadd.f32 %v2586, %v2935
  %v2937 = vpop.f32.mrb[0].mxu0
  %v2938 = vadd.f32 %v2582, %v2937
  %v2939 = vpop.f32.mrb[0].mxu0
  %v2940 = vadd.f32 %v2586, %v2939
  %2941 = vmatprep.mubr.bf16.mxu0 0
  %2942 = vmatmul.mubr.bf16.gmra.mrb[0].mxu0 %v2553
  %v2943 = vpop.f32.mrb[0].mxu0
  %v2944 = vadd.f32 %v2582, %v2943
  %v2945 = vpop.f32.mrb[0].mxu0
  %v2946 = vadd.f32 %v2586, %v2945
  %v2947 = vpop.f32.mrb[0].mxu0
  %v2948 = vadd.f32 %v2582, %v2947
  %v2949 = vpop.f32.mrb[0].mxu0
  %v2950 = vadd.f32 %v2586, %v2949
  %2951 = vmatprep.mubr.bf16.mxu0 0
  %2952 = vmatmul.mubr.bf16.gmra.mrb[0].mxu0 %v2554
  %v2953 = vpop.f32.mrb[0].mxu0
  %v2954 = vadd.f32 %v2582, %v2953
  %v2955 = vpop.f32.mrb[0].mxu0
  %v2956 = vadd.f32 %v2586, %v2955
  %v2957 = vpop.f32.mrb[0].mxu0
  %v2958 = vadd.f32 %v2582, %v2957
  %v2959 = vpop.f32.mrb[0].mxu0
  %v2960 = vadd.f32 %v2586, %v2959
  %2961 = vmatprep.mubr.bf16.mxu0 0
  %2962 = vmatmul.mubr.bf16.gmra.mrb[0].mxu0 %v2555
  %v2963 = vpop.f32.mrb[0].mxu0
  %v2964 = vadd.f32 %v2582, %v2963
  %v2965 = vpop.f32.mrb[0].mxu0
  %v2966 = vadd.f32 %v2586, %v2965
  %v2967 = vpop.f32.mrb[0].mxu0
  %v2968 = vadd.f32 %v2582, %v2967
  %v2969 = vpop.f32.mrb[0].mxu0
  %v2970 = vadd.f32 %v2586, %v2969
  %2971 = vmatprep.mubr.bf16.mxu0 0
  %2972 = vmatmul.mubr.bf16.gmra.mrb[0].mxu0 %v2556
  %v2973 = vpop.f32.mrb[0].mxu0
  %v2974 = vadd.f32 %v2582, %v2973
  %v2975 = vpop.f32.mrb[0].mxu0
  %v2976 = vadd.f32 %v2586, %v2975
  %v2977 = vpop.f32.mrb[0].mxu0
  %v2978 = vadd.f32 %v2582, %v2977
  %v2979 = vpop.f32.mrb[0].mxu0
  %v2980 = vadd.f32 %v2586, %v2979
  %2981 = vmatprep.mubr.bf16.mxu0 0
  %2982 = vmatmul.mubr.bf16.gmra.mrb[0].mxu0 %v2557
  %v2983 = vpop.f32.mrb[0].mxu0
  %v2984 = vadd.f32 %v2582, %v2983
  %v2985 = vpop.f32.mrb[0].mxu0
  %v2986 = vadd.f32 %v2586, %v2985
  %v2987 = vpop.f32.mrb[0].mxu0
  %v2988 = vadd.f32 %v2582, %v2987
  %v2989 = vpop.f32.mrb[0].mxu0
  %v2990 = vadd.f32 %v2586, %v2989
  %2991 = vmatprep.mubr.bf16.mxu0 0
  %2992 = vmatmul.mubr.bf16.gmra.mrb[0].mxu0 %v2558
  %v2993 = vpop.f32.mrb[0].mxu0
  %v2994 = vadd.f32 %v2582, %v2993
  %v2995 = vpop.f32.mrb[0].mxu0
  %v2996 = vadd.f32 %v2586, %v2995
  %v2997 = vpop.f32.mrb[0].mxu0
  %v2998 = vadd.f32 %v2582, %v2997
  %v2999 = vpop.f32.mrb[0].mxu0
  %v3000 = vadd.f32 %v2586, %v2999
  %3001 = vmatprep.mubr.bf16.mxu0 0
  %3002 = vmatmul.mubr.bf16.gmra.mrb[0].mxu0 %v2559
  %v3003 = vpop.f32.mrb[0].mxu0
  %v3004 = vadd.f32 %v2582, %v3003
  %v3005 = vpop.f32.mrb[0].mxu0
  %v3006 = vadd.f32 %v2586, %v3005
  %v3007 = vpop.f32.mrb[0].mxu0
  %v3008 = vadd.f32 %v2582, %v3007
  %v3009 = vpop.f32.mrb[0].mxu0
  %v3010 = vadd.f32 %v2586, %v3009
  %3011 = vmatprep.mubr.bf16.mxu0 0
  %3012 = vmatmul.mubr.bf16.gmra.mrb[0].mxu0 %v2560
  %v3013 = vpop.f32.mrb[0].mxu0
  %v3014 = vadd.f32 %v2582, %v3013
  %v3015 = vpop.f32.mrb[0].mxu0
  %v3016 = vadd.f32 %v2586, %v3015
  %v3017 = vpop.f32.mrb[0].mxu0
  %v3018 = vadd.f32 %v2582, %v3017
  %v3019 = vpop.f32.mrb[0].mxu0
  %v3020 = vadd.f32 %v2586, %v3019
  %3021 = vdwg.mxu0
  %v3022 = vmax.f32 %v2704, 0.0
  %v3023 = vmax.f32 %v2706, 0.0
  %v3024 = vmax.f32 %v2708, 0.0
  %v3025 = vmax.f32 %v2710, 0.0
  %v3026 = vmax.f32 %v2714, 0.0
  %v3027 = vmax.f32 %v2716, 0.0
  %v3028 = vmax.f32 %v2718, 0.0
  %v3029 = vmax.f32 %v2720, 0.0
  %v3030 = vmax.f32 %v2724, 0.0
  %v3031 = vmax.f32 %v2726, 0.0
  %v3032 = vmax.f32 %v2728, 0.0
  %v3033 = vmax.f32 %v2730, 0.0
  %v3034 = vmax.f32 %v2734, 0.0
  %v3035 = vmax.f32 %v2736, 0.0
  %v3036 = vmax.f32 %v2738, 0.0
  %v3037 = vmax.f32 %v2740, 0.0
  %v3038 = vmax.f32 %v2744, 0.0
  %v3039 = vmax.f32 %v2746, 0.0
  %v3040 = vmax.f32 %v2748, 0.0
  %v3041 = vmax.f32 %v2750, 0.0
  %v3042 = vmax.f32 %v2754, 0.0
  %v3043 = vmax.f32 %v2756, 0.0
  %v3044 = vmax.f32 %v2758, 0.0
  %v3045 = vmax.f32 %v2760, 0.0
  %v3046 = vmax.f32 %v2764, 0.0
  %v3047 = vmax.f32 %v2766, 0.0
  %v3048 = vmax.f32 %v2768, 0.0
  %v3049 = vmax.f32 %v2770, 0.0
  %v3050 = vmax.f32 %v2774, 0.0
  %v3051 = vmax.f32 %v2776, 0.0
  %v3052 = vmax.f32 %v2778, 0.0
  %v3053 = vmax.f32 %v2780, 0.0
  %v3054 = vmax.f32 %v2784, 0.0
  %v3055 = vmax.f32 %v2786, 0.0
  %v3056 = vmax.f32 %v2788, 0.0
  %v3057 = vmax.f32 %v2790, 0.0
  %v3058 = vmax.f32 %v2794, 0.0
  %v3059 = vmax.f32 %v2796, 0.0
  %v3060 = vmax.f32 %v2798, 0.0
  %v3061 = vmax.f32 %v2800, 0.0
  %v3062 = vmax.f32 %v2804, 0.0
  %v3063 = vmax.f32 %v2806, 0.0
  %v3064 = vmax.f32 %v2808, 0.0
  %v3065 = vmax.f32 %v2810, 0.0
  %v3066 = vmax.f32 %v2814, 0.0
  %v3067 = vmax.f32 %v2816, 0.0
  %v3068 = vmax.f32 %v2818, 0.0
  %v3069 = vmax.f32 %v2820, 0.0
  %v3070 = vmax.f32 %v2824, 0.0
  %v3071 = vmax.f32 %v2826, 0.0
  %v3072 = vmax.f32 %v2828, 0.0
  %v3073 = vmax.f32 %v2830, 0.0
  %v3074 = vmax.f32 %v2834, 0.0
  %v3075 = vmax.f32 %v2836, 0.0
  %v3076 = vmax.f32 %v2838, 0.0
  %v3077 = vmax.f32 %v2840, 0.0
  %v3078 = vmax.f32 %v2844, 0.0
  %v3079 = vmax.f32 %v2846, 0.0
  %v3080 = vmax.f32 %v2848, 0.0
  %v3081 = vmax.f32 %v2850, 0.0
  %v3082 = vmax.f32 %v2854, 0.0
  %v3083 = vmax.f32 %v2856, 0.0
  %v3084 = vmax.f32 %v2858, 0.0
  %v3085 = vmax.f32 %v2860, 0.0
  %v3086 = vmax.f32 %v2864, 0.0
  %v3087 = vmax.f32 %v2866, 0.0
  %v3088 = vmax.f32 %v2868, 0.0
  %v3089 = vmax.f32 %v2870, 0.0
  %v3090 = vmax.f32 %v2874, 0.0
  %v3091 = vmax.f32 %v2876, 0.0
  %v3092 = vmax.f32 %v2878, 0.0
  %v3093 = vmax.f32 %v2880, 0.0
  %v3094 = vmax.f32 %v2884, 0.0
  %v3095 = vmax.f32 %v2886, 0.0
  %v3096 = vmax.f32 %v2888, 0.0
  %v3097 = vmax.f32 %v2890, 0.0
  %v3098 = vmax.f32 %v2894, 0.0
  %v3099 = vmax.f32 %v2896, 0.0
  %v3100 = vmax.f32 %v2898, 0.0
  %v3101 = vmax.f32 %v2900, 0.0
  %v3102 = vmax.f32 %v2904, 0.0
  %v3103 = vmax.f32 %v2906, 0.0
  %v3104 = vmax.f32 %v2908, 0.0
  %v3105 = vmax.f32 %v2910, 0.0
  %v3106 = vmax.f32 %v2914, 0.0
  %v3107 = vmax.f32 %v2916, 0.0
  %v3108 = vmax.f32 %v2918, 0.0
  %v3109 = vmax.f32 %v2920, 0.0
  %v3110 = vmax.f32 %v2924, 0.0
  %v3111 = vmax.f32 %v2926, 0.0
  %v3112 = vmax.f32 %v2928, 0.0
  %v3113 = vmax.f32 %v2930, 0.0
  %v3114 = vmax.f32 %v2934, 0.0
  %v3115 = vmax.f32 %v2936, 0.0
  %v3116 = vmax.f32 %v2938, 0.0
  %v3117 = vmax.f32 %v2940, 0.0
  %v3118 = vmax.f32 %v2944, 0.0
  %v3119 = vmax.f32 %v2946, 0.0
  %v3120 = vmax.f32 %v2948, 0.0
  %v3121 = vmax.f32 %v2950, 0.0
  %v3122 = vmax.f32 %v2954, 0.0
  %v3123 = vmax.f32 %v2956, 0.0
  %v3124 = vmax.f32 %v2958, 0.0
  %v3125 = vmax.f32 %v2960, 0.0
  %v3126 = vmax.f32 %v2964, 0.0
  %v3127 = vmax.f32 %v2966, 0.0
  %v3128 = vmax.f32 %v2968, 0.0
  %v3129 = vmax.f32 %v2970, 0.0
  %v3130 = vmax.f32 %v2974, 0.0
  %v3131 = vmax.f32 %v2976, 0.0
  %v3132 = vmax.f32 %v2978, 0.0
  %v3133 = vmax.f32 %v2980, 0.0
  %v3134 = vmax.f32 %v2984, 0.0
  %v3135 = vmax.f32 %v2986, 0.0
  %v3136 = vmax.f32 %v2988, 0.0
  %v3137 = vmax.f32 %v2990, 0.0
  %v3138 = vmax.f32 %v2994, 0.0
  %v3139 = vmax.f32 %v2996, 0.0
  %v3140 = vmax.f32 %v2998, 0.0
  %v3141 = vmax.f32 %v3000, 0.0
  %v3142 = vmax.f32 %v3004, 0.0
  %v3143 = vmax.f32 %v3006, 0.0
  %v3144 = vmax.f32 %v3008, 0.0
  %v3145 = vmax.f32 %v3010, 0.0
  %v3146 = vmax.f32 %v3014, 0.0
  %v3147 = vmax.f32 %v3016, 0.0
  %v3148 = vmax.f32 %v3018, 0.0
  %v3149 = vmax.f32 %v3020, 0.0
  %v3150 = vmax.f32 %v3022, %v3024
  %v3151 = vrot.slane %v3150, 4
  %v3152 = vmax.f32 %v3150, %v3151
  %v3153 = vrot.slane %v3152, 2
  %v3154 = vmax.f32 %v3152, %v3153
  %v3155 = vrot.slane %v3154, 1
  %v3156 = vmax.f32 %v3154, %v3155
  %v3157 = vmax.f32 %v3023, %v3025
  %v3158 = vrot.slane %v3157, 4
  %v3159 = vmax.f32 %v3157, %v3158
  %v3160 = vrot.slane %v3159, 2
  %v3161 = vmax.f32 %v3159, %v3160
  %v3162 = vrot.slane %v3161, 1
  %v3163 = vmax.f32 %v3161, %v3162
  %v3164 = vmax.f32 %v3026, %v3028
  %v3165 = vrot.slane %v3164, 4
  %v3166 = vmax.f32 %v3164, %v3165
  %v3167 = vrot.slane %v3166, 2
  %v3168 = vmax.f32 %v3166, %v3167
  %v3169 = vrot.slane %v3168, 1
  %v3170 = vmax.f32 %v3168, %v3169
  %v3171 = vmax.f32 %v3027, %v3029
  %v3172 = vrot.slane %v3171, 4
  %v3173 = vmax.f32 %v3171, %v3172
  %v3174 = vrot.slane %v3173, 2
  %v3175 = vmax.f32 %v3173, %v3174
  %v3176 = vrot.slane %v3175, 1
  %v3177 = vmax.f32 %v3175, %v3176
  %v3178 = vmax.f32 %v3030, %v3032
  %v3179 = vrot.slane %v3178, 4
  %v3180 = vmax.f32 %v3178, %v3179
  %v3181 = vrot.slane %v3180, 2
  %v3182 = vmax.f32 %v3180, %v3181
  %v3183 = vrot.slane %v3182, 1
  %v3184 = vmax.f32 %v3182, %v3183
  %v3185 = vmax.f32 %v3031, %v3033
  %v3186 = vrot.slane %v3185, 4
  %v3187 = vmax.f32 %v3185, %v3186
  %v3188 = vrot.slane %v3187, 2
  %v3189 = vmax.f32 %v3187, %v3188
  %v3190 = vrot.slane %v3189, 1
  %v3191 = vmax.f32 %v3189, %v3190
  %v3192 = vmax.f32 %v3034, %v3036
  %v3193 = vrot.slane %v3192, 4
  %v3194 = vmax.f32 %v3192, %v3193
  %v3195 = vrot.slane %v3194, 2
  %v3196 = vmax.f32 %v3194, %v3195
  %v3197 = vrot.slane %v3196, 1
  %v3198 = vmax.f32 %v3196, %v3197
  %v3199 = vmax.f32 %v3035, %v3037
  %v3200 = vrot.slane %v3199, 4
  %v3201 = vmax.f32 %v3199, %v3200
  %v3202 = vrot.slane %v3201, 2
  %v3203 = vmax.f32 %v3201, %v3202
  %v3204 = vrot.slane %v3203, 1
  %v3205 = vmax.f32 %v3203, %v3204
  %v3206 = vmax.f32 %v3038, %v3040
  %v3207 = vrot.slane %v3206, 4
  %v3208 = vmax.f32 %v3206, %v3207
  %v3209 = vrot.slane %v3208, 2
  %v3210 = vmax.f32 %v3208, %v3209
  %v3211 = vrot.slane %v3210, 1
  %v3212 = vmax.f32 %v3210, %v3211
  %v3213 = vmax.f32 %v3039, %v3041
  %v3214 = vrot.slane %v3213, 4
  %v3215 = vmax.f32 %v3213, %v3214
  %v3216 = vrot.slane %v3215, 2
  %v3217 = vmax.f32 %v3215, %v3216
  %v3218 = vrot.slane %v3217, 1
  %v3219 = vmax.f32 %v3217, %v3218
  %v3220 = vmax.f32 %v3042, %v3044
  %v3221 = vrot.slane %v3220, 4
  %v3222 = vmax.f32 %v3220, %v3221
  %v3223 = vrot.slane %v3222, 2
  %v3224 = vmax.f32 %v3222, %v3223
  %v3225 = vrot.slane %v3224, 1
  %v3226 = vmax.f32 %v3224, %v3225
  %v3227 = vmax.f32 %v3043, %v3045
  %v3228 = vrot.slane %v3227, 4
  %v3229 = vmax.f32 %v3227, %v3228
  %v3230 = vrot.slane %v3229, 2
  %v3231 = vmax.f32 %v3229, %v3230
  %v3232 = vrot.slane %v3231, 1
  %v3233 = vmax.f32 %v3231, %v3232
  %v3234 = vmax.f32 %v3046, %v3048
  %v3235 = vrot.slane %v3234, 4
  %v3236 = vmax.f32 %v3234, %v3235
  %v3237 = vrot.slane %v3236, 2
  %v3238 = vmax.f32 %v3236, %v3237
  %v3239 = vrot.slane %v3238, 1
  %v3240 = vmax.f32 %v3238, %v3239
  %v3241 = vmax.f32 %v3047, %v3049
  %v3242 = vrot.slane %v3241, 4
  %v3243 = vmax.f32 %v3241, %v3242
  %v3244 = vrot.slane %v3243, 2
  %v3245 = vmax.f32 %v3243, %v3244
  %v3246 = vrot.slane %v3245, 1
  %v3247 = vmax.f32 %v3245, %v3246
  %v3248 = vmax.f32 %v3050, %v3052
  %v3249 = vrot.slane %v3248, 4
  %v3250 = vmax.f32 %v3248, %v3249
  %v3251 = vrot.slane %v3250, 2
  %v3252 = vmax.f32 %v3250, %v3251
  %v3253 = vrot.slane %v3252, 1
  %v3254 = vmax.f32 %v3252, %v3253
  %v3255 = vmax.f32 %v3051, %v3053
  %v3256 = vrot.slane %v3255, 4
  %v3257 = vmax.f32 %v3255, %v3256
  %v3258 = vrot.slane %v3257, 2
  %v3259 = vmax.f32 %v3257, %v3258
  %v3260 = vrot.slane %v3259, 1
  %v3261 = vmax.f32 %v3259, %v3260
  %v3262 = vmax.f32 %v3054, %v3056
  %v3263 = vrot.slane %v3262, 4
  %v3264 = vmax.f32 %v3262, %v3263
  %v3265 = vrot.slane %v3264, 2
  %v3266 = vmax.f32 %v3264, %v3265
  %v3267 = vrot.slane %v3266, 1
  %v3268 = vmax.f32 %v3266, %v3267
  %v3269 = vmax.f32 %v3055, %v3057
  %v3270 = vrot.slane %v3269, 4
  %v3271 = vmax.f32 %v3269, %v3270
  %v3272 = vrot.slane %v3271, 2
  %v3273 = vmax.f32 %v3271, %v3272
  %v3274 = vrot.slane %v3273, 1
  %v3275 = vmax.f32 %v3273, %v3274
  %v3276 = vmax.f32 %v3058, %v3060
  %v3277 = vrot.slane %v3276, 4
  %v3278 = vmax.f32 %v3276, %v3277
  %v3279 = vrot.slane %v3278, 2
  %v3280 = vmax.f32 %v3278, %v3279
  %v3281 = vrot.slane %v3280, 1
  %v3282 = vmax.f32 %v3280, %v3281
  %v3283 = vmax.f32 %v3059, %v3061
  %v3284 = vrot.slane %v3283, 4
  %v3285 = vmax.f32 %v3283, %v3284
  %v3286 = vrot.slane %v3285, 2
  %v3287 = vmax.f32 %v3285, %v3286
  %v3288 = vrot.slane %v3287, 1
  %v3289 = vmax.f32 %v3287, %v3288
  %v3290 = vmax.f32 %v3062, %v3064
  %v3291 = vrot.slane %v3290, 4
  %v3292 = vmax.f32 %v3290, %v3291
  %v3293 = vrot.slane %v3292, 2
  %v3294 = vmax.f32 %v3292, %v3293
  %v3295 = vrot.slane %v3294, 1
  %v3296 = vmax.f32 %v3294, %v3295
  %v3297 = vmax.f32 %v3063, %v3065
  %v3298 = vrot.slane %v3297, 4
  %v3299 = vmax.f32 %v3297, %v3298
  %v3300 = vrot.slane %v3299, 2
  %v3301 = vmax.f32 %v3299, %v3300
  %v3302 = vrot.slane %v3301, 1
  %v3303 = vmax.f32 %v3301, %v3302
  %v3304 = vmax.f32 %v3066, %v3068
  %v3305 = vrot.slane %v3304, 4
  %v3306 = vmax.f32 %v3304, %v3305
  %v3307 = vrot.slane %v3306, 2
  %v3308 = vmax.f32 %v3306, %v3307
  %v3309 = vrot.slane %v3308, 1
  %v3310 = vmax.f32 %v3308, %v3309
  %v3311 = vmax.f32 %v3067, %v3069
  %v3312 = vrot.slane %v3311, 4
  %v3313 = vmax.f32 %v3311, %v3312
  %v3314 = vrot.slane %v3313, 2
  %v3315 = vmax.f32 %v3313, %v3314
  %v3316 = vrot.slane %v3315, 1
  %v3317 = vmax.f32 %v3315, %v3316
  %v3318 = vmax.f32 %v3070, %v3072
  %v3319 = vrot.slane %v3318, 4
  %v3320 = vmax.f32 %v3318, %v3319
  %v3321 = vrot.slane %v3320, 2
  %v3322 = vmax.f32 %v3320, %v3321
  %v3323 = vrot.slane %v3322, 1
  %v3324 = vmax.f32 %v3322, %v3323
  %v3325 = vmax.f32 %v3071, %v3073
  %v3326 = vrot.slane %v3325, 4
  %v3327 = vmax.f32 %v3325, %v3326
  %v3328 = vrot.slane %v3327, 2
  %v3329 = vmax.f32 %v3327, %v3328
  %v3330 = vrot.slane %v3329, 1
  %v3331 = vmax.f32 %v3329, %v3330
  %v3332 = vmax.f32 %v3074, %v3076
  %v3333 = vrot.slane %v3332, 4
  %v3334 = vmax.f32 %v3332, %v3333
  %v3335 = vrot.slane %v3334, 2
  %v3336 = vmax.f32 %v3334, %v3335
  %v3337 = vrot.slane %v3336, 1
  %v3338 = vmax.f32 %v3336, %v3337
  %v3339 = vmax.f32 %v3075, %v3077
  %v3340 = vrot.slane %v3339, 4
  %v3341 = vmax.f32 %v3339, %v3340
  %v3342 = vrot.slane %v3341, 2
  %v3343 = vmax.f32 %v3341, %v3342
  %v3344 = vrot.slane %v3343, 1
  %v3345 = vmax.f32 %v3343, %v3344
  %v3346 = vmax.f32 %v3078, %v3080
  %v3347 = vrot.slane %v3346, 4
  %v3348 = vmax.f32 %v3346, %v3347
  %v3349 = vrot.slane %v3348, 2
  %v3350 = vmax.f32 %v3348, %v3349
  %v3351 = vrot.slane %v3350, 1
  %v3352 = vmax.f32 %v3350, %v3351
  %v3353 = vmax.f32 %v3079, %v3081
  %v3354 = vrot.slane %v3353, 4
  %v3355 = vmax.f32 %v3353, %v3354
  %v3356 = vrot.slane %v3355, 2
  %v3357 = vmax.f32 %v3355, %v3356
  %v3358 = vrot.slane %v3357, 1
  %v3359 = vmax.f32 %v3357, %v3358
  %v3360 = vmax.f32 %v3082, %v3084
  %v3361 = vrot.slane %v3360, 4
  %v3362 = vmax.f32 %v3360, %v3361
  %v3363 = vrot.slane %v3362, 2
  %v3364 = vmax.f32 %v3362, %v3363
  %v3365 = vrot.slane %v3364, 1
  %v3366 = vmax.f32 %v3364, %v3365
  %v3367 = vmax.f32 %v3083, %v3085
  %v3368 = vrot.slane %v3367, 4
  %v3369 = vmax.f32 %v3367, %v3368
  %v3370 = vrot.slane %v3369, 2
  %v3371 = vmax.f32 %v3369, %v3370
  %v3372 = vrot.slane %v3371, 1
  %v3373 = vmax.f32 %v3371, %v3372
  %v3374 = vmax.f32 %v3086, %v3088
  %v3375 = vrot.slane %v3374, 4
  %v3376 = vmax.f32 %v3374, %v3375
  %v3377 = vrot.slane %v3376, 2
  %v3378 = vmax.f32 %v3376, %v3377
  %v3379 = vrot.slane %v3378, 1
  %v3380 = vmax.f32 %v3378, %v3379
  %v3381 = vmax.f32 %v3087, %v3089
  %v3382 = vrot.slane %v3381, 4
  %v3383 = vmax.f32 %v3381, %v3382
  %v3384 = vrot.slane %v3383, 2
  %v3385 = vmax.f32 %v3383, %v3384
  %v3386 = vrot.slane %v3385, 1
  %v3387 = vmax.f32 %v3385, %v3386
  %v3388 = vmax.f32 %v3090, %v3092
  %v3389 = vrot.slane %v3388, 4
  %v3390 = vmax.f32 %v3388, %v3389
  %v3391 = vrot.slane %v3390, 2
  %v3392 = vmax.f32 %v3390, %v3391
  %v3393 = vrot.slane %v3392, 1
  %v3394 = vmax.f32 %v3392, %v3393
  %v3395 = vmax.f32 %v3091, %v3093
  %v3396 = vrot.slane %v3395, 4
  %v3397 = vmax.f32 %v3395, %v3396
  %v3398 = vrot.slane %v3397, 2
  %v3399 = vmax.f32 %v3397, %v3398
  %v3400 = vrot.slane %v3399, 1
  %v3401 = vmax.f32 %v3399, %v3400
  %v3402 = vmax.f32 %v3094, %v3096
  %v3403 = vrot.slane %v3402, 4
  %v3404 = vmax.f32 %v3402, %v3403
  %v3405 = vrot.slane %v3404, 2
  %v3406 = vmax.f32 %v3404, %v3405
  %v3407 = vrot.slane %v3406, 1
  %v3408 = vmax.f32 %v3406, %v3407
  %v3409 = vmax.f32 %v3095, %v3097
  %v3410 = vrot.slane %v3409, 4
  %v3411 = vmax.f32 %v3409, %v3410
  %v3412 = vrot.slane %v3411, 2
  %v3413 = vmax.f32 %v3411, %v3412
  %v3414 = vrot.slane %v3413, 1
  %v3415 = vmax.f32 %v3413, %v3414
  %v3416 = vmax.f32 %v3098, %v3100
  %v3417 = vrot.slane %v3416, 4
  %v3418 = vmax.f32 %v3416, %v3417
  %v3419 = vrot.slane %v3418, 2
  %v3420 = vmax.f32 %v3418, %v3419
  %v3421 = vrot.slane %v3420, 1
  %v3422 = vmax.f32 %v3420, %v3421
  %v3423 = vmax.f32 %v3099, %v3101
  %v3424 = vrot.slane %v3423, 4
  %v3425 = vmax.f32 %v3423, %v3424
  %v3426 = vrot.slane %v3425, 2
  %v3427 = vmax.f32 %v3425, %v3426
  %v3428 = vrot.slane %v3427, 1
  %v3429 = vmax.f32 %v3427, %v3428
  %v3430 = vmax.f32 %v3102, %v3104
  %v3431 = vrot.slane %v3430, 4
  %v3432 = vmax.f32 %v3430, %v3431
  %v3433 = vrot.slane %v3432, 2
  %v3434 = vmax.f32 %v3432, %v3433
  %v3435 = vrot.slane %v3434, 1
  %v3436 = vmax.f32 %v3434, %v3435
  %v3437 = vmax.f32 %v3103, %v3105
  %v3438 = vrot.slane %v3437, 4
  %v3439 = vmax.f32 %v3437, %v3438
  %v3440 = vrot.slane %v3439, 2
  %v3441 = vmax.f32 %v3439, %v3440
  %v3442 = vrot.slane %v3441, 1
  %v3443 = vmax.f32 %v3441, %v3442
  %v3444 = vmax.f32 %v3106, %v3108
  %v3445 = vrot.slane %v3444, 4
  %v3446 = vmax.f32 %v3444, %v3445
  %v3447 = vrot.slane %v3446, 2
  %v3448 = vmax.f32 %v3446, %v3447
  %v3449 = vrot.slane %v3448, 1
  %v3450 = vmax.f32 %v3448, %v3449
  %v3451 = vmax.f32 %v3107, %v3109
  %v3452 = vrot.slane %v3451, 4
  %v3453 = vmax.f32 %v3451, %v3452
  %v3454 = vrot.slane %v3453, 2
  %v3455 = vmax.f32 %v3453, %v3454
  %v3456 = vrot.slane %v3455, 1
  %v3457 = vmax.f32 %v3455, %v3456
  %v3458 = vmax.f32 %v3110, %v3112
  %v3459 = vrot.slane %v3458, 4
  %v3460 = vmax.f32 %v3458, %v3459
  %v3461 = vrot.slane %v3460, 2
  %v3462 = vmax.f32 %v3460, %v3461
  %v3463 = vrot.slane %v3462, 1
  %v3464 = vmax.f32 %v3462, %v3463
  %v3465 = vmax.f32 %v3111, %v3113
  %v3466 = vrot.slane %v3465, 4
  %v3467 = vmax.f32 %v3465, %v3466
  %v3468 = vrot.slane %v3467, 2
  %v3469 = vmax.f32 %v3467, %v3468
  %v3470 = vrot.slane %v3469, 1
  %v3471 = vmax.f32 %v3469, %v3470
  %v3472 = vmax.f32 %v3114, %v3116
  %v3473 = vrot.slane %v3472, 4
  %v3474 = vmax.f32 %v3472, %v3473
  %v3475 = vrot.slane %v3474, 2
  %v3476 = vmax.f32 %v3474, %v3475
  %v3477 = vrot.slane %v3476, 1
  %v3478 = vmax.f32 %v3476, %v3477
  %v3479 = vmax.f32 %v3115, %v3117
  %v3480 = vrot.slane %v3479, 4
  %v3481 = vmax.f32 %v3479, %v3480
  %v3482 = vrot.slane %v3481, 2
  %v3483 = vmax.f32 %v3481, %v3482
  %v3484 = vrot.slane %v3483, 1
  %v3485 = vmax.f32 %v3483, %v3484
  %v3486 = vmax.f32 %v3118, %v3120
  %v3487 = vrot.slane %v3486, 4
  %v3488 = vmax.f32 %v3486, %v3487
  %v3489 = vrot.slane %v3488, 2
  %v3490 = vmax.f32 %v3488, %v3489
  %v3491 = vrot.slane %v3490, 1
  %v3492 = vmax.f32 %v3490, %v3491
  %v3493 = vmax.f32 %v3119, %v3121
  %v3494 = vrot.slane %v3493, 4
  %v3495 = vmax.f32 %v3493, %v3494
  %v3496 = vrot.slane %v3495, 2
  %v3497 = vmax.f32 %v3495, %v3496
  %v3498 = vrot.slane %v3497, 1
  %v3499 = vmax.f32 %v3497, %v3498
  %v3500 = vmax.f32 %v3122, %v3124
  %v3501 = vrot.slane %v3500, 4
  %v3502 = vmax.f32 %v3500, %v3501
  %v3503 = vrot.slane %v3502, 2
  %v3504 = vmax.f32 %v3502, %v3503
  %v3505 = vrot.slane %v3504, 1
  %v3506 = vmax.f32 %v3504, %v3505
  %v3507 = vmax.f32 %v3123, %v3125
  %v3508 = vrot.slane %v3507, 4
  %v3509 = vmax.f32 %v3507, %v3508
  %v3510 = vrot.slane %v3509, 2
  %v3511 = vmax.f32 %v3509, %v3510
  %v3512 = vrot.slane %v3511, 1
  %v3513 = vmax.f32 %v3511, %v3512
  %v3514 = vmax.f32 %v3126, %v3128
  %v3515 = vrot.slane %v3514, 4
  %v3516 = vmax.f32 %v3514, %v3515
  %v3517 = vrot.slane %v3516, 2
  %v3518 = vmax.f32 %v3516, %v3517
  %v3519 = vrot.slane %v3518, 1
  %v3520 = vmax.f32 %v3518, %v3519
  %v3521 = vmax.f32 %v3127, %v3129
  %v3522 = vrot.slane %v3521, 4
  %v3523 = vmax.f32 %v3521, %v3522
  %v3524 = vrot.slane %v3523, 2
  %v3525 = vmax.f32 %v3523, %v3524
  %v3526 = vrot.slane %v3525, 1
  %v3527 = vmax.f32 %v3525, %v3526
  %v3528 = vmax.f32 %v3130, %v3132
  %v3529 = vrot.slane %v3528, 4
  %v3530 = vmax.f32 %v3528, %v3529
  %v3531 = vrot.slane %v3530, 2
  %v3532 = vmax.f32 %v3530, %v3531
  %v3533 = vrot.slane %v3532, 1
  %v3534 = vmax.f32 %v3532, %v3533
  %v3535 = vmax.f32 %v3131, %v3133
  %v3536 = vrot.slane %v3535, 4
  %v3537 = vmax.f32 %v3535, %v3536
  %v3538 = vrot.slane %v3537, 2
  %v3539 = vmax.f32 %v3537, %v3538
  %v3540 = vrot.slane %v3539, 1
  %v3541 = vmax.f32 %v3539, %v3540
  %v3542 = vmax.f32 %v3134, %v3136
  %v3543 = vrot.slane %v3542, 4
  %v3544 = vmax.f32 %v3542, %v3543
  %v3545 = vrot.slane %v3544, 2
  %v3546 = vmax.f32 %v3544, %v3545
  %v3547 = vrot.slane %v3546, 1
  %v3548 = vmax.f32 %v3546, %v3547
  %v3549 = vmax.f32 %v3135, %v3137
  %v3550 = vrot.slane %v3549, 4
  %v3551 = vmax.f32 %v3549, %v3550
  %v3552 = vrot.slane %v3551, 2
  %v3553 = vmax.f32 %v3551, %v3552
  %v3554 = vrot.slane %v3553, 1
  %v3555 = vmax.f32 %v3553, %v3554
  %v3556 = vmax.f32 %v3138, %v3140
  %v3557 = vrot.slane %v3556, 4
  %v3558 = vmax.f32 %v3556, %v3557
  %v3559 = vrot.slane %v3558, 2
  %v3560 = vmax.f32 %v3558, %v3559
  %v3561 = vrot.slane %v3560, 1
  %v3562 = vmax.f32 %v3560, %v3561
  %v3563 = vmax.f32 %v3139, %v3141
  %v3564 = vrot.slane %v3563, 4
  %v3565 = vmax.f32 %v3563, %v3564
  %v3566 = vrot.slane %v3565, 2
  %v3567 = vmax.f32 %v3565, %v3566
  %v3568 = vrot.slane %v3567, 1
  %v3569 = vmax.f32 %v3567, %v3568
  %v3570 = vmax.f32 %v3142, %v3144
  %v3571 = vrot.slane %v3570, 4
  %v3572 = vmax.f32 %v3570, %v3571
  %v3573 = vrot.slane %v3572, 2
  %v3574 = vmax.f32 %v3572, %v3573
  %v3575 = vrot.slane %v3574, 1
  %v3576 = vmax.f32 %v3574, %v3575
  %v3577 = vmax.f32 %v3143, %v3145
  %v3578 = vrot.slane %v3577, 4
  %v3579 = vmax.f32 %v3577, %v3578
  %v3580 = vrot.slane %v3579, 2
  %v3581 = vmax.f32 %v3579, %v3580
  %v3582 = vrot.slane %v3581, 1
  %v3583 = vmax.f32 %v3581, %v3582
  %v3584 = vmax.f32 %v3146, %v3148
  %v3585 = vrot.slane %v3584, 4
  %v3586 = vmax.f32 %v3584, %v3585
  %v3587 = vrot.slane %v3586, 2
  %v3588 = vmax.f32 %v3586, %v3587
  %v3589 = vrot.slane %v3588, 1
  %v3590 = vmax.f32 %v3588, %v3589
  %v3591 = vmax.f32 %v3147, %v3149
  %v3592 = vrot.slane %v3591, 4
  %v3593 = vmax.f32 %v3591, %v3592
  %v3594 = vrot.slane %v3593, 2
  %v3595 = vmax.f32 %v3593, %v3594
  %v3596 = vrot.slane %v3595, 1
  %v3597 = vmax.f32 %v3595, %v3596
  %v3598 = vpack.c.bf16 %v3156, %v3156
  %v3599 = vpack.c.bf16 %v3163, %v3163
  %v3600 = vpack.c.bf16 %v3170, %v3170
  %v3601 = vpack.c.bf16 %v3177, %v3177
  %v3602 = vpack.c.bf16 %v3184, %v3184
  %v3603 = vpack.c.bf16 %v3191, %v3191
  %v3604 = vpack.c.bf16 %v3198, %v3198
  %v3605 = vpack.c.bf16 %v3205, %v3205
  %v3606 = vpack.c.bf16 %v3212, %v3212
  %v3607 = vpack.c.bf16 %v3219, %v3219
  %v3608 = vpack.c.bf16 %v3226, %v3226
  %v3609 = vpack.c.bf16 %v3233, %v3233
  %v3610 = vpack.c.bf16 %v3240, %v3240
  %v3611 = vpack.c.bf16 %v3247, %v3247
  %v3612 = vpack.c.bf16 %v3254, %v3254
  %v3613 = vpack.c.bf16 %v3261, %v3261
  %v3614 = vpack.c.bf16 %v3268, %v3268
  %v3615 = vpack.c.bf16 %v3275, %v3275
  %v3616 = vpack.c.bf16 %v3282, %v3282
  %v3617 = vpack.c.bf16 %v3289, %v3289
  %v3618 = vpack.c.bf16 %v3296, %v3296
  %v3619 = vpack.c.bf16 %v3303, %v3303
  %v3620 = vpack.c.bf16 %v3310, %v3310
  %v3621 = vpack.c.bf16 %v3317, %v3317
  %v3622 = vpack.c.bf16 %v3324, %v3324
  %v3623 = vpack.c.bf16 %v3331, %v3331
  %v3624 = vpack.c.bf16 %v3338, %v3338
  %v3625 = vpack.c.bf16 %v3345, %v3345
  %v3626 = vpack.c.bf16 %v3352, %v3352
  %v3627 = vpack.c.bf16 %v3359, %v3359
  %v3628 = vpack.c.bf16 %v3366, %v3366
  %v3629 = vpack.c.bf16 %v3373, %v3373
  %v3630 = vpack.c.bf16 %v3380, %v3380
  %v3631 = vpack.c.bf16 %v3387, %v3387
  %v3632 = vpack.c.bf16 %v3394, %v3394
  %v3633 = vpack.c.bf16 %v3401, %v3401
  %v3634 = vpack.c.bf16 %v3408, %v3408
  %v3635 = vpack.c.bf16 %v3415, %v3415
  %v3636 = vpack.c.bf16 %v3422, %v3422
  %v3637 = vpack.c.bf16 %v3429, %v3429
  %v3638 = vpack.c.bf16 %v3436, %v3436
  %v3639 = vpack.c.bf16 %v3443, %v3443
  %v3640 = vpack.c.bf16 %v3450, %v3450
  %v3641 = vpack.c.bf16 %v3457, %v3457
  %v3642 = vpack.c.bf16 %v3464, %v3464
  %v3643 = vpack.c.bf16 %v3471, %v3471
  %v3644 = vpack.c.bf16 %v3478, %v3478
  %v3645 = vpack.c.bf16 %v3485, %v3485
  %v3646 = vpack.c.bf16 %v3492, %v3492
  %v3647 = vpack.c.bf16 %v3499, %v3499
  %v3648 = vpack.c.bf16 %v3506, %v3506
  %v3649 = vpack.c.bf16 %v3513, %v3513
  %v3650 = vpack.c.bf16 %v3520, %v3520
  %v3651 = vpack.c.bf16 %v3527, %v3527
  %v3652 = vpack.c.bf16 %v3534, %v3534
  %v3653 = vpack.c.bf16 %v3541, %v3541
  %v3654 = vpack.c.bf16 %v3548, %v3548
  %v3655 = vpack.c.bf16 %v3555, %v3555
  %v3656 = vpack.c.bf16 %v3562, %v3562
  %v3657 = vpack.c.bf16 %v3569, %v3569
  %v3658 = vpack.c.bf16 %v3576, %v3576
  %v3659 = vpack.c.bf16 %v3583, %v3583
  %v3660 = vpack.c.bf16 %v3590, %v3590
  %v3661 = vpack.c.bf16 %v3597, %v3597
  %v3726 = vunpack.c.l.b16 %v3598
  %v3727 = vunpack.c.l.b16 %v3599
  %v3728 = vunpack.c.l.b16 %v3600
  %v3729 = vunpack.c.l.b16 %v3601
  %v3730 = vunpack.c.l.b16 %v3602
  %v3731 = vunpack.c.l.b16 %v3603
  %v3732 = vunpack.c.l.b16 %v3604
  %v3733 = vunpack.c.l.b16 %v3605
  %v3734 = vunpack.c.l.b16 %v3606
  %v3735 = vunpack.c.l.b16 %v3607
  %v3736 = vunpack.c.l.b16 %v3608
  %v3737 = vunpack.c.l.b16 %v3609
  %v3738 = vunpack.c.l.b16 %v3610
  %v3739 = vunpack.c.l.b16 %v3611
  %v3740 = vunpack.c.l.b16 %v3612
  %v3741 = vunpack.c.l.b16 %v3613
  %v3742 = vunpack.c.l.b16 %v3614
  %v3743 = vunpack.c.l.b16 %v3615
  %v3744 = vunpack.c.l.b16 %v3616
  %v3745 = vunpack.c.l.b16 %v3617
  %v3746 = vunpack.c.l.b16 %v3618
  %v3747 = vunpack.c.l.b16 %v3619
  %v3748 = vunpack.c.l.b16 %v3620
  %v3749 = vunpack.c.l.b16 %v3621
  %v3750 = vunpack.c.l.b16 %v3622
  %v3751 = vunpack.c.l.b16 %v3623
  %v3752 = vunpack.c.l.b16 %v3624
  %v3753 = vunpack.c.l.b16 %v3625
  %v3754 = vunpack.c.l.b16 %v3626
  %v3755 = vunpack.c.l.b16 %v3627
  %v3756 = vunpack.c.l.b16 %v3628
  %v3757 = vunpack.c.l.b16 %v3629
  %v3758 = vunpack.c.l.b16 %v3630
  %v3759 = vunpack.c.l.b16 %v3631
  %v3760 = vunpack.c.l.b16 %v3632
  %v3761 = vunpack.c.l.b16 %v3633
  %v3762 = vunpack.c.l.b16 %v3634
  %v3763 = vunpack.c.l.b16 %v3635
  %v3764 = vunpack.c.l.b16 %v3636
  %v3765 = vunpack.c.l.b16 %v3637
  %v3766 = vunpack.c.l.b16 %v3638
  %v3767 = vunpack.c.l.b16 %v3639
  %v3768 = vunpack.c.l.b16 %v3640
  %v3769 = vunpack.c.l.b16 %v3641
  %v3770 = vunpack.c.l.b16 %v3642
  %v3771 = vunpack.c.l.b16 %v3643
  %v3772 = vunpack.c.l.b16 %v3644
  %v3773 = vunpack.c.l.b16 %v3645
  %v3774 = vunpack.c.l.b16 %v3646
  %v3775 = vunpack.c.l.b16 %v3647
  %v3776 = vunpack.c.l.b16 %v3648
  %v3777 = vunpack.c.l.b16 %v3649
  %v3778 = vunpack.c.l.b16 %v3650
  %v3779 = vunpack.c.l.b16 %v3651
  %v3780 = vunpack.c.l.b16 %v3652
  %v3781 = vunpack.c.l.b16 %v3653
  %v3782 = vunpack.c.l.b16 %v3654
  %v3783 = vunpack.c.l.b16 %v3655
  %v3784 = vunpack.c.l.b16 %v3656
  %v3785 = vunpack.c.l.b16 %v3657
  %v3786 = vunpack.c.l.b16 %v3658
  %v3787 = vunpack.c.l.b16 %v3659
  %v3788 = vunpack.c.l.b16 %v3660
  %v3789 = vunpack.c.l.b16 %v3661
  %v3790 = vpack.c.b16 %v3727, %v3726
  %v3791 = vpack.c.b16 %v3729, %v3728
  %v3792 = vpack.c.b16 %v3731, %v3730
  %v3793 = vpack.c.b16 %v3733, %v3732
  %v3794 = vpack.c.b16 %v3735, %v3734
  %v3795 = vpack.c.b16 %v3737, %v3736
  %v3796 = vpack.c.b16 %v3739, %v3738
  %v3797 = vpack.c.b16 %v3741, %v3740
  %v3798 = vpack.c.b16 %v3743, %v3742
  %v3799 = vpack.c.b16 %v3745, %v3744
  %v3800 = vpack.c.b16 %v3747, %v3746
  %v3801 = vpack.c.b16 %v3749, %v3748
  %v3802 = vpack.c.b16 %v3751, %v3750
  %v3803 = vpack.c.b16 %v3753, %v3752
  %v3804 = vpack.c.b16 %v3755, %v3754
  %v3805 = vpack.c.b16 %v3757, %v3756
  %v3806 = vpack.c.b16 %v3759, %v3758
  %v3807 = vpack.c.b16 %v3761, %v3760
  %v3808 = vpack.c.b16 %v3763, %v3762
  %v3809 = vpack.c.b16 %v3765, %v3764
  %v3810 = vpack.c.b16 %v3767, %v3766
  %v3811 = vpack.c.b16 %v3769, %v3768
  %v3812 = vpack.c.b16 %v3771, %v3770
  %v3813 = vpack.c.b16 %v3773, %v3772
  %v3814 = vpack.c.b16 %v3775, %v3774
  %v3815 = vpack.c.b16 %v3777, %v3776
  %v3816 = vpack.c.b16 %v3779, %v3778
  %v3817 = vpack.c.b16 %v3781, %v3780
  %v3818 = vpack.c.b16 %v3783, %v3782
  %v3819 = vpack.c.b16 %v3785, %v3784
  %v3820 = vpack.c.b16 %v3787, %v3786
  %v3821 = vpack.c.b16 %v3789, %v3788
  %v3822 = vunpack.c.l.b16 %v3790
  %v3823 = vunpack.c.h.b16 %v3790
  %v3824 = vunpack.c.l.b16 %v3791
  %v3825 = vunpack.c.h.b16 %v3791
  %v3826 = vunpack.c.l.b16 %v3792
  %v3827 = vunpack.c.h.b16 %v3792
  %v3828 = vunpack.c.l.b16 %v3793
  %v3829 = vunpack.c.h.b16 %v3793
  %v3830 = vunpack.c.l.b16 %v3794
  %v3831 = vunpack.c.h.b16 %v3794
  %v3832 = vunpack.c.l.b16 %v3795
  %v3833 = vunpack.c.h.b16 %v3795
  %v3834 = vunpack.c.l.b16 %v3796
  %v3835 = vunpack.c.h.b16 %v3796
  %v3836 = vunpack.c.l.b16 %v3797
  %v3837 = vunpack.c.h.b16 %v3797
  %v3838 = vunpack.c.l.b16 %v3798
  %v3839 = vunpack.c.h.b16 %v3798
  %v3840 = vunpack.c.l.b16 %v3799
  %v3841 = vunpack.c.h.b16 %v3799
  %v3842 = vunpack.c.l.b16 %v3800
  %v3843 = vunpack.c.h.b16 %v3800
  %v3844 = vunpack.c.l.b16 %v3801
  %v3845 = vunpack.c.h.b16 %v3801
  %v3846 = vunpack.c.l.b16 %v3802
  %v3847 = vunpack.c.h.b16 %v3802
  %v3848 = vunpack.c.l.b16 %v3803
  %v3849 = vunpack.c.h.b16 %v3803
  %v3850 = vunpack.c.l.b16 %v3804
  %v3851 = vunpack.c.h.b16 %v3804
  %v3852 = vunpack.c.l.b16 %v3805
  %v3853 = vunpack.c.h.b16 %v3805
  %v3854 = vunpack.c.l.b16 %v3806
  %v3855 = vunpack.c.h.b16 %v3806
  %v3856 = vunpack.c.l.b16 %v3807
  %v3857 = vunpack.c.h.b16 %v3807
  %v3858 = vunpack.c.l.b16 %v3808
  %v3859 = vunpack.c.h.b16 %v3808
  %v3860 = vunpack.c.l.b16 %v3809
  %v3861 = vunpack.c.h.b16 %v3809
  %v3862 = vunpack.c.l.b16 %v3810
  %v3863 = vunpack.c.h.b16 %v3810
  %v3864 = vunpack.c.l.b16 %v3811
  %v3865 = vunpack.c.h.b16 %v3811
  %v3866 = vunpack.c.l.b16 %v3812
  %v3867 = vunpack.c.h.b16 %v3812
  %v3868 = vunpack.c.l.b16 %v3813
  %v3869 = vunpack.c.h.b16 %v3813
  %v3870 = vunpack.c.l.b16 %v3814
  %v3871 = vunpack.c.h.b16 %v3814
  %v3872 = vunpack.c.l.b16 %v3815
  %v3873 = vunpack.c.h.b16 %v3815
  %v3874 = vunpack.c.l.b16 %v3816
  %v3875 = vunpack.c.h.b16 %v3816
  %v3876 = vunpack.c.l.b16 %v3817
  %v3877 = vunpack.c.h.b16 %v3817
  %v3878 = vunpack.c.l.b16 %v3818
  %v3879 = vunpack.c.h.b16 %v3818
  %v3880 = vunpack.c.l.b16 %v3819
  %v3881 = vunpack.c.h.b16 %v3819
  %v3882 = vunpack.c.l.b16 %v3820
  %v3883 = vunpack.c.h.b16 %v3820
  %v3884 = vunpack.c.l.b16 %v3821
  %v3885 = vunpack.c.h.b16 %v3821
  %vm3886 = vcmask 1041409
  %v3887 = vsel %vm3886, %v3824, %v3822
  %vm3888 = vcmask 1042434
  %v3889 = vsel %vm3888, %v3826, %v3887
  %vm3890 = vcmask 1043459
  %v3891 = vsel %vm3890, %v3828, %v3889
  %vm3892 = vcmask 1044484
  %v3893 = vsel %vm3892, %v3830, %v3891
  %vm3894 = vcmask 1045509
  %v3895 = vsel %vm3894, %v3832, %v3893
  %vm3896 = vcmask 1046534
  %v3897 = vsel %vm3896, %v3834, %v3895
  %vm3898 = vcmask 1047559
  %v3899 = vsel %vm3898, %v3836, %v3897
  %v3900 = vsel %vm3886, %v3825, %v3823
  %v3901 = vsel %vm3888, %v3827, %v3900
  %v3902 = vsel %vm3890, %v3829, %v3901
  %v3903 = vsel %vm3892, %v3831, %v3902
  %v3904 = vsel %vm3894, %v3833, %v3903
  %v3905 = vsel %vm3896, %v3835, %v3904
  %v3906 = vsel %vm3898, %v3837, %v3905
  %v3907 = vsel %vm3886, %v3840, %v3838
  %v3908 = vsel %vm3888, %v3842, %v3907
  %v3909 = vsel %vm3890, %v3844, %v3908
  %v3910 = vsel %vm3892, %v3846, %v3909
  %v3911 = vsel %vm3894, %v3848, %v3910
  %v3912 = vsel %vm3896, %v3850, %v3911
  %v3913 = vsel %vm3898, %v3852, %v3912
  %v3914 = vsel %vm3886, %v3841, %v3839
  %v3915 = vsel %vm3888, %v3843, %v3914
  %v3916 = vsel %vm3890, %v3845, %v3915
  %v3917 = vsel %vm3892, %v3847, %v3916
  %v3918 = vsel %vm3894, %v3849, %v3917
  %v3919 = vsel %vm3896, %v3851, %v3918
  %v3920 = vsel %vm3898, %v3853, %v3919
  %v3921 = vsel %vm3886, %v3856, %v3854
  %v3922 = vsel %vm3888, %v3858, %v3921
  %v3923 = vsel %vm3890, %v3860, %v3922
  %v3924 = vsel %vm3892, %v3862, %v3923
  %v3925 = vsel %vm3894, %v3864, %v3924
  %v3926 = vsel %vm3896, %v3866, %v3925
  %v3927 = vsel %vm3898, %v3868, %v3926
  %v3928 = vsel %vm3886, %v3857, %v3855
  %v3929 = vsel %vm3888, %v3859, %v3928
  %v3930 = vsel %vm3890, %v3861, %v3929
  %v3931 = vsel %vm3892, %v3863, %v3930
  %v3932 = vsel %vm3894, %v3865, %v3931
  %v3933 = vsel %vm3896, %v3867, %v3932
  %v3934 = vsel %vm3898, %v3869, %v3933
  %v3935 = vsel %vm3886, %v3872, %v3870
  %v3936 = vsel %vm3888, %v3874, %v3935
  %v3937 = vsel %vm3890, %v3876, %v3936
  %v3938 = vsel %vm3892, %v3878, %v3937
  %v3939 = vsel %vm3894, %v3880, %v3938
  %v3940 = vsel %vm3896, %v3882, %v3939
  %v3941 = vsel %vm3898, %v3884, %v3940
  %v3942 = vsel %vm3886, %v3873, %v3871
  %v3943 = vsel %vm3888, %v3875, %v3942
  %v3944 = vsel %vm3890, %v3877, %v3943
  %v3945 = vsel %vm3892, %v3879, %v3944
  %v3946 = vsel %vm3894, %v3881, %v3945
  %v3947 = vsel %vm3896, %v3883, %v3946
  %v3948 = vsel %vm3898, %v3885, %v3947
  %v3949 = vpack.c.b16 %v3906, %v3899
  %v3950 = vpack.c.b16 %v3920, %v3913
  %v3951 = vpack.c.b16 %v3934, %v3927
  %v3952 = vpack.c.b16 %v3948, %v3941
  %3957 = vst [vmem:[%s9] sm:$0xff] %v3949
  %3958 = vst [vmem:[%s9 + $0x8] sm:$0xff] %v3950
  %3959 = vst [vmem:[%s9 + $0x10] sm:$0xff] %v3951
  %3960 = vst [vmem:[%s9 + $0x18] sm:$0xff] %v3952
  // Predicated region
  $region38: #{pointnetv2_linear_forward.4} parent=0 // pred_check
    _
  $region39: #{pointnetv2_linear_forward.4} parent=0 // pred_check_branch
    %3962 = sbr.rel (0) target = $region41
  $region40: #{pointnetv2_linear_forward.4} parent=0 // pred_region
    _
  $region41: #{pointnetv2_linear_forward.4} parent=0 // pred_fallthru
    _
  // Predicated region
  $region42: #{pointnetv2_linear_forward.4} parent=0 // pred_check
    _
  $region43: #{pointnetv2_linear_forward.4} parent=0 // pred_check_branch
    %3964 = sbr.rel (0) target = $region45
  $region44: #{pointnetv2_linear_forward.4} parent=0 // pred_region
    _
  $region45: #{pointnetv2_linear_forward.4} parent=0 // pred_fallthru
    _

// kernel: pointnetv2_linear_forward.5
$region0: #{pointnetv2_linear_forward.5}
  #allocation0 [shape = 'u32[]', space=smem, size = 0x4, offset = 0x4, fixed_abs, tag = 'smem constant byte address 0x4 - core index']
  #allocation1 [shape = 'u32[144,128]{1,0:T(1,128)}', space=vmem, size = 0x12000, scoped, tag = 'internal scratch']
  #allocation2 [shape = 'f32[32,512]{1,0:T(8,128)}', space=vmem, size = 0x10000, scoped, tag = 'scratch operand']
  %s0 = inlined_call_operand.vmem [shape: f32[32,3], index: 0, kind: input, shape index: {}]
  %s1 = inlined_call_operand.vmem [shape: bf16[32,256], index: 1, kind: input, shape index: {}]
  %s2 = inlined_call_operand.vmem [shape: bf16[3,256], index: 2, kind: input, shape index: {}]
  %s3 = inlined_call_operand.vmem [shape: bf16[256,256], index: 3, kind: input, shape index: {}]
  %s4 = inlined_call_operand.vmem [shape: f32[1,256], index: 4, kind: input, shape index: {}]
  %s5 = inlined_call_operand.vmem [shape: bf16[256,512], index: 5, kind: input, shape index: {}]
  %s6 = inlined_call_operand.vmem [shape: f32[1,512], index: 6, kind: input, shape index: {}]
  %s7 = inlined_call_operand.vmem [shape: bf16[512,1024], index: 7, kind: input, shape index: {}]
  %s8 = inlined_call_operand.vmem [shape: f32[1,1024], index: 8, kind: input, shape index: {}]
  %s9 = inlined_call_operand.vmem [shape: bf16[1024,128], index: 9, kind: input, shape index: {}]
  %s10 = inlined_call_operand.vmem [shape: f32[1,128], index: 10, kind: input, shape index: {}]
  %s11 = inlined_call_operand.hbm [shape: f32[2,1,128], index: 11, kind: output, shape index: {}]
  %s12 = sld [smem:[#allocation0]]
  $region119: #{pointnetv2_linear_forward.5} parent=0
    _
  %s14 = ssub.s32 1, %s12
  %s15 = scalar_select 0, %s14, %s12
  $region1: #{pointnetv2_linear_forward.5} parent=0
    #allocation3 [shape = 'u8[524288]{0}', space=vmem, size = 0x80000, scoped, tag = 'input window, operand 7']
    #allocation4 [shape = 'u8[1024]{0}', space=vmem, size = 0x400, scoped, tag = 'output window, operand 0, single buffered']
    #allocation5 [shape = 's32[2]{0}', space=sflag, size = 0x8, scoped, tag = 'scoped memory for pointnetv2_linear_forward.5']
    %16 = vsyncpa [#allocation5], 0
    loop: start=0, step=1, limit=6
    $region2: #{pointnetv2_linear_forward.5} parent=1 // loop_pre_header
      _
    $region3: #{pointnetv2_linear_forward.5} parent=1 // loop_header
      %s18 = sphi 0, %s22
      %p19 = scmp.ge.s32.totalorder %s18, 6
      %s25 = sphi 0, %s37
      %s26 = sphi 0, %s33
      %s27 = sphi 0, %s25
      %s28 = sphi 0, %s26
      %s29 = sphi 0, %s27
      %s30 = sphi 0, %s28
      %s40 = sphi 0, %s42
      %s43 = sphi 0, %s40
      %s44 = sphi 0, %s43
      %s60 = sphi 0, %s44
      %s66 = sphi 0, %s68
      %s69 = sphi 0, %s66
      %s70 = sphi 0, %s69
      %s86 = sphi 0, %s70
      %s90 = sphi 0, %s90
      %s92 = sphi 0, %s90
      %s93 = sphi 0, %s92
      %s107 = sphi 0, %s93
      %s111 = sphi 0, %s111
      %s113 = sphi 0, %s111
      %s114 = sphi 0, %s113
      %s128 = sphi 0, %s114
      %s132 = sphi 0, %s132
      %s134 = sphi 0, %s132
      %s135 = sphi 0, %s134
      %s149 = sphi 0, %s135
      %s153 = sphi 0, %s153
      %s155 = sphi 0, %s153
      %s156 = sphi 0, %s155
      %s170 = sphi 0, %s156
      %s174 = sphi 0, %s174
      %s176 = sphi 0, %s174
      %s177 = sphi 0, %s176
      %s191 = sphi 0, %s177
      %s197 = sphi 0, %s199
      %s200 = sphi 0, %s197
      %s201 = sphi 0, %s200
      %s217 = sphi 0, %s201
      %s223 = sphi 0, %s225
      %s226 = sphi 0, %s223
      %s227 = sphi 0, %s226
      %s243 = sphi 0, %s227
      %s249 = sphi 0, %s251
      %s252 = sphi 0, %s249
      %s253 = sphi 0, %s252
      %s269 = sphi 0, %s253
      %s273 = sphi 0, %s273
      %s275 = sphi 0, %s273
      %s276 = sphi 0, %s275
      %s290 = sphi 0, %s276
      %s296 = sphi 0, %s298
      %s299 = sphi 0, %s296
      %s300 = sphi 0, %s299
      %s316 = sphi 0, %s300
    $region4: #{pointnetv2_linear_forward.5} parent=1 // loop_header_branch
      %21 = sbr.rel (%p19) target = $region8
    $region5: #{pointnetv2_linear_forward.5} parent=1 // loop_body
      %s23 = ssub.s32 %s18, 1
      %s24 = ssub.s32 %s18, 2
      %s31 = sadd.s32 1, %s26
      %p32 = scmp.ge.s32.totalorder %s31, 4
      %s33 = scalar_select %p32, 0, %s31
      %s34 = sadd.s32 1, %s25
      %s35 = scalar_select %p32, %s34, %s25
      %p36 = scmp.ge.s32.totalorder %s35, 1
      %s37 = scalar_select %p36, 0, %s35
      %s38 = ssub.s32 %s25, %s37
      %p39 = scmp.eq.s32.totalorder %s38, 0
      %s41 = sadd.s32 %s40, 1
      %s42 = scalar_select %p39, %s40, %s41
      %p45 = pneg %p39
      %p46 = scmp.eq.s32.totalorder %s18, 3
      %p47 = por %p45, %p46
      %p48 = scmp.ne.s32.totalorder %s40, %s43
      %p49 = scmp.eq.s32.totalorder %s18, 0
      %p50 = por %p48, %p49
      %p51 = scmp.ne.s32.totalorder %s40, %s43
      %p52 = scmp.eq.s32.totalorder %s23, 3
      %p53 = por %p51, %p52
      %p54 = scmp.ne.s32.totalorder %s43, %s44
      %p55 = scmp.eq.s32.totalorder %s23, 0
      %p56 = por %p54, %p55
      %p57 = scmp.ne.s32.totalorder %s43, %s44
      %p58 = scmp.eq.s32.totalorder %s24, 3
      %p59 = por %p57, %p58
      %p61 = scmp.ne.s32.totalorder %s44, %s60
      %p62 = scmp.eq.s32.totalorder %s24, 0
      %p63 = por %p61, %p62
      %s64 = ssub.s32 %s25, %s37
      %p65 = scmp.eq.s32.totalorder %s64, 0
      %s67 = sadd.s32 %s66, 1
      %s68 = scalar_select %p65, %s66, %s67
      %p71 = pneg %p65
      %p72 = scmp.eq.s32.totalorder %s18, 3
      %p73 = por %p71, %p72
      %p74 = scmp.ne.s32.totalorder %s66, %s69
      %p75 = scmp.eq.s32.totalorder %s18, 0
      %p76 = por %p74, %p75
      %p77 = scmp.ne.s32.totalorder %s66, %s69
      %p78 = scmp.eq.s32.totalorder %s23, 3
      %p79 = por %p77, %p78
      %p80 = scmp.ne.s32.totalorder %s69, %s70
      %p81 = scmp.eq.s32.totalorder %s23, 0
      %p82 = por %p80, %p81
      %p83 = scmp.ne.s32.totalorder %s69, %s70
      %p84 = scmp.eq.s32.totalorder %s24, 3
      %p85 = por %p83, %p84
      %p87 = scmp.ne.s32.totalorder %s70, %s86
      %p88 = scmp.eq.s32.totalorder %s24, 0
      %p89 = por %p87, %p88
      %s91 = sadd.s32 %s90, 1
      %p94 = scmp.eq.s32.totalorder %s18, 3
      %p95 = scmp.ne.s32.totalorder %s90, %s92
      %p96 = scmp.eq.s32.totalorder %s18, 0
      %p97 = por %p95, %p96
      %p98 = scmp.ne.s32.totalorder %s90, %s92
      %p99 = scmp.eq.s32.totalorder %s23, 3
      %p100 = por %p98, %p99
      %p101 = scmp.ne.s32.totalorder %s92, %s93
      %p102 = scmp.eq.s32.totalorder %s23, 0
      %p103 = por %p101, %p102
      %p104 = scmp.ne.s32.totalorder %s92, %s93
      %p105 = scmp.eq.s32.totalorder %s24, 3
      %p106 = por %p104, %p105
      %p108 = scmp.ne.s32.totalorder %s93, %s107
      %p109 = scmp.eq.s32.totalorder %s24, 0
      %p110 = por %p108, %p109
      %s112 = sadd.s32 %s111, 1
      %p115 = scmp.eq.s32.totalorder %s18, 3
      %p116 = scmp.ne.s32.totalorder %s111, %s113
      %p117 = scmp.eq.s32.totalorder %s18, 0
      %p118 = por %p116, %p117
      %p119 = scmp.ne.s32.totalorder %s111, %s113
      %p120 = scmp.eq.s32.totalorder %s23, 3
      %p121 = por %p119, %p120
      %p122 = scmp.ne.s32.totalorder %s113, %s114
      %p123 = scmp.eq.s32.totalorder %s23, 0
      %p124 = por %p122, %p123
      %p125 = scmp.ne.s32.totalorder %s113, %s114
      %p126 = scmp.eq.s32.totalorder %s24, 3
      %p127 = por %p125, %p126
      %p129 = scmp.ne.s32.totalorder %s114, %s128
      %p130 = scmp.eq.s32.totalorder %s24, 0
      %p131 = por %p129, %p130
      %s133 = sadd.s32 %s132, 1
      %p136 = scmp.eq.s32.totalorder %s18, 3
      %p137 = scmp.ne.s32.totalorder %s132, %s134
      %p138 = scmp.eq.s32.totalorder %s18, 0
      %p139 = por %p137, %p138
      %p140 = scmp.ne.s32.totalorder %s132, %s134
      %p141 = scmp.eq.s32.totalorder %s23, 3
      %p142 = por %p140, %p141
      %p143 = scmp.ne.s32.totalorder %s134, %s135
      %p144 = scmp.eq.s32.totalorder %s23, 0
      %p145 = por %p143, %p144
      %p146 = scmp.ne.s32.totalorder %s134, %s135
      %p147 = scmp.eq.s32.totalorder %s24, 3
      %p148 = por %p146, %p147
      %p150 = scmp.ne.s32.totalorder %s135, %s149
      %p151 = scmp.eq.s32.totalorder %s24, 0
      %p152 = por %p150, %p151
      %s154 = sadd.s32 %s153, 1
      %p157 = scmp.eq.s32.totalorder %s18, 3
      %p158 = scmp.ne.s32.totalorder %s153, %s155
      %p159 = scmp.eq.s32.totalorder %s18, 0
      %p160 = por %p158, %p159
      %p161 = scmp.ne.s32.totalorder %s153, %s155
      %p162 = scmp.eq.s32.totalorder %s23, 3
      %p163 = por %p161, %p162
      %p164 = scmp.ne.s32.totalorder %s155, %s156
      %p165 = scmp.eq.s32.totalorder %s23, 0
      %p166 = por %p164, %p165
      %p167 = scmp.ne.s32.totalorder %s155, %s156
      %p168 = scmp.eq.s32.totalorder %s24, 3
      %p169 = por %p167, %p168
      %p171 = scmp.ne.s32.totalorder %s156, %s170
      %p172 = scmp.eq.s32.totalorder %s24, 0
      %p173 = por %p171, %p172
      %s175 = sadd.s32 %s174, 1
      %p178 = scmp.eq.s32.totalorder %s18, 3
      %p179 = scmp.ne.s32.totalorder %s174, %s176
      %p180 = scmp.eq.s32.totalorder %s18, 0
      %p181 = por %p179, %p180
      %p182 = scmp.ne.s32.totalorder %s174, %s176
      %p183 = scmp.eq.s32.totalorder %s23, 3
      %p184 = por %p182, %p183
      %p185 = scmp.ne.s32.totalorder %s176, %s177
      %p186 = scmp.eq.s32.totalorder %s23, 0
      %p187 = por %p185, %p186
      %p188 = scmp.ne.s32.totalorder %s176, %s177
      %p189 = scmp.eq.s32.totalorder %s24, 3
      %p190 = por %p188, %p189
      %p192 = scmp.ne.s32.totalorder %s177, %s191
      %p193 = scmp.eq.s32.totalorder %s24, 0
      %p194 = por %p192, %p193
      %s195 = ssub.s32 %s26, %s33
      %p196 = scmp.eq.s32.totalorder %s195, 0
      %s198 = sadd.s32 %s197, 1
      %s199 = scalar_select %p196, %s197, %s198
      %p202 = pneg %p196
      %p203 = scmp.eq.s32.totalorder %s18, 3
      %p204 = por %p202, %p203
      %p205 = scmp.ne.s32.totalorder %s197, %s200
      %p206 = scmp.eq.s32.totalorder %s18, 0
      %p207 = por %p205, %p206
      %p208 = scmp.ne.s32.totalorder %s197, %s200
      %p209 = scmp.eq.s32.totalorder %s23, 3
      %p210 = por %p208, %p209
      %p211 = scmp.ne.s32.totalorder %s200, %s201
      %p212 = scmp.eq.s32.totalorder %s23, 0
      %p213 = por %p211, %p212
      %p214 = scmp.ne.s32.totalorder %s200, %s201
      %p215 = scmp.eq.s32.totalorder %s24, 3
      %p216 = por %p214, %p215
      %p218 = scmp.ne.s32.totalorder %s201, %s217
      %p219 = scmp.eq.s32.totalorder %s24, 0
      %p220 = por %p218, %p219
      %s221 = ssub.s32 %s26, %s33
      %p222 = scmp.eq.s32.totalorder %s221, 0
      %s224 = sadd.s32 %s223, 1
      %s225 = scalar_select %p222, %s223, %s224
      %p228 = pneg %p222
      %p229 = scmp.eq.s32.totalorder %s18, 3
      %p230 = por %p228, %p229
      %p231 = scmp.ne.s32.totalorder %s223, %s226
      %p232 = scmp.eq.s32.totalorder %s18, 0
      %p233 = por %p231, %p232
      %p234 = scmp.ne.s32.totalorder %s223, %s226
      %p235 = scmp.eq.s32.totalorder %s23, 3
      %p236 = por %p234, %p235
      %p237 = scmp.ne.s32.totalorder %s226, %s227
      %p238 = scmp.eq.s32.totalorder %s23, 0
      %p239 = por %p237, %p238
      %p240 = scmp.ne.s32.totalorder %s226, %s227
      %p241 = scmp.eq.s32.totalorder %s24, 3
      %p242 = por %p240, %p241
      %p244 = scmp.ne.s32.totalorder %s227, %s243
      %p245 = scmp.eq.s32.totalorder %s24, 0
      %p246 = por %p244, %p245
      %s247 = ssub.s32 %s26, %s33
      %p248 = scmp.eq.s32.totalorder %s247, 0
      %s250 = sadd.s32 %s249, 1
      %s251 = scalar_select %p248, %s249, %s250
      %p254 = pneg %p248
      %p255 = scmp.eq.s32.totalorder %s18, 3
      %p256 = por %p254, %p255
      %p257 = scmp.ne.s32.totalorder %s249, %s252
      %p258 = scmp.eq.s32.totalorder %s18, 0
      %p259 = por %p257, %p258
      %p260 = scmp.ne.s32.totalorder %s249, %s252
      %p261 = scmp.eq.s32.totalorder %s23, 3
      %p262 = por %p260, %p261
      %p263 = scmp.ne.s32.totalorder %s252, %s253
      %p264 = scmp.eq.s32.totalorder %s23, 0
      %p265 = por %p263, %p264
      %p266 = scmp.ne.s32.totalorder %s252, %s253
      %p267 = scmp.eq.s32.totalorder %s24, 3
      %p268 = por %p266, %p267
      %p270 = scmp.ne.s32.totalorder %s253, %s269
      %p271 = scmp.eq.s32.totalorder %s24, 0
      %p272 = por %p270, %p271
      %s274 = sadd.s32 %s273, 1
      %p277 = scmp.eq.s32.totalorder %s18, 3
      %p278 = scmp.ne.s32.totalorder %s273, %s275
      %p279 = scmp.eq.s32.totalorder %s18, 0
      %p280 = por %p278, %p279
      %p281 = scmp.ne.s32.totalorder %s273, %s275
      %p282 = scmp.eq.s32.totalorder %s23, 3
      %p283 = por %p281, %p282
      %p284 = scmp.ne.s32.totalorder %s275, %s276
      %p285 = scmp.eq.s32.totalorder %s23, 0
      %p286 = por %p284, %p285
      %p287 = scmp.ne.s32.totalorder %s275, %s276
      %p288 = scmp.eq.s32.totalorder %s24, 3
      %p289 = por %p287, %p288
      %p291 = scmp.ne.s32.totalorder %s276, %s290
      %p292 = scmp.eq.s32.totalorder %s24, 0
      %p293 = por %p291, %p292
      %s294 = ssub.s32 %s25, %s37
      %p295 = scmp.eq.s32.totalorder %s294, 0
      %s297 = sadd.s32 %s296, 1
      %s298 = scalar_select %p295, %s296, %s297
      %p301 = pneg %p295
      %p302 = scmp.eq.s32.totalorder %s18, 3
      %p303 = por %p301, %p302
      %p304 = scmp.ne.s32.totalorder %s296, %s299
      %p305 = scmp.eq.s32.totalorder %s18, 0
      %p306 = por %p304, %p305
      %p307 = scmp.ne.s32.totalorder %s296, %s299
      %p308 = scmp.eq.s32.totalorder %s23, 3
      %p309 = por %p307, %p308
      %p310 = scmp.ne.s32.totalorder %s299, %s300
      %p311 = scmp.eq.s32.totalorder %s23, 0
      %p312 = por %p310, %p311
      %p313 = scmp.ne.s32.totalorder %s299, %s300
      %p314 = scmp.eq.s32.totalorder %s24, 3
      %p315 = por %p313, %p314
      %p317 = scmp.ne.s32.totalorder %s300, %s316
      %p318 = scmp.eq.s32.totalorder %s24, 0
      %p319 = por %p317, %p318
      %p320 = scmp.le.s32.totalorder 1, %s18
      %p321 = scmp.lt.s32.totalorder %s18, 5
      %p322 = pnand %p320, %p321
      %p323 = pneg %p322
      // Predicated region
      $region9: #{pointnetv2_linear_forward.5} parent=5 // pred_check
        _
      $region10: #{pointnetv2_linear_forward.5} parent=5 // pred_check_branch
        %325 = sbr.rel (%p322) target = $region12
      $region11: #{pointnetv2_linear_forward.5} parent=5 // pred_region
        %s326 = ssub.s32 %s18, 1
        // Predicated region
        $region13: #{pointnetv2_linear_forward.5} parent=11 // pred_check
          %p327 = pneg %p56
        $region14: #{pointnetv2_linear_forward.5} parent=11 // pred_check_branch
          %329 = sbr.rel (%p327) target = $region16
        $region15: #{pointnetv2_linear_forward.5} parent=11 // pred_region
          %s330 = smul.u32 4, %s27
          %p331 = scmp.lt.s32.totalorder %s330, 3
          %s332 = scalar_select %p331, %s330, 3
          %s333 = smul.addr %s332, 8
          %s334 = scalar_lea.vmem %s0, %s333
          %s335 = smul.u32 4, %s27
        $region16: #{pointnetv2_linear_forward.5} parent=11 // pred_fallthru
          _
        // Predicated region
        $region17: #{pointnetv2_linear_forward.5} parent=11 // pred_check
          %p336 = pneg %p82
        $region18: #{pointnetv2_linear_forward.5} parent=11 // pred_check_branch
          %338 = sbr.rel (%p336) target = $region20
        $region19: #{pointnetv2_linear_forward.5} parent=11 // pred_region
          %s339 = smul.u32 4, %s27
          %p340 = scmp.lt.s32.totalorder %s339, 3
          %s341 = scalar_select %p340, %s339, 3
          %s342 = smul.addr %s341, 2
          %s343 = smul.addr %s342, 4
          %s344 = scalar_lea.vmem %s1, %s343
          %s345 = smul.u32 4, %s27
        $region20: #{pointnetv2_linear_forward.5} parent=11 // pred_fallthru
          _
        // Predicated region
        $region21: #{pointnetv2_linear_forward.5} parent=11 // pred_check
          %p346 = pneg %p103
        $region22: #{pointnetv2_linear_forward.5} parent=11 // pred_check_branch
          %348 = sbr.rel (%p346) target = $region24
        $region23: #{pointnetv2_linear_forward.5} parent=11 // pred_region
          _
        $region24: #{pointnetv2_linear_forward.5} parent=11 // pred_fallthru
          _
        // Predicated region
        $region25: #{pointnetv2_linear_forward.5} parent=11 // pred_check
          %p349 = pneg %p124
        $region26: #{pointnetv2_linear_forward.5} parent=11 // pred_check_branch
          %351 = sbr.rel (%p349) target = $region28
        $region27: #{pointnetv2_linear_forward.5} parent=11 // pred_region
          _
        $region28: #{pointnetv2_linear_forward.5} parent=11 // pred_fallthru
          _
        // Predicated region
        $region29: #{pointnetv2_linear_forward.5} parent=11 // pred_check
          %p352 = pneg %p145
        $region30: #{pointnetv2_linear_forward.5} parent=11 // pred_check_branch
          %354 = sbr.rel (%p352) target = $region32
        $region31: #{pointnetv2_linear_forward.5} parent=11 // pred_region
          _
        $region32: #{pointnetv2_linear_forward.5} parent=11 // pred_fallthru
          _
        // Predicated region
        $region33: #{pointnetv2_linear_forward.5} parent=11 // pred_check
          %p355 = pneg %p166
        $region34: #{pointnetv2_linear_forward.5} parent=11 // pred_check_branch
          %357 = sbr.rel (%p355) target = $region36
        $region35: #{pointnetv2_linear_forward.5} parent=11 // pred_region
          _
        $region36: #{pointnetv2_linear_forward.5} parent=11 // pred_fallthru
          _
        // Predicated region
        $region37: #{pointnetv2_linear_forward.5} parent=11 // pred_check
          %p358 = pneg %p187
        $region38: #{pointnetv2_linear_forward.5} parent=11 // pred_check_branch
          %360 = sbr.rel (%p358) target = $region40
        $region39: #{pointnetv2_linear_forward.5} parent=11 // pred_region
          _
        $region40: #{pointnetv2_linear_forward.5} parent=11 // pred_fallthru
          _
        // Predicated region
        $region41: #{pointnetv2_linear_forward.5} parent=11 // pred_check
          %p361 = pneg %p286
        $region42: #{pointnetv2_linear_forward.5} parent=11 // pred_check_branch
          %363 = sbr.rel (%p361) target = $region44
        $region43: #{pointnetv2_linear_forward.5} parent=11 // pred_region
          _
        $region44: #{pointnetv2_linear_forward.5} parent=11 // pred_fallthru
          _
      $region12: #{pointnetv2_linear_forward.5} parent=5 // pred_fallthru
        _
      %p364 = scmp.lt.s32.totalorder %s18, 4
      // Predicated region
      $region45: #{pointnetv2_linear_forward.5} parent=5 // pred_check
        %p365 = pneg %p364
      $region46: #{pointnetv2_linear_forward.5} parent=5 // pred_check_branch
        %367 = sbr.rel (%p365) target = $region48
      $region47: #{pointnetv2_linear_forward.5} parent=5 // pred_region
        // Predicated region
        $region49: #{pointnetv2_linear_forward.5} parent=47 // pred_check
          %p368 = pneg %p207
        $region50: #{pointnetv2_linear_forward.5} parent=47 // pred_check_branch
          %370 = sbr.rel (%p368) target = $region52
        $region51: #{pointnetv2_linear_forward.5} parent=47 // pred_region
          %s371 = sand.u32 %s197, 1
          %s372 = sand.u32 %s197, 1
          %s373 = smul.addr %s372, 512
          %s374 = scalar_lea.vmem [#allocation3], %s373
          %s375 = smul.u32 2, %s26
          %s376 = smul.addr %s375, 4
          %s377 = scalar_lea.vmem %s7, %s376
          // Predicated region
          $region53: #{pointnetv2_linear_forward.5} parent=51 // pred_check
            _
          $region54: #{pointnetv2_linear_forward.5} parent=51 // pred_check_branch
            %379 = sbr.rel (0) target = $region56
          $region55: #{pointnetv2_linear_forward.5} parent=51 // pred_region
            // Predicated region
            $region57: #{pointnetv2_linear_forward.5} parent=55 // pred_check
              _
            $region58: #{pointnetv2_linear_forward.5} parent=55 // pred_check_branch
              %381 = sbr.rel (0) target = $region60
            $region59: #{pointnetv2_linear_forward.5} parent=55 // pred_region
              // Predicated region
              $region72: #{pointnetv2_linear_forward.5} parent=59 // pred_check
                _
              $region73: #{pointnetv2_linear_forward.5} parent=59 // pred_check_branch
                %522 = sbr.rel (0) target = $region75
              $region74: #{pointnetv2_linear_forward.5} parent=59 // pred_region
                loop: start=0, step=1, limit=1
                $region76: #{pointnetv2_linear_forward.5} parent=74 // loop_pre_header
                  _
                $region77: #{pointnetv2_linear_forward.5} parent=74 // loop_header
                  %s524 = sphi 0, %s528
                  %p525 = scmp.ge.s32.totalorder %s524, 1
                  %s529 = sphi %s377, %s377
                  %s530 = sphi %s374, %s374
                $region78: #{pointnetv2_linear_forward.5} parent=74 // loop_header_branch
                  %527 = sbr.rel (%p525) target = $region82
                $region79: #{pointnetv2_linear_forward.5} parent=74 // loop_body
                  %v531 = vld [vmem:[%s529] sm:$0xff]
                  %532 = vst [vmem:[%s530] sm:$0xff] %v531
                  %v533 = vld [vmem:[%s529 + $0x20] sm:$0xff]
                  %534 = vst [vmem:[%s530 + $0x8] sm:$0xff] %v533
                  %v535 = vld [vmem:[%s529 + $0x40] sm:$0xff]
                  %536 = vst [vmem:[%s530 + $0x10] sm:$0xff] %v535
                  %v537 = vld [vmem:[%s529 + $0x60] sm:$0xff]
                  %538 = vst [vmem:[%s530 + $0x18] sm:$0xff] %v537
                  %v539 = vld [vmem:[%s529 + $0x80] sm:$0xff]
                  %540 = vst [vmem:[%s530 + $0x20] sm:$0xff] %v539
                  %v541 = vld [vmem:[%s529 + $0xa0] sm:$0xff]
                  %542 = vst [vmem:[%s530 + $0x28] sm:$0xff] %v541
                  %v543 = vld [vmem:[%s529 + $0xc0] sm:$0xff]
                  %544 = vst [vmem:[%s530 + $0x30] sm:$0xff] %v543
                  %v545 = vld [vmem:[%s529 + $0xe0] sm:$0xff]
                  %546 = vst [vmem:[%s530 + $0x38] sm:$0xff] %v545
                  %v547 = vld [vmem:[%s529 + $0x100] sm:$0xff]
                  %548 = vst [vmem:[%s530 + $0x40] sm:$0xff] %v547
                  %v549 = vld [vmem:[%s529 + $0x120] sm:$0xff]
                  %550 = vst [vmem:[%s530 + $0x48] sm:$0xff] %v549
                  %v551 = vld [vmem:[%s529 + $0x140] sm:$0xff]
                  %552 = vst [vmem:[%s530 + $0x50] sm:$0xff] %v551
                  %v553 = vld [vmem:[%s529 + $0x160] sm:$0xff]
                  %554 = vst [vmem:[%s530 + $0x58] sm:$0xff] %v553
                  %v555 = vld [vmem:[%s529 + $0x180] sm:$0xff]
                  %556 = vst [vmem:[%s530 + $0x60] sm:$0xff] %v555
                  %v557 = vld [vmem:[%s529 + $0x1a0] sm:$0xff]
                  %558 = vst [vmem:[%s530 + $0x68] sm:$0xff] %v557
                  %v559 = vld [vmem:[%s529 + $0x1c0] sm:$0xff]
                  %560 = vst [vmem:[%s530 + $0x70] sm:$0xff] %v559
                  %v561 = vld [vmem:[%s529 + $0x1e0] sm:$0xff]
                  %562 = vst [vmem:[%s530 + $0x78] sm:$0xff] %v561
                  %v563 = vld [vmem:[%s529 + $0x200] sm:$0xff]
                  %564 = vst [vmem:[%s530 + $0x80] sm:$0xff] %v563
                  %v565 = vld [vmem:[%s529 + $0x220] sm:$0xff]
                  %566 = vst [vmem:[%s530 + $0x88] sm:$0xff] %v565
                  %v567 = vld [vmem:[%s529 + $0x240] sm:$0xff]
                  %568 = vst [vmem:[%s530 + $0x90] sm:$0xff] %v567
                  %v569 = vld [vmem:[%s529 + $0x260] sm:$0xff]
                  %570 = vst [vmem:[%s530 + $0x98] sm:$0xff] %v569
                  %v571 = vld [vmem:[%s529 + $0x280] sm:$0xff]
                  %572 = vst [vmem:[%s530 + $0xa0] sm:$0xff] %v571
                  %v573 = vld [vmem:[%s529 + $0x2a0] sm:$0xff]
                  %574 = vst [vmem:[%s530 + $0xa8] sm:$0xff] %v573
                  %v575 = vld [vmem:[%s529 + $0x2c0] sm:$0xff]
                  %576 = vst [vmem:[%s530 + $0xb0] sm:$0xff] %v575
                  %v577 = vld [vmem:[%s529 + $0x2e0] sm:$0xff]
                  %578 = vst [vmem:[%s530 + $0xb8] sm:$0xff] %v577
                  %v579 = vld [vmem:[%s529 + $0x300] sm:$0xff]
                  %580 = vst [vmem:[%s530 + $0xc0] sm:$0xff] %v579
                  %v581 = vld [vmem:[%s529 + $0x320] sm:$0xff]
                  %582 = vst [vmem:[%s530 + $0xc8] sm:$0xff] %v581
                  %v583 = vld [vmem:[%s529 + $0x340] sm:$0xff]
                  %584 = vst [vmem:[%s530 + $0xd0] sm:$0xff] %v583
                  %v585 = vld [vmem:[%s529 + $0x360] sm:$0xff]
                  %586 = vst [vmem:[%s530 + $0xd8] sm:$0xff] %v585
                  %v587 = vld [vmem:[%s529 + $0x380] sm:$0xff]
                  %588 = vst [vmem:[%s530 + $0xe0] sm:$0xff] %v587
                  %v589 = vld [vmem:[%s529 + $0x3a0] sm:$0xff]
                  %590 = vst [vmem:[%s530 + $0xe8] sm:$0xff] %v589
                  %v591 = vld [vmem:[%s529 + $0x3c0] sm:$0xff]
                  %592 = vst [vmem:[%s530 + $0xf0] sm:$0xff] %v591
                  %v593 = vld [vmem:[%s529 + $0x3e0] sm:$0xff]
                  %594 = vst [vmem:[%s530 + $0xf8] sm:$0xff] %v593
                  %v595 = vld [vmem:[%s529 + $0x400] sm:$0xff]
                  %596 = vst [vmem:[%s530 + $0x100] sm:$0xff] %v595
                  %v597 = vld [vmem:[%s529 + $0x420] sm:$0xff]
                  %598 = vst [vmem:[%s530 + $0x108] sm:$0xff] %v597
                  %v599 = vld [vmem:[%s529 + $0x440] sm:$0xff]
                  %600 = vst [vmem:[%s530 + $0x110] sm:$0xff] %v599
                  %v601 = vld [vmem:[%s529 + $0x460] sm:$0xff]
                  %602 = vst [vmem:[%s530 + $0x118] sm:$0xff] %v601
                  %v603 = vld [vmem:[%s529 + $0x480] sm:$0xff]
                  %604 = vst [vmem:[%s530 + $0x120] sm:$0xff] %v603
                  %v605 = vld [vmem:[%s529 + $0x4a0] sm:$0xff]
                  %606 = vst [vmem:[%s530 + $0x128] sm:$0xff] %v605
                  %v607 = vld [vmem:[%s529 + $0x4c0] sm:$0xff]
                  %608 = vst [vmem:[%s530 + $0x130] sm:$0xff] %v607
                  %v609 = vld [vmem:[%s529 + $0x4e0] sm:$0xff]
                  %610 = vst [vmem:[%s530 + $0x138] sm:$0xff] %v609
                  %v611 = vld [vmem:[%s529 + $0x500] sm:$0xff]
                  %612 = vst [vmem:[%s530 + $0x140] sm:$0xff] %v611
                  %v613 = vld [vmem:[%s529 + $0x520] sm:$0xff]
                  %614 = vst [vmem:[%s530 + $0x148] sm:$0xff] %v613
                  %v615 = vld [vmem:[%s529 + $0x540] sm:$0xff]
                  %616 = vst [vmem:[%s530 + $0x150] sm:$0xff] %v615
                  %v617 = vld [vmem:[%s529 + $0x560] sm:$0xff]
                  %618 = vst [vmem:[%s530 + $0x158] sm:$0xff] %v617
                  %v619 = vld [vmem:[%s529 + $0x580] sm:$0xff]
                  %620 = vst [vmem:[%s530 + $0x160] sm:$0xff] %v619
                  %v621 = vld [vmem:[%s529 + $0x5a0] sm:$0xff]
                  %622 = vst [vmem:[%s530 + $0x168] sm:$0xff] %v621
                  %v623 = vld [vmem:[%s529 + $0x5c0] sm:$0xff]
                  %624 = vst [vmem:[%s530 + $0x170] sm:$0xff] %v623
                  %v625 = vld [vmem:[%s529 + $0x5e0] sm:$0xff]
                  %626 = vst [vmem:[%s530 + $0x178] sm:$0xff] %v625
                  %v627 = vld [vmem:[%s529 + $0x600] sm:$0xff]
                  %628 = vst [vmem:[%s530 + $0x180] sm:$0xff] %v627
                  %v629 = vld [vmem:[%s529 + $0x620] sm:$0xff]
                  %630 = vst [vmem:[%s530 + $0x188] sm:$0xff] %v629
                  %v631 = vld [vmem:[%s529 + $0x640] sm:$0xff]
                  %632 = vst [vmem:[%s530 + $0x190] sm:$0xff] %v631
                  %v633 = vld [vmem:[%s529 + $0x660] sm:$0xff]
                  %634 = vst [vmem:[%s530 + $0x198] sm:$0xff] %v633
                  %v635 = vld [vmem:[%s529 + $0x680] sm:$0xff]
                  %636 = vst [vmem:[%s530 + $0x1a0] sm:$0xff] %v635
                  %v637 = vld [vmem:[%s529 + $0x6a0] sm:$0xff]
                  %638 = vst [vmem:[%s530 + $0x1a8] sm:$0xff] %v637
                  %v639 = vld [vmem:[%s529 + $0x6c0] sm:$0xff]
                  %640 = vst [vmem:[%s530 + $0x1b0] sm:$0xff] %v639
                  %v641 = vld [vmem:[%s529 + $0x6e0] sm:$0xff]
                  %642 = vst [vmem:[%s530 + $0x1b8] sm:$0xff] %v641
                  %v643 = vld [vmem:[%s529 + $0x700] sm:$0xff]
                  %644 = vst [vmem:[%s530 + $0x1c0] sm:$0xff] %v643
                  %v645 = vld [vmem:[%s529 + $0x720] sm:$0xff]
                  %646 = vst [vmem:[%s530 + $0x1c8] sm:$0xff] %v645
                  %v647 = vld [vmem:[%s529 + $0x740] sm:$0xff]
                  %648 = vst [vmem:[%s530 + $0x1d0] sm:$0xff] %v647
                  %v649 = vld [vmem:[%s529 + $0x760] sm:$0xff]
                  %650 = vst [vmem:[%s530 + $0x1d8] sm:$0xff] %v649
                  %v651 = vld [vmem:[%s529 + $0x780] sm:$0xff]
                  %652 = vst [vmem:[%s530 + $0x1e0] sm:$0xff] %v651
                  %v653 = vld [vmem:[%s529 + $0x7a0] sm:$0xff]
                  %654 = vst [vmem:[%s530 + $0x1e8] sm:$0xff] %v653
                  %v655 = vld [vmem:[%s529 + $0x7c0] sm:$0xff]
                  %656 = vst [vmem:[%s530 + $0x1f0] sm:$0xff] %v655
                  %v657 = vld [vmem:[%s529 + $0x7e0] sm:$0xff]
                  %658 = vst [vmem:[%s530 + $0x1f8] sm:$0xff] %v657
                $region80: #{pointnetv2_linear_forward.5} parent=74 // loop_footer
                  %s528 = sadd.s32 1, %s524
                $region81: #{pointnetv2_linear_forward.5} parent=74 // loop_footer_branch
                  %523 = sbr.rel target = $region77
                $region82: #{pointnetv2_linear_forward.5} parent=74 // loop_exit
                  _
              $region75: #{pointnetv2_linear_forward.5} parent=59 // pred_fallthru
                _
              // Predicated region
              $region83: #{pointnetv2_linear_forward.5} parent=59 // pred_check
                _
              $region84: #{pointnetv2_linear_forward.5} parent=59 // pred_check_branch
                %660 = sbr.rel target = $region86
              $region85: #{pointnetv2_linear_forward.5} parent=59 // pred_region
                _
              $region86: #{pointnetv2_linear_forward.5} parent=59 // pred_fallthru
                _
            $region60: #{pointnetv2_linear_forward.5} parent=55 // pred_fallthru
              _
            // Predicated region
            $region61: #{pointnetv2_linear_forward.5} parent=55 // pred_check
              _
            $region62: #{pointnetv2_linear_forward.5} parent=55 // pred_check_branch
              %383 = sbr.rel target = $region64
            $region63: #{pointnetv2_linear_forward.5} parent=55 // pred_region
              loop: start=0, step=1, limit=1
              $region65: #{pointnetv2_linear_forward.5} parent=63 // loop_pre_header
                _
              $region66: #{pointnetv2_linear_forward.5} parent=63 // loop_header
                %s386 = sphi 0, %s390
                %p387 = scmp.ge.s32.totalorder %s386, 1
                %s391 = sphi %s377, %s377
                %s392 = sphi %s374, %s374
              $region67: #{pointnetv2_linear_forward.5} parent=63 // loop_header_branch
                %389 = sbr.rel (%p387) target = $region71
              $region68: #{pointnetv2_linear_forward.5} parent=63 // loop_body
                %v393 = vld [vmem:[%s391] sm:$0xff]
                %394 = vst [vmem:[%s392] sm:$0xff] %v393
                %v395 = vld [vmem:[%s391 + $0x20] sm:$0xff]
                %396 = vst [vmem:[%s392 + $0x8] sm:$0xff] %v395
                %v397 = vld [vmem:[%s391 + $0x40] sm:$0xff]
                %398 = vst [vmem:[%s392 + $0x10] sm:$0xff] %v397
                %v399 = vld [vmem:[%s391 + $0x60] sm:$0xff]
                %400 = vst [vmem:[%s392 + $0x18] sm:$0xff] %v399
                %v401 = vld [vmem:[%s391 + $0x80] sm:$0xff]
                %402 = vst [vmem:[%s392 + $0x20] sm:$0xff] %v401
                %v403 = vld [vmem:[%s391 + $0xa0] sm:$0xff]
                %404 = vst [vmem:[%s392 + $0x28] sm:$0xff] %v403
                %v405 = vld [vmem:[%s391 + $0xc0] sm:$0xff]
                %406 = vst [vmem:[%s392 + $0x30] sm:$0xff] %v405
                %v407 = vld [vmem:[%s391 + $0xe0] sm:$0xff]
                %408 = vst [vmem:[%s392 + $0x38] sm:$0xff] %v407
                %v409 = vld [vmem:[%s391 + $0x100] sm:$0xff]
                %410 = vst [vmem:[%s392 + $0x40] sm:$0xff] %v409
                %v411 = vld [vmem:[%s391 + $0x120] sm:$0xff]
                %412 = vst [vmem:[%s392 + $0x48] sm:$0xff] %v411
                %v413 = vld [vmem:[%s391 + $0x140] sm:$0xff]
                %414 = vst [vmem:[%s392 + $0x50] sm:$0xff] %v413
                %v415 = vld [vmem:[%s391 + $0x160] sm:$0xff]
                %416 = vst [vmem:[%s392 + $0x58] sm:$0xff] %v415
                %v417 = vld [vmem:[%s391 + $0x180] sm:$0xff]
                %418 = vst [vmem:[%s392 + $0x60] sm:$0xff] %v417
                %v419 = vld [vmem:[%s391 + $0x1a0] sm:$0xff]
                %420 = vst [vmem:[%s392 + $0x68] sm:$0xff] %v419
                %v421 = vld [vmem:[%s391 + $0x1c0] sm:$0xff]
                %422 = vst [vmem:[%s392 + $0x70] sm:$0xff] %v421
                %v423 = vld [vmem:[%s391 + $0x1e0] sm:$0xff]
                %424 = vst [vmem:[%s392 + $0x78] sm:$0xff] %v423
                %v425 = vld [vmem:[%s391 + $0x200] sm:$0xff]
                %426 = vst [vmem:[%s392 + $0x80] sm:$0xff] %v425
                %v427 = vld [vmem:[%s391 + $0x220] sm:$0xff]
                %428 = vst [vmem:[%s392 + $0x88] sm:$0xff] %v427
                %v429 = vld [vmem:[%s391 + $0x240] sm:$0xff]
                %430 = vst [vmem:[%s392 + $0x90] sm:$0xff] %v429
                %v431 = vld [vmem:[%s391 + $0x260] sm:$0xff]
                %432 = vst [vmem:[%s392 + $0x98] sm:$0xff] %v431
                %v433 = vld [vmem:[%s391 + $0x280] sm:$0xff]
                %434 = vst [vmem:[%s392 + $0xa0] sm:$0xff] %v433
                %v435 = vld [vmem:[%s391 + $0x2a0] sm:$0xff]
                %436 = vst [vmem:[%s392 + $0xa8] sm:$0xff] %v435
                %v437 = vld [vmem:[%s391 + $0x2c0] sm:$0xff]
                %438 = vst [vmem:[%s392 + $0xb0] sm:$0xff] %v437
                %v439 = vld [vmem:[%s391 + $0x2e0] sm:$0xff]
                %440 = vst [vmem:[%s392 + $0xb8] sm:$0xff] %v439
                %v441 = vld [vmem:[%s391 + $0x300] sm:$0xff]
                %442 = vst [vmem:[%s392 + $0xc0] sm:$0xff] %v441
                %v443 = vld [vmem:[%s391 + $0x320] sm:$0xff]
                %444 = vst [vmem:[%s392 + $0xc8] sm:$0xff] %v443
                %v445 = vld [vmem:[%s391 + $0x340] sm:$0xff]
                %446 = vst [vmem:[%s392 + $0xd0] sm:$0xff] %v445
                %v447 = vld [vmem:[%s391 + $0x360] sm:$0xff]
                %448 = vst [vmem:[%s392 + $0xd8] sm:$0xff] %v447
                %v449 = vld [vmem:[%s391 + $0x380] sm:$0xff]
                %450 = vst [vmem:[%s392 + $0xe0] sm:$0xff] %v449
                %v451 = vld [vmem:[%s391 + $0x3a0] sm:$0xff]
                %452 = vst [vmem:[%s392 + $0xe8] sm:$0xff] %v451
                %v453 = vld [vmem:[%s391 + $0x3c0] sm:$0xff]
                %454 = vst [vmem:[%s392 + $0xf0] sm:$0xff] %v453
                %v455 = vld [vmem:[%s391 + $0x3e0] sm:$0xff]
                %456 = vst [vmem:[%s392 + $0xf8] sm:$0xff] %v455
                %v457 = vld [vmem:[%s391 + $0x400] sm:$0xff]
                %458 = vst [vmem:[%s392 + $0x100] sm:$0xff] %v457
                %v459 = vld [vmem:[%s391 + $0x420] sm:$0xff]
                %460 = vst [vmem:[%s392 + $0x108] sm:$0xff] %v459
                %v461 = vld [vmem:[%s391 + $0x440] sm:$0xff]
                %462 = vst [vmem:[%s392 + $0x110] sm:$0xff] %v461
                %v463 = vld [vmem:[%s391 + $0x460] sm:$0xff]
                %464 = vst [vmem:[%s392 + $0x118] sm:$0xff] %v463
                %v465 = vld [vmem:[%s391 + $0x480] sm:$0xff]
                %466 = vst [vmem:[%s392 + $0x120] sm:$0xff] %v465
                %v467 = vld [vmem:[%s391 + $0x4a0] sm:$0xff]
                %468 = vst [vmem:[%s392 + $0x128] sm:$0xff] %v467
                %v469 = vld [vmem:[%s391 + $0x4c0] sm:$0xff]
                %470 = vst [vmem:[%s392 + $0x130] sm:$0xff] %v469
                %v471 = vld [vmem:[%s391 + $0x4e0] sm:$0xff]
                %472 = vst [vmem:[%s392 + $0x138] sm:$0xff] %v471
                %v473 = vld [vmem:[%s391 + $0x500] sm:$0xff]
                %474 = vst [vmem:[%s392 + $0x140] sm:$0xff] %v473
                %v475 = vld [vmem:[%s391 + $0x520] sm:$0xff]
                %476 = vst [vmem:[%s392 + $0x148] sm:$0xff] %v475
                %v477 = vld [vmem:[%s391 + $0x540] sm:$0xff]
                %478 = vst [vmem:[%s392 + $0x150] sm:$0xff] %v477
                %v479 = vld [vmem:[%s391 + $0x560] sm:$0xff]
                %480 = vst [vmem:[%s392 + $0x158] sm:$0xff] %v479
                %v481 = vld [vmem:[%s391 + $0x580] sm:$0xff]
                %482 = vst [vmem:[%s392 + $0x160] sm:$0xff] %v481
                %v483 = vld [vmem:[%s391 + $0x5a0] sm:$0xff]
                %484 = vst [vmem:[%s392 + $0x168] sm:$0xff] %v483
                %v485 = vld [vmem:[%s391 + $0x5c0] sm:$0xff]
                %486 = vst [vmem:[%s392 + $0x170] sm:$0xff] %v485
                %v487 = vld [vmem:[%s391 + $0x5e0] sm:$0xff]
                %488 = vst [vmem:[%s392 + $0x178] sm:$0xff] %v487
                %v489 = vld [vmem:[%s391 + $0x600] sm:$0xff]
                %490 = vst [vmem:[%s392 + $0x180] sm:$0xff] %v489
                %v491 = vld [vmem:[%s391 + $0x620] sm:$0xff]
                %492 = vst [vmem:[%s392 + $0x188] sm:$0xff] %v491
                %v493 = vld [vmem:[%s391 + $0x640] sm:$0xff]
                %494 = vst [vmem:[%s392 + $0x190] sm:$0xff] %v493
                %v495 = vld [vmem:[%s391 + $0x660] sm:$0xff]
                %496 = vst [vmem:[%s392 + $0x198] sm:$0xff] %v495
                %v497 = vld [vmem:[%s391 + $0x680] sm:$0xff]
                %498 = vst [vmem:[%s392 + $0x1a0] sm:$0xff] %v497
                %v499 = vld [vmem:[%s391 + $0x6a0] sm:$0xff]
                %500 = vst [vmem:[%s392 + $0x1a8] sm:$0xff] %v499
                %v501 = vld [vmem:[%s391 + $0x6c0] sm:$0xff]
                %502 = vst [vmem:[%s392 + $0x1b0] sm:$0xff] %v501
                %v503 = vld [vmem:[%s391 + $0x6e0] sm:$0xff]
                %504 = vst [vmem:[%s392 + $0x1b8] sm:$0xff] %v503
                %v505 = vld [vmem:[%s391 + $0x700] sm:$0xff]
                %506 = vst [vmem:[%s392 + $0x1c0] sm:$0xff] %v505
                %v507 = vld [vmem:[%s391 + $0x720] sm:$0xff]
                %508 = vst [vmem:[%s392 + $0x1c8] sm:$0xff] %v507
                %v509 = vld [vmem:[%s391 + $0x740] sm:$0xff]
                %510 = vst [vmem:[%s392 + $0x1d0] sm:$0xff] %v509
                %v511 = vld [vmem:[%s391 + $0x760] sm:$0xff]
                %512 = vst [vmem:[%s392 + $0x1d8] sm:$0xff] %v511
                %v513 = vld [vmem:[%s391 + $0x780] sm:$0xff]
                %514 = vst [vmem:[%s392 + $0x1e0] sm:$0xff] %v513
                %v515 = vld [vmem:[%s391 + $0x7a0] sm:$0xff]
                %516 = vst [vmem:[%s392 + $0x1e8] sm:$0xff] %v515
                %v517 = vld [vmem:[%s391 + $0x7c0] sm:$0xff]
                %518 = vst [vmem:[%s392 + $0x1f0] sm:$0xff] %v517
                %v519 = vld [vmem:[%s391 + $0x7e0] sm:$0xff]
                %520 = vst [vmem:[%s392 + $0x1f8] sm:$0xff] %v519
              $region69: #{pointnetv2_linear_forward.5} parent=63 // loop_footer
                %s390 = sadd.s32 1, %s386
              $region70: #{pointnetv2_linear_forward.5} parent=63 // loop_footer_branch
                %385 = sbr.rel target = $region66
              $region71: #{pointnetv2_linear_forward.5} parent=63 // loop_exit
                _
            $region64: #{pointnetv2_linear_forward.5} parent=55 // pred_fallthru
              _
          $region56: #{pointnetv2_linear_forward.5} parent=51 // pred_fallthru
            _
          %661 = vnop
        $region52: #{pointnetv2_linear_forward.5} parent=47 // pred_fallthru
          _
        // Predicated region
        $region87: #{pointnetv2_linear_forward.5} parent=47 // pred_check
          %p662 = pneg %p233
        $region88: #{pointnetv2_linear_forward.5} parent=47 // pred_check_branch
          %664 = sbr.rel (%p662) target = $region90
        $region89: #{pointnetv2_linear_forward.5} parent=47 // pred_region
          %s665 = smul.u32 2, %s26
          %p666 = scmp.lt.s32.totalorder %s665, 7
          %s667 = scalar_select %p666, %s665, 7
          %s668 = scalar_lea.vmem %s8, %s667
          %s669 = smul.u32 2, %s26
        $region90: #{pointnetv2_linear_forward.5} parent=47 // pred_fallthru
          _
        // Predicated region
        $region91: #{pointnetv2_linear_forward.5} parent=47 // pred_check
          %p670 = pneg %p259
        $region92: #{pointnetv2_linear_forward.5} parent=47 // pred_check_branch
          %672 = sbr.rel (%p670) target = $region94
        $region93: #{pointnetv2_linear_forward.5} parent=47 // pred_region
          %s673 = smul.u32 32, %s26
          %p674 = scmp.lt.s32.totalorder %s673, 127
          %s675 = scalar_select %p674, %s673, 127
          %s676 = smul.addr %s675, 4
          %s677 = scalar_lea.vmem %s9, %s676
          %s678 = smul.u32 32, %s26
        $region94: #{pointnetv2_linear_forward.5} parent=47 // pred_fallthru
          _
      $region48: #{pointnetv2_linear_forward.5} parent=5 // pred_fallthru
        _
      %p679 = scmp.le.s32.totalorder 1, %s18
      %p680 = scmp.lt.s32.totalorder %s18, 5
      %p681 = pnand %p679, %p680
      %p682 = pneg %p681
      // Predicated region
      $region95: #{pointnetv2_linear_forward.5} parent=5 // pred_check
        _
      $region96: #{pointnetv2_linear_forward.5} parent=5 // pred_check_branch
        %684 = sbr.rel (%p681) target = $region98
      $region97: #{pointnetv2_linear_forward.5} parent=5 // pred_region
        %s685 = ssub.s32 %s18, 1
        %s686 = sand.u32 %s200, 1
        %s687 = sand.u32 %s200, 1
        %s688 = smul.addr %s687, 512
        %s689 = scalar_lea.vmem [#allocation3], %s688
        // Predicated region
        $region99: #{pointnetv2_linear_forward.5} parent=97 // pred_check
          %p690 = pneg %p213
        $region100: #{pointnetv2_linear_forward.5} parent=97 // pred_check_branch
          %692 = sbr.rel (%p690) target = $region102
        $region101: #{pointnetv2_linear_forward.5} parent=97 // pred_region
          _
        $region102: #{pointnetv2_linear_forward.5} parent=97 // pred_fallthru
          _
        %s693 = smul.u32 4, %s27
        %p694 = scmp.lt.s32.totalorder %s693, 3
        %s695 = scalar_select %p694, %s693, 3
        %s696 = smul.addr %s695, 8
        %s697 = scalar_lea.vmem %s0, %s696
        %p698 = pneg %p56
        %p699 = pneg %p53
        %s700 = smul.u32 4, %s27
        %p701 = scmp.lt.s32.totalorder %s700, 3
        %s702 = scalar_select %p701, %s700, 3
        %s703 = smul.addr %s702, 2
        %s704 = smul.addr %s703, 4
        %s705 = scalar_lea.vmem %s1, %s704
        %p706 = pneg %p82
        %p707 = pneg %p79
        %p708 = pneg %p103
        %p709 = pneg %p100
        %p710 = pneg %p124
        %p711 = pneg %p121
        %p712 = pneg %p145
        %p713 = pneg %p142
        %p714 = pneg %p166
        %p715 = pneg %p163
        %p716 = pneg %p187
        %p717 = pneg %p184
        %s718 = sand.u32 %s200, 1
        %s719 = sand.u32 %s200, 1
        %s720 = smul.addr %s719, 512
        %s721 = scalar_lea.vmem [#allocation3], %s720
        %p722 = pneg %p213
        %p723 = pneg %p210
        %s724 = smul.u32 2, %s28
        %p725 = scmp.lt.s32.totalorder %s724, 7
        %s726 = scalar_select %p725, %s724, 7
        %s727 = scalar_lea.vmem %s8, %s726
        %p728 = pneg %p239
        %p729 = pneg %p236
        %s730 = smul.u32 32, %s28
        %p731 = scmp.lt.s32.totalorder %s730, 127
        %s732 = scalar_select %p731, %s730, 127
        %s733 = smul.addr %s732, 4
        %s734 = scalar_lea.vmem %s9, %s733
        %p735 = pneg %p265
        %p736 = pneg %p262
        %p737 = pneg %p286
        %p738 = pneg %p283
        %p739 = pneg %p312
        %p740 = pneg %p309
        %s741 = smul.u32 4, %s27
        %p742 = scmp.lt.s32.totalorder %s741, 3
        %s743 = scalar_select %p742, %s741, 3
        %s744 = smul.addr %s743, 8
        %s745 = scalar_lea.vmem %s0, %s744
        %s746 = smul.u32 4, %s27
        %s747 = smul.u32 4, %s27
        %p748 = scmp.lt.s32.totalorder %s747, 3
        %s749 = scalar_select %p748, %s747, 3
        %s750 = smul.addr %s749, 2
        %s751 = smul.addr %s750, 4
        %s752 = scalar_lea.vmem %s1, %s751
        %s753 = smul.u32 4, %s27
        %s754 = smul.u32 2, %s28
        %s755 = smul.u32 2, %s28
        %p756 = scmp.lt.s32.totalorder %s755, 7
        %s757 = scalar_select %p756, %s755, 7
        %s758 = scalar_lea.vmem %s8, %s757
        %s759 = smul.u32 2, %s28
        %s760 = smul.u32 32, %s28
        %p761 = scmp.lt.s32.totalorder %s760, 127
        %s762 = scalar_select %p761, %s760, 127
        %s763 = smul.addr %s762, 4
        %s764 = scalar_lea.vmem %s9, %s763
        %s765 = smul.u32 32, %s28
        %s766 = smul.u32 2, %s27
        %p768 = scmp.eq.s32.totalorder %s28, 0
        // Predicated region
        $region103: #{pointnetv2_linear_forward.5} parent=97 // pred_check
          %p769 = pneg %p768
        $region104: #{pointnetv2_linear_forward.5} parent=97 // pred_check_branch
          %771 = sbr.rel (%p769) target = $region106
        $region105: #{pointnetv2_linear_forward.5} parent=97 // pred_region
          %v772 = vld [vmem:[%s745] sm:$0xff]
          %v773 = vld [vmem:[%s745 + $0x8] sm:$0xff]
          %v774 = vld [vmem:[%s745 + $0x10] sm:$0xff]
          %v775 = vld [vmem:[%s745 + $0x18] sm:$0xff]
          %v776 = vld [vmem:[%s2] sm:$0x5]
          %v777 = vunpack.c.l.bf16 %v776
          %779 = vset.pattern.permute.xlu0 0
          %780 = vperm.xlu0 %779, %v772
          %v781 = vpop.permute.xlu0 %780
          %784 = vset.pattern.permute.xlu0 0
          %785 = vperm.xlu0 %784, %v773
          %v786 = vpop.permute.xlu0 %785
          %789 = vset.pattern.permute.xlu0 0
          %790 = vperm.xlu0 %789, %v774
          %v791 = vpop.permute.xlu0 %790
          %794 = vset.pattern.permute.xlu0 0
          %795 = vperm.xlu0 %794, %v775
          %v796 = vpop.permute.xlu0 %795
          %v799 = vlaneseq
          %v800 = vshrl.u32 %v799, 7
          %v801 = vsub.s32 0, %v800
          %v802 = vrot.slane %v777, %v801
          %v803 = vlaneseq
          %v804 = vshrl.u32 %v803, 7
          %v805 = vsub.s32 4, %v804
          %v806 = vrot.slane %v777, %v805
          %v809 = vlaneseq
          %v810 = vshrl.u32 %v809, 7
          %v811 = vsub.s32 0, %v810
          %v812 = vrot.slane %v802, %v811
          %v813 = vlaneseq
          %v814 = vshrl.u32 %v813, 7
          %v815 = vsub.s32 0, %v814
          %v816 = vrot.slane %v806, %v815
          %v817 = vmul.f32 %v781, %v812
          %v818 = vmul.f32 %v781, %v816
          %v819 = vmul.f32 %v786, %v812
          %v820 = vmul.f32 %v786, %v816
          %v821 = vmul.f32 %v791, %v812
          %v822 = vmul.f32 %v791, %v816
          %v823 = vmul.f32 %v796, %v812
          %v824 = vmul.f32 %v796, %v816
          %825 = vset.pattern.permute.xlu0 1
          %826 = vperm.xlu0 %825, %v772
          %v827 = vpop.permute.xlu0 %826
          %829 = vset.pattern.permute.xlu0 1
          %830 = vperm.xlu0 %829, %v773
          %v831 = vpop.permute.xlu0 %830
          %833 = vset.pattern.permute.xlu0 1
          %834 = vperm.xlu0 %833, %v774
          %v835 = vpop.permute.xlu0 %834
          %837 = vset.pattern.permute.xlu0 1
          %838 = vperm.xlu0 %837, %v775
          %v839 = vpop.permute.xlu0 %838
          %v841 = vlaneseq
          %v842 = vshrl.u32 %v841, 7
          %v843 = vsub.s32 1, %v842
          %v844 = vrot.slane %v777, %v843
          %v845 = vlaneseq
          %v846 = vshrl.u32 %v845, 7
          %v847 = vsub.s32 5, %v846
          %v848 = vrot.slane %v777, %v847
          %v851 = vlaneseq
          %v852 = vshrl.u32 %v851, 7
          %v853 = vsub.s32 1, %v852
          %v854 = vrot.slane %v844, %v853
          %v855 = vlaneseq
          %v856 = vshrl.u32 %v855, 7
          %v857 = vsub.s32 1, %v856
          %v858 = vrot.slane %v848, %v857
          %v859 = vmul.f32 %v827, %v854
          %v860 = vmul.f32 %v827, %v858
          %v861 = vmul.f32 %v831, %v854
          %v862 = vmul.f32 %v831, %v858
          %v863 = vmul.f32 %v835, %v854
          %v864 = vmul.f32 %v835, %v858
          %v865 = vmul.f32 %v839, %v854
          %v866 = vmul.f32 %v839, %v858
          %v867 = vadd.f32 %v817, %v859
          %v868 = vadd.f32 %v818, %v860
          %v869 = vadd.f32 %v819, %v861
          %v870 = vadd.f32 %v820, %v862
          %v871 = vadd.f32 %v821, %v863
          %v872 = vadd.f32 %v822, %v864
          %v873 = vadd.f32 %v823, %v865
          %v874 = vadd.f32 %v824, %v866
          %v875 = vld [vmem:[%s2] sm:$0xa]
          %v876 = vunpack.c.l.bf16 %v875
          %877 = vset.pattern.permute.xlu0 2
          %878 = vperm.xlu0 %877, %v772
          %v879 = vpop.permute.xlu0 %878
          %881 = vset.pattern.permute.xlu0 2
          %882 = vperm.xlu0 %881, %v773
          %v883 = vpop.permute.xlu0 %882
          %885 = vset.pattern.permute.xlu0 2
          %886 = vperm.xlu0 %885, %v774
          %v887 = vpop.permute.xlu0 %886
          %889 = vset.pattern.permute.xlu0 2
          %890 = vperm.xlu0 %889, %v775
          %v891 = vpop.permute.xlu0 %890
          %v894 = vlaneseq
          %v895 = vshrl.u32 %v894, 7
          %v896 = vsub.s32 2, %v895
          %v897 = vrot.slane %v876, %v896
          %v898 = vlaneseq
          %v899 = vshrl.u32 %v898, 7
          %v900 = vsub.s32 6, %v899
          %v901 = vrot.slane %v876, %v900
          %v904 = vlaneseq
          %v905 = vshrl.u32 %v904, 7
          %v906 = vsub.s32 2, %v905
          %v907 = vrot.slane %v897, %v906
          %v908 = vlaneseq
          %v909 = vshrl.u32 %v908, 7
          %v910 = vsub.s32 2, %v909
          %v911 = vrot.slane %v901, %v910
          %v912 = vmul.f32 %v879, %v907
          %v913 = vmul.f32 %v879, %v911
          %v914 = vmul.f32 %v883, %v907
          %v915 = vmul.f32 %v883, %v911
          %v916 = vmul.f32 %v887, %v907
          %v917 = vmul.f32 %v887, %v911
          %v918 = vmul.f32 %v891, %v907
          %v919 = vmul.f32 %v891, %v911
          %v920 = vadd.f32 %v867, %v912
          %v921 = vadd.f32 %v868, %v913
          %v922 = vadd.f32 %v869, %v914
          %v923 = vadd.f32 %v870, %v915
          %v924 = vadd.f32 %v871, %v916
          %v925 = vadd.f32 %v872, %v917
          %v926 = vadd.f32 %v873, %v918
          %v927 = vadd.f32 %v874, %v919
          %v928 = vld [vmem:[%s752] sm:$0xff]
          %v929 = vld [vmem:[%s752 + $0x8] sm:$0xff]
          %v930 = vld [vmem:[%s752 + $0x10] sm:$0xff]
          %v931 = vld [vmem:[%s752 + $0x18] sm:$0xff]
          %v932 = vld [vmem:[%s3] sm:$0xff]
          %v933 = vld [vmem:[%s3 + $0x8] sm:$0xff]
          %v934 = vld [vmem:[%s3 + $0x10] sm:$0xff]
          %v935 = vld [vmem:[%s3 + $0x18] sm:$0xff]
          %v936 = vld [vmem:[%s3 + $0x20] sm:$0xff]
          %v937 = vld [vmem:[%s3 + $0x28] sm:$0xff]
          %v938 = vld [vmem:[%s3 + $0x30] sm:$0xff]
          %v939 = vld [vmem:[%s3 + $0x38] sm:$0xff]
          %v940 = vld [vmem:[%s3 + $0x40] sm:$0xff]
          %v941 = vld [vmem:[%s3 + $0x48] sm:$0xff]
          %v942 = vld [vmem:[%s3 + $0x50] sm:$0xff]
          %v943 = vld [vmem:[%s3 + $0x58] sm:$0xff]
          %v944 = vld [vmem:[%s3 + $0x60] sm:$0xff]
          %v945 = vld [vmem:[%s3 + $0x68] sm:$0xff]
          %v946 = vld [vmem:[%s3 + $0x70] sm:$0xff]
          %v947 = vld [vmem:[%s3 + $0x78] sm:$0xff]
          %v948 = vld [vmem:[%s3 + $0x80] sm:$0xff]
          %v949 = vld [vmem:[%s3 + $0x88] sm:$0xff]
          %v950 = vld [vmem:[%s3 + $0x90] sm:$0xff]
          %v951 = vld [vmem:[%s3 + $0x98] sm:$0xff]
          %v952 = vld [vmem:[%s3 + $0xa0] sm:$0xff]
          %v953 = vld [vmem:[%s3 + $0xa8] sm:$0xff]
          %v954 = vld [vmem:[%s3 + $0xb0] sm:$0xff]
          %v955 = vld [vmem:[%s3 + $0xb8] sm:$0xff]
          %v956 = vld [vmem:[%s3 + $0xc0] sm:$0xff]
          %v957 = vld [vmem:[%s3 + $0xc8] sm:$0xff]
          %v958 = vld [vmem:[%s3 + $0xd0] sm:$0xff]
          %v959 = vld [vmem:[%s3 + $0xd8] sm:$0xff]
          %v960 = vld [vmem:[%s3 + $0xe0] sm:$0xff]
          %v961 = vld [vmem:[%s3 + $0xe8] sm:$0xff]
          %v962 = vld [vmem:[%s3 + $0xf0] sm:$0xff]
          %v963 = vld [vmem:[%s3 + $0xf8] sm:$0xff]
          %v968 = vunpack.c.l.b16 %v928
          %v969 = vunpack.c.h.b16 %v928
          %v970 = vunpack.c.l.b16 %v929
          %v971 = vunpack.c.h.b16 %v929
          %v972 = vunpack.c.l.b16 %v930
          %v973 = vunpack.c.h.b16 %v930
          %v974 = vunpack.c.l.b16 %v931
          %v975 = vunpack.c.h.b16 %v931
          %v976 = vpack.c.b16 %v970, %v968
          %v977 = vpack.c.b16 %v971, %v969
          %v978 = vpack.c.b16 %v974, %v972
          %v979 = vpack.c.b16 %v975, %v973
          %v1016 = vunpack.c.l.b16 %v932
          %v1017 = vunpack.c.h.b16 %v932
          %v1018 = vunpack.c.l.b16 %v933
          %v1019 = vunpack.c.h.b16 %v933
          %v1020 = vunpack.c.l.b16 %v934
          %v1021 = vunpack.c.h.b16 %v934
          %v1022 = vunpack.c.l.b16 %v935
          %v1023 = vunpack.c.h.b16 %v935
          %v1024 = vunpack.c.l.b16 %v936
          %v1025 = vunpack.c.h.b16 %v936
          %v1026 = vunpack.c.l.b16 %v937
          %v1027 = vunpack.c.h.b16 %v937
          %v1028 = vunpack.c.l.b16 %v938
          %v1029 = vunpack.c.h.b16 %v938
          %v1030 = vunpack.c.l.b16 %v939
          %v1031 = vunpack.c.h.b16 %v939
          %v1032 = vunpack.c.l.b16 %v940
          %v1033 = vunpack.c.h.b16 %v940
          %v1034 = vunpack.c.l.b16 %v941
          %v1035 = vunpack.c.h.b16 %v941
          %v1036 = vunpack.c.l.b16 %v942
          %v1037 = vunpack.c.h.b16 %v942
          %v1038 = vunpack.c.l.b16 %v943
          %v1039 = vunpack.c.h.b16 %v943
          %v1040 = vunpack.c.l.b16 %v944
          %v1041 = vunpack.c.h.b16 %v944
          %v1042 = vunpack.c.l.b16 %v945
          %v1043 = vunpack.c.h.b16 %v945
          %v1044 = vunpack.c.l.b16 %v946
          %v1045 = vunpack.c.h.b16 %v946
          %v1046 = vunpack.c.l.b16 %v947
          %v1047 = vunpack.c.h.b16 %v947
          %v1048 = vunpack.c.l.b16 %v948
          %v1049 = vunpack.c.h.b16 %v948
          %v1050 = vunpack.c.l.b16 %v949
          %v1051 = vunpack.c.h.b16 %v949
          %v1052 = vunpack.c.l.b16 %v950
          %v1053 = vunpack.c.h.b16 %v950
          %v1054 = vunpack.c.l.b16 %v951
          %v1055 = vunpack.c.h.b16 %v951
          %v1056 = vunpack.c.l.b16 %v952
          %v1057 = vunpack.c.h.b16 %v952
          %v1058 = vunpack.c.l.b16 %v953
          %v1059 = vunpack.c.h.b16 %v953
          %v1060 = vunpack.c.l.b16 %v954
          %v1061 = vunpack.c.h.b16 %v954
          %v1062 = vunpack.c.l.b16 %v955
          %v1063 = vunpack.c.h.b16 %v955
          %v1064 = vunpack.c.l.b16 %v956
          %v1065 = vunpack.c.h.b16 %v956
          %v1066 = vunpack.c.l.b16 %v957
          %v1067 = vunpack.c.h.b16 %v957
          %v1068 = vunpack.c.l.b16 %v958
          %v1069 = vunpack.c.h.b16 %v958
          %v1070 = vunpack.c.l.b16 %v959
          %v1071 = vunpack.c.h.b16 %v959
          %v1072 = vunpack.c.l.b16 %v960
          %v1073 = vunpack.c.h.b16 %v960
          %v1074 = vunpack.c.l.b16 %v961
          %v1075 = vunpack.c.h.b16 %v961
          %v1076 = vunpack.c.l.b16 %v962
          %v1077 = vunpack.c.h.b16 %v962
          %v1078 = vunpack.c.l.b16 %v963
          %v1079 = vunpack.c.h.b16 %v963
          %v1080 = vpack.c.b16 %v1018, %v1016
          %v1081 = vpack.c.b16 %v1019, %v1017
          %v1082 = vpack.c.b16 %v1022, %v1020
          %v1083 = vpack.c.b16 %v1023, %v1021
          %v1084 = vpack.c.b16 %v1026, %v1024
          %v1085 = vpack.c.b16 %v1027, %v1025
          %v1086 = vpack.c.b16 %v1030, %v1028
          %v1087 = vpack.c.b16 %v1031, %v1029
          %v1088 = vpack.c.b16 %v1034, %v1032
          %v1089 = vpack.c.b16 %v1035, %v1033
          %v1090 = vpack.c.b16 %v1038, %v1036
          %v1091 = vpack.c.b16 %v1039, %v1037
          %v1092 = vpack.c.b16 %v1042, %v1040
          %v1093 = vpack.c.b16 %v1043, %v1041
          %v1094 = vpack.c.b16 %v1046, %v1044
          %v1095 = vpack.c.b16 %v1047, %v1045
          %v1096 = vpack.c.b16 %v1050, %v1048
          %v1097 = vpack.c.b16 %v1051, %v1049
          %v1098 = vpack.c.b16 %v1054, %v1052
          %v1099 = vpack.c.b16 %v1055, %v1053
          %v1100 = vpack.c.b16 %v1058, %v1056
          %v1101 = vpack.c.b16 %v1059, %v1057
          %v1102 = vpack.c.b16 %v1062, %v1060
          %v1103 = vpack.c.b16 %v1063, %v1061
          %v1104 = vpack.c.b16 %v1066, %v1064
          %v1105 = vpack.c.b16 %v1067, %v1065
          %v1106 = vpack.c.b16 %v1070, %v1068
          %v1107 = vpack.c.b16 %v1071, %v1069
          %v1108 = vpack.c.b16 %v1074, %v1072
          %v1109 = vpack.c.b16 %v1075, %v1073
          %v1110 = vpack.c.b16 %v1078, %v1076
          %v1111 = vpack.c.b16 %v1079, %v1077
          %1144 = vmatprep.subr.bf16.mxu0 %v1081
          %1145 = vmatpush1.bf16.msra.mxu0 %v1080
          %1146 = vmatprep.subr.bf16.mxu0 %v1083
          %1147 = vmatpush1.bf16.msra.mxu0 %v1082
          %1148 = vmatprep.subr.bf16.mxu0 %v1085
          %1149 = vmatpush1.bf16.msra.mxu0 %v1084
          %1150 = vmatprep.subr.bf16.mxu0 %v1087
          %1151 = vmatpush1.bf16.msra.mxu0 %v1086
          %1152 = vmatprep.subr.bf16.mxu0 %v1089
          %1153 = vmatpush1.bf16.msra.mxu0 %v1088
          %1154 = vmatprep.subr.bf16.mxu0 %v1091
          %1155 = vmatpush1.bf16.msra.mxu0 %v1090
          %1156 = vmatprep.subr.bf16.mxu0 %v1093
          %1157 = vmatpush1.bf16.msra.mxu0 %v1092
          %1158 = vmatprep.subr.bf16.mxu0 %v1095
          %1159 = vmatpush1.bf16.msra.mxu0 %v1094
          %1160 = vmatprep.subr.bf16.mxu0 %v1097
          %1161 = vmatpush1.bf16.msra.mxu0 %v1096
          %1162 = vmatprep.subr.bf16.mxu0 %v1099
          %1163 = vmatpush1.bf16.msra.mxu0 %v1098
          %1164 = vmatprep.subr.bf16.mxu0 %v1101
          %1165 = vmatpush1.bf16.msra.mxu0 %v1100
          %1166 = vmatprep.subr.bf16.mxu0 %v1103
          %1167 = vmatpush1.bf16.msra.mxu0 %v1102
          %1168 = vmatprep.subr.bf16.mxu0 %v1105
          %1169 = vmatpush1.bf16.msra.mxu0 %v1104
          %1170 = vmatprep.subr.bf16.mxu0 %v1107
          %1171 = vmatpush1.bf16.msra.mxu0 %v1106
          %1172 = vmatprep.subr.bf16.mxu0 %v1109
          %1173 = vmatpush1.bf16.msra.mxu0 %v1108
          %1174 = vmatprep.subr.bf16.mxu0 %v1111
          %1175 = vmatpush1.bf16.msra.mxu0 %v1110
          %1176 = vmatprep.mubr.bf16.mxu0 %v977
          %1177 = vmatmul.mubr.bf16.gmra.mrb[0].mxu0 %v976
          %v1178 = vpop.f32.mrb[0].mxu0
          %v1179 = vadd.f32 0.0, %v1178
          %v1180 = vpop.f32.mrb[0].mxu0
          %v1181 = vadd.f32 0.0, %v1180
          %v1182 = vpop.f32.mrb[0].mxu0
          %v1183 = vadd.f32 0.0, %v1182
          %v1184 = vpop.f32.mrb[0].mxu0
          %v1185 = vadd.f32 0.0, %v1184
          %1186 = vmatprep.mubr.bf16.mxu0 %v979
          %1187 = vmatmul.mubr.bf16.gmra.mrb[0].mxu0 %v978
          %v1188 = vpop.f32.mrb[0].mxu0
          %v1189 = vadd.f32 0.0, %v1188
          %v1190 = vpop.f32.mrb[0].mxu0
          %v1191 = vadd.f32 0.0, %v1190
          %v1192 = vpop.f32.mrb[0].mxu0
          %v1193 = vadd.f32 0.0, %v1192
          %v1194 = vpop.f32.mrb[0].mxu0
          %v1195 = vadd.f32 0.0, %v1194
          %1196 = vdwg.mxu0
          %v1197 = vadd.f32 %v920, %v1179
          %v1198 = vadd.f32 %v921, %v1181
          %v1199 = vadd.f32 %v922, %v1183
          %v1200 = vadd.f32 %v923, %v1185
          %v1201 = vadd.f32 %v924, %v1189
          %v1202 = vadd.f32 %v925, %v1191
          %v1203 = vadd.f32 %v926, %v1193
          %v1204 = vadd.f32 %v927, %v1195
          %v1205 = vld [vmem:[%s4] sm:$0x3]
          %v1207 = vlaneseq
          %v1208 = vshrl.u32 %v1207, 7
          %v1209 = vsub.s32 0, %v1208
          %v1210 = vrot.slane %v1205, %v1209
          %v1211 = vlaneseq
          %v1212 = vshrl.u32 %v1211, 7
          %v1213 = vsub.s32 1, %v1212
          %v1214 = vrot.slane %v1205, %v1213
          %v1217 = vadd.f32 %v1197, %v1210
          %v1218 = vadd.f32 %v1198, %v1214
          %v1219 = vadd.f32 %v1199, %v1210
          %v1220 = vadd.f32 %v1200, %v1214
          %v1221 = vadd.f32 %v1201, %v1210
          %v1222 = vadd.f32 %v1202, %v1214
          %v1223 = vadd.f32 %v1203, %v1210
          %v1224 = vadd.f32 %v1204, %v1214
          %v1225 = vmax.f32 %v1217, 0.0
          %v1226 = vmax.f32 %v1218, 0.0
          %v1227 = vmax.f32 %v1219, 0.0
          %v1228 = vmax.f32 %v1220, 0.0
          %v1229 = vmax.f32 %v1221, 0.0
          %v1230 = vmax.f32 %v1222, 0.0
          %v1231 = vmax.f32 %v1223, 0.0
          %v1232 = vmax.f32 %v1224, 0.0
          %v1233 = vpack.c.bf16 %v1227, %v1225
          %v1234 = vpack.c.bf16 %v1228, %v1226
          %v1235 = vpack.c.bf16 %v1231, %v1229
          %v1236 = vpack.c.bf16 %v1232, %v1230
          %v1237 = vld [vmem:[%s5] sm:$0xff]
          %v1238 = vld [vmem:[%s5 + $0x8] sm:$0xff]
          %v1239 = vld [vmem:[%s5 + $0x10] sm:$0xff]
          %v1240 = vld [vmem:[%s5 + $0x18] sm:$0xff]
          %v1241 = vld [vmem:[%s5 + $0x20] sm:$0xff]
          %v1242 = vld [vmem:[%s5 + $0x28] sm:$0xff]
          %v1243 = vld [vmem:[%s5 + $0x30] sm:$0xff]
          %v1244 = vld [vmem:[%s5 + $0x38] sm:$0xff]
          %v1245 = vld [vmem:[%s5 + $0x40] sm:$0xff]
          %v1246 = vld [vmem:[%s5 + $0x48] sm:$0xff]
          %v1247 = vld [vmem:[%s5 + $0x50] sm:$0xff]
          %v1248 = vld [vmem:[%s5 + $0x58] sm:$0xff]
          %v1249 = vld [vmem:[%s5 + $0x60] sm:$0xff]
          %v1250 = vld [vmem:[%s5 + $0x68] sm:$0xff]
          %v1251 = vld [vmem:[%s5 + $0x70] sm:$0xff]
          %v1252 = vld [vmem:[%s5 + $0x78] sm:$0xff]
          %v1253 = vld [vmem:[%s5 + $0x80] sm:$0xff]
          %v1254 = vld [vmem:[%s5 + $0x88] sm:$0xff]
          %v1255 = vld [vmem:[%s5 + $0x90] sm:$0xff]
          %v1256 = vld [vmem:[%s5 + $0x98] sm:$0xff]
          %v1257 = vld [vmem:[%s5 + $0xa0] sm:$0xff]
          %v1258 = vld [vmem:[%s5 + $0xa8] sm:$0xff]
          %v1259 = vld [vmem:[%s5 + $0xb0] sm:$0xff]
          %v1260 = vld [vmem:[%s5 + $0xb8] sm:$0xff]
          %v1261 = vld [vmem:[%s5 + $0xc0] sm:$0xff]
          %v1262 = vld [vmem:[%s5 + $0xc8] sm:$0xff]
          %v1263 = vld [vmem:[%s5 + $0xd0] sm:$0xff]
          %v1264 = vld [vmem:[%s5 + $0xd8] sm:$0xff]
          %v1265 = vld [vmem:[%s5 + $0xe0] sm:$0xff]
          %v1266 = vld [vmem:[%s5 + $0xe8] sm:$0xff]
          %v1267 = vld [vmem:[%s5 + $0xf0] sm:$0xff]
          %v1268 = vld [vmem:[%s5 + $0xf8] sm:$0xff]
          %v1269 = vld [vmem:[%s5 + $0x100] sm:$0xff]
          %v1270 = vld [vmem:[%s5 + $0x108] sm:$0xff]
          %v1271 = vld [vmem:[%s5 + $0x110] sm:$0xff]
          %v1272 = vld [vmem:[%s5 + $0x118] sm:$0xff]
          %v1273 = vld [vmem:[%s5 + $0x120] sm:$0xff]
          %v1274 = vld [vmem:[%s5 + $0x128] sm:$0xff]
          %v1275 = vld [vmem:[%s5 + $0x130] sm:$0xff]
          %v1276 = vld [vmem:[%s5 + $0x138] sm:$0xff]
          %v1277 = vld [vmem:[%s5 + $0x140] sm:$0xff]
          %v1278 = vld [vmem:[%s5 + $0x148] sm:$0xff]
          %v1279 = vld [vmem:[%s5 + $0x150] sm:$0xff]
          %v1280 = vld [vmem:[%s5 + $0x158] sm:$0xff]
          %v1281 = vld [vmem:[%s5 + $0x160] sm:$0xff]
          %v1282 = vld [vmem:[%s5 + $0x168] sm:$0xff]
          %v1283 = vld [vmem:[%s5 + $0x170] sm:$0xff]
          %v1284 = vld [vmem:[%s5 + $0x178] sm:$0xff]
          %v1285 = vld [vmem:[%s5 + $0x180] sm:$0xff]
          %v1286 = vld [vmem:[%s5 + $0x188] sm:$0xff]
          %v1287 = vld [vmem:[%s5 + $0x190] sm:$0xff]
          %v1288 = vld [vmem:[%s5 + $0x198] sm:$0xff]
          %v1289 = vld [vmem:[%s5 + $0x1a0] sm:$0xff]
          %v1290 = vld [vmem:[%s5 + $0x1a8] sm:$0xff]
          %v1291 = vld [vmem:[%s5 + $0x1b0] sm:$0xff]
          %v1292 = vld [vmem:[%s5 + $0x1b8] sm:$0xff]
          %v1293 = vld [vmem:[%s5 + $0x1c0] sm:$0xff]
          %v1294 = vld [vmem:[%s5 + $0x1c8] sm:$0xff]
          %v1295 = vld [vmem:[%s5 + $0x1d0] sm:$0xff]
          %v1296 = vld [vmem:[%s5 + $0x1d8] sm:$0xff]
          %v1297 = vld [vmem:[%s5 + $0x1e0] sm:$0xff]
          %v1298 = vld [vmem:[%s5 + $0x1e8] sm:$0xff]
          %v1299 = vld [vmem:[%s5 + $0x1f0] sm:$0xff]
          %v1300 = vld [vmem:[%s5 + $0x1f8] sm:$0xff]
          %v1301 = vld [vmem:[%s6] sm:$0xf]
          %v1303 = vlaneseq
          %v1304 = vshrl.u32 %v1303, 7
          %v1305 = vsub.s32 0, %v1304
          %v1306 = vrot.slane %v1301, %v1305
          %v1307 = vlaneseq
          %v1308 = vshrl.u32 %v1307, 7
          %v1309 = vsub.s32 1, %v1308
          %v1310 = vrot.slane %v1301, %v1309
          %v1311 = vlaneseq
          %v1312 = vshrl.u32 %v1311, 7
          %v1313 = vsub.s32 2, %v1312
          %v1314 = vrot.slane %v1301, %v1313
          %v1315 = vlaneseq
          %v1316 = vshrl.u32 %v1315, 7
          %v1317 = vsub.s32 3, %v1316
          %v1318 = vrot.slane %v1301, %v1317
          %v1387 = vunpack.c.l.b16 %v1237
          %v1388 = vunpack.c.h.b16 %v1237
          %v1389 = vunpack.c.l.b16 %v1238
          %v1390 = vunpack.c.h.b16 %v1238
          %v1391 = vunpack.c.l.b16 %v1239
          %v1392 = vunpack.c.h.b16 %v1239
          %v1393 = vunpack.c.l.b16 %v1240
          %v1394 = vunpack.c.h.b16 %v1240
          %v1395 = vunpack.c.l.b16 %v1241
          %v1396 = vunpack.c.h.b16 %v1241
          %v1397 = vunpack.c.l.b16 %v1242
          %v1398 = vunpack.c.h.b16 %v1242
          %v1399 = vunpack.c.l.b16 %v1243
          %v1400 = vunpack.c.h.b16 %v1243
          %v1401 = vunpack.c.l.b16 %v1244
          %v1402 = vunpack.c.h.b16 %v1244
          %v1403 = vunpack.c.l.b16 %v1245
          %v1404 = vunpack.c.h.b16 %v1245
          %v1405 = vunpack.c.l.b16 %v1246
          %v1406 = vunpack.c.h.b16 %v1246
          %v1407 = vunpack.c.l.b16 %v1247
          %v1408 = vunpack.c.h.b16 %v1247
          %v1409 = vunpack.c.l.b16 %v1248
          %v1410 = vunpack.c.h.b16 %v1248
          %v1411 = vunpack.c.l.b16 %v1249
          %v1412 = vunpack.c.h.b16 %v1249
          %v1413 = vunpack.c.l.b16 %v1250
          %v1414 = vunpack.c.h.b16 %v1250
          %v1415 = vunpack.c.l.b16 %v1251
          %v1416 = vunpack.c.h.b16 %v1251
          %v1417 = vunpack.c.l.b16 %v1252
          %v1418 = vunpack.c.h.b16 %v1252
          %v1419 = vunpack.c.l.b16 %v1253
          %v1420 = vunpack.c.h.b16 %v1253
          %v1421 = vunpack.c.l.b16 %v1254
          %v1422 = vunpack.c.h.b16 %v1254
          %v1423 = vunpack.c.l.b16 %v1255
          %v1424 = vunpack.c.h.b16 %v1255
          %v1425 = vunpack.c.l.b16 %v1256
          %v1426 = vunpack.c.h.b16 %v1256
          %v1427 = vunpack.c.l.b16 %v1257
          %v1428 = vunpack.c.h.b16 %v1257
          %v1429 = vunpack.c.l.b16 %v1258
          %v1430 = vunpack.c.h.b16 %v1258
          %v1431 = vunpack.c.l.b16 %v1259
          %v1432 = vunpack.c.h.b16 %v1259
          %v1433 = vunpack.c.l.b16 %v1260
          %v1434 = vunpack.c.h.b16 %v1260
          %v1435 = vunpack.c.l.b16 %v1261
          %v1436 = vunpack.c.h.b16 %v1261
          %v1437 = vunpack.c.l.b16 %v1262
          %v1438 = vunpack.c.h.b16 %v1262
          %v1439 = vunpack.c.l.b16 %v1263
          %v1440 = vunpack.c.h.b16 %v1263
          %v1441 = vunpack.c.l.b16 %v1264
          %v1442 = vunpack.c.h.b16 %v1264
          %v1443 = vunpack.c.l.b16 %v1265
          %v1444 = vunpack.c.h.b16 %v1265
          %v1445 = vunpack.c.l.b16 %v1266
          %v1446 = vunpack.c.h.b16 %v1266
          %v1447 = vunpack.c.l.b16 %v1267
          %v1448 = vunpack.c.h.b16 %v1267
          %v1449 = vunpack.c.l.b16 %v1268
          %v1450 = vunpack.c.h.b16 %v1268
          %v1451 = vunpack.c.l.b16 %v1269
          %v1452 = vunpack.c.h.b16 %v1269
          %v1453 = vunpack.c.l.b16 %v1270
          %v1454 = vunpack.c.h.b16 %v1270
          %v1455 = vunpack.c.l.b16 %v1271
          %v1456 = vunpack.c.h.b16 %v1271
          %v1457 = vunpack.c.l.b16 %v1272
          %v1458 = vunpack.c.h.b16 %v1272
          %v1459 = vunpack.c.l.b16 %v1273
          %v1460 = vunpack.c.h.b16 %v1273
          %v1461 = vunpack.c.l.b16 %v1274
          %v1462 = vunpack.c.h.b16 %v1274
          %v1463 = vunpack.c.l.b16 %v1275
          %v1464 = vunpack.c.h.b16 %v1275
          %v1465 = vunpack.c.l.b16 %v1276
          %v1466 = vunpack.c.h.b16 %v1276
          %v1467 = vunpack.c.l.b16 %v1277
          %v1468 = vunpack.c.h.b16 %v1277
          %v1469 = vunpack.c.l.b16 %v1278
          %v1470 = vunpack.c.h.b16 %v1278
          %v1471 = vunpack.c.l.b16 %v1279
          %v1472 = vunpack.c.h.b16 %v1279
          %v1473 = vunpack.c.l.b16 %v1280
          %v1474 = vunpack.c.h.b16 %v1280
          %v1475 = vunpack.c.l.b16 %v1281
          %v1476 = vunpack.c.h.b16 %v1281
          %v1477 = vunpack.c.l.b16 %v1282
          %v1478 = vunpack.c.h.b16 %v1282
          %v1479 = vunpack.c.l.b16 %v1283
          %v1480 = vunpack.c.h.b16 %v1283
          %v1481 = vunpack.c.l.b16 %v1284
          %v1482 = vunpack.c.h.b16 %v1284
          %v1483 = vunpack.c.l.b16 %v1285
          %v1484 = vunpack.c.h.b16 %v1285
          %v1485 = vunpack.c.l.b16 %v1286
          %v1486 = vunpack.c.h.b16 %v1286
          %v1487 = vunpack.c.l.b16 %v1287
          %v1488 = vunpack.c.h.b16 %v1287
          %v1489 = vunpack.c.l.b16 %v1288
          %v1490 = vunpack.c.h.b16 %v1288
          %v1491 = vunpack.c.l.b16 %v1289
          %v1492 = vunpack.c.h.b16 %v1289
          %v1493 = vunpack.c.l.b16 %v1290
          %v1494 = vunpack.c.h.b16 %v1290
          %v1495 = vunpack.c.l.b16 %v1291
          %v1496 = vunpack.c.h.b16 %v1291
          %v1497 = vunpack.c.l.b16 %v1292
          %v1498 = vunpack.c.h.b16 %v1292
          %v1499 = vunpack.c.l.b16 %v1293
          %v1500 = vunpack.c.h.b16 %v1293
          %v1501 = vunpack.c.l.b16 %v1294
          %v1502 = vunpack.c.h.b16 %v1294
          %v1503 = vunpack.c.l.b16 %v1295
          %v1504 = vunpack.c.h.b16 %v1295
          %v1505 = vunpack.c.l.b16 %v1296
          %v1506 = vunpack.c.h.b16 %v1296
          %v1507 = vunpack.c.l.b16 %v1297
          %v1508 = vunpack.c.h.b16 %v1297
          %v1509 = vunpack.c.l.b16 %v1298
          %v1510 = vunpack.c.h.b16 %v1298
          %v1511 = vunpack.c.l.b16 %v1299
          %v1512 = vunpack.c.h.b16 %v1299
          %v1513 = vunpack.c.l.b16 %v1300
          %v1514 = vunpack.c.h.b16 %v1300
          %v1515 = vpack.c.b16 %v1391, %v1387
          %v1516 = vpack.c.b16 %v1392, %v1388
          %v1517 = vpack.c.b16 %v1393, %v1389
          %v1518 = vpack.c.b16 %v1394, %v1390
          %v1519 = vpack.c.b16 %v1399, %v1395
          %v1520 = vpack.c.b16 %v1400, %v1396
          %v1521 = vpack.c.b16 %v1401, %v1397
          %v1522 = vpack.c.b16 %v1402, %v1398
          %v1523 = vpack.c.b16 %v1407, %v1403
          %v1524 = vpack.c.b16 %v1408, %v1404
          %v1525 = vpack.c.b16 %v1409, %v1405
          %v1526 = vpack.c.b16 %v1410, %v1406
          %v1527 = vpack.c.b16 %v1415, %v1411
          %v1528 = vpack.c.b16 %v1416, %v1412
          %v1529 = vpack.c.b16 %v1417, %v1413
          %v1530 = vpack.c.b16 %v1418, %v1414
          %v1531 = vpack.c.b16 %v1423, %v1419
          %v1532 = vpack.c.b16 %v1424, %v1420
          %v1533 = vpack.c.b16 %v1425, %v1421
          %v1534 = vpack.c.b16 %v1426, %v1422
          %v1535 = vpack.c.b16 %v1431, %v1427
          %v1536 = vpack.c.b16 %v1432, %v1428
          %v1537 = vpack.c.b16 %v1433, %v1429
          %v1538 = vpack.c.b16 %v1434, %v1430
          %v1539 = vpack.c.b16 %v1439, %v1435
          %v1540 = vpack.c.b16 %v1440, %v1436
          %v1541 = vpack.c.b16 %v1441, %v1437
          %v1542 = vpack.c.b16 %v1442, %v1438
          %v1543 = vpack.c.b16 %v1447, %v1443
          %v1544 = vpack.c.b16 %v1448, %v1444
          %v1545 = vpack.c.b16 %v1449, %v1445
          %v1546 = vpack.c.b16 %v1450, %v1446
          %v1547 = vpack.c.b16 %v1455, %v1451
          %v1548 = vpack.c.b16 %v1456, %v1452
          %v1549 = vpack.c.b16 %v1457, %v1453
          %v1550 = vpack.c.b16 %v1458, %v1454
          %v1551 = vpack.c.b16 %v1463, %v1459
          %v1552 = vpack.c.b16 %v1464, %v1460
          %v1553 = vpack.c.b16 %v1465, %v1461
          %v1554 = vpack.c.b16 %v1466, %v1462
          %v1555 = vpack.c.b16 %v1471, %v1467
          %v1556 = vpack.c.b16 %v1472, %v1468
          %v1557 = vpack.c.b16 %v1473, %v1469
          %v1558 = vpack.c.b16 %v1474, %v1470
          %v1559 = vpack.c.b16 %v1479, %v1475
          %v1560 = vpack.c.b16 %v1480, %v1476
          %v1561 = vpack.c.b16 %v1481, %v1477
          %v1562 = vpack.c.b16 %v1482, %v1478
          %v1563 = vpack.c.b16 %v1487, %v1483
          %v1564 = vpack.c.b16 %v1488, %v1484
          %v1565 = vpack.c.b16 %v1489, %v1485
          %v1566 = vpack.c.b16 %v1490, %v1486
          %v1567 = vpack.c.b16 %v1495, %v1491
          %v1568 = vpack.c.b16 %v1496, %v1492
          %v1569 = vpack.c.b16 %v1497, %v1493
          %v1570 = vpack.c.b16 %v1498, %v1494
          %v1571 = vpack.c.b16 %v1503, %v1499
          %v1572 = vpack.c.b16 %v1504, %v1500
          %v1573 = vpack.c.b16 %v1505, %v1501
          %v1574 = vpack.c.b16 %v1506, %v1502
          %v1575 = vpack.c.b16 %v1511, %v1507
          %v1576 = vpack.c.b16 %v1512, %v1508
          %v1577 = vpack.c.b16 %v1513, %v1509
          %v1578 = vpack.c.b16 %v1514, %v1510
          %1643 = vmatprep.subr.bf16.mxu0 %v1516
          %1644 = vmatpush1.bf16.msra.mxu0 %v1515
          %1645 = vmatprep.subr.bf16.mxu0 %v1520
          %1646 = vmatpush1.bf16.msra.mxu0 %v1519
          %1647 = vmatprep.subr.bf16.mxu0 %v1524
          %1648 = vmatpush1.bf16.msra.mxu0 %v1523
          %1649 = vmatprep.subr.bf16.mxu0 %v1528
          %1650 = vmatpush1.bf16.msra.mxu0 %v1527
          %1651 = vmatprep.subr.bf16.mxu0 %v1532
          %1652 = vmatpush1.bf16.msra.mxu0 %v1531
          %1653 = vmatprep.subr.bf16.mxu0 %v1536
          %1654 = vmatpush1.bf16.msra.mxu0 %v1535
          %1655 = vmatprep.subr.bf16.mxu0 %v1540
          %1656 = vmatpush1.bf16.msra.mxu0 %v1539
          %1657 = vmatprep.subr.bf16.mxu0 %v1544
          %1658 = vmatpush1.bf16.msra.mxu0 %v1543
          %1659 = vmatprep.subr.bf16.mxu0 %v1548
          %1660 = vmatpush1.bf16.msra.mxu0 %v1547
          %1661 = vmatprep.subr.bf16.mxu0 %v1552
          %1662 = vmatpush1.bf16.msra.mxu0 %v1551
          %1663 = vmatprep.subr.bf16.mxu0 %v1556
          %1664 = vmatpush1.bf16.msra.mxu0 %v1555
          %1665 = vmatprep.subr.bf16.mxu0 %v1560
          %1666 = vmatpush1.bf16.msra.mxu0 %v1559
          %1667 = vmatprep.subr.bf16.mxu0 %v1564
          %1668 = vmatpush1.bf16.msra.mxu0 %v1563
          %1669 = vmatprep.subr.bf16.mxu0 %v1568
          %1670 = vmatpush1.bf16.msra.mxu0 %v1567
          %1671 = vmatprep.subr.bf16.mxu0 %v1572
          %1672 = vmatpush1.bf16.msra.mxu0 %v1571
          %1673 = vmatprep.subr.bf16.mxu0 %v1576
          %1674 = vmatpush1.bf16.msra.mxu0 %v1575
          %1675 = vmatprep.mubr.bf16.mxu0 %v1234
          %1676 = vmatmul.mubr.bf16.gmra.mrb[0].mxu0 %v1233
          %v1677 = vpop.f32.mrb[0].mxu0
          %v1678 = vadd.f32 %v1306, %v1677
          %v1679 = vpop.f32.mrb[0].mxu0
          %v1680 = vadd.f32 %v1310, %v1679
          %v1681 = vpop.f32.mrb[0].mxu0
          %v1682 = vadd.f32 %v1306, %v1681
          %v1683 = vpop.f32.mrb[0].mxu0
          %v1684 = vadd.f32 %v1310, %v1683
          %1685 = vmatprep.mubr.bf16.mxu0 %v1236
          %1686 = vmatmul.mubr.bf16.gmra.mrb[0].mxu0 %v1235
          %v1687 = vpop.f32.mrb[0].mxu0
          %v1688 = vadd.f32 %v1306, %v1687
          %v1689 = vpop.f32.mrb[0].mxu0
          %v1690 = vadd.f32 %v1310, %v1689
          %v1691 = vpop.f32.mrb[0].mxu0
          %v1692 = vadd.f32 %v1306, %v1691
          %v1693 = vpop.f32.mrb[0].mxu0
          %v1694 = vadd.f32 %v1310, %v1693
          %1695 = vdwg.mxu0
          %1696 = vmatprep.subr.bf16.mxu0 %v1518
          %1697 = vmatpush1.bf16.msra.mxu0 %v1517
          %1698 = vmatprep.subr.bf16.mxu0 %v1522
          %1699 = vmatpush1.bf16.msra.mxu0 %v1521
          %1700 = vmatprep.subr.bf16.mxu0 %v1526
          %1701 = vmatpush1.bf16.msra.mxu0 %v1525
          %1702 = vmatprep.subr.bf16.mxu0 %v1530
          %1703 = vmatpush1.bf16.msra.mxu0 %v1529
          %1704 = vmatprep.subr.bf16.mxu0 %v1534
          %1705 = vmatpush1.bf16.msra.mxu0 %v1533
          %1706 = vmatprep.subr.bf16.mxu0 %v1538
          %1707 = vmatpush1.bf16.msra.mxu0 %v1537
          %1708 = vmatprep.subr.bf16.mxu0 %v1542
          %1709 = vmatpush1.bf16.msra.mxu0 %v1541
          %1710 = vmatprep.subr.bf16.mxu0 %v1546
          %1711 = vmatpush1.bf16.msra.mxu0 %v1545
          %1712 = vmatprep.subr.bf16.mxu0 %v1550
          %1713 = vmatpush1.bf16.msra.mxu0 %v1549
          %1714 = vmatprep.subr.bf16.mxu0 %v1554
          %1715 = vmatpush1.bf16.msra.mxu0 %v1553
          %1716 = vmatprep.subr.bf16.mxu0 %v1558
          %1717 = vmatpush1.bf16.msra.mxu0 %v1557
          %1718 = vmatprep.subr.bf16.mxu0 %v1562
          %1719 = vmatpush1.bf16.msra.mxu0 %v1561
          %1720 = vmatprep.subr.bf16.mxu0 %v1566
          %1721 = vmatpush1.bf16.msra.mxu0 %v1565
          %1722 = vmatprep.subr.bf16.mxu0 %v1570
          %1723 = vmatpush1.bf16.msra.mxu0 %v1569
          %1724 = vmatprep.subr.bf16.mxu0 %v1574
          %1725 = vmatpush1.bf16.msra.mxu0 %v1573
          %1726 = vmatprep.subr.bf16.mxu0 %v1578
          %1727 = vmatpush1.bf16.msra.mxu0 %v1577
          %1728 = vmatprep.mubr.bf16.mxu0 %v1234
          %1729 = vmatmul.mubr.bf16.gmra.mrb[0].mxu0 %v1233
          %v1730 = vpop.f32.mrb[0].mxu0
          %v1731 = vadd.f32 %v1314, %v1730
          %v1732 = vpop.f32.mrb[0].mxu0
          %v1733 = vadd.f32 %v1318, %v1732
          %v1734 = vpop.f32.mrb[0].mxu0
          %v1735 = vadd.f32 %v1314, %v1734
          %v1736 = vpop.f32.mrb[0].mxu0
          %v1737 = vadd.f32 %v1318, %v1736
          %1738 = vmatprep.mubr.bf16.mxu0 %v1236
          %1739 = vmatmul.mubr.bf16.gmra.mrb[0].mxu0 %v1235
          %v1740 = vpop.f32.mrb[0].mxu0
          %v1741 = vadd.f32 %v1314, %v1740
          %v1742 = vpop.f32.mrb[0].mxu0
          %v1743 = vadd.f32 %v1318, %v1742
          %v1744 = vpop.f32.mrb[0].mxu0
          %v1745 = vadd.f32 %v1314, %v1744
          %v1746 = vpop.f32.mrb[0].mxu0
          %v1747 = vadd.f32 %v1318, %v1746
          %1748 = vdwg.mxu0
          %v1749 = vmax.f32 %v1678, 0.0
          %v1750 = vmax.f32 %v1680, 0.0
          %v1751 = vmax.f32 %v1731, 0.0
          %v1752 = vmax.f32 %v1733, 0.0
          %v1753 = vmax.f32 %v1682, 0.0
          %v1754 = vmax.f32 %v1684, 0.0
          %v1755 = vmax.f32 %v1735, 0.0
          %v1756 = vmax.f32 %v1737, 0.0
          %v1757 = vmax.f32 %v1688, 0.0
          %v1758 = vmax.f32 %v1690, 0.0
          %v1759 = vmax.f32 %v1741, 0.0
          %v1760 = vmax.f32 %v1743, 0.0
          %v1761 = vmax.f32 %v1692, 0.0
          %v1762 = vmax.f32 %v1694, 0.0
          %v1763 = vmax.f32 %v1745, 0.0
          %v1764 = vmax.f32 %v1747, 0.0
          %1765 = vst [vmem:[#allocation2] sm:$0xff] %v1749
          %1766 = vst [vmem:[#allocation2 + $0x8] sm:$0xff] %v1750
          %1767 = vst [vmem:[#allocation2 + $0x10] sm:$0xff] %v1751
          %1768 = vst [vmem:[#allocation2 + $0x18] sm:$0xff] %v1752
          %1769 = vst [vmem:[#allocation2 + $0x20] sm:$0xff] %v1753
          %1770 = vst [vmem:[#allocation2 + $0x28] sm:$0xff] %v1754
          %1771 = vst [vmem:[#allocation2 + $0x30] sm:$0xff] %v1755
          %1772 = vst [vmem:[#allocation2 + $0x38] sm:$0xff] %v1756
          %1773 = vst [vmem:[#allocation2 + $0x40] sm:$0xff] %v1757
          %1774 = vst [vmem:[#allocation2 + $0x48] sm:$0xff] %v1758
          %1775 = vst [vmem:[#allocation2 + $0x50] sm:$0xff] %v1759
          %1776 = vst [vmem:[#allocation2 + $0x58] sm:$0xff] %v1760
          %1777 = vst [vmem:[#allocation2 + $0x60] sm:$0xff] %v1761
          %1778 = vst [vmem:[#allocation2 + $0x68] sm:$0xff] %v1762
          %1779 = vst [vmem:[#allocation2 + $0x70] sm:$0xff] %v1763
          %1780 = vst [vmem:[#allocation2 + $0x78] sm:$0xff] %v1764
          %v1781 = vld [vmem:[%s10] sm:$0x1]
          %1782 = vst [vmem:[#allocation4] sm:$0x1] %v1781
          %1783 = vst [vmem:[#allocation4 + $0x1] sm:$0x1] %v1781
        $region106: #{pointnetv2_linear_forward.5} parent=97 // pred_fallthru
          _
        %v1784 = vld [vmem:[#allocation2] sm:$0xff]
        %v1785 = vld [vmem:[#allocation2 + $0x8] sm:$0xff]
        %v1786 = vld [vmem:[#allocation2 + $0x10] sm:$0xff]
        %v1787 = vld [vmem:[#allocation2 + $0x18] sm:$0xff]
        %v1788 = vld [vmem:[#allocation2 + $0x20] sm:$0xff]
        %v1789 = vld [vmem:[#allocation2 + $0x28] sm:$0xff]
        %v1790 = vld [vmem:[#allocation2 + $0x30] sm:$0xff]
        %v1791 = vld [vmem:[#allocation2 + $0x38] sm:$0xff]
        %v1792 = vld [vmem:[#allocation2 + $0x40] sm:$0xff]
        %v1793 = vld [vmem:[#allocation2 + $0x48] sm:$0xff]
        %v1794 = vld [vmem:[#allocation2 + $0x50] sm:$0xff]
        %v1795 = vld [vmem:[#allocation2 + $0x58] sm:$0xff]
        %v1796 = vld [vmem:[#allocation2 + $0x60] sm:$0xff]
        %v1797 = vld [vmem:[#allocation2 + $0x68] sm:$0xff]
        %v1798 = vld [vmem:[#allocation2 + $0x70] sm:$0xff]
        %v1799 = vld [vmem:[#allocation2 + $0x78] sm:$0xff]
        %v1800 = vpack.c.bf16 %v1788, %v1784
        %v1801 = vpack.c.bf16 %v1789, %v1785
        %v1802 = vpack.c.bf16 %v1790, %v1786
        %v1803 = vpack.c.bf16 %v1791, %v1787
        %v1804 = vpack.c.bf16 %v1796, %v1792
        %v1805 = vpack.c.bf16 %v1797, %v1793
        %v1806 = vpack.c.bf16 %v1798, %v1794
        %v1807 = vpack.c.bf16 %v1799, %v1795
        %v1808 = vld [vmem:[%s689] sm:$0xff]
        %v1809 = vld [vmem:[%s689 + $0x8] sm:$0xff]
        %v1810 = vld [vmem:[%s689 + $0x10] sm:$0xff]
        %v1811 = vld [vmem:[%s689 + $0x18] sm:$0xff]
        %v1812 = vld [vmem:[%s689 + $0x20] sm:$0xff]
        %v1813 = vld [vmem:[%s689 + $0x28] sm:$0xff]
        %v1814 = vld [vmem:[%s689 + $0x30] sm:$0xff]
        %v1815 = vld [vmem:[%s689 + $0x38] sm:$0xff]
        %v1816 = vld [vmem:[%s689 + $0x40] sm:$0xff]
        %v1817 = vld [vmem:[%s689 + $0x48] sm:$0xff]
        %v1818 = vld [vmem:[%s689 + $0x50] sm:$0xff]
        %v1819 = vld [vmem:[%s689 + $0x58] sm:$0xff]
        %v1820 = vld [vmem:[%s689 + $0x60] sm:$0xff]
        %v1821 = vld [vmem:[%s689 + $0x68] sm:$0xff]
        %v1822 = vld [vmem:[%s689 + $0x70] sm:$0xff]
        %v1823 = vld [vmem:[%s689 + $0x78] sm:$0xff]
        %v1824 = vld [vmem:[%s689 + $0x80] sm:$0xff]
        %v1825 = vld [vmem:[%s689 + $0x88] sm:$0xff]
        %v1826 = vld [vmem:[%s689 + $0x90] sm:$0xff]
        %v1827 = vld [vmem:[%s689 + $0x98] sm:$0xff]
        %v1828 = vld [vmem:[%s689 + $0xa0] sm:$0xff]
        %v1829 = vld [vmem:[%s689 + $0xa8] sm:$0xff]
        %v1830 = vld [vmem:[%s689 + $0xb0] sm:$0xff]
        %v1831 = vld [vmem:[%s689 + $0xb8] sm:$0xff]
        %v1832 = vld [vmem:[%s689 + $0xc0] sm:$0xff]
        %v1833 = vld [vmem:[%s689 + $0xc8] sm:$0xff]
        %v1834 = vld [vmem:[%s689 + $0xd0] sm:$0xff]
        %v1835 = vld [vmem:[%s689 + $0xd8] sm:$0xff]
        %v1836 = vld [vmem:[%s689 + $0xe0] sm:$0xff]
        %v1837 = vld [vmem:[%s689 + $0xe8] sm:$0xff]
        %v1838 = vld [vmem:[%s689 + $0xf0] sm:$0xff]
        %v1839 = vld [vmem:[%s689 + $0xf8] sm:$0xff]
        %v1840 = vld [vmem:[%s689 + $0x100] sm:$0xff]
        %v1841 = vld [vmem:[%s689 + $0x108] sm:$0xff]
        %v1842 = vld [vmem:[%s689 + $0x110] sm:$0xff]
        %v1843 = vld [vmem:[%s689 + $0x118] sm:$0xff]
        %v1844 = vld [vmem:[%s689 + $0x120] sm:$0xff]
        %v1845 = vld [vmem:[%s689 + $0x128] sm:$0xff]
        %v1846 = vld [vmem:[%s689 + $0x130] sm:$0xff]
        %v1847 = vld [vmem:[%s689 + $0x138] sm:$0xff]
        %v1848 = vld [vmem:[%s689 + $0x140] sm:$0xff]
        %v1849 = vld [vmem:[%s689 + $0x148] sm:$0xff]
        %v1850 = vld [vmem:[%s689 + $0x150] sm:$0xff]
        %v1851 = vld [vmem:[%s689 + $0x158] sm:$0xff]
        %v1852 = vld [vmem:[%s689 + $0x160] sm:$0xff]
        %v1853 = vld [vmem:[%s689 + $0x168] sm:$0xff]
        %v1854 = vld [vmem:[%s689 + $0x170] sm:$0xff]
        %v1855 = vld [vmem:[%s689 + $0x178] sm:$0xff]
        %v1856 = vld [vmem:[%s689 + $0x180] sm:$0xff]
        %v1857 = vld [vmem:[%s689 + $0x188] sm:$0xff]
        %v1858 = vld [vmem:[%s689 + $0x190] sm:$0xff]
        %v1859 = vld [vmem:[%s689 + $0x198] sm:$0xff]
        %v1860 = vld [vmem:[%s689 + $0x1a0] sm:$0xff]
        %v1861 = vld [vmem:[%s689 + $0x1a8] sm:$0xff]
        %v1862 = vld [vmem:[%s689 + $0x1b0] sm:$0xff]
        %v1863 = vld [vmem:[%s689 + $0x1b8] sm:$0xff]
        %v1864 = vld [vmem:[%s689 + $0x1c0] sm:$0xff]
        %v1865 = vld [vmem:[%s689 + $0x1c8] sm:$0xff]
        %v1866 = vld [vmem:[%s689 + $0x1d0] sm:$0xff]
        %v1867 = vld [vmem:[%s689 + $0x1d8] sm:$0xff]
        %v1868 = vld [vmem:[%s689 + $0x1e0] sm:$0xff]
        %v1869 = vld [vmem:[%s689 + $0x1e8] sm:$0xff]
        %v1870 = vld [vmem:[%s689 + $0x1f0] sm:$0xff]
        %v1871 = vld [vmem:[%s689 + $0x1f8] sm:$0xff]
        %v1872 = vld [vmem:[%s758] sm:$0x3]
        %v1874 = vlaneseq
        %v1875 = vshrl.u32 %v1874, 7
        %v1876 = vsub.s32 0, %v1875
        %v1877 = vrot.slane %v1872, %v1876
        %v1878 = vlaneseq
        %v1879 = vshrl.u32 %v1878, 7
        %v1880 = vsub.s32 1, %v1879
        %v1881 = vrot.slane %v1872, %v1880
        %v1948 = vunpack.c.l.b16 %v1808
        %v1949 = vunpack.c.h.b16 %v1808
        %v1950 = vunpack.c.l.b16 %v1809
        %v1951 = vunpack.c.h.b16 %v1809
        %v1952 = vunpack.c.l.b16 %v1810
        %v1953 = vunpack.c.h.b16 %v1810
        %v1954 = vunpack.c.l.b16 %v1811
        %v1955 = vunpack.c.h.b16 %v1811
        %v1956 = vunpack.c.l.b16 %v1812
        %v1957 = vunpack.c.h.b16 %v1812
        %v1958 = vunpack.c.l.b16 %v1813
        %v1959 = vunpack.c.h.b16 %v1813
        %v1960 = vunpack.c.l.b16 %v1814
        %v1961 = vunpack.c.h.b16 %v1814
        %v1962 = vunpack.c.l.b16 %v1815
        %v1963 = vunpack.c.h.b16 %v1815
        %v1964 = vunpack.c.l.b16 %v1816
        %v1965 = vunpack.c.h.b16 %v1816
        %v1966 = vunpack.c.l.b16 %v1817
        %v1967 = vunpack.c.h.b16 %v1817
        %v1968 = vunpack.c.l.b16 %v1818
        %v1969 = vunpack.c.h.b16 %v1818
        %v1970 = vunpack.c.l.b16 %v1819
        %v1971 = vunpack.c.h.b16 %v1819
        %v1972 = vunpack.c.l.b16 %v1820
        %v1973 = vunpack.c.h.b16 %v1820
        %v1974 = vunpack.c.l.b16 %v1821
        %v1975 = vunpack.c.h.b16 %v1821
        %v1976 = vunpack.c.l.b16 %v1822
        %v1977 = vunpack.c.h.b16 %v1822
        %v1978 = vunpack.c.l.b16 %v1823
        %v1979 = vunpack.c.h.b16 %v1823
        %v1980 = vunpack.c.l.b16 %v1824
        %v1981 = vunpack.c.h.b16 %v1824
        %v1982 = vunpack.c.l.b16 %v1825
        %v1983 = vunpack.c.h.b16 %v1825
        %v1984 = vunpack.c.l.b16 %v1826
        %v1985 = vunpack.c.h.b16 %v1826
        %v1986 = vunpack.c.l.b16 %v1827
        %v1987 = vunpack.c.h.b16 %v1827
        %v1988 = vunpack.c.l.b16 %v1828
        %v1989 = vunpack.c.h.b16 %v1828
        %v1990 = vunpack.c.l.b16 %v1829
        %v1991 = vunpack.c.h.b16 %v1829
        %v1992 = vunpack.c.l.b16 %v1830
        %v1993 = vunpack.c.h.b16 %v1830
        %v1994 = vunpack.c.l.b16 %v1831
        %v1995 = vunpack.c.h.b16 %v1831
        %v1996 = vunpack.c.l.b16 %v1832
        %v1997 = vunpack.c.h.b16 %v1832
        %v1998 = vunpack.c.l.b16 %v1833
        %v1999 = vunpack.c.h.b16 %v1833
        %v2000 = vunpack.c.l.b16 %v1834
        %v2001 = vunpack.c.h.b16 %v1834
        %v2002 = vunpack.c.l.b16 %v1835
        %v2003 = vunpack.c.h.b16 %v1835
        %v2004 = vunpack.c.l.b16 %v1836
        %v2005 = vunpack.c.h.b16 %v1836
        %v2006 = vunpack.c.l.b16 %v1837
        %v2007 = vunpack.c.h.b16 %v1837
        %v2008 = vunpack.c.l.b16 %v1838
        %v2009 = vunpack.c.h.b16 %v1838
        %v2010 = vunpack.c.l.b16 %v1839
        %v2011 = vunpack.c.h.b16 %v1839
        %v2012 = vunpack.c.l.b16 %v1840
        %v2013 = vunpack.c.h.b16 %v1840
        %v2014 = vunpack.c.l.b16 %v1841
        %v2015 = vunpack.c.h.b16 %v1841
        %v2016 = vunpack.c.l.b16 %v1842
        %v2017 = vunpack.c.h.b16 %v1842
        %v2018 = vunpack.c.l.b16 %v1843
        %v2019 = vunpack.c.h.b16 %v1843
        %v2020 = vunpack.c.l.b16 %v1844
        %v2021 = vunpack.c.h.b16 %v1844
        %v2022 = vunpack.c.l.b16 %v1845
        %v2023 = vunpack.c.h.b16 %v1845
        %v2024 = vunpack.c.l.b16 %v1846
        %v2025 = vunpack.c.h.b16 %v1846
        %v2026 = vunpack.c.l.b16 %v1847
        %v2027 = vunpack.c.h.b16 %v1847
        %v2028 = vunpack.c.l.b16 %v1848
        %v2029 = vunpack.c.h.b16 %v1848
        %v2030 = vunpack.c.l.b16 %v1849
        %v2031 = vunpack.c.h.b16 %v1849
        %v2032 = vunpack.c.l.b16 %v1850
        %v2033 = vunpack.c.h.b16 %v1850
        %v2034 = vunpack.c.l.b16 %v1851
        %v2035 = vunpack.c.h.b16 %v1851
        %v2036 = vunpack.c.l.b16 %v1852
        %v2037 = vunpack.c.h.b16 %v1852
        %v2038 = vunpack.c.l.b16 %v1853
        %v2039 = vunpack.c.h.b16 %v1853
        %v2040 = vunpack.c.l.b16 %v1854
        %v2041 = vunpack.c.h.b16 %v1854
        %v2042 = vunpack.c.l.b16 %v1855
        %v2043 = vunpack.c.h.b16 %v1855
        %v2044 = vunpack.c.l.b16 %v1856
        %v2045 = vunpack.c.h.b16 %v1856
        %v2046 = vunpack.c.l.b16 %v1857
        %v2047 = vunpack.c.h.b16 %v1857
        %v2048 = vunpack.c.l.b16 %v1858
        %v2049 = vunpack.c.h.b16 %v1858
        %v2050 = vunpack.c.l.b16 %v1859
        %v2051 = vunpack.c.h.b16 %v1859
        %v2052 = vunpack.c.l.b16 %v1860
        %v2053 = vunpack.c.h.b16 %v1860
        %v2054 = vunpack.c.l.b16 %v1861
        %v2055 = vunpack.c.h.b16 %v1861
        %v2056 = vunpack.c.l.b16 %v1862
        %v2057 = vunpack.c.h.b16 %v1862
        %v2058 = vunpack.c.l.b16 %v1863
        %v2059 = vunpack.c.h.b16 %v1863
        %v2060 = vunpack.c.l.b16 %v1864
        %v2061 = vunpack.c.h.b16 %v1864
        %v2062 = vunpack.c.l.b16 %v1865
        %v2063 = vunpack.c.h.b16 %v1865
        %v2064 = vunpack.c.l.b16 %v1866
        %v2065 = vunpack.c.h.b16 %v1866
        %v2066 = vunpack.c.l.b16 %v1867
        %v2067 = vunpack.c.h.b16 %v1867
        %v2068 = vunpack.c.l.b16 %v1868
        %v2069 = vunpack.c.h.b16 %v1868
        %v2070 = vunpack.c.l.b16 %v1869
        %v2071 = vunpack.c.h.b16 %v1869
        %v2072 = vunpack.c.l.b16 %v1870
        %v2073 = vunpack.c.h.b16 %v1870
        %v2074 = vunpack.c.l.b16 %v1871
        %v2075 = vunpack.c.h.b16 %v1871
        %v2076 = vpack.c.b16 %v1950, %v1948
        %v2077 = vpack.c.b16 %v1951, %v1949
        %v2078 = vpack.c.b16 %v1954, %v1952
        %v2079 = vpack.c.b16 %v1955, %v1953
        %v2080 = vpack.c.b16 %v1958, %v1956
        %v2081 = vpack.c.b16 %v1959, %v1957
        %v2082 = vpack.c.b16 %v1962, %v1960
        %v2083 = vpack.c.b16 %v1963, %v1961
        %v2084 = vpack.c.b16 %v1966, %v1964
        %v2085 = vpack.c.b16 %v1967, %v1965
        %v2086 = vpack.c.b16 %v1970, %v1968
        %v2087 = vpack.c.b16 %v1971, %v1969
        %v2088 = vpack.c.b16 %v1974, %v1972
        %v2089 = vpack.c.b16 %v1975, %v1973
        %v2090 = vpack.c.b16 %v1978, %v1976
        %v2091 = vpack.c.b16 %v1979, %v1977
        %v2092 = vpack.c.b16 %v1982, %v1980
        %v2093 = vpack.c.b16 %v1983, %v1981
        %v2094 = vpack.c.b16 %v1986, %v1984
        %v2095 = vpack.c.b16 %v1987, %v1985
        %v2096 = vpack.c.b16 %v1990, %v1988
        %v2097 = vpack.c.b16 %v1991, %v1989
        %v2098 = vpack.c.b16 %v1994, %v1992
        %v2099 = vpack.c.b16 %v1995, %v1993
        %v2100 = vpack.c.b16 %v1998, %v1996
        %v2101 = vpack.c.b16 %v1999, %v1997
        %v2102 = vpack.c.b16 %v2002, %v2000
        %v2103 = vpack.c.b16 %v2003, %v2001
        %v2104 = vpack.c.b16 %v2006, %v2004
        %v2105 = vpack.c.b16 %v2007, %v2005
        %v2106 = vpack.c.b16 %v2010, %v2008
        %v2107 = vpack.c.b16 %v2011, %v2009
        %v2108 = vpack.c.b16 %v2014, %v2012
        %v2109 = vpack.c.b16 %v2015, %v2013
        %v2110 = vpack.c.b16 %v2018, %v2016
        %v2111 = vpack.c.b16 %v2019, %v2017
        %v2112 = vpack.c.b16 %v2022, %v2020
        %v2113 = vpack.c.b16 %v2023, %v2021
        %v2114 = vpack.c.b16 %v2026, %v2024
        %v2115 = vpack.c.b16 %v2027, %v2025
        %v2116 = vpack.c.b16 %v2030, %v2028
        %v2117 = vpack.c.b16 %v2031, %v2029
        %v2118 = vpack.c.b16 %v2034, %v2032
        %v2119 = vpack.c.b16 %v2035, %v2033
        %v2120 = vpack.c.b16 %v2038, %v2036
        %v2121 = vpack.c.b16 %v2039, %v2037
        %v2122 = vpack.c.b16 %v2042, %v2040
        %v2123 = vpack.c.b16 %v2043, %v2041
        %v2124 = vpack.c.b16 %v2046, %v2044
        %v2125 = vpack.c.b16 %v2047, %v2045
        %v2126 = vpack.c.b16 %v2050, %v2048
        %v2127 = vpack.c.b16 %v2051, %v2049
        %v2128 = vpack.c.b16 %v2054, %v2052
        %v2129 = vpack.c.b16 %v2055, %v2053
        %v2130 = vpack.c.b16 %v2058, %v2056
        %v2131 = vpack.c.b16 %v2059, %v2057
        %v2132 = vpack.c.b16 %v2062, %v2060
        %v2133 = vpack.c.b16 %v2063, %v2061
        %v2134 = vpack.c.b16 %v2066, %v2064
        %v2135 = vpack.c.b16 %v2067, %v2065
        %v2136 = vpack.c.b16 %v2070, %v2068
        %v2137 = vpack.c.b16 %v2071, %v2069
        %v2138 = vpack.c.b16 %v2074, %v2072
        %v2139 = vpack.c.b16 %v2075, %v2073
        %2204 = vmatprep.subr.bf16.mxu0 %v2077
        %2205 = vmatpush1.bf16.msra.mxu0 %v2076
        %2206 = vmatprep.subr.bf16.mxu0 %v2079
        %2207 = vmatpush1.bf16.msra.mxu0 %v2078
        %2208 = vmatprep.subr.bf16.mxu0 %v2081
        %2209 = vmatpush1.bf16.msra.mxu0 %v2080
        %2210 = vmatprep.subr.bf16.mxu0 %v2083
        %2211 = vmatpush1.bf16.msra.mxu0 %v2082
        %2212 = vmatprep.subr.bf16.mxu0 %v2085
        %2213 = vmatpush1.bf16.msra.mxu0 %v2084
        %2214 = vmatprep.subr.bf16.mxu0 %v2087
        %2215 = vmatpush1.bf16.msra.mxu0 %v2086
        %2216 = vmatprep.subr.bf16.mxu0 %v2089
        %2217 = vmatpush1.bf16.msra.mxu0 %v2088
        %2218 = vmatprep.subr.bf16.mxu0 %v2091
        %2219 = vmatpush1.bf16.msra.mxu0 %v2090
        %2220 = vmatprep.subr.bf16.mxu0 %v2093
        %2221 = vmatpush1.bf16.msra.mxu0 %v2092
        %2222 = vmatprep.subr.bf16.mxu0 %v2095
        %2223 = vmatpush1.bf16.msra.mxu0 %v2094
        %2224 = vmatprep.subr.bf16.mxu0 %v2097
        %2225 = vmatpush1.bf16.msra.mxu0 %v2096
        %2226 = vmatprep.subr.bf16.mxu0 %v2099
        %2227 = vmatpush1.bf16.msra.mxu0 %v2098
        %2228 = vmatprep.subr.bf16.mxu0 %v2101
        %2229 = vmatpush1.bf16.msra.mxu0 %v2100
        %2230 = vmatprep.subr.bf16.mxu0 %v2103
        %2231 = vmatpush1.bf16.msra.mxu0 %v2102
        %2232 = vmatprep.subr.bf16.mxu0 %v2105
        %2233 = vmatpush1.bf16.msra.mxu0 %v2104
        %2234 = vmatprep.subr.bf16.mxu0 %v2107
        %2235 = vmatpush1.bf16.msra.mxu0 %v2106
        %2236 = vmatprep.mubr.bf16.mxu0 %v1801
        %2237 = vmatmul.mubr.bf16.gmra.mrb[0].mxu0 %v1800
        %v2238 = vpop.f32.mrb[0].mxu0
        %v2239 = vadd.f32 %v1877, %v2238
        %v2240 = vpop.f32.mrb[0].mxu0
        %v2241 = vadd.f32 %v1881, %v2240
        %v2242 = vpop.f32.mrb[0].mxu0
        %v2243 = vadd.f32 %v1877, %v2242
        %v2244 = vpop.f32.mrb[0].mxu0
        %v2245 = vadd.f32 %v1881, %v2244
        %2246 = vmatprep.mubr.bf16.mxu0 %v1805
        %2247 = vmatmul.mubr.bf16.gmra.mrb[0].mxu0 %v1804
        %v2248 = vpop.f32.mrb[0].mxu0
        %v2249 = vadd.f32 %v1877, %v2248
        %v2250 = vpop.f32.mrb[0].mxu0
        %v2251 = vadd.f32 %v1881, %v2250
        %v2252 = vpop.f32.mrb[0].mxu0
        %v2253 = vadd.f32 %v1877, %v2252
        %v2254 = vpop.f32.mrb[0].mxu0
        %v2255 = vadd.f32 %v1881, %v2254
        %2256 = vdwg.mxu0
        %2257 = vmatprep.subr.bf16.mxu0 %v2109
        %2258 = vmatpush1.bf16.msra.mxu0 %v2108
        %2259 = vmatprep.subr.bf16.mxu0 %v2111
        %2260 = vmatpush1.bf16.msra.mxu0 %v2110
        %2261 = vmatprep.subr.bf16.mxu0 %v2113
        %2262 = vmatpush1.bf16.msra.mxu0 %v2112
        %2263 = vmatprep.subr.bf16.mxu0 %v2115
        %2264 = vmatpush1.bf16.msra.mxu0 %v2114
        %2265 = vmatprep.subr.bf16.mxu0 %v2117
        %2266 = vmatpush1.bf16.msra.mxu0 %v2116
        %2267 = vmatprep.subr.bf16.mxu0 %v2119
        %2268 = vmatpush1.bf16.msra.mxu0 %v2118
        %2269 = vmatprep.subr.bf16.mxu0 %v2121
        %2270 = vmatpush1.bf16.msra.mxu0 %v2120
        %2271 = vmatprep.subr.bf16.mxu0 %v2123
        %2272 = vmatpush1.bf16.msra.mxu0 %v2122
        %2273 = vmatprep.subr.bf16.mxu0 %v2125
        %2274 = vmatpush1.bf16.msra.mxu0 %v2124
        %2275 = vmatprep.subr.bf16.mxu0 %v2127
        %2276 = vmatpush1.bf16.msra.mxu0 %v2126
        %2277 = vmatprep.subr.bf16.mxu0 %v2129
        %2278 = vmatpush1.bf16.msra.mxu0 %v2128
        %2279 = vmatprep.subr.bf16.mxu0 %v2131
        %2280 = vmatpush1.bf16.msra.mxu0 %v2130
        %2281 = vmatprep.subr.bf16.mxu0 %v2133
        %2282 = vmatpush1.bf16.msra.mxu0 %v2132
        %2283 = vmatprep.subr.bf16.mxu0 %v2135
        %2284 = vmatpush1.bf16.msra.mxu0 %v2134
        %2285 = vmatprep.subr.bf16.mxu0 %v2137
        %2286 = vmatpush1.bf16.msra.mxu0 %v2136
        %2287 = vmatprep.subr.bf16.mxu0 %v2139
        %2288 = vmatpush1.bf16.msra.mxu0 %v2138
        %2289 = vmatprep.mubr.bf16.mxu0 %v1803
        %2290 = vmatmul.mubr.bf16.gmra.mrb[0].mxu0 %v1802
        %v2291 = vpop.f32.mrb[0].mxu0
        %v2292 = vadd.f32 %v2239, %v2291
        %v2293 = vpop.f32.mrb[0].mxu0
        %v2294 = vadd.f32 %v2241, %v2293
        %v2295 = vpop.f32.mrb[0].mxu0
        %v2296 = vadd.f32 %v2243, %v2295
        %v2297 = vpop.f32.mrb[0].mxu0
        %v2298 = vadd.f32 %v2245, %v2297
        %2299 = vmatprep.mubr.bf16.mxu0 %v1807
        %2300 = vmatmul.mubr.bf16.gmra.mrb[0].mxu0 %v1806
        %v2301 = vpop.f32.mrb[0].mxu0
        %v2302 = vadd.f32 %v2249, %v2301
        %v2303 = vpop.f32.mrb[0].mxu0
        %v2304 = vadd.f32 %v2251, %v2303
        %v2305 = vpop.f32.mrb[0].mxu0
        %v2306 = vadd.f32 %v2253, %v2305
        %v2307 = vpop.f32.mrb[0].mxu0
        %v2308 = vadd.f32 %v2255, %v2307
        %2309 = vdwg.mxu0
        %v2310 = vmax.f32 %v2292, 0.0
        %v2311 = vmax.f32 %v2294, 0.0
        %v2312 = vmax.f32 %v2296, 0.0
        %v2313 = vmax.f32 %v2298, 0.0
        %v2314 = vmax.f32 %v2302, 0.0
        %v2315 = vmax.f32 %v2304, 0.0
        %v2316 = vmax.f32 %v2306, 0.0
        %v2317 = vmax.f32 %v2308, 0.0
        %v2318 = vmax.f32 %v2310, %v2312
        %v2319 = vrot.slane %v2318, 4
        %v2320 = vmax.f32 %v2318, %v2319
        %v2321 = vrot.slane %v2320, 2
        %v2322 = vmax.f32 %v2320, %v2321
        %v2323 = vrot.slane %v2322, 1
        %v2324 = vmax.f32 %v2322, %v2323
        %v2325 = vmax.f32 %v2311, %v2313
        %v2326 = vrot.slane %v2325, 4
        %v2327 = vmax.f32 %v2325, %v2326
        %v2328 = vrot.slane %v2327, 2
        %v2329 = vmax.f32 %v2327, %v2328
        %v2330 = vrot.slane %v2329, 1
        %v2331 = vmax.f32 %v2329, %v2330
        %v2332 = vmax.f32 %v2314, %v2316
        %v2333 = vrot.slane %v2332, 4
        %v2334 = vmax.f32 %v2332, %v2333
        %v2335 = vrot.slane %v2334, 2
        %v2336 = vmax.f32 %v2334, %v2335
        %v2337 = vrot.slane %v2336, 1
        %v2338 = vmax.f32 %v2336, %v2337
        %v2339 = vmax.f32 %v2315, %v2317
        %v2340 = vrot.slane %v2339, 4
        %v2341 = vmax.f32 %v2339, %v2340
        %v2342 = vrot.slane %v2341, 2
        %v2343 = vmax.f32 %v2341, %v2342
        %v2344 = vrot.slane %v2343, 1
        %v2345 = vmax.f32 %v2343, %v2344
        %v2346 = vld [vmem:[#allocation4] sm:$0x1]
        %v2347 = vld [vmem:[#allocation4 + $0x1] sm:$0x1]
        %v2348 = vpack.c.bf16 %v2324, %v2324
        %v2349 = vpack.c.bf16 %v2331, %v2331
        %v2350 = vpack.c.bf16 %v2338, %v2338
        %v2351 = vpack.c.bf16 %v2345, %v2345
        %v2352 = vld [vmem:[%s764] sm:$0xf]
        %v2353 = vld [vmem:[%s764 + $0x4] sm:$0xf]
        %v2354 = vld [vmem:[%s764 + $0x8] sm:$0xf]
        %v2355 = vld [vmem:[%s764 + $0xc] sm:$0xf]
        %v2356 = vld [vmem:[%s764 + $0x10] sm:$0xf]
        %v2357 = vld [vmem:[%s764 + $0x14] sm:$0xf]
        %v2358 = vld [vmem:[%s764 + $0x18] sm:$0xf]
        %v2359 = vld [vmem:[%s764 + $0x1c] sm:$0xf]
        %v2360 = vld [vmem:[%s764 + $0x20] sm:$0xf]
        %v2361 = vld [vmem:[%s764 + $0x24] sm:$0xf]
        %v2362 = vld [vmem:[%s764 + $0x28] sm:$0xf]
        %v2363 = vld [vmem:[%s764 + $0x2c] sm:$0xf]
        %v2364 = vld [vmem:[%s764 + $0x30] sm:$0xf]
        %v2365 = vld [vmem:[%s764 + $0x34] sm:$0xf]
        %v2366 = vld [vmem:[%s764 + $0x38] sm:$0xf]
        %v2367 = vld [vmem:[%s764 + $0x3c] sm:$0xf]
        %v2368 = vld [vmem:[%s764 + $0x40] sm:$0xf]
        %v2369 = vld [vmem:[%s764 + $0x44] sm:$0xf]
        %v2370 = vld [vmem:[%s764 + $0x48] sm:$0xf]
        %v2371 = vld [vmem:[%s764 + $0x4c] sm:$0xf]
        %v2372 = vld [vmem:[%s764 + $0x50] sm:$0xf]
        %v2373 = vld [vmem:[%s764 + $0x54] sm:$0xf]
        %v2374 = vld [vmem:[%s764 + $0x58] sm:$0xf]
        %v2375 = vld [vmem:[%s764 + $0x5c] sm:$0xf]
        %v2376 = vld [vmem:[%s764 + $0x60] sm:$0xf]
        %v2377 = vld [vmem:[%s764 + $0x64] sm:$0xf]
        %v2378 = vld [vmem:[%s764 + $0x68] sm:$0xf]
        %v2379 = vld [vmem:[%s764 + $0x6c] sm:$0xf]
        %v2380 = vld [vmem:[%s764 + $0x70] sm:$0xf]
        %v2381 = vld [vmem:[%s764 + $0x74] sm:$0xf]
        %v2382 = vld [vmem:[%s764 + $0x78] sm:$0xf]
        %v2383 = vld [vmem:[%s764 + $0x7c] sm:$0xf]
        %v2388 = vunpack.c.l.b16 %v2348
        %v2389 = vunpack.c.l.b16 %v2349
        %v2390 = vunpack.c.l.b16 %v2350
        %v2391 = vunpack.c.l.b16 %v2351
        %vm2392 = vcmask 1041409
        %v2393 = vsel %vm2392, %v2390, %v2388
        %v2394 = vsel %vm2392, %v2391, %v2389
        %v2395 = vpack.c.b16 %v2393, %v2393
        %v2396 = vpack.c.b16 %v2394, %v2394
        %v2431 = vunpack.c.l.b16 %v2352
        %v2432 = vunpack.c.l.b16 %v2353
        %v2433 = vunpack.c.l.b16 %v2354
        %v2434 = vunpack.c.l.b16 %v2355
        %v2435 = vunpack.c.l.b16 %v2356
        %v2436 = vunpack.c.l.b16 %v2357
        %v2437 = vunpack.c.l.b16 %v2358
        %v2438 = vunpack.c.l.b16 %v2359
        %v2439 = vunpack.c.l.b16 %v2360
        %v2440 = vunpack.c.l.b16 %v2361
        %v2441 = vunpack.c.l.b16 %v2362
        %v2442 = vunpack.c.l.b16 %v2363
        %v2443 = vunpack.c.l.b16 %v2364
        %v2444 = vunpack.c.l.b16 %v2365
        %v2445 = vunpack.c.l.b16 %v2366
        %v2446 = vunpack.c.l.b16 %v2367
        %v2447 = vunpack.c.l.b16 %v2368
        %v2448 = vunpack.c.l.b16 %v2369
        %v2449 = vunpack.c.l.b16 %v2370
        %v2450 = vunpack.c.l.b16 %v2371
        %v2451 = vunpack.c.l.b16 %v2372
        %v2452 = vunpack.c.l.b16 %v2373
        %v2453 = vunpack.c.l.b16 %v2374
        %v2454 = vunpack.c.l.b16 %v2375
        %v2455 = vunpack.c.l.b16 %v2376
        %v2456 = vunpack.c.l.b16 %v2377
        %v2457 = vunpack.c.l.b16 %v2378
        %v2458 = vunpack.c.l.b16 %v2379
        %v2459 = vunpack.c.l.b16 %v2380
        %v2460 = vunpack.c.l.b16 %v2381
        %v2461 = vunpack.c.l.b16 %v2382
        %v2462 = vunpack.c.l.b16 %v2383
        %v2463 = vpack.c.b16 %v2432, %v2431
        %v2464 = vpack.c.b16 %v2434, %v2433
        %v2465 = vpack.c.b16 %v2436, %v2435
        %v2466 = vpack.c.b16 %v2438, %v2437
        %v2467 = vpack.c.b16 %v2440, %v2439
        %v2468 = vpack.c.b16 %v2442, %v2441
        %v2469 = vpack.c.b16 %v2444, %v2443
        %v2470 = vpack.c.b16 %v2446, %v2445
        %v2471 = vpack.c.b16 %v2448, %v2447
        %v2472 = vpack.c.b16 %v2450, %v2449
        %v2473 = vpack.c.b16 %v2452, %v2451
        %v2474 = vpack.c.b16 %v2454, %v2453
        %v2475 = vpack.c.b16 %v2456, %v2455
        %v2476 = vpack.c.b16 %v2458, %v2457
        %v2477 = vpack.c.b16 %v2460, %v2459
        %v2478 = vpack.c.b16 %v2462, %v2461
        %2495 = vmatprep.subr.bf16.mxu0 0
        %2496 = vmatpush1.bf16.msra.mxu0 %v2463
        %2497 = vmatprep.subr.bf16.mxu0 0
        %2498 = vmatpush1.bf16.msra.mxu0 %v2464
        %2499 = vmatprep.subr.bf16.mxu0 0
        %2500 = vmatpush1.bf16.msra.mxu0 %v2465
        %2501 = vmatprep.subr.bf16.mxu0 0
        %2502 = vmatpush1.bf16.msra.mxu0 %v2466
        %2503 = vmatprep.subr.bf16.mxu0 0
        %2504 = vmatpush1.bf16.msra.mxu0 %v2467
        %2505 = vmatprep.subr.bf16.mxu0 0
        %2506 = vmatpush1.bf16.msra.mxu0 %v2468
        %2507 = vmatprep.subr.bf16.mxu0 0
        %2508 = vmatpush1.bf16.msra.mxu0 %v2469
        %2509 = vmatprep.subr.bf16.mxu0 0
        %2510 = vmatpush1.bf16.msra.mxu0 %v2470
        %2511 = vmatprep.subr.bf16.mxu0 0
        %2512 = vmatpush1.bf16.msra.mxu0 %v2471
        %2513 = vmatprep.subr.bf16.mxu0 0
        %2514 = vmatpush1.bf16.msra.mxu0 %v2472
        %2515 = vmatprep.subr.bf16.mxu0 0
        %2516 = vmatpush1.bf16.msra.mxu0 %v2473
        %2517 = vmatprep.subr.bf16.mxu0 0
        %2518 = vmatpush1.bf16.msra.mxu0 %v2474
        %2519 = vmatprep.subr.bf16.mxu0 0
        %2520 = vmatpush1.bf16.msra.mxu0 %v2475
        %2521 = vmatprep.subr.bf16.mxu0 0
        %2522 = vmatpush1.bf16.msra.mxu0 %v2476
        %2523 = vmatprep.subr.bf16.mxu0 0
        %2524 = vmatpush1.bf16.msra.mxu0 %v2477
        %2525 = vmatprep.subr.bf16.mxu0 0
        %2526 = vmatpush1.bf16.msra.mxu0 %v2478
        %2527 = vmatprep.mubr.bf16.mxu0 %v2396
        %2528 = vmatmul.mubr.bf16.gmra.mrb[0].mxu0 %v2395
        %v2529 = vpop.f32.mrb[0].mxu0
        %v2530 = vadd.f32 0.0, %v2529
        %v2531 = vpop.f32.mrb[0].mxu0
        %v2532 = vpop.f32.mrb[0].mxu0
        %v2533 = vpop.f32.mrb[0].mxu0
        %2534 = vdwg.mxu0
        %v2537 = vunpack.c.l.s4 1966171168
        %v2538 = vunpack.c.0.s8 %v2537
        %v2539 = vlaneseq
        %v2540 = vshrl.u32 %v2539, 7
        %v2541 = vsub.s32 %v2538, %v2540
        %v2542 = vrot.slane %v2530, %v2541
        %v2543 = vcombine.high %v2542, %v2542
        %v2545 = vunpack.c.l.s4 1966171168
        %v2546 = vunpack.c.0.s8 %v2545
        %v2547 = vlaneseq
        %v2548 = vshrl.u32 %v2547, 7
        %v2549 = vsub.s32 %v2546, %v2548
        %v2550 = vrot.slane %v2542, %v2549
        %v2552 = vunpack.c.l.s4 1966171168
        %v2553 = vunpack.c.0.s8 %v2552
        %v2554 = vlaneseq
        %v2555 = vshrl.u32 %v2554, 7
        %v2556 = vsub.s32 %v2553, %v2555
        %v2557 = vrot.slane %v2543, %v2556
        %v2560 = vadd.f32 %v2346, %v2550
        %v2561 = vadd.f32 %v2347, %v2557
        %2562 = vst [vmem:[#allocation4] sm:$0x1] %v2560
        %2563 = vst [vmem:[#allocation4 + $0x1] sm:$0x1] %v2561
        // Predicated region
        $region107: #{pointnetv2_linear_forward.5} parent=97 // pred_check
          %p2564 = pneg %p309
        $region108: #{pointnetv2_linear_forward.5} parent=97 // pred_check_branch
          %2566 = sbr.rel (%p2564) target = $region110
        $region109: #{pointnetv2_linear_forward.5} parent=97 // pred_region
          %s2567 = smul.u32 2, %s27
          %s2569 = ssub.s32 32, 32
          %2570 = vsyncadd [#allocation5], %s2569
          %s2571 = smul.addr %s2567, 16
          %s2572 = scalar_lea.hbm %s11, %s2571
          %s2573 = sshll.u32 [#allocation4], 4
          %s2574 = int_to_ptr.vmem [resolvable:$true] %s2573
          %2579 = dma.vmem_to_hbm [thread:$0]  %s2574, 32, %s2572, [#allocation5], 16, 16, 1
        $region110: #{pointnetv2_linear_forward.5} parent=97 // pred_fallthru
          _
        // Predicated region
        $region111: #{pointnetv2_linear_forward.5} parent=97 // pred_check
          %p2580 = pneg %p309
        $region112: #{pointnetv2_linear_forward.5} parent=97 // pred_check_branch
          %2582 = sbr.rel (%p2580) target = $region114
        $region113: #{pointnetv2_linear_forward.5} parent=97 // pred_region
          %2583 = dma.done [#allocation5], 32
        $region114: #{pointnetv2_linear_forward.5} parent=97 // pred_fallthru
          _
      $region98: #{pointnetv2_linear_forward.5} parent=5 // pred_fallthru
        _
      %p2584 = scmp.le.s32.totalorder 2, %s18
      // Predicated region
      $region115: #{pointnetv2_linear_forward.5} parent=5 // pred_check
        %p2585 = pneg %p2584
      $region116: #{pointnetv2_linear_forward.5} parent=5 // pred_check_branch
        %2587 = sbr.rel (%p2585) target = $region118
      $region117: #{pointnetv2_linear_forward.5} parent=5 // pred_region
        %s2588 = ssub.s32 %s18, 2
      $region118: #{pointnetv2_linear_forward.5} parent=5 // pred_fallthru
        _
    $region6: #{pointnetv2_linear_forward.5} parent=1 // loop_footer
      %s22 = sadd.s32 1, %s18
    $region7: #{pointnetv2_linear_forward.5} parent=1 // loop_footer_branch
      %17 = sbr.rel target = $region3
    $region8: #{pointnetv2_linear_forward.5} parent=1 // loop_exit
      _
    %2589 = vsyncpa [#allocation5], 1
    %s2590 = scalar_lea.sflag [#allocation5], 1
    %2591 = vsyncpa %s2590, 1

</llo_original>
